<compile_context>
chip_gen: v7x
topology: tpu7x:2x2x1
jax: 0.10.0
libtpu: 0.0.40
codegen_flags: <defaults>
</compile_context>

<pallas_src>
import math
from functools import partial

import jax
import jax.numpy as jnp
import numpy as np
from jax import lax
from jax.experimental import pallas as pl
from jax.experimental.pallas import tpu as pltpu


# ---------------------------------------------------------------------------
# Hardware-derived budgets
# ---------------------------------------------------------------------------
def _query_vmem_limit_bytes():
    try:
        cap = int(pltpu.get_tpu_info().vmem_capacity_bytes)
    except Exception:
        cap = 64 * 1024 * 1024          # conservative default (v7x physical)
    return int(min(cap // 2, 64 * 1024 * 1024))


_VMEM_LIMIT_BYTES = _query_vmem_limit_bytes()
# ~2 MiB lane-dense blocks put a purely mem-bound kernel at ~85%+ of roofline.
_TILE_TARGET_BYTES = min(2 * 1024 * 1024, _VMEM_LIMIT_BYTES // 16)
# Hard per-block cap for the minor-axis paths (in/out double buffers ~4-5x).
_HARD_BLOCK_BYTES = _VMEM_LIMIT_BYTES // 6
_MAX_UNROLL = 256                       # cap on statically unrolled loops


def _prod(xs):
    return int(math.prod(xs)) if len(xs) else 1


def _ceil_to(x, k):
    return ((int(x) + k - 1) // k) * k


def _largest_divisor_leq(n, cap):
    n = int(n)
    cap = int(max(1, min(n, cap)))
    for c in range(cap, 0, -1):
        if n % c == 0:
            return c
    return 1


def _largest_divisor_leq_pred(n, cap, pred):
    n = int(n)
    cap = int(max(0, min(n, cap)))
    for c in range(cap, 0, -1):
        if n % c == 0 and pred(c):
            return c
    return None


def _compiler_params(n_grid_dims):
    return pltpu.CompilerParams(
        dimension_semantics=("parallel",) * n_grid_dims,
        vmem_limit_bytes=_VMEM_LIMIT_BYTES)


def _cost(x, reads, writes, flops_per_elem=2):
    nbytes = int(x.size) * jnp.dtype(x.dtype).itemsize
    return pl.CostEstimate(flops=int(flops_per_elem) * int(x.size),
                           transcendentals=0,
                           bytes_accessed=int((reads + writes) * nbytes))


# ---------------------------------------------------------------------------
# Kernel bodies
# ---------------------------------------------------------------------------
def _avg_kernel(a_ref, b_ref, o_ref):
    # Plain index-map-swap average (only used for enormous symmetrized axes).
    o_ref[...] = (a_ref[...] + b_ref[...]) * 0.5


def _tri_avg_kernel(u_tbl, v_tbl, a_ref, b_ref, o_hbm, acc_ref, sem_ref,
                    *, bp, bq, bs):
    # Triangle (u <= v) block swap: compute the averaged block once and
    # mirror-write it to both (u, v) and (v, u) by manual DMA.
    t = pl.program_id(0)
    pb = pl.program_id(1)
    qb = pl.program_id(2)
    sb = pl.program_id(3)
    u = u_tbl[t]
    v = v_tbl[t]

    acc_ref[...] = (a_ref[...] + b_ref[...]) * 0.5

    p0 = pb * bp
    q0 = qb * bq
    s0 = sb * bs
    dst = o_hbm.at[pl.ds(p0, bp), pl.ds(u, 1), pl.ds(q0, bq),
                   pl.ds(v, 1), pl.ds(s0, bs), :]
    cp = pltpu.make_async_copy(acc_ref, dst, sem_ref.at[0])
    cp.start()

    @pl.when(u != v)
    def _mirror():
        dst2 = o_hbm.at[pl.ds(p0, bp), pl.ds(v, 1), pl.ds(q0, bq),
                        pl.ds(u, 1), pl.ds(s0, bs), :]
        cp2 = pltpu.make_async_copy(acc_ref, dst2, sem_ref.at[1])
        cp2.start()
        cp2.wait()

    cp.wait()


def _minor_last_kernel(x_ref, o_ref, *, m, bp, bq):
    # Pair (i1, n-1) on the flat view (P, m, Q*m): every (m, m) column block
    # is averaged with its own transpose.  The transpose is an exact identity
    # matmul on the (otherwise idle) MXU; results are stored per column block
    # (no concatenate, no whole-slab temporary -> low vreg pressure).
    r = lax.broadcasted_iota(jnp.int32, (m, m), 0)
    c = lax.broadcasted_iota(jnp.int32, (m, m), 1)
    eye = (r == c).astype(x_ref.dtype)
    for i in range(bp):
        for q in range(bq):
            a = x_ref[i, :, q * m:(q + 1) * m]                  # (m, m)
            at = lax.dot_general(a, eye, (((0,), (0,)), ((), ())),
                                 preferred_element_type=jnp.float32)
            o_ref[i, :, q * m:(q + 1) * m] = (a + at.astype(a.dtype)) * 0.5


def _minor_sublane_kernel(x_ref, o_ref, *, m, bp, bq):
    # Pair (i1, n-2) on view (P, m, Q, m, T): for each q-cube
    # c = X[p, :, q, :, :], out[p, u, q, :, :] = (c[u] + c[:, u, :]) / 2.
    # Single input stream (no duplicate slab read); the sublane re-gather of
    # c[:, u, :] is XLU/VPU work hidden under the HBM DMA.
    for i in range(bp):
        for q in range(bq):
            c = x_ref[i, :, q]                                  # (m, m, T)
            for u in range(m):
                o_ref[i, u, q] = (c[u] + c[:, u, :]) * 0.5


# ---------------------------------------------------------------------------
# Per-pair drivers (wrapper side uses only free reshapes, never transposes)
# ---------------------------------------------------------------------------
def _pick_swap_blocks(p_sz, q_sz, s, l, itemsize):
    budget = _TILE_TARGET_BYTES
    l_pad = _ceil_to(l, 128)
    # bs: the second-to-last block dim must be a multiple of 8 or the full s.
    if _ceil_to(s, 8) * l_pad * itemsize <= budget or s % 8 != 0:
        bs = s
    else:
        cap_s = max(1, budget // (l_pad * itemsize))
        bs = _largest_divisor_leq_pred(s, cap_s, lambda c: c % 8 == 0) or 8
    unit = _ceil_to(bs, 8) * l_pad * itemsize
    bq = _largest_divisor_leq(q_sz, max(1, budget // unit))
    bp = _largest_divisor_leq(p_sz, max(1, budget // (bq * unit)))
    return bp, bq, bs


def _pair_blockswap(x, i1, i2, s, l):
    """(X + X.swapaxes(i1, i2)) / 2 on view (P, m, Q, m, S, L): the swap lives
    purely in the index maps.  Triangle iteration + mirror DMA writes cut HBM
    traffic from ~3N to ~2N."""
    d = x.shape
    m = d[i1]
    p_sz = _prod(d[:i1])
    q_sz = _prod(d[i1 + 1:i2])
    itemsize = jnp.dtype(x.dtype).itemsize
    bp, bq, bs = _pick_swap_blocks(p_sz, q_sz, s, l, itemsize)
    view = (p_sz, m, q_sz, m, s, l)
    y = jnp.reshape(x, view)
    blk = (bp, 1, bq, 1, bs, l)
    n_tri = m * (m + 1) // 2

    if n_tri > 16384:
        # TODO(synk): enormous symmetrized axes -- plain full-grid swap keeps
        # the SMEM pair tables small (no mirror writes).
        grid = (p_sz // bp, m, q_sz // bq, m, s // bs)
        fwd = lambda p, u, q, v, si: (p, u, q, v, si, 0)
        swp = lambda p, u, q, v, si: (p, v, q, u, si, 0)
        out = pl.pallas_call(
            _avg_kernel,
            out_shape=jax.ShapeDtypeStruct(view, x.dtype),
            grid=grid,
            in_specs=[pl.BlockSpec(blk, fwd), pl.BlockSpec(blk, swp)],
            out_specs=pl.BlockSpec(blk, fwd),
            compiler_params=_compiler_params(len(grid)),
            cost_estimate=_cost(x, reads=2, writes=1),
        )(y, y)
        return jnp.reshape(out, d)

    u_np, v_np = np.triu_indices(m)
    u_tbl = jnp.asarray(u_np, dtype=jnp.int32)
    v_tbl = jnp.asarray(v_np, dtype=jnp.int32)
    grid = (n_tri, p_sz // bp, q_sz // bq, s // bs)

    def a_map(t, p, q, si, u_ref, v_ref):
        return (p, u_ref[t], q, v_ref[t], si, 0)

    def b_map(t, p, q, si, u_ref, v_ref):
        return (p, v_ref[t], q, u_ref[t], si, 0)

    out = pl.pallas_call(
        partial(_tri_avg_kernel, bp=bp, bq=bq, bs=bs),
        out_shape=jax.ShapeDtypeStruct(view, x.dtype),
        grid_spec=pltpu.PrefetchScalarGridSpec(
            num_scalar_prefetch=2,
            grid=grid,
            in_specs=[pl.BlockSpec(blk, a_map), pl.BlockSpec(blk, b_map)],
            out_specs=pl.BlockSpec(memory_space=pl.ANY),
            scratch_shapes=[pltpu.VMEM(blk, x.dtype),
                            pltpu.SemaphoreType.DMA((2,))],
        ),
        compiler_params=_compiler_params(len(grid)),
        cost_estimate=_cost(x, reads=1, writes=1),
    )(u_tbl, v_tbl, y, y)
    return jnp.reshape(out, d)


def _pair_minor_last(x, i1, i2):
    d = x.shape
    m = d[i1]
    p_sz = _prod(d[:i1])
    q_sz = _prod(d[i1 + 1:i2])
    itemsize = jnp.dtype(x.dtype).itemsize
    unit = m * m * itemsize
    budget = _TILE_TARGET_BYTES

    # bq*m must be a multiple of 128 (lane-dense blocks) or the full width.
    cap_q = max(1, min(budget // unit, _MAX_UNROLL))
    bq = _largest_divisor_leq_pred(q_sz, cap_q, lambda c: (c * m) % 128 == 0)
    if bq is None:
        bq = q_sz                                   # full width always legal
    if bq > _MAX_UNROLL:
        return None                                 # caller falls back
    blk_unit = _ceil_to(m, 8) * _ceil_to(bq * m, 128) * itemsize
    if blk_unit > _HARD_BLOCK_BYTES:
        return None
    bp = _largest_divisor_leq(
        p_sz, min(max(1, budget // blk_unit), max(1, _MAX_UNROLL // bq)))
    # keep the grid >= 2 steps so both v7x TensorCores / pipelining stay busy
    if (p_sz // bp) * (q_sz // bq) == 1 and p_sz > 1:
        bp = _largest_divisor_leq(p_sz, max(1, bp // 2))

    view = (p_sz, m, q_sz * m)
    y = jnp.reshape(x, view)
    blk = (bp, m, bq * m)
    grid = (p_sz // bp, q_sz // bq)
    out = pl.pallas_call(
        partial(_minor_last_kernel, m=m, bp=bp, bq=bq),
        out_shape=jax.ShapeDtypeStruct(view, x.dtype),
        grid=grid,
        in_specs=[pl.BlockSpec(blk, lambda p, q: (p, 0, q))],
        out_specs=pl.BlockSpec(blk, lambda p, q: (p, 0, q)),
        compiler_params=_compiler_params(len(grid)),
        cost_estimate=_cost(x, reads=1, writes=1, flops_per_elem=2 * m + 2),
    )(y)
    return jnp.reshape(out, d)


def _pair_minor_sublane(x, i1, i2):
    d = x.shape
    n = len(d)
    m = d[i1]
    p_sz = _prod(d[:i1])
    q_sz = _prod(d[i1 + 1:i2])
    t = d[n - 1]
    itemsize = jnp.dtype(x.dtype).itemsize
    cube = m * _ceil_to(m, 8) * _ceil_to(t, 128) * itemsize   # padded VMEM cube
    if cube > _HARD_BLOCK_BYTES or m > _MAX_UNROLL:
        return None
    budget = _TILE_TARGET_BYTES
    bq = _largest_divisor_leq(
        q_sz, min(max(1, budget // cube), max(1, _MAX_UNROLL // m)))
    bp = _largest_divisor_leq(
        p_sz, min(max(1, budget // (bq * cube)),
                  max(1, _MAX_UNROLL // (m * bq))))
    # keep the grid >= 2 steps where possible (megacore / pipelining)
    if (p_sz // bp) * (q_sz // bq) == 1:
        if q_sz > 1:
            bq = _largest_divisor_leq(q_sz, max(1, bq // 2))
        elif p_sz > 1:
            bp = _largest_divisor_leq(p_sz, max(1, bp // 2))

    view = (p_sz, m, q_sz, m, t)
    y = jnp.reshape(x, view)
    blk = (bp, m, bq, m, t)
    grid = (p_sz // bp, q_sz // bq)
    # TODO(synk): for t < 128 the per-(u, q) stores are lane-masked; a fully
    # lane-dense flat-view output needs an in-kernel (m,T)->(m*T,) relayout
    # whose Mosaic reshape support is not guaranteed, so it is not done here.
    out = pl.pallas_call(
        partial(_minor_sublane_kernel, m=m, bp=bp, bq=bq),
        out_shape=jax.ShapeDtypeStruct(view, x.dtype),
        grid=grid,
        in_specs=[pl.BlockSpec(blk, lambda p, q: (p, 0, q, 0, 0))],
        out_specs=pl.BlockSpec(blk, lambda p, q: (p, 0, q, 0, 0)),
        compiler_params=_compiler_params(len(grid)),
        cost_estimate=_cost(x, reads=1, writes=1),
    )(y)
    return jnp.reshape(out, d)


def _symmetrize_pair(x, pair):
    i1, i2 = sorted(int(a) for a in pair)
    if i1 == i2:
        return x
    d = x.shape
    n = len(d)
    assert d[i1] == d[i2], "symmetrized axes must have equal sizes"
    # TODO(synk): integer dtypes would need floor-division semantics to match
    # the PyTorch reference; the kernels assume a floating dtype.
    assert jnp.issubdtype(x.dtype, jnp.floating)
    if d[i1] == 1:
        return x

    if i2 <= n - 3:
        # Both axes strictly major: triangle block swap, lane-dense blocks.
        return _pair_blockswap(x, i1, i2, _prod(d[i2 + 1:n - 1]), d[n - 1])

    if i2 == n - 1:
        out = _pair_minor_last(x, i1, i2)
    else:  # i2 == n - 2
        out = _pair_minor_sublane(x, i1, i2)
    if out is not None:
        return out

    # TODO(synk): oversized minor-axis pairs (very large m) fall back to the
    # generic block swap with narrow trailing tiles; a tiled in-kernel
    # transpose variant would avoid this perf cliff.
    return _pair_blockswap(x, i1, i2, 1, _prod(d[i2 + 1:]))


# ---------------------------------------------------------------------------
# Module wrapper + reference
# ---------------------------------------------------------------------------
class Symmetrize:
    """JAX/Pallas port of the PyTorch `Symmetrize` module."""

    def __init__(self, xi_sizes, eta_sizes, symmetries):
        self.xi_sizes = tuple(int(s) for s in xi_sizes)
        self.eta_sizes = tuple(int(s) for s in eta_sizes)
        self.symmetries = [tuple(int(a) for a in p) for p in symmetries]

    def __call__(self, W):
        X = jnp.reshape(W, self.xi_sizes + self.eta_sizes)
        # TODO(synk): axis-disjoint pairs could be fused into one pallas_call
        # (average over the 2^k swap combinations); applied sequentially here
        # to mirror the reference recursion exactly.
        for pair in self.symmetries:
            X = _symmetrize_pair(X, pair)
        return jnp.reshape(
            X, (math.prod(self.xi_sizes), math.prod(self.eta_sizes)))


def _reference(W, xi_sizes, eta_sizes, symmetries):
    X = jnp.reshape(W, tuple(xi_sizes) + tuple(eta_sizes))
    for (i1, i2) in symmetries:
        X = (X + jnp.swapaxes(X, i1, i2)) / 2.0
    return jnp.reshape(X, (math.prod(xi_sizes), math.prod(eta_sizes)))


def _run_case(key, xi_sizes, eta_sizes, symmetries):
    W = jax.random.normal(
        key, (math.prod(xi_sizes), math.prod(eta_sizes)), dtype=jnp.float32)
    module = Symmetrize(xi_sizes, eta_sizes, symmetries)
    out = jax.block_until_ready(jax.jit(module.__call__)(W))
    ref = _reference(W, xi_sizes, eta_sizes, symmetries)
    assert out.shape == ref.shape and out.dtype == ref.dtype
    assert jnp.allclose(out, ref, atol=1e-5, rtol=1e-5)
    return out


if __name__ == "__main__":
    key = jax.random.PRNGKey(0)
    k1, k2, k3 = jax.random.split(key, 3)

    # 1) Canonical use: W in R^{(8*16) x (8*16)}, symmetric under
    #    xi-axis0 <-> eta-axis0 and xi-axis1 <-> eta-axis1.
    #    Exercises the "sublane pair" and "lane pair" kernels.
    out = _run_case(k1, (8, 16), (8, 16), [(0, 2), (1, 3)])
    # combined symmetries make the flattened matrix symmetric:
    assert jnp.allclose(out, out.T, atol=1e-5, rtol=1e-5)

    # 2) Symmetry between the two minor axes (classic (X + X.T)/2 per batch).
    _run_case(k2, (4, 32), (32,), [(1, 2)])

    # 3) Symmetries between major axes only: triangle block swap with
    #    mirror writes and lane-dense (multiple-of-128 last dim) blocks.
    _run_case(k3, (4, 4), (4, 4, 8, 128), [(0, 2), (1, 3)])

    print("KERNEL_OK")
</pallas_src>

<mosaic_0001>
module attributes {stable_mosaic.version = 11 : i64} {
  func.func @_minor_last_kernel(%arg0: i32, %arg1: i32, %arg2: memref<4x16x128xf32, #tpu.memory_space<vmem>>, %arg3: memref<4x16x128xf32, #tpu.memory_space<vmem>>) attributes {dimension_semantics = [#tpu.dimension_semantics<parallel>, #tpu.dimension_semantics<parallel>], iteration_bounds = array<i64: 2, 1>, scalar_prefetch = 0 : i64, scratch_operands = 0 : i64, tpu.core_type = #tpu.core_type<tc>, window_params = [{transform_indices = @transform_0, window_bounds = array<i64: 4, 16, 128>}, {transform_indices = @transform_1, window_bounds = array<i64: 4, 16, 128>}]} {
    %0 = tpu.iota {dimensions = array<i32: 0>} : vector<16x16xi32>
    %1 = tpu.iota {dimensions = array<i32: 1>} : vector<16x16xi32>
    %2 = arith.cmpi eq, %0, %1 : vector<16x16xi32>
    %3 = arith.extui %2 : vector<16x16xi1> to vector<16x16xi32>
    %4 = arith.sitofp %3 : vector<16x16xi32> to vector<16x16xf32>
    %c0 = arith.constant 0 : index
    %c0_0 = arith.constant 0 : index
    %c0_1 = arith.constant 0 : index
    %5 = vector.load %arg2[%c0, %c0_0, %c0_1] : memref<4x16x128xf32, #tpu.memory_space<vmem>>, vector<1x16x16xf32>
    %6 = vector.shape_cast %5 : vector<1x16x16xf32> to vector<16x16xf32>
    %cst = arith.constant dense<0.000000e+00> : vector<16x16xf32>
    %7 = tpu.matmul %6, %4, %cst {dimension_numbers = #tpu.dot_dimension_numbers<[0], [0], [1], [1], [0, 1, 1, 1], [], []>} : vector<16x16xf32>, vector<16x16xf32>, vector<16x16xf32> -> vector<16x16xf32>
    %8 = arith.addf %6, %7 : vector<16x16xf32>
    %cst_2 = arith.constant 5.000000e-01 : f32
    %9 = vector.broadcast %cst_2 : f32 to vector<16x16xf32>
    %10 = arith.mulf %8, %9 : vector<16x16xf32>
    %c0_3 = arith.constant 0 : index
    %c0_4 = arith.constant 0 : index
    %c0_5 = arith.constant 0 : index
    %11 = vector.load %arg3[%c0_3, %c0_4, %c0_5] : memref<4x16x128xf32, #tpu.memory_space<vmem>>, vector<1x16x16xf32>
    %12 = vector.shape_cast %11 : vector<1x16x16xf32> to vector<16x16xf32>
    %13 = vector.shape_cast %10 : vector<16x16xf32> to vector<1x16x16xf32>
    tpu.vector_store %arg3[%c0_3, %c0_4, %c0_5], %13 {strides = array<i32>} : memref<4x16x128xf32, #tpu.memory_space<vmem>>, vector<1x16x16xf32>,
    %c0_6 = arith.constant 0 : index
    %c0_7 = arith.constant 0 : index
    %c16 = arith.constant 16 : index
    %14 = vector.load %arg2[%c0_6, %c0_7, %c16] : memref<4x16x128xf32, #tpu.memory_space<vmem>>, vector<1x16x16xf32>
    %15 = vector.shape_cast %14 : vector<1x16x16xf32> to vector<16x16xf32>
    %cst_8 = arith.constant dense<0.000000e+00> : vector<16x16xf32>
    %16 = tpu.matmul %15, %4, %cst_8 {dimension_numbers = #tpu.dot_dimension_numbers<[0], [0], [1], [1], [0, 1, 1, 1], [], []>} : vector<16x16xf32>, vector<16x16xf32>, vector<16x16xf32> -> vector<16x16xf32>
    %17 = arith.addf %15, %16 : vector<16x16xf32>
    %cst_9 = arith.constant 5.000000e-01 : f32
    %18 = vector.broadcast %cst_9 : f32 to vector<16x16xf32>
    %19 = arith.mulf %17, %18 : vector<16x16xf32>
    %c0_10 = arith.constant 0 : index
    %c0_11 = arith.constant 0 : index
    %c16_12 = arith.constant 16 : index
    %20 = vector.load %arg3[%c0_10, %c0_11, %c16_12] : memref<4x16x128xf32, #tpu.memory_space<vmem>>, vector<1x16x16xf32>
    %21 = vector.shape_cast %20 : vector<1x16x16xf32> to vector<16x16xf32>
    %22 = vector.shape_cast %19 : vector<16x16xf32> to vector<1x16x16xf32>
    tpu.vector_store %arg3[%c0_10, %c0_11, %c16_12], %22 {strides = array<i32>} : memref<4x16x128xf32, #tpu.memory_space<vmem>>, vector<1x16x16xf32>,
    %c0_13 = arith.constant 0 : index
    %c0_14 = arith.constant 0 : index
    %c32 = arith.constant 32 : index
    %23 = vector.load %arg2[%c0_13, %c0_14, %c32] : memref<4x16x128xf32, #tpu.memory_space<vmem>>, vector<1x16x16xf32>
    %24 = vector.shape_cast %23 : vector<1x16x16xf32> to vector<16x16xf32>
    %cst_15 = arith.constant dense<0.000000e+00> : vector<16x16xf32>
    %25 = tpu.matmul %24, %4, %cst_15 {dimension_numbers = #tpu.dot_dimension_numbers<[0], [0], [1], [1], [0, 1, 1, 1], [], []>} : vector<16x16xf32>, vector<16x16xf32>, vector<16x16xf32> -> vector<16x16xf32>
    %26 = arith.addf %24, %25 : vector<16x16xf32>
    %cst_16 = arith.constant 5.000000e-01 : f32
    %27 = vector.broadcast %cst_16 : f32 to vector<16x16xf32>
    %28 = arith.mulf %26, %27 : vector<16x16xf32>
    %c0_17 = arith.constant 0 : index
    %c0_18 = arith.constant 0 : index
    %c32_19 = arith.constant 32 : index
    %29 = vector.load %arg3[%c0_17, %c0_18, %c32_19] : memref<4x16x128xf32, #tpu.memory_space<vmem>>, vector<1x16x16xf32>
    %30 = vector.shape_cast %29 : vector<1x16x16xf32> to vector<16x16xf32>
    %31 = vector.shape_cast %28 : vector<16x16xf32> to vector<1x16x16xf32>
    tpu.vector_store %arg3[%c0_17, %c0_18, %c32_19], %31 {strides = array<i32>} : memref<4x16x128xf32, #tpu.memory_space<vmem>>, vector<1x16x16xf32>,
    %c0_20 = arith.constant 0 : index
    %c0_21 = arith.constant 0 : index
    %c48 = arith.constant 48 : index
    %32 = vector.load %arg2[%c0_20, %c0_21, %c48] : memref<4x16x128xf32, #tpu.memory_space<vmem>>, vector<1x16x16xf32>
    %33 = vector.shape_cast %32 : vector<1x16x16xf32> to vector<16x16xf32>
    %cst_22 = arith.constant dense<0.000000e+00> : vector<16x16xf32>
    %34 = tpu.matmul %33, %4, %cst_22 {dimension_numbers = #tpu.dot_dimension_numbers<[0], [0], [1], [1], [0, 1, 1, 1], [], []>} : vector<16x16xf32>, vector<16x16xf32>, vector<16x16xf32> -> vector<16x16xf32>
    %35 = arith.addf %33, %34 : vector<16x16xf32>
    %cst_23 = arith.constant 5.000000e-01 : f32
    %36 = vector.broadcast %cst_23 : f32 to vector<16x16xf32>
    %37 = arith.mulf %35, %36 : vector<16x16xf32>
    %c0_24 = arith.constant 0 : index
    %c0_25 = arith.constant 0 : index
    %c48_26 = arith.constant 48 : index
    %38 = vector.load %arg3[%c0_24, %c0_25, %c48_26] : memref<4x16x128xf32, #tpu.memory_space<vmem>>, vector<1x16x16xf32>
    %39 = vector.shape_cast %38 : vector<1x16x16xf32> to vector<16x16xf32>
    %40 = vector.shape_cast %37 : vector<16x16xf32> to vector<1x16x16xf32>
    tpu.vector_store %arg3[%c0_24, %c0_25, %c48_26], %40 {strides = array<i32>} : memref<4x16x128xf32, #tpu.memory_space<vmem>>, vector<1x16x16xf32>,
    %c0_27 = arith.constant 0 : index
    %c0_28 = arith.constant 0 : index
    %c64 = arith.constant 64 : index
    %41 = vector.load %arg2[%c0_27, %c0_28, %c64] : memref<4x16x128xf32, #tpu.memory_space<vmem>>, vector<1x16x16xf32>
    %42 = vector.shape_cast %41 : vector<1x16x16xf32> to vector<16x16xf32>
    %cst_29 = arith.constant dense<0.000000e+00> : vector<16x16xf32>
    %43 = tpu.matmul %42, %4, %cst_29 {dimension_numbers = #tpu.dot_dimension_numbers<[0], [0], [1], [1], [0, 1, 1, 1], [], []>} : vector<16x16xf32>, vector<16x16xf32>, vector<16x16xf32> -> vector<16x16xf32>
    %44 = arith.addf %42, %43 : vector<16x16xf32>
    %cst_30 = arith.constant 5.000000e-01 : f32
    %45 = vector.broadcast %cst_30 : f32 to vector<16x16xf32>
    %46 = arith.mulf %44, %45 : vector<16x16xf32>
    %c0_31 = arith.constant 0 : index
    %c0_32 = arith.constant 0 : index
    %c64_33 = arith.constant 64 : index
    %47 = vector.load %arg3[%c0_31, %c0_32, %c64_33] : memref<4x16x128xf32, #tpu.memory_space<vmem>>, vector<1x16x16xf32>
    %48 = vector.shape_cast %47 : vector<1x16x16xf32> to vector<16x16xf32>
    %49 = vector.shape_cast %46 : vector<16x16xf32> to vector<1x16x16xf32>
    tpu.vector_store %arg3[%c0_31, %c0_32, %c64_33], %49 {strides = array<i32>} : memref<4x16x128xf32, #tpu.memory_space<vmem>>, vector<1x16x16xf32>,
    %c0_34 = arith.constant 0 : index
    %c0_35 = arith.constant 0 : index
    %c80 = arith.constant 80 : index
    %50 = vector.load %arg2[%c0_34, %c0_35, %c80] : memref<4x16x128xf32, #tpu.memory_space<vmem>>, vector<1x16x16xf32>
    %51 = vector.shape_cast %50 : vector<1x16x16xf32> to vector<16x16xf32>
    %cst_36 = arith.constant dense<0.000000e+00> : vector<16x16xf32>
    %52 = tpu.matmul %51, %4, %cst_36 {dimension_numbers = #tpu.dot_dimension_numbers<[0], [0], [1], [1], [0, 1, 1, 1], [], []>} : vector<16x16xf32>, vector<16x16xf32>, vector<16x16xf32> -> vector<16x16xf32>
    %53 = arith.addf %51, %52 : vector<16x16xf32>
    %cst_37 = arith.constant 5.000000e-01 : f32
    %54 = vector.broadcast %cst_37 : f32 to vector<16x16xf32>
    %55 = arith.mulf %53, %54 : vector<16x16xf32>
    %c0_38 = arith.constant 0 : index
    %c0_39 = arith.constant 0 : index
    %c80_40 = arith.constant 80 : index
    %56 = vector.load %arg3[%c0_38, %c0_39, %c80_40] : memref<4x16x128xf32, #tpu.memory_space<vmem>>, vector<1x16x16xf32>
    %57 = vector.shape_cast %56 : vector<1x16x16xf32> to vector<16x16xf32>
    %58 = vector.shape_cast %55 : vector<16x16xf32> to vector<1x16x16xf32>
    tpu.vector_store %arg3[%c0_38, %c0_39, %c80_40], %58 {strides = array<i32>} : memref<4x16x128xf32, #tpu.memory_space<vmem>>, vector<1x16x16xf32>,
    %c0_41 = arith.constant 0 : index
    %c0_42 = arith.constant 0 : index
    %c96 = arith.constant 96 : index
    %59 = vector.load %arg2[%c0_41, %c0_42, %c96] : memref<4x16x128xf32, #tpu.memory_space<vmem>>, vector<1x16x16xf32>
    %60 = vector.shape_cast %59 : vector<1x16x16xf32> to vector<16x16xf32>
    %cst_43 = arith.constant dense<0.000000e+00> : vector<16x16xf32>
    %61 = tpu.matmul %60, %4, %cst_43 {dimension_numbers = #tpu.dot_dimension_numbers<[0], [0], [1], [1], [0, 1, 1, 1], [], []>} : vector<16x16xf32>, vector<16x16xf32>, vector<16x16xf32> -> vector<16x16xf32>
    %62 = arith.addf %60, %61 : vector<16x16xf32>
    %cst_44 = arith.constant 5.000000e-01 : f32
    %63 = vector.broadcast %cst_44 : f32 to vector<16x16xf32>
    %64 = arith.mulf %62, %63 : vector<16x16xf32>
    %c0_45 = arith.constant 0 : index
    %c0_46 = arith.constant 0 : index
    %c96_47 = arith.constant 96 : index
    %65 = vector.load %arg3[%c0_45, %c0_46, %c96_47] : memref<4x16x128xf32, #tpu.memory_space<vmem>>, vector<1x16x16xf32>
    %66 = vector.shape_cast %65 : vector<1x16x16xf32> to vector<16x16xf32>
    %67 = vector.shape_cast %64 : vector<16x16xf32> to vector<1x16x16xf32>
    tpu.vector_store %arg3[%c0_45, %c0_46, %c96_47], %67 {strides = array<i32>} : memref<4x16x128xf32, #tpu.memory_space<vmem>>, vector<1x16x16xf32>,
    %c0_48 = arith.constant 0 : index
    %c0_49 = arith.constant 0 : index
    %c112 = arith.constant 112 : index
    %68 = vector.load %arg2[%c0_48, %c0_49, %c112] : memref<4x16x128xf32, #tpu.memory_space<vmem>>, vector<1x16x16xf32>
    %69 = vector.shape_cast %68 : vector<1x16x16xf32> to vector<16x16xf32>
    %cst_50 = arith.constant dense<0.000000e+00> : vector<16x16xf32>
    %70 = tpu.matmul %69, %4, %cst_50 {dimension_numbers = #tpu.dot_dimension_numbers<[0], [0], [1], [1], [0, 1, 1, 1], [], []>} : vector<16x16xf32>, vector<16x16xf32>, vector<16x16xf32> -> vector<16x16xf32>
    %71 = arith.addf %69, %70 : vector<16x16xf32>
    %cst_51 = arith.constant 5.000000e-01 : f32
    %72 = vector.broadcast %cst_51 : f32 to vector<16x16xf32>
    %73 = arith.mulf %71, %72 : vector<16x16xf32>
    %c0_52 = arith.constant 0 : index
    %c0_53 = arith.constant 0 : index
    %c112_54 = arith.constant 112 : index
    %74 = vector.load %arg3[%c0_52, %c0_53, %c112_54] : memref<4x16x128xf32, #tpu.memory_space<vmem>>, vector<1x16x16xf32>
    %75 = vector.shape_cast %74 : vector<1x16x16xf32> to vector<16x16xf32>
    %76 = vector.shape_cast %73 : vector<16x16xf32> to vector<1x16x16xf32>
    tpu.vector_store %arg3[%c0_52, %c0_53, %c112_54], %76 {strides = array<i32>} : memref<4x16x128xf32, #tpu.memory_space<vmem>>, vector<1x16x16xf32>,
    %c1 = arith.constant 1 : index
    %c0_55 = arith.constant 0 : index
    %c0_56 = arith.constant 0 : index
    %77 = vector.load %arg2[%c1, %c0_55, %c0_56] : memref<4x16x128xf32, #tpu.memory_space<vmem>>, vector<1x16x16xf32>
    %78 = vector.shape_cast %77 : vector<1x16x16xf32> to vector<16x16xf32>
    %cst_57 = arith.constant dense<0.000000e+00> : vector<16x16xf32>
    %79 = tpu.matmul %78, %4, %cst_57 {dimension_numbers = #tpu.dot_dimension_numbers<[0], [0], [1], [1], [0, 1, 1, 1], [], []>} : vector<16x16xf32>, vector<16x16xf32>, vector<16x16xf32> -> vector<16x16xf32>
    %80 = arith.addf %78, %79 : vector<16x16xf32>
    %cst_58 = arith.constant 5.000000e-01 : f32
    %81 = vector.broadcast %cst_58 : f32 to vector<16x16xf32>
    %82 = arith.mulf %80, %81 : vector<16x16xf32>
    %c1_59 = arith.constant 1 : index
    %c0_60 = arith.constant 0 : index
    %c0_61 = arith.constant 0 : index
    %83 = vector.load %arg3[%c1_59, %c0_60, %c0_61] : memref<4x16x128xf32, #tpu.memory_space<vmem>>, vector<1x16x16xf32>
    %84 = vector.shape_cast %83 : vector<1x16x16xf32> to vector<16x16xf32>
    %85 = vector.shape_cast %82 : vector<16x16xf32> to vector<1x16x16xf32>
    tpu.vector_store %arg3[%c1_59, %c0_60, %c0_61], %85 {strides = array<i32>} : memref<4x16x128xf32, #tpu.memory_space<vmem>>, vector<1x16x16xf32>,
    %c1_62 = arith.constant 1 : index
    %c0_63 = arith.constant 0 : index
    %c16_64 = arith.constant 16 : index
    %86 = vector.load %arg2[%c1_62, %c0_63, %c16_64] : memref<4x16x128xf32, #tpu.memory_space<vmem>>, vector<1x16x16xf32>
    %87 = vector.shape_cast %86 : vector<1x16x16xf32> to vector<16x16xf32>
    %cst_65 = arith.constant dense<0.000000e+00> : vector<16x16xf32>
    %88 = tpu.matmul %87, %4, %cst_65 {dimension_numbers = #tpu.dot_dimension_numbers<[0], [0], [1], [1], [0, 1, 1, 1], [], []>} : vector<16x16xf32>, vector<16x16xf32>, vector<16x16xf32> -> vector<16x16xf32>
    %89 = arith.addf %87, %88 : vector<16x16xf32>
    %cst_66 = arith.constant 5.000000e-01 : f32
    %90 = vector.broadcast %cst_66 : f32 to vector<16x16xf32>
    %91 = arith.mulf %89, %90 : vector<16x16xf32>
    %c1_67 = arith.constant 1 : index
    %c0_68 = arith.constant 0 : index
    %c16_69 = arith.constant 16 : index
    %92 = vector.load %arg3[%c1_67, %c0_68, %c16_69] : memref<4x16x128xf32, #tpu.memory_space<vmem>>, vector<1x16x16xf32>
    %93 = vector.shape_cast %92 : vector<1x16x16xf32> to vector<16x16xf32>
    %94 = vector.shape_cast %91 : vector<16x16xf32> to vector<1x16x16xf32>
    tpu.vector_store %arg3[%c1_67, %c0_68, %c16_69], %94 {strides = array<i32>} : memref<4x16x128xf32, #tpu.memory_space<vmem>>, vector<1x16x16xf32>,
    %c1_70 = arith.constant 1 : index
    %c0_71 = arith.constant 0 : index
    %c32_72 = arith.constant 32 : index
    %95 = vector.load %arg2[%c1_70, %c0_71, %c32_72] : memref<4x16x128xf32, #tpu.memory_space<vmem>>, vector<1x16x16xf32>
    %96 = vector.shape_cast %95 : vector<1x16x16xf32> to vector<16x16xf32>
    %cst_73 = arith.constant dense<0.000000e+00> : vector<16x16xf32>
    %97 = tpu.matmul %96, %4, %cst_73 {dimension_numbers = #tpu.dot_dimension_numbers<[0], [0], [1], [1], [0, 1, 1, 1], [], []>} : vector<16x16xf32>, vector<16x16xf32>, vector<16x16xf32> -> vector<16x16xf32>
    %98 = arith.addf %96, %97 : vector<16x16xf32>
    %cst_74 = arith.constant 5.000000e-01 : f32
    %99 = vector.broadcast %cst_74 : f32 to vector<16x16xf32>
    %100 = arith.mulf %98, %99 : vector<16x16xf32>
    %c1_75 = arith.constant 1 : index
    %c0_76 = arith.constant 0 : index
    %c32_77 = arith.constant 32 : index
    %101 = vector.load %arg3[%c1_75, %c0_76, %c32_77] : memref<4x16x128xf32, #tpu.memory_space<vmem>>, vector<1x16x16xf32>
    %102 = vector.shape_cast %101 : vector<1x16x16xf32> to vector<16x16xf32>
    %103 = vector.shape_cast %100 : vector<16x16xf32> to vector<1x16x16xf32>
    tpu.vector_store %arg3[%c1_75, %c0_76, %c32_77], %103 {strides = array<i32>} : memref<4x16x128xf32, #tpu.memory_space<vmem>>, vector<1x16x16xf32>,
    %c1_78 = arith.constant 1 : index
    %c0_79 = arith.constant 0 : index
    %c48_80 = arith.constant 48 : index
    %104 = vector.load %arg2[%c1_78, %c0_79, %c48_80] : memref<4x16x128xf32, #tpu.memory_space<vmem>>, vector<1x16x16xf32>
    %105 = vector.shape_cast %104 : vector<1x16x16xf32> to vector<16x16xf32>
    %cst_81 = arith.constant dense<0.000000e+00> : vector<16x16xf32>
    %106 = tpu.matmul %105, %4, %cst_81 {dimension_numbers = #tpu.dot_dimension_numbers<[0], [0], [1], [1], [0, 1, 1, 1], [], []>} : vector<16x16xf32>, vector<16x16xf32>, vector<16x16xf32> -> vector<16x16xf32>
    %107 = arith.addf %105, %106 : vector<16x16xf32>
    %cst_82 = arith.constant 5.000000e-01 : f32
    %108 = vector.broadcast %cst_82 : f32 to vector<16x16xf32>
    %109 = arith.mulf %107, %108 : vector<16x16xf32>
    %c1_83 = arith.constant 1 : index
    %c0_84 = arith.constant 0 : index
    %c48_85 = arith.constant 48 : index
    %110 = vector.load %arg3[%c1_83, %c0_84, %c48_85] : memref<4x16x128xf32, #tpu.memory_space<vmem>>, vector<1x16x16xf32>
    %111 = vector.shape_cast %110 : vector<1x16x16xf32> to vector<16x16xf32>
    %112 = vector.shape_cast %109 : vector<16x16xf32> to vector<1x16x16xf32>
    tpu.vector_store %arg3[%c1_83, %c0_84, %c48_85], %112 {strides = array<i32>} : memref<4x16x128xf32, #tpu.memory_space<vmem>>, vector<1x16x16xf32>,
    %c1_86 = arith.constant 1 : index
    %c0_87 = arith.constant 0 : index
    %c64_88 = arith.constant 64 : index
    %113 = vector.load %arg2[%c1_86, %c0_87, %c64_88] : memref<4x16x128xf32, #tpu.memory_space<vmem>>, vector<1x16x16xf32>
    %114 = vector.shape_cast %113 : vector<1x16x16xf32> to vector<16x16xf32>
    %cst_89 = arith.constant dense<0.000000e+00> : vector<16x16xf32>
    %115 = tpu.matmul %114, %4, %cst_89 {dimension_numbers = #tpu.dot_dimension_numbers<[0], [0], [1], [1], [0, 1, 1, 1], [], []>} : vector<16x16xf32>, vector<16x16xf32>, vector<16x16xf32> -> vector<16x16xf32>
    %116 = arith.addf %114, %115 : vector<16x16xf32>
    %cst_90 = arith.constant 5.000000e-01 : f32
    %117 = vector.broadcast %cst_90 : f32 to vector<16x16xf32>
    %118 = arith.mulf %116, %117 : vector<16x16xf32>
    %c1_91 = arith.constant 1 : index
    %c0_92 = arith.constant 0 : index
    %c64_93 = arith.constant 64 : index
    %119 = vector.load %arg3[%c1_91, %c0_92, %c64_93] : memref<4x16x128xf32, #tpu.memory_space<vmem>>, vector<1x16x16xf32>
    %120 = vector.shape_cast %119 : vector<1x16x16xf32> to vector<16x16xf32>
    %121 = vector.shape_cast %118 : vector<16x16xf32> to vector<1x16x16xf32>
    tpu.vector_store %arg3[%c1_91, %c0_92, %c64_93], %121 {strides = array<i32>} : memref<4x16x128xf32, #tpu.memory_space<vmem>>, vector<1x16x16xf32>,
    %c1_94 = arith.constant 1 : index
    %c0_95 = arith.constant 0 : index
    %c80_96 = arith.constant 80 : index
    %122 = vector.load %arg2[%c1_94, %c0_95, %c80_96] : memref<4x16x128xf32, #tpu.memory_space<vmem>>, vector<1x16x16xf32>
    %123 = vector.shape_cast %122 : vector<1x16x16xf32> to vector<16x16xf32>
    %cst_97 = arith.constant dense<0.000000e+00> : vector<16x16xf32>
    %124 = tpu.matmul %123, %4, %cst_97 {dimension_numbers = #tpu.dot_dimension_numbers<[0], [0], [1], [1], [0, 1, 1, 1], [], []>} : vector<16x16xf32>, vector<16x16xf32>, vector<16x16xf32> -> vector<16x16xf32>
    %125 = arith.addf %123, %124 : vector<16x16xf32>
    %cst_98 = arith.constant 5.000000e-01 : f32
    %126 = vector.broadcast %cst_98 : f32 to vector<16x16xf32>
    %127 = arith.mulf %125, %126 : vector<16x16xf32>
    %c1_99 = arith.constant 1 : index
    %c0_100 = arith.constant 0 : index
    %c80_101 = arith.constant 80 : index
    %128 = vector.load %arg3[%c1_99, %c0_100, %c80_101] : memref<4x16x128xf32, #tpu.memory_space<vmem>>, vector<1x16x16xf32>
    %129 = vector.shape_cast %128 : vector<1x16x16xf32> to vector<16x16xf32>
    %130 = vector.shape_cast %127 : vector<16x16xf32> to vector<1x16x16xf32>
    tpu.vector_store %arg3[%c1_99, %c0_100, %c80_101], %130 {strides = array<i32>} : memref<4x16x128xf32, #tpu.memory_space<vmem>>, vector<1x16x16xf32>,
    %c1_102 = arith.constant 1 : index
    %c0_103 = arith.constant 0 : index
    %c96_104 = arith.constant 96 : index
    %131 = vector.load %arg2[%c1_102, %c0_103, %c96_104] : memref<4x16x128xf32, #tpu.memory_space<vmem>>, vector<1x16x16xf32>
    %132 = vector.shape_cast %131 : vector<1x16x16xf32> to vector<16x16xf32>
    %cst_105 = arith.constant dense<0.000000e+00> : vector<16x16xf32>
    %133 = tpu.matmul %132, %4, %cst_105 {dimension_numbers = #tpu.dot_dimension_numbers<[0], [0], [1], [1], [0, 1, 1, 1], [], []>} : vector<16x16xf32>, vector<16x16xf32>, vector<16x16xf32> -> vector<16x16xf32>
    %134 = arith.addf %132, %133 : vector<16x16xf32>
    %cst_106 = arith.constant 5.000000e-01 : f32
    %135 = vector.broadcast %cst_106 : f32 to vector<16x16xf32>
    %136 = arith.mulf %134, %135 : vector<16x16xf32>
    %c1_107 = arith.constant 1 : index
    %c0_108 = arith.constant 0 : index
    %c96_109 = arith.constant 96 : index
    %137 = vector.load %arg3[%c1_107, %c0_108, %c96_109] : memref<4x16x128xf32, #tpu.memory_space<vmem>>, vector<1x16x16xf32>
    %138 = vector.shape_cast %137 : vector<1x16x16xf32> to vector<16x16xf32>
    %139 = vector.shape_cast %136 : vector<16x16xf32> to vector<1x16x16xf32>
    tpu.vector_store %arg3[%c1_107, %c0_108, %c96_109], %139 {strides = array<i32>} : memref<4x16x128xf32, #tpu.memory_space<vmem>>, vector<1x16x16xf32>,
    %c1_110 = arith.constant 1 : index
    %c0_111 = arith.constant 0 : index
    %c112_112 = arith.constant 112 : index
    %140 = vector.load %arg2[%c1_110, %c0_111, %c112_112] : memref<4x16x128xf32, #tpu.memory_space<vmem>>, vector<1x16x16xf32>
    %141 = vector.shape_cast %140 : vector<1x16x16xf32> to vector<16x16xf32>
    %cst_113 = arith.constant dense<0.000000e+00> : vector<16x16xf32>
    %142 = tpu.matmul %141, %4, %cst_113 {dimension_numbers = #tpu.dot_dimension_numbers<[0], [0], [1], [1], [0, 1, 1, 1], [], []>} : vector<16x16xf32>, vector<16x16xf32>, vector<16x16xf32> -> vector<16x16xf32>
    %143 = arith.addf %141, %142 : vector<16x16xf32>
    %cst_114 = arith.constant 5.000000e-01 : f32
    %144 = vector.broadcast %cst_114 : f32 to vector<16x16xf32>
    %145 = arith.mulf %143, %144 : vector<16x16xf32>
    %c1_115 = arith.constant 1 : index
    %c0_116 = arith.constant 0 : index
    %c112_117 = arith.constant 112 : index
    %146 = vector.load %arg3[%c1_115, %c0_116, %c112_117] : memref<4x16x128xf32, #tpu.memory_space<vmem>>, vector<1x16x16xf32>
    %147 = vector.shape_cast %146 : vector<1x16x16xf32> to vector<16x16xf32>
    %148 = vector.shape_cast %145 : vector<16x16xf32> to vector<1x16x16xf32>
    tpu.vector_store %arg3[%c1_115, %c0_116, %c112_117], %148 {strides = array<i32>} : memref<4x16x128xf32, #tpu.memory_space<vmem>>, vector<1x16x16xf32>,
    %c2 = arith.constant 2 : index
    %c0_118 = arith.constant 0 : index
    %c0_119 = arith.constant 0 : index
    %149 = vector.load %arg2[%c2, %c0_118, %c0_119] : memref<4x16x128xf32, #tpu.memory_space<vmem>>, vector<1x16x16xf32>
    %150 = vector.shape_cast %149 : vector<1x16x16xf32> to vector<16x16xf32>
    %cst_120 = arith.constant dense<0.000000e+00> : vector<16x16xf32>
    %151 = tpu.matmul %150, %4, %cst_120 {dimension_numbers = #tpu.dot_dimension_numbers<[0], [0], [1], [1], [0, 1, 1, 1], [], []>} : vector<16x16xf32>, vector<16x16xf32>, vector<16x16xf32> -> vector<16x16xf32>
    %152 = arith.addf %150, %151 : vector<16x16xf32>
    %cst_121 = arith.constant 5.000000e-01 : f32
    %153 = vector.broadcast %cst_121 : f32 to vector<16x16xf32>
    %154 = arith.mulf %152, %153 : vector<16x16xf32>
    %c2_122 = arith.constant 2 : index
    %c0_123 = arith.constant 0 : index
    %c0_124 = arith.constant 0 : index
    %155 = vector.load %arg3[%c2_122, %c0_123, %c0_124] : memref<4x16x128xf32, #tpu.memory_space<vmem>>, vector<1x16x16xf32>
    %156 = vector.shape_cast %155 : vector<1x16x16xf32> to vector<16x16xf32>
    %157 = vector.shape_cast %154 : vector<16x16xf32> to vector<1x16x16xf32>
    tpu.vector_store %arg3[%c2_122, %c0_123, %c0_124], %157 {strides = array<i32>} : memref<4x16x128xf32, #tpu.memory_space<vmem>>, vector<1x16x16xf32>,
    %c2_125 = arith.constant 2 : index
    %c0_126 = arith.constant 0 : index
    %c16_127 = arith.constant 16 : index
    %158 = vector.load %arg2[%c2_125, %c0_126, %c16_127] : memref<4x16x128xf32, #tpu.memory_space<vmem>>, vector<1x16x16xf32>
    %159 = vector.shape_cast %158 : vector<1x16x16xf32> to vector<16x16xf32>
    %cst_128 = arith.constant dense<0.000000e+00> : vector<16x16xf32>
    %160 = tpu.matmul %159, %4, %cst_128 {dimension_numbers = #tpu.dot_dimension_numbers<[0], [0], [1], [1], [0, 1, 1, 1], [], []>} : vector<16x16xf32>, vector<16x16xf32>, vector<16x16xf32> -> vector<16x16xf32>
    %161 = arith.addf %159, %160 : vector<16x16xf32>
    %cst_129 = arith.constant 5.000000e-01 : f32
    %162 = vector.broadcast %cst_129 : f32 to vector<16x16xf32>
    %163 = arith.mulf %161, %162 : vector<16x16xf32>
    %c2_130 = arith.constant 2 : index
    %c0_131 = arith.constant 0 : index
    %c16_132 = arith.constant 16 : index
    %164 = vector.load %arg3[%c2_130, %c0_131, %c16_132] : memref<4x16x128xf32, #tpu.memory_space<vmem>>, vector<1x16x16xf32>
    %165 = vector.shape_cast %164 : vector<1x16x16xf32> to vector<16x16xf32>
    %166 = vector.shape_cast %163 : vector<16x16xf32> to vector<1x16x16xf32>
    tpu.vector_store %arg3[%c2_130, %c0_131, %c16_132], %166 {strides = array<i32>} : memref<4x16x128xf32, #tpu.memory_space<vmem>>, vector<1x16x16xf32>,
    %c2_133 = arith.constant 2 : index
    %c0_134 = arith.constant 0 : index
    %c32_135 = arith.constant 32 : index
    %167 = vector.load %arg2[%c2_133, %c0_134, %c32_135] : memref<4x16x128xf32, #tpu.memory_space<vmem>>, vector<1x16x16xf32>
    %168 = vector.shape_cast %167 : vector<1x16x16xf32> to vector<16x16xf32>
    %cst_136 = arith.constant dense<0.000000e+00> : vector<16x16xf32>
    %169 = tpu.matmul %168, %4, %cst_136 {dimension_numbers = #tpu.dot_dimension_numbers<[0], [0], [1], [1], [0, 1, 1, 1], [], []>} : vector<16x16xf32>, vector<16x16xf32>, vector<16x16xf32> -> vector<16x16xf32>
    %170 = arith.addf %168, %169 : vector<16x16xf32>
    %cst_137 = arith.constant 5.000000e-01 : f32
    %171 = vector.broadcast %cst_137 : f32 to vector<16x16xf32>
    %172 = arith.mulf %170, %171 : vector<16x16xf32>
    %c2_138 = arith.constant 2 : index
    %c0_139 = arith.constant 0 : index
    %c32_140 = arith.constant 32 : index
    %173 = vector.load %arg3[%c2_138, %c0_139, %c32_140] : memref<4x16x128xf32, #tpu.memory_space<vmem>>, vector<1x16x16xf32>
    %174 = vector.shape_cast %173 : vector<1x16x16xf32> to vector<16x16xf32>
    %175 = vector.shape_cast %172 : vector<16x16xf32> to vector<1x16x16xf32>
    tpu.vector_store %arg3[%c2_138, %c0_139, %c32_140], %175 {strides = array<i32>} : memref<4x16x128xf32, #tpu.memory_space<vmem>>, vector<1x16x16xf32>,
    %c2_141 = arith.constant 2 : index
    %c0_142 = arith.constant 0 : index
    %c48_143 = arith.constant 48 : index
    %176 = vector.load %arg2[%c2_141, %c0_142, %c48_143] : memref<4x16x128xf32, #tpu.memory_space<vmem>>, vector<1x16x16xf32>
    %177 = vector.shape_cast %176 : vector<1x16x16xf32> to vector<16x16xf32>
    %cst_144 = arith.constant dense<0.000000e+00> : vector<16x16xf32>
    %178 = tpu.matmul %177, %4, %cst_144 {dimension_numbers = #tpu.dot_dimension_numbers<[0], [0], [1], [1], [0, 1, 1, 1], [], []>} : vector<16x16xf32>, vector<16x16xf32>, vector<16x16xf32> -> vector<16x16xf32>
    %179 = arith.addf %177, %178 : vector<16x16xf32>
    %cst_145 = arith.constant 5.000000e-01 : f32
    %180 = vector.broadcast %cst_145 : f32 to vector<16x16xf32>
    %181 = arith.mulf %179, %180 : vector<16x16xf32>
    %c2_146 = arith.constant 2 : index
    %c0_147 = arith.constant 0 : index
    %c48_148 = arith.constant 48 : index
    %182 = vector.load %arg3[%c2_146, %c0_147, %c48_148] : memref<4x16x128xf32, #tpu.memory_space<vmem>>, vector<1x16x16xf32>
    %183 = vector.shape_cast %182 : vector<1x16x16xf32> to vector<16x16xf32>
    %184 = vector.shape_cast %181 : vector<16x16xf32> to vector<1x16x16xf32>
    tpu.vector_store %arg3[%c2_146, %c0_147, %c48_148], %184 {strides = array<i32>} : memref<4x16x128xf32, #tpu.memory_space<vmem>>, vector<1x16x16xf32>,
    %c2_149 = arith.constant 2 : index
    %c0_150 = arith.constant 0 : index
    %c64_151 = arith.constant 64 : index
    %185 = vector.load %arg2[%c2_149, %c0_150, %c64_151] : memref<4x16x128xf32, #tpu.memory_space<vmem>>, vector<1x16x16xf32>
    %186 = vector.shape_cast %185 : vector<1x16x16xf32> to vector<16x16xf32>
    %cst_152 = arith.constant dense<0.000000e+00> : vector<16x16xf32>
    %187 = tpu.matmul %186, %4, %cst_152 {dimension_numbers = #tpu.dot_dimension_numbers<[0], [0], [1], [1], [0, 1, 1, 1], [], []>} : vector<16x16xf32>, vector<16x16xf32>, vector<16x16xf32> -> vector<16x16xf32>
    %188 = arith.addf %186, %187 : vector<16x16xf32>
    %cst_153 = arith.constant 5.000000e-01 : f32
    %189 = vector.broadcast %cst_153 : f32 to vector<16x16xf32>
    %190 = arith.mulf %188, %189 : vector<16x16xf32>
    %c2_154 = arith.constant 2 : index
    %c0_155 = arith.constant 0 : index
    %c64_156 = arith.constant 64 : index
    %191 = vector.load %arg3[%c2_154, %c0_155, %c64_156] : memref<4x16x128xf32, #tpu.memory_space<vmem>>, vector<1x16x16xf32>
    %192 = vector.shape_cast %191 : vector<1x16x16xf32> to vector<16x16xf32>
    %193 = vector.shape_cast %190 : vector<16x16xf32> to vector<1x16x16xf32>
    tpu.vector_store %arg3[%c2_154, %c0_155, %c64_156], %193 {strides = array<i32>} : memref<4x16x128xf32, #tpu.memory_space<vmem>>, vector<1x16x16xf32>,
    %c2_157 = arith.constant 2 : index
    %c0_158 = arith.constant 0 : index
    %c80_159 = arith.constant 80 : index
    %194 = vector.load %arg2[%c2_157, %c0_158, %c80_159] : memref<4x16x128xf32, #tpu.memory_space<vmem>>, vector<1x16x16xf32>
    %195 = vector.shape_cast %194 : vector<1x16x16xf32> to vector<16x16xf32>
    %cst_160 = arith.constant dense<0.000000e+00> : vector<16x16xf32>
    %196 = tpu.matmul %195, %4, %cst_160 {dimension_numbers = #tpu.dot_dimension_numbers<[0], [0], [1], [1], [0, 1, 1, 1], [], []>} : vector<16x16xf32>, vector<16x16xf32>, vector<16x16xf32> -> vector<16x16xf32>
    %197 = arith.addf %195, %196 : vector<16x16xf32>
    %cst_161 = arith.constant 5.000000e-01 : f32
    %198 = vector.broadcast %cst_161 : f32 to vector<16x16xf32>
    %199 = arith.mulf %197, %198 : vector<16x16xf32>
    %c2_162 = arith.constant 2 : index
    %c0_163 = arith.constant 0 : index
    %c80_164 = arith.constant 80 : index
    %200 = vector.load %arg3[%c2_162, %c0_163, %c80_164] : memref<4x16x128xf32, #tpu.memory_space<vmem>>, vector<1x16x16xf32>
    %201 = vector.shape_cast %200 : vector<1x16x16xf32> to vector<16x16xf32>
    %202 = vector.shape_cast %199 : vector<16x16xf32> to vector<1x16x16xf32>
    tpu.vector_store %arg3[%c2_162, %c0_163, %c80_164], %202 {strides = array<i32>} : memref<4x16x128xf32, #tpu.memory_space<vmem>>, vector<1x16x16xf32>,
    %c2_165 = arith.constant 2 : index
    %c0_166 = arith.constant 0 : index
    %c96_167 = arith.constant 96 : index
    %203 = vector.load %arg2[%c2_165, %c0_166, %c96_167] : memref<4x16x128xf32, #tpu.memory_space<vmem>>, vector<1x16x16xf32>
    %204 = vector.shape_cast %203 : vector<1x16x16xf32> to vector<16x16xf32>
    %cst_168 = arith.constant dense<0.000000e+00> : vector<16x16xf32>
    %205 = tpu.matmul %204, %4, %cst_168 {dimension_numbers = #tpu.dot_dimension_numbers<[0], [0], [1], [1], [0, 1, 1, 1], [], []>} : vector<16x16xf32>, vector<16x16xf32>, vector<16x16xf32> -> vector<16x16xf32>
    %206 = arith.addf %204, %205 : vector<16x16xf32>
    %cst_169 = arith.constant 5.000000e-01 : f32
    %207 = vector.broadcast %cst_169 : f32 to vector<16x16xf32>
    %208 = arith.mulf %206, %207 : vector<16x16xf32>
    %c2_170 = arith.constant 2 : index
    %c0_171 = arith.constant 0 : index
    %c96_172 = arith.constant 96 : index
    %209 = vector.load %arg3[%c2_170, %c0_171, %c96_172] : memref<4x16x128xf32, #tpu.memory_space<vmem>>, vector<1x16x16xf32>
    %210 = vector.shape_cast %209 : vector<1x16x16xf32> to vector<16x16xf32>
    %211 = vector.shape_cast %208 : vector<16x16xf32> to vector<1x16x16xf32>
    tpu.vector_store %arg3[%c2_170, %c0_171, %c96_172], %211 {strides = array<i32>} : memref<4x16x128xf32, #tpu.memory_space<vmem>>, vector<1x16x16xf32>,
    %c2_173 = arith.constant 2 : index
    %c0_174 = arith.constant 0 : index
    %c112_175 = arith.constant 112 : index
    %212 = vector.load %arg2[%c2_173, %c0_174, %c112_175] : memref<4x16x128xf32, #tpu.memory_space<vmem>>, vector<1x16x16xf32>
    %213 = vector.shape_cast %212 : vector<1x16x16xf32> to vector<16x16xf32>
    %cst_176 = arith.constant dense<0.000000e+00> : vector<16x16xf32>
    %214 = tpu.matmul %213, %4, %cst_176 {dimension_numbers = #tpu.dot_dimension_numbers<[0], [0], [1], [1], [0, 1, 1, 1], [], []>} : vector<16x16xf32>, vector<16x16xf32>, vector<16x16xf32> -> vector<16x16xf32>
    %215 = arith.addf %213, %214 : vector<16x16xf32>
    %cst_177 = arith.constant 5.000000e-01 : f32
    %216 = vector.broadcast %cst_177 : f32 to vector<16x16xf32>
    %217 = arith.mulf %215, %216 : vector<16x16xf32>
    %c2_178 = arith.constant 2 : index
    %c0_179 = arith.constant 0 : index
    %c112_180 = arith.constant 112 : index
    %218 = vector.load %arg3[%c2_178, %c0_179, %c112_180] : memref<4x16x128xf32, #tpu.memory_space<vmem>>, vector<1x16x16xf32>
    %219 = vector.shape_cast %218 : vector<1x16x16xf32> to vector<16x16xf32>
    %220 = vector.shape_cast %217 : vector<16x16xf32> to vector<1x16x16xf32>
    tpu.vector_store %arg3[%c2_178, %c0_179, %c112_180], %220 {strides = array<i32>} : memref<4x16x128xf32, #tpu.memory_space<vmem>>, vector<1x16x16xf32>,
    %c3 = arith.constant 3 : index
    %c0_181 = arith.constant 0 : index
    %c0_182 = arith.constant 0 : index
    %221 = vector.load %arg2[%c3, %c0_181, %c0_182] : memref<4x16x128xf32, #tpu.memory_space<vmem>>, vector<1x16x16xf32>
    %222 = vector.shape_cast %221 : vector<1x16x16xf32> to vector<16x16xf32>
    %cst_183 = arith.constant dense<0.000000e+00> : vector<16x16xf32>
    %223 = tpu.matmul %222, %4, %cst_183 {dimension_numbers = #tpu.dot_dimension_numbers<[0], [0], [1], [1], [0, 1, 1, 1], [], []>} : vector<16x16xf32>, vector<16x16xf32>, vector<16x16xf32> -> vector<16x16xf32>
    %224 = arith.addf %222, %223 : vector<16x16xf32>
    %cst_184 = arith.constant 5.000000e-01 : f32
    %225 = vector.broadcast %cst_184 : f32 to vector<16x16xf32>
    %226 = arith.mulf %224, %225 : vector<16x16xf32>
    %c3_185 = arith.constant 3 : index
    %c0_186 = arith.constant 0 : index
    %c0_187 = arith.constant 0 : index
    %227 = vector.load %arg3[%c3_185, %c0_186, %c0_187] : memref<4x16x128xf32, #tpu.memory_space<vmem>>, vector<1x16x16xf32>
    %228 = vector.shape_cast %227 : vector<1x16x16xf32> to vector<16x16xf32>
    %229 = vector.shape_cast %226 : vector<16x16xf32> to vector<1x16x16xf32>
    tpu.vector_store %arg3[%c3_185, %c0_186, %c0_187], %229 {strides = array<i32>} : memref<4x16x128xf32, #tpu.memory_space<vmem>>, vector<1x16x16xf32>,
    %c3_188 = arith.constant 3 : index
    %c0_189 = arith.constant 0 : index
    %c16_190 = arith.constant 16 : index
    %230 = vector.load %arg2[%c3_188, %c0_189, %c16_190] : memref<4x16x128xf32, #tpu.memory_space<vmem>>, vector<1x16x16xf32>
    %231 = vector.shape_cast %230 : vector<1x16x16xf32> to vector<16x16xf32>
    %cst_191 = arith.constant dense<0.000000e+00> : vector<16x16xf32>
    %232 = tpu.matmul %231, %4, %cst_191 {dimension_numbers = #tpu.dot_dimension_numbers<[0], [0], [1], [1], [0, 1, 1, 1], [], []>} : vector<16x16xf32>, vector<16x16xf32>, vector<16x16xf32> -> vector<16x16xf32>
    %233 = arith.addf %231, %232 : vector<16x16xf32>
    %cst_192 = arith.constant 5.000000e-01 : f32
    %234 = vector.broadcast %cst_192 : f32 to vector<16x16xf32>
    %235 = arith.mulf %233, %234 : vector<16x16xf32>
    %c3_193 = arith.constant 3 : index
    %c0_194 = arith.constant 0 : index
    %c16_195 = arith.constant 16 : index
    %236 = vector.load %arg3[%c3_193, %c0_194, %c16_195] : memref<4x16x128xf32, #tpu.memory_space<vmem>>, vector<1x16x16xf32>
    %237 = vector.shape_cast %236 : vector<1x16x16xf32> to vector<16x16xf32>
    %238 = vector.shape_cast %235 : vector<16x16xf32> to vector<1x16x16xf32>
    tpu.vector_store %arg3[%c3_193, %c0_194, %c16_195], %238 {strides = array<i32>} : memref<4x16x128xf32, #tpu.memory_space<vmem>>, vector<1x16x16xf32>,
    %c3_196 = arith.constant 3 : index
    %c0_197 = arith.constant 0 : index
    %c32_198 = arith.constant 32 : index
    %239 = vector.load %arg2[%c3_196, %c0_197, %c32_198] : memref<4x16x128xf32, #tpu.memory_space<vmem>>, vector<1x16x16xf32>
    %240 = vector.shape_cast %239 : vector<1x16x16xf32> to vector<16x16xf32>
    %cst_199 = arith.constant dense<0.000000e+00> : vector<16x16xf32>
    %241 = tpu.matmul %240, %4, %cst_199 {dimension_numbers = #tpu.dot_dimension_numbers<[0], [0], [1], [1], [0, 1, 1, 1], [], []>} : vector<16x16xf32>, vector<16x16xf32>, vector<16x16xf32> -> vector<16x16xf32>
    %242 = arith.addf %240, %241 : vector<16x16xf32>
    %cst_200 = arith.constant 5.000000e-01 : f32
    %243 = vector.broadcast %cst_200 : f32 to vector<16x16xf32>
    %244 = arith.mulf %242, %243 : vector<16x16xf32>
    %c3_201 = arith.constant 3 : index
    %c0_202 = arith.constant 0 : index
    %c32_203 = arith.constant 32 : index
    %245 = vector.load %arg3[%c3_201, %c0_202, %c32_203] : memref<4x16x128xf32, #tpu.memory_space<vmem>>, vector<1x16x16xf32>
    %246 = vector.shape_cast %245 : vector<1x16x16xf32> to vector<16x16xf32>
    %247 = vector.shape_cast %244 : vector<16x16xf32> to vector<1x16x16xf32>
    tpu.vector_store %arg3[%c3_201, %c0_202, %c32_203], %247 {strides = array<i32>} : memref<4x16x128xf32, #tpu.memory_space<vmem>>, vector<1x16x16xf32>,
    %c3_204 = arith.constant 3 : index
    %c0_205 = arith.constant 0 : index
    %c48_206 = arith.constant 48 : index
    %248 = vector.load %arg2[%c3_204, %c0_205, %c48_206] : memref<4x16x128xf32, #tpu.memory_space<vmem>>, vector<1x16x16xf32>
    %249 = vector.shape_cast %248 : vector<1x16x16xf32> to vector<16x16xf32>
    %cst_207 = arith.constant dense<0.000000e+00> : vector<16x16xf32>
    %250 = tpu.matmul %249, %4, %cst_207 {dimension_numbers = #tpu.dot_dimension_numbers<[0], [0], [1], [1], [0, 1, 1, 1], [], []>} : vector<16x16xf32>, vector<16x16xf32>, vector<16x16xf32> -> vector<16x16xf32>
    %251 = arith.addf %249, %250 : vector<16x16xf32>
    %cst_208 = arith.constant 5.000000e-01 : f32
    %252 = vector.broadcast %cst_208 : f32 to vector<16x16xf32>
    %253 = arith.mulf %251, %252 : vector<16x16xf32>
    %c3_209 = arith.constant 3 : index
    %c0_210 = arith.constant 0 : index
    %c48_211 = arith.constant 48 : index
    %254 = vector.load %arg3[%c3_209, %c0_210, %c48_211] : memref<4x16x128xf32, #tpu.memory_space<vmem>>, vector<1x16x16xf32>
    %255 = vector.shape_cast %254 : vector<1x16x16xf32> to vector<16x16xf32>
    %256 = vector.shape_cast %253 : vector<16x16xf32> to vector<1x16x16xf32>
    tpu.vector_store %arg3[%c3_209, %c0_210, %c48_211], %256 {strides = array<i32>} : memref<4x16x128xf32, #tpu.memory_space<vmem>>, vector<1x16x16xf32>,
    %c3_212 = arith.constant 3 : index
    %c0_213 = arith.constant 0 : index
    %c64_214 = arith.constant 64 : index
    %257 = vector.load %arg2[%c3_212, %c0_213, %c64_214] : memref<4x16x128xf32, #tpu.memory_space<vmem>>, vector<1x16x16xf32>
    %258 = vector.shape_cast %257 : vector<1x16x16xf32> to vector<16x16xf32>
    %cst_215 = arith.constant dense<0.000000e+00> : vector<16x16xf32>
    %259 = tpu.matmul %258, %4, %cst_215 {dimension_numbers = #tpu.dot_dimension_numbers<[0], [0], [1], [1], [0, 1, 1, 1], [], []>} : vector<16x16xf32>, vector<16x16xf32>, vector<16x16xf32> -> vector<16x16xf32>
    %260 = arith.addf %258, %259 : vector<16x16xf32>
    %cst_216 = arith.constant 5.000000e-01 : f32
    %261 = vector.broadcast %cst_216 : f32 to vector<16x16xf32>
    %262 = arith.mulf %260, %261 : vector<16x16xf32>
    %c3_217 = arith.constant 3 : index
    %c0_218 = arith.constant 0 : index
    %c64_219 = arith.constant 64 : index
    %263 = vector.load %arg3[%c3_217, %c0_218, %c64_219] : memref<4x16x128xf32, #tpu.memory_space<vmem>>, vector<1x16x16xf32>
    %264 = vector.shape_cast %263 : vector<1x16x16xf32> to vector<16x16xf32>
    %265 = vector.shape_cast %262 : vector<16x16xf32> to vector<1x16x16xf32>
    tpu.vector_store %arg3[%c3_217, %c0_218, %c64_219], %265 {strides = array<i32>} : memref<4x16x128xf32, #tpu.memory_space<vmem>>, vector<1x16x16xf32>,
    %c3_220 = arith.constant 3 : index
    %c0_221 = arith.constant 0 : index
    %c80_222 = arith.constant 80 : index
    %266 = vector.load %arg2[%c3_220, %c0_221, %c80_222] : memref<4x16x128xf32, #tpu.memory_space<vmem>>, vector<1x16x16xf32>
    %267 = vector.shape_cast %266 : vector<1x16x16xf32> to vector<16x16xf32>
    %cst_223 = arith.constant dense<0.000000e+00> : vector<16x16xf32>
    %268 = tpu.matmul %267, %4, %cst_223 {dimension_numbers = #tpu.dot_dimension_numbers<[0], [0], [1], [1], [0, 1, 1, 1], [], []>} : vector<16x16xf32>, vector<16x16xf32>, vector<16x16xf32> -> vector<16x16xf32>
    %269 = arith.addf %267, %268 : vector<16x16xf32>
    %cst_224 = arith.constant 5.000000e-01 : f32
    %270 = vector.broadcast %cst_224 : f32 to vector<16x16xf32>
    %271 = arith.mulf %269, %270 : vector<16x16xf32>
    %c3_225 = arith.constant 3 : index
    %c0_226 = arith.constant 0 : index
    %c80_227 = arith.constant 80 : index
    %272 = vector.load %arg3[%c3_225, %c0_226, %c80_227] : memref<4x16x128xf32, #tpu.memory_space<vmem>>, vector<1x16x16xf32>
    %273 = vector.shape_cast %272 : vector<1x16x16xf32> to vector<16x16xf32>
    %274 = vector.shape_cast %271 : vector<16x16xf32> to vector<1x16x16xf32>
    tpu.vector_store %arg3[%c3_225, %c0_226, %c80_227], %274 {strides = array<i32>} : memref<4x16x128xf32, #tpu.memory_space<vmem>>, vector<1x16x16xf32>,
    %c3_228 = arith.constant 3 : index
    %c0_229 = arith.constant 0 : index
    %c96_230 = arith.constant 96 : index
    %275 = vector.load %arg2[%c3_228, %c0_229, %c96_230] : memref<4x16x128xf32, #tpu.memory_space<vmem>>, vector<1x16x16xf32>
    %276 = vector.shape_cast %275 : vector<1x16x16xf32> to vector<16x16xf32>
    %cst_231 = arith.constant dense<0.000000e+00> : vector<16x16xf32>
    %277 = tpu.matmul %276, %4, %cst_231 {dimension_numbers = #tpu.dot_dimension_numbers<[0], [0], [1], [1], [0, 1, 1, 1], [], []>} : vector<16x16xf32>, vector<16x16xf32>, vector<16x16xf32> -> vector<16x16xf32>
    %278 = arith.addf %276, %277 : vector<16x16xf32>
    %cst_232 = arith.constant 5.000000e-01 : f32
    %279 = vector.broadcast %cst_232 : f32 to vector<16x16xf32>
    %280 = arith.mulf %278, %279 : vector<16x16xf32>
    %c3_233 = arith.constant 3 : index
    %c0_234 = arith.constant 0 : index
    %c96_235 = arith.constant 96 : index
    %281 = vector.load %arg3[%c3_233, %c0_234, %c96_235] : memref<4x16x128xf32, #tpu.memory_space<vmem>>, vector<1x16x16xf32>
    %282 = vector.shape_cast %281 : vector<1x16x16xf32> to vector<16x16xf32>
    %283 = vector.shape_cast %280 : vector<16x16xf32> to vector<1x16x16xf32>
    tpu.vector_store %arg3[%c3_233, %c0_234, %c96_235], %283 {strides = array<i32>} : memref<4x16x128xf32, #tpu.memory_space<vmem>>, vector<1x16x16xf32>,
    %c3_236 = arith.constant 3 : index
    %c0_237 = arith.constant 0 : index
    %c112_238 = arith.constant 112 : index
    %284 = vector.load %arg2[%c3_236, %c0_237, %c112_238] : memref<4x16x128xf32, #tpu.memory_space<vmem>>, vector<1x16x16xf32>
    %285 = vector.shape_cast %284 : vector<1x16x16xf32> to vector<16x16xf32>
    %cst_239 = arith.constant dense<0.000000e+00> : vector<16x16xf32>
    %286 = tpu.matmul %285, %4, %cst_239 {dimension_numbers = #tpu.dot_dimension_numbers<[0], [0], [1], [1], [0, 1, 1, 1], [], []>} : vector<16x16xf32>, vector<16x16xf32>, vector<16x16xf32> -> vector<16x16xf32>
    %287 = arith.addf %285, %286 : vector<16x16xf32>
    %cst_240 = arith.constant 5.000000e-01 : f32
    %288 = vector.broadcast %cst_240 : f32 to vector<16x16xf32>
    %289 = arith.mulf %287, %288 : vector<16x16xf32>
    %c3_241 = arith.constant 3 : index
    %c0_242 = arith.constant 0 : index
    %c112_243 = arith.constant 112 : index
    %290 = vector.load %arg3[%c3_241, %c0_242, %c112_243] : memref<4x16x128xf32, #tpu.memory_space<vmem>>, vector<1x16x16xf32>
    %291 = vector.shape_cast %290 : vector<1x16x16xf32> to vector<16x16xf32>
    %292 = vector.shape_cast %289 : vector<16x16xf32> to vector<1x16x16xf32>
    tpu.vector_store %arg3[%c3_241, %c0_242, %c112_243], %292 {strides = array<i32>} : memref<4x16x128xf32, #tpu.memory_space<vmem>>, vector<1x16x16xf32>,
    return
  }
  func.func @transform_0(%arg0: i32, %arg1: i32) -> (i32, i32, i32) {
    %c0_i32 = arith.constant 0 : i32
    %c0_i32_0 = arith.constant 0 : i32
    return %arg0, %c0_i32, %arg1 : i32, i32, i32
  }
  func.func @transform_1(%arg0: i32, %arg1: i32) -> (i32, i32, i32) {
    %c0_i32 = arith.constant 0 : i32
    %c0_i32_0 = arith.constant 0 : i32
    return %arg0, %c0_i32, %arg1 : i32, i32, i32
  }
}

module attributes {stable_mosaic.version = 11 : i64} {
  func.func @_minor_sublane_kernel(%arg0: i32, %arg1: i32, %arg2: memref<1x8x8x8x16xf32, #tpu.memory_space<vmem>>, %arg3: memref<1x8x8x8x16xf32, #tpu.memory_space<vmem>>) attributes {dimension_semantics = [#tpu.dimension_semantics<parallel>, #tpu.dimension_semantics<parallel>], iteration_bounds = array<i64: 1, 2>, scalar_prefetch = 0 : i64, scratch_operands = 0 : i64, tpu.core_type = #tpu.core_type<tc>, window_params = [{transform_indices = @transform_0, window_bounds = array<i64: 1, 8, 8, 8, 16>}, {transform_indices = @transform_1, window_bounds = array<i64: 1, 8, 8, 8, 16>}]} {
    %c0 = arith.constant 0 : index
    %c0_0 = arith.constant 0 : index
    %c0_1 = arith.constant 0 : index
    %c0_2 = arith.constant 0 : index
    %c0_3 = arith.constant 0 : index
    %0 = vector.load %arg2[%c0, %c0_0, %c0_1, %c0_2, %c0_3] : memref<1x8x8x8x16xf32, #tpu.memory_space<vmem>>, vector<1x8x1x8x16xf32>
    %1 = vector.shape_cast %0 : vector<1x8x1x8x16xf32> to vector<8x8x16xf32>
    %2 = vector.extract_strided_slice %1 {offsets = [0, 0, 0], sizes = [1, 8, 16], strides = [1, 1, 1]} : vector<8x8x16xf32> to vector<1x8x16xf32>
    %3 = vector.shape_cast %2 : vector<1x8x16xf32> to vector<8x16xf32>
    %4 = vector.extract_strided_slice %1 {offsets = [0, 0, 0], sizes = [8, 1, 16], strides = [1, 1, 1]} : vector<8x8x16xf32> to vector<8x1x16xf32>
    %5 = vector.shape_cast %4 : vector<8x1x16xf32> to vector<8x16xf32>
    %6 = arith.addf %3, %5 : vector<8x16xf32>
    %cst = arith.constant 5.000000e-01 : f32
    %7 = vector.broadcast %cst : f32 to vector<8x16xf32>
    %8 = arith.mulf %6, %7 : vector<8x16xf32>
    %c0_4 = arith.constant 0 : index
    %c0_5 = arith.constant 0 : index
    %c0_6 = arith.constant 0 : index
    %c0_7 = arith.constant 0 : index
    %c0_8 = arith.constant 0 : index
    %9 = vector.load %arg3[%c0_4, %c0_5, %c0_6, %c0_7, %c0_8] : memref<1x8x8x8x16xf32, #tpu.memory_space<vmem>>, vector<1x1x1x8x16xf32>
    %10 = vector.shape_cast %9 : vector<1x1x1x8x16xf32> to vector<8x16xf32>
    %11 = vector.shape_cast %8 : vector<8x16xf32> to vector<1x1x1x8x16xf32>
    tpu.vector_store %arg3[%c0_4, %c0_5, %c0_6, %c0_7, %c0_8], %11 {strides = array<i32>} : memref<1x8x8x8x16xf32, #tpu.memory_space<vmem>>, vector<1x1x1x8x16xf32>,
    %12 = vector.extract_strided_slice %1 {offsets = [1, 0, 0], sizes = [1, 8, 16], strides = [1, 1, 1]} : vector<8x8x16xf32> to vector<1x8x16xf32>
    %13 = vector.shape_cast %12 : vector<1x8x16xf32> to vector<8x16xf32>
    %14 = vector.extract_strided_slice %1 {offsets = [0, 1, 0], sizes = [8, 1, 16], strides = [1, 1, 1]} : vector<8x8x16xf32> to vector<8x1x16xf32>
    %15 = vector.shape_cast %14 : vector<8x1x16xf32> to vector<8x16xf32>
    %16 = arith.addf %13, %15 : vector<8x16xf32>
    %cst_9 = arith.constant 5.000000e-01 : f32
    %17 = vector.broadcast %cst_9 : f32 to vector<8x16xf32>
    %18 = arith.mulf %16, %17 : vector<8x16xf32>
    %c0_10 = arith.constant 0 : index
    %c1 = arith.constant 1 : index
    %c0_11 = arith.constant 0 : index
    %c0_12 = arith.constant 0 : index
    %c0_13 = arith.constant 0 : index
    %19 = vector.load %arg3[%c0_10, %c1, %c0_11, %c0_12, %c0_13] : memref<1x8x8x8x16xf32, #tpu.memory_space<vmem>>, vector<1x1x1x8x16xf32>
    %20 = vector.shape_cast %19 : vector<1x1x1x8x16xf32> to vector<8x16xf32>
    %21 = vector.shape_cast %18 : vector<8x16xf32> to vector<1x1x1x8x16xf32>
    tpu.vector_store %arg3[%c0_10, %c1, %c0_11, %c0_12, %c0_13], %21 {strides = array<i32>} : memref<1x8x8x8x16xf32, #tpu.memory_space<vmem>>, vector<1x1x1x8x16xf32>,
    %22 = vector.extract_strided_slice %1 {offsets = [2, 0, 0], sizes = [1, 8, 16], strides = [1, 1, 1]} : vector<8x8x16xf32> to vector<1x8x16xf32>
    %23 = vector.shape_cast %22 : vector<1x8x16xf32> to vector<8x16xf32>
    %24 = vector.extract_strided_slice %1 {offsets = [0, 2, 0], sizes = [8, 1, 16], strides = [1, 1, 1]} : vector<8x8x16xf32> to vector<8x1x16xf32>
    %25 = vector.shape_cast %24 : vector<8x1x16xf32> to vector<8x16xf32>
    %26 = arith.addf %23, %25 : vector<8x16xf32>
    %cst_14 = arith.constant 5.000000e-01 : f32
    %27 = vector.broadcast %cst_14 : f32 to vector<8x16xf32>
    %28 = arith.mulf %26, %27 : vector<8x16xf32>
    %c0_15 = arith.constant 0 : index
    %c2 = arith.constant 2 : index
    %c0_16 = arith.constant 0 : index
    %c0_17 = arith.constant 0 : index
    %c0_18 = arith.constant 0 : index
    %29 = vector.load %arg3[%c0_15, %c2, %c0_16, %c0_17, %c0_18] : memref<1x8x8x8x16xf32, #tpu.memory_space<vmem>>, vector<1x1x1x8x16xf32>
    %30 = vector.shape_cast %29 : vector<1x1x1x8x16xf32> to vector<8x16xf32>
    %31 = vector.shape_cast %28 : vector<8x16xf32> to vector<1x1x1x8x16xf32>
    tpu.vector_store %arg3[%c0_15, %c2, %c0_16, %c0_17, %c0_18], %31 {strides = array<i32>} : memref<1x8x8x8x16xf32, #tpu.memory_space<vmem>>, vector<1x1x1x8x16xf32>,
    %32 = vector.extract_strided_slice %1 {offsets = [3, 0, 0], sizes = [1, 8, 16], strides = [1, 1, 1]} : vector<8x8x16xf32> to vector<1x8x16xf32>
    %33 = vector.shape_cast %32 : vector<1x8x16xf32> to vector<8x16xf32>
    %34 = vector.extract_strided_slice %1 {offsets = [0, 3, 0], sizes = [8, 1, 16], strides = [1, 1, 1]} : vector<8x8x16xf32> to vector<8x1x16xf32>
    %35 = vector.shape_cast %34 : vector<8x1x16xf32> to vector<8x16xf32>
    %36 = arith.addf %33, %35 : vector<8x16xf32>
    %cst_19 = arith.constant 5.000000e-01 : f32
    %37 = vector.broadcast %cst_19 : f32 to vector<8x16xf32>
    %38 = arith.mulf %36, %37 : vector<8x16xf32>
    %c0_20 = arith.constant 0 : index
    %c3 = arith.constant 3 : index
    %c0_21 = arith.constant 0 : index
    %c0_22 = arith.constant 0 : index
    %c0_23 = arith.constant 0 : index
    %39 = vector.load %arg3[%c0_20, %c3, %c0_21, %c0_22, %c0_23] : memref<1x8x8x8x16xf32, #tpu.memory_space<vmem>>, vector<1x1x1x8x16xf32>
    %40 = vector.shape_cast %39 : vector<1x1x1x8x16xf32> to vector<8x16xf32>
    %41 = vector.shape_cast %38 : vector<8x16xf32> to vector<1x1x1x8x16xf32>
    tpu.vector_store %arg3[%c0_20, %c3, %c0_21, %c0_22, %c0_23], %41 {strides = array<i32>} : memref<1x8x8x8x16xf32, #tpu.memory_space<vmem>>, vector<1x1x1x8x16xf32>,
    %42 = vector.extract_strided_slice %1 {offsets = [4, 0, 0], sizes = [1, 8, 16], strides = [1, 1, 1]} : vector<8x8x16xf32> to vector<1x8x16xf32>
    %43 = vector.shape_cast %42 : vector<1x8x16xf32> to vector<8x16xf32>
    %44 = vector.extract_strided_slice %1 {offsets = [0, 4, 0], sizes = [8, 1, 16], strides = [1, 1, 1]} : vector<8x8x16xf32> to vector<8x1x16xf32>
    %45 = vector.shape_cast %44 : vector<8x1x16xf32> to vector<8x16xf32>
    %46 = arith.addf %43, %45 : vector<8x16xf32>
    %cst_24 = arith.constant 5.000000e-01 : f32
    %47 = vector.broadcast %cst_24 : f32 to vector<8x16xf32>
    %48 = arith.mulf %46, %47 : vector<8x16xf32>
    %c0_25 = arith.constant 0 : index
    %c4 = arith.constant 4 : index
    %c0_26 = arith.constant 0 : index
    %c0_27 = arith.constant 0 : index
    %c0_28 = arith.constant 0 : index
    %49 = vector.load %arg3[%c0_25, %c4, %c0_26, %c0_27, %c0_28] : memref<1x8x8x8x16xf32, #tpu.memory_space<vmem>>, vector<1x1x1x8x16xf32>
    %50 = vector.shape_cast %49 : vector<1x1x1x8x16xf32> to vector<8x16xf32>
    %51 = vector.shape_cast %48 : vector<8x16xf32> to vector<1x1x1x8x16xf32>
    tpu.vector_store %arg3[%c0_25, %c4, %c0_26, %c0_27, %c0_28], %51 {strides = array<i32>} : memref<1x8x8x8x16xf32, #tpu.memory_space<vmem>>, vector<1x1x1x8x16xf32>,
    %52 = vector.extract_strided_slice %1 {offsets = [5, 0, 0], sizes = [1, 8, 16], strides = [1, 1, 1]} : vector<8x8x16xf32> to vector<1x8x16xf32>
    %53 = vector.shape_cast %52 : vector<1x8x16xf32> to vector<8x16xf32>
    %54 = vector.extract_strided_slice %1 {offsets = [0, 5, 0], sizes = [8, 1, 16], strides = [1, 1, 1]} : vector<8x8x16xf32> to vector<8x1x16xf32>
    %55 = vector.shape_cast %54 : vector<8x1x16xf32> to vector<8x16xf32>
    %56 = arith.addf %53, %55 : vector<8x16xf32>
    %cst_29 = arith.constant 5.000000e-01 : f32
    %57 = vector.broadcast %cst_29 : f32 to vector<8x16xf32>
    %58 = arith.mulf %56, %57 : vector<8x16xf32>
    %c0_30 = arith.constant 0 : index
    %c5 = arith.constant 5 : index
    %c0_31 = arith.constant 0 : index
    %c0_32 = arith.constant 0 : index
    %c0_33 = arith.constant 0 : index
    %59 = vector.load %arg3[%c0_30, %c5, %c0_31, %c0_32, %c0_33] : memref<1x8x8x8x16xf32, #tpu.memory_space<vmem>>, vector<1x1x1x8x16xf32>
    %60 = vector.shape_cast %59 : vector<1x1x1x8x16xf32> to vector<8x16xf32>
    %61 = vector.shape_cast %58 : vector<8x16xf32> to vector<1x1x1x8x16xf32>
    tpu.vector_store %arg3[%c0_30, %c5, %c0_31, %c0_32, %c0_33], %61 {strides = array<i32>} : memref<1x8x8x8x16xf32, #tpu.memory_space<vmem>>, vector<1x1x1x8x16xf32>,
    %62 = vector.extract_strided_slice %1 {offsets = [6, 0, 0], sizes = [1, 8, 16], strides = [1, 1, 1]} : vector<8x8x16xf32> to vector<1x8x16xf32>
    %63 = vector.shape_cast %62 : vector<1x8x16xf32> to vector<8x16xf32>
    %64 = vector.extract_strided_slice %1 {offsets = [0, 6, 0], sizes = [8, 1, 16], strides = [1, 1, 1]} : vector<8x8x16xf32> to vector<8x1x16xf32>
    %65 = vector.shape_cast %64 : vector<8x1x16xf32> to vector<8x16xf32>
    %66 = arith.addf %63, %65 : vector<8x16xf32>
    %cst_34 = arith.constant 5.000000e-01 : f32
    %67 = vector.broadcast %cst_34 : f32 to vector<8x16xf32>
    %68 = arith.mulf %66, %67 : vector<8x16xf32>
    %c0_35 = arith.constant 0 : index
    %c6 = arith.constant 6 : index
    %c0_36 = arith.constant 0 : index
    %c0_37 = arith.constant 0 : index
    %c0_38 = arith.constant 0 : index
    %69 = vector.load %arg3[%c0_35, %c6, %c0_36, %c0_37, %c0_38] : memref<1x8x8x8x16xf32, #tpu.memory_space<vmem>>, vector<1x1x1x8x16xf32>
    %70 = vector.shape_cast %69 : vector<1x1x1x8x16xf32> to vector<8x16xf32>
    %71 = vector.shape_cast %68 : vector<8x16xf32> to vector<1x1x1x8x16xf32>
    tpu.vector_store %arg3[%c0_35, %c6, %c0_36, %c0_37, %c0_38], %71 {strides = array<i32>} : memref<1x8x8x8x16xf32, #tpu.memory_space<vmem>>, vector<1x1x1x8x16xf32>,
    %72 = vector.extract_strided_slice %1 {offsets = [7, 0, 0], sizes = [1, 8, 16], strides = [1, 1, 1]} : vector<8x8x16xf32> to vector<1x8x16xf32>
    %73 = vector.shape_cast %72 : vector<1x8x16xf32> to vector<8x16xf32>
    %74 = vector.extract_strided_slice %1 {offsets = [0, 7, 0], sizes = [8, 1, 16], strides = [1, 1, 1]} : vector<8x8x16xf32> to vector<8x1x16xf32>
    %75 = vector.shape_cast %74 : vector<8x1x16xf32> to vector<8x16xf32>
    %76 = arith.addf %73, %75 : vector<8x16xf32>
    %cst_39 = arith.constant 5.000000e-01 : f32
    %77 = vector.broadcast %cst_39 : f32 to vector<8x16xf32>
    %78 = arith.mulf %76, %77 : vector<8x16xf32>
    %c0_40 = arith.constant 0 : index
    %c7 = arith.constant 7 : index
    %c0_41 = arith.constant 0 : index
    %c0_42 = arith.constant 0 : index
    %c0_43 = arith.constant 0 : index
    %79 = vector.load %arg3[%c0_40, %c7, %c0_41, %c0_42, %c0_43] : memref<1x8x8x8x16xf32, #tpu.memory_space<vmem>>, vector<1x1x1x8x16xf32>
    %80 = vector.shape_cast %79 : vector<1x1x1x8x16xf32> to vector<8x16xf32>
    %81 = vector.shape_cast %78 : vector<8x16xf32> to vector<1x1x1x8x16xf32>
    tpu.vector_store %arg3[%c0_40, %c7, %c0_41, %c0_42, %c0_43], %81 {strides = array<i32>} : memref<1x8x8x8x16xf32, #tpu.memory_space<vmem>>, vector<1x1x1x8x16xf32>,
    %c0_44 = arith.constant 0 : index
    %c0_45 = arith.constant 0 : index
    %c1_46 = arith.constant 1 : index
    %c0_47 = arith.constant 0 : index
    %c0_48 = arith.constant 0 : index
    %82 = vector.load %arg2[%c0_44, %c0_45, %c1_46, %c0_47, %c0_48] : memref<1x8x8x8x16xf32, #tpu.memory_space<vmem>>, vector<1x8x1x8x16xf32>
    %83 = vector.shape_cast %82 : vector<1x8x1x8x16xf32> to vector<8x8x16xf32>
    %84 = vector.extract_strided_slice %83 {offsets = [0, 0, 0], sizes = [1, 8, 16], strides = [1, 1, 1]} : vector<8x8x16xf32> to vector<1x8x16xf32>
    %85 = vector.shape_cast %84 : vector<1x8x16xf32> to vector<8x16xf32>
    %86 = vector.extract_strided_slice %83 {offsets = [0, 0, 0], sizes = [8, 1, 16], strides = [1, 1, 1]} : vector<8x8x16xf32> to vector<8x1x16xf32>
    %87 = vector.shape_cast %86 : vector<8x1x16xf32> to vector<8x16xf32>
    %88 = arith.addf %85, %87 : vector<8x16xf32>
    %cst_49 = arith.constant 5.000000e-01 : f32
    %89 = vector.broadcast %cst_49 : f32 to vector<8x16xf32>
    %90 = arith.mulf %88, %89 : vector<8x16xf32>
    %c0_50 = arith.constant 0 : index
    %c0_51 = arith.constant 0 : index
    %c1_52 = arith.constant 1 : index
    %c0_53 = arith.constant 0 : index
    %c0_54 = arith.constant 0 : index
    %91 = vector.load %arg3[%c0_50, %c0_51, %c1_52, %c0_53, %c0_54] : memref<1x8x8x8x16xf32, #tpu.memory_space<vmem>>, vector<1x1x1x8x16xf32>
    %92 = vector.shape_cast %91 : vector<1x1x1x8x16xf32> to vector<8x16xf32>
    %93 = vector.shape_cast %90 : vector<8x16xf32> to vector<1x1x1x8x16xf32>
    tpu.vector_store %arg3[%c0_50, %c0_51, %c1_52, %c0_53, %c0_54], %93 {strides = array<i32>} : memref<1x8x8x8x16xf32, #tpu.memory_space<vmem>>, vector<1x1x1x8x16xf32>,
    %94 = vector.extract_strided_slice %83 {offsets = [1, 0, 0], sizes = [1, 8, 16], strides = [1, 1, 1]} : vector<8x8x16xf32> to vector<1x8x16xf32>
    %95 = vector.shape_cast %94 : vector<1x8x16xf32> to vector<8x16xf32>
    %96 = vector.extract_strided_slice %83 {offsets = [0, 1, 0], sizes = [8, 1, 16], strides = [1, 1, 1]} : vector<8x8x16xf32> to vector<8x1x16xf32>
    %97 = vector.shape_cast %96 : vector<8x1x16xf32> to vector<8x16xf32>
    %98 = arith.addf %95, %97 : vector<8x16xf32>
    %cst_55 = arith.constant 5.000000e-01 : f32
    %99 = vector.broadcast %cst_55 : f32 to vector<8x16xf32>
    %100 = arith.mulf %98, %99 : vector<8x16xf32>
    %c0_56 = arith.constant 0 : index
    %c1_57 = arith.constant 1 : index
    %c1_58 = arith.constant 1 : index
    %c0_59 = arith.constant 0 : index
    %c0_60 = arith.constant 0 : index
    %101 = vector.load %arg3[%c0_56, %c1_57, %c1_58, %c0_59, %c0_60] : memref<1x8x8x8x16xf32, #tpu.memory_space<vmem>>, vector<1x1x1x8x16xf32>
    %102 = vector.shape_cast %101 : vector<1x1x1x8x16xf32> to vector<8x16xf32>
    %103 = vector.shape_cast %100 : vector<8x16xf32> to vector<1x1x1x8x16xf32>
    tpu.vector_store %arg3[%c0_56, %c1_57, %c1_58, %c0_59, %c0_60], %103 {strides = array<i32>} : memref<1x8x8x8x16xf32, #tpu.memory_space<vmem>>, vector<1x1x1x8x16xf32>,
    %104 = vector.extract_strided_slice %83 {offsets = [2, 0, 0], sizes = [1, 8, 16], strides = [1, 1, 1]} : vector<8x8x16xf32> to vector<1x8x16xf32>
    %105 = vector.shape_cast %104 : vector<1x8x16xf32> to vector<8x16xf32>
    %106 = vector.extract_strided_slice %83 {offsets = [0, 2, 0], sizes = [8, 1, 16], strides = [1, 1, 1]} : vector<8x8x16xf32> to vector<8x1x16xf32>
    %107 = vector.shape_cast %106 : vector<8x1x16xf32> to vector<8x16xf32>
    %108 = arith.addf %105, %107 : vector<8x16xf32>
    %cst_61 = arith.constant 5.000000e-01 : f32
    %109 = vector.broadcast %cst_61 : f32 to vector<8x16xf32>
    %110 = arith.mulf %108, %109 : vector<8x16xf32>
    %c0_62 = arith.constant 0 : index
    %c2_63 = arith.constant 2 : index
    %c1_64 = arith.constant 1 : index
    %c0_65 = arith.constant 0 : index
    %c0_66 = arith.constant 0 : index
    %111 = vector.load %arg3[%c0_62, %c2_63, %c1_64, %c0_65, %c0_66] : memref<1x8x8x8x16xf32, #tpu.memory_space<vmem>>, vector<1x1x1x8x16xf32>
    %112 = vector.shape_cast %111 : vector<1x1x1x8x16xf32> to vector<8x16xf32>
    %113 = vector.shape_cast %110 : vector<8x16xf32> to vector<1x1x1x8x16xf32>
    tpu.vector_store %arg3[%c0_62, %c2_63, %c1_64, %c0_65, %c0_66], %113 {strides = array<i32>} : memref<1x8x8x8x16xf32, #tpu.memory_space<vmem>>, vector<1x1x1x8x16xf32>,
    %114 = vector.extract_strided_slice %83 {offsets = [3, 0, 0], sizes = [1, 8, 16], strides = [1, 1, 1]} : vector<8x8x16xf32> to vector<1x8x16xf32>
    %115 = vector.shape_cast %114 : vector<1x8x16xf32> to vector<8x16xf32>
    %116 = vector.extract_strided_slice %83 {offsets = [0, 3, 0], sizes = [8, 1, 16], strides = [1, 1, 1]} : vector<8x8x16xf32> to vector<8x1x16xf32>
    %117 = vector.shape_cast %116 : vector<8x1x16xf32> to vector<8x16xf32>
    %118 = arith.addf %115, %117 : vector<8x16xf32>
    %cst_67 = arith.constant 5.000000e-01 : f32
    %119 = vector.broadcast %cst_67 : f32 to vector<8x16xf32>
    %120 = arith.mulf %118, %119 : vector<8x16xf32>
    %c0_68 = arith.constant 0 : index
    %c3_69 = arith.constant 3 : index
    %c1_70 = arith.constant 1 : index
    %c0_71 = arith.constant 0 : index
    %c0_72 = arith.constant 0 : index
    %121 = vector.load %arg3[%c0_68, %c3_69, %c1_70, %c0_71, %c0_72] : memref<1x8x8x8x16xf32, #tpu.memory_space<vmem>>, vector<1x1x1x8x16xf32>
    %122 = vector.shape_cast %121 : vector<1x1x1x8x16xf32> to vector<8x16xf32>
    %123 = vector.shape_cast %120 : vector<8x16xf32> to vector<1x1x1x8x16xf32>
    tpu.vector_store %arg3[%c0_68, %c3_69, %c1_70, %c0_71, %c0_72], %123 {strides = array<i32>} : memref<1x8x8x8x16xf32, #tpu.memory_space<vmem>>, vector<1x1x1x8x16xf32>,
    %124 = vector.extract_strided_slice %83 {offsets = [4, 0, 0], sizes = [1, 8, 16], strides = [1, 1, 1]} : vector<8x8x16xf32> to vector<1x8x16xf32>
    %125 = vector.shape_cast %124 : vector<1x8x16xf32> to vector<8x16xf32>
    %126 = vector.extract_strided_slice %83 {offsets = [0, 4, 0], sizes = [8, 1, 16], strides = [1, 1, 1]} : vector<8x8x16xf32> to vector<8x1x16xf32>
    %127 = vector.shape_cast %126 : vector<8x1x16xf32> to vector<8x16xf32>
    %128 = arith.addf %125, %127 : vector<8x16xf32>
    %cst_73 = arith.constant 5.000000e-01 : f32
    %129 = vector.broadcast %cst_73 : f32 to vector<8x16xf32>
    %130 = arith.mulf %128, %129 : vector<8x16xf32>
    %c0_74 = arith.constant 0 : index
    %c4_75 = arith.constant 4 : index
    %c1_76 = arith.constant 1 : index
    %c0_77 = arith.constant 0 : index
    %c0_78 = arith.constant 0 : index
    %131 = vector.load %arg3[%c0_74, %c4_75, %c1_76, %c0_77, %c0_78] : memref<1x8x8x8x16xf32, #tpu.memory_space<vmem>>, vector<1x1x1x8x16xf32>
    %132 = vector.shape_cast %131 : vector<1x1x1x8x16xf32> to vector<8x16xf32>
    %133 = vector.shape_cast %130 : vector<8x16xf32> to vector<1x1x1x8x16xf32>
    tpu.vector_store %arg3[%c0_74, %c4_75, %c1_76, %c0_77, %c0_78], %133 {strides = array<i32>} : memref<1x8x8x8x16xf32, #tpu.memory_space<vmem>>, vector<1x1x1x8x16xf32>,
    %134 = vector.extract_strided_slice %83 {offsets = [5, 0, 0], sizes = [1, 8, 16], strides = [1, 1, 1]} : vector<8x8x16xf32> to vector<1x8x16xf32>
    %135 = vector.shape_cast %134 : vector<1x8x16xf32> to vector<8x16xf32>
    %136 = vector.extract_strided_slice %83 {offsets = [0, 5, 0], sizes = [8, 1, 16], strides = [1, 1, 1]} : vector<8x8x16xf32> to vector<8x1x16xf32>
    %137 = vector.shape_cast %136 : vector<8x1x16xf32> to vector<8x16xf32>
    %138 = arith.addf %135, %137 : vector<8x16xf32>
    %cst_79 = arith.constant 5.000000e-01 : f32
    %139 = vector.broadcast %cst_79 : f32 to vector<8x16xf32>
    %140 = arith.mulf %138, %139 : vector<8x16xf32>
    %c0_80 = arith.constant 0 : index
    %c5_81 = arith.constant 5 : index
    %c1_82 = arith.constant 1 : index
    %c0_83 = arith.constant 0 : index
    %c0_84 = arith.constant 0 : index
    %141 = vector.load %arg3[%c0_80, %c5_81, %c1_82, %c0_83, %c0_84] : memref<1x8x8x8x16xf32, #tpu.memory_space<vmem>>, vector<1x1x1x8x16xf32>
    %142 = vector.shape_cast %141 : vector<1x1x1x8x16xf32> to vector<8x16xf32>
    %143 = vector.shape_cast %140 : vector<8x16xf32> to vector<1x1x1x8x16xf32>
    tpu.vector_store %arg3[%c0_80, %c5_81, %c1_82, %c0_83, %c0_84], %143 {strides = array<i32>} : memref<1x8x8x8x16xf32, #tpu.memory_space<vmem>>, vector<1x1x1x8x16xf32>,
    %144 = vector.extract_strided_slice %83 {offsets = [6, 0, 0], sizes = [1, 8, 16], strides = [1, 1, 1]} : vector<8x8x16xf32> to vector<1x8x16xf32>
    %145 = vector.shape_cast %144 : vector<1x8x16xf32> to vector<8x16xf32>
    %146 = vector.extract_strided_slice %83 {offsets = [0, 6, 0], sizes = [8, 1, 16], strides = [1, 1, 1]} : vector<8x8x16xf32> to vector<8x1x16xf32>
    %147 = vector.shape_cast %146 : vector<8x1x16xf32> to vector<8x16xf32>
    %148 = arith.addf %145, %147 : vector<8x16xf32>
    %cst_85 = arith.constant 5.000000e-01 : f32
    %149 = vector.broadcast %cst_85 : f32 to vector<8x16xf32>
    %150 = arith.mulf %148, %149 : vector<8x16xf32>
    %c0_86 = arith.constant 0 : index
    %c6_87 = arith.constant 6 : index
    %c1_88 = arith.constant 1 : index
    %c0_89 = arith.constant 0 : index
    %c0_90 = arith.constant 0 : index
    %151 = vector.load %arg3[%c0_86, %c6_87, %c1_88, %c0_89, %c0_90] : memref<1x8x8x8x16xf32, #tpu.memory_space<vmem>>, vector<1x1x1x8x16xf32>
    %152 = vector.shape_cast %151 : vector<1x1x1x8x16xf32> to vector<8x16xf32>
    %153 = vector.shape_cast %150 : vector<8x16xf32> to vector<1x1x1x8x16xf32>
    tpu.vector_store %arg3[%c0_86, %c6_87, %c1_88, %c0_89, %c0_90], %153 {strides = array<i32>} : memref<1x8x8x8x16xf32, #tpu.memory_space<vmem>>, vector<1x1x1x8x16xf32>,
    %154 = vector.extract_strided_slice %83 {offsets = [7, 0, 0], sizes = [1, 8, 16], strides = [1, 1, 1]} : vector<8x8x16xf32> to vector<1x8x16xf32>
    %155 = vector.shape_cast %154 : vector<1x8x16xf32> to vector<8x16xf32>
    %156 = vector.extract_strided_slice %83 {offsets = [0, 7, 0], sizes = [8, 1, 16], strides = [1, 1, 1]} : vector<8x8x16xf32> to vector<8x1x16xf32>
    %157 = vector.shape_cast %156 : vector<8x1x16xf32> to vector<8x16xf32>
    %158 = arith.addf %155, %157 : vector<8x16xf32>
    %cst_91 = arith.constant 5.000000e-01 : f32
    %159 = vector.broadcast %cst_91 : f32 to vector<8x16xf32>
    %160 = arith.mulf %158, %159 : vector<8x16xf32>
    %c0_92 = arith.constant 0 : index
    %c7_93 = arith.constant 7 : index
    %c1_94 = arith.constant 1 : index
    %c0_95 = arith.constant 0 : index
    %c0_96 = arith.constant 0 : index
    %161 = vector.load %arg3[%c0_92, %c7_93, %c1_94, %c0_95, %c0_96] : memref<1x8x8x8x16xf32, #tpu.memory_space<vmem>>, vector<1x1x1x8x16xf32>
    %162 = vector.shape_cast %161 : vector<1x1x1x8x16xf32> to vector<8x16xf32>
    %163 = vector.shape_cast %160 : vector<8x16xf32> to vector<1x1x1x8x16xf32>
    tpu.vector_store %arg3[%c0_92, %c7_93, %c1_94, %c0_95, %c0_96], %163 {strides = array<i32>} : memref<1x8x8x8x16xf32, #tpu.memory_space<vmem>>, vector<1x1x1x8x16xf32>,
    %c0_97 = arith.constant 0 : index
    %c0_98 = arith.constant 0 : index
    %c2_99 = arith.constant 2 : index
    %c0_100 = arith.constant 0 : index
    %c0_101 = arith.constant 0 : index
    %164 = vector.load %arg2[%c0_97, %c0_98, %c2_99, %c0_100, %c0_101] : memref<1x8x8x8x16xf32, #tpu.memory_space<vmem>>, vector<1x8x1x8x16xf32>
    %165 = vector.shape_cast %164 : vector<1x8x1x8x16xf32> to vector<8x8x16xf32>
    %166 = vector.extract_strided_slice %165 {offsets = [0, 0, 0], sizes = [1, 8, 16], strides = [1, 1, 1]} : vector<8x8x16xf32> to vector<1x8x16xf32>
    %167 = vector.shape_cast %166 : vector<1x8x16xf32> to vector<8x16xf32>
    %168 = vector.extract_strided_slice %165 {offsets = [0, 0, 0], sizes = [8, 1, 16], strides = [1, 1, 1]} : vector<8x8x16xf32> to vector<8x1x16xf32>
    %169 = vector.shape_cast %168 : vector<8x1x16xf32> to vector<8x16xf32>
    %170 = arith.addf %167, %169 : vector<8x16xf32>
    %cst_102 = arith.constant 5.000000e-01 : f32
    %171 = vector.broadcast %cst_102 : f32 to vector<8x16xf32>
    %172 = arith.mulf %170, %171 : vector<8x16xf32>
    %c0_103 = arith.constant 0 : index
    %c0_104 = arith.constant 0 : index
    %c2_105 = arith.constant 2 : index
    %c0_106 = arith.constant 0 : index
    %c0_107 = arith.constant 0 : index
    %173 = vector.load %arg3[%c0_103, %c0_104, %c2_105, %c0_106, %c0_107] : memref<1x8x8x8x16xf32, #tpu.memory_space<vmem>>, vector<1x1x1x8x16xf32>
    %174 = vector.shape_cast %173 : vector<1x1x1x8x16xf32> to vector<8x16xf32>
    %175 = vector.shape_cast %172 : vector<8x16xf32> to vector<1x1x1x8x16xf32>
    tpu.vector_store %arg3[%c0_103, %c0_104, %c2_105, %c0_106, %c0_107], %175 {strides = array<i32>} : memref<1x8x8x8x16xf32, #tpu.memory_space<vmem>>, vector<1x1x1x8x16xf32>,
    %176 = vector.extract_strided_slice %165 {offsets = [1, 0, 0], sizes = [1, 8, 16], strides = [1, 1, 1]} : vector<8x8x16xf32> to vector<1x8x16xf32>
    %177 = vector.shape_cast %176 : vector<1x8x16xf32> to vector<8x16xf32>
    %178 = vector.extract_strided_slice %165 {offsets = [0, 1, 0], sizes = [8, 1, 16], strides = [1, 1, 1]} : vector<8x8x16xf32> to vector<8x1x16xf32>
    %179 = vector.shape_cast %178 : vector<8x1x16xf32> to vector<8x16xf32>
    %180 = arith.addf %177, %179 : vector<8x16xf32>
    %cst_108 = arith.constant 5.000000e-01 : f32
    %181 = vector.broadcast %cst_108 : f32 to vector<8x16xf32>
    %182 = arith.mulf %180, %181 : vector<8x16xf32>
    %c0_109 = arith.constant 0 : index
    %c1_110 = arith.constant 1 : index
    %c2_111 = arith.constant 2 : index
    %c0_112 = arith.constant 0 : index
    %c0_113 = arith.constant 0 : index
    %183 = vector.load %arg3[%c0_109, %c1_110, %c2_111, %c0_112, %c0_113] : memref<1x8x8x8x16xf32, #tpu.memory_space<vmem>>, vector<1x1x1x8x16xf32>
    %184 = vector.shape_cast %183 : vector<1x1x1x8x16xf32> to vector<8x16xf32>
    %185 = vector.shape_cast %182 : vector<8x16xf32> to vector<1x1x1x8x16xf32>
    tpu.vector_store %arg3[%c0_109, %c1_110, %c2_111, %c0_112, %c0_113], %185 {strides = array<i32>} : memref<1x8x8x8x16xf32, #tpu.memory_space<vmem>>, vector<1x1x1x8x16xf32>,
    %186 = vector.extract_strided_slice %165 {offsets = [2, 0, 0], sizes = [1, 8, 16], strides = [1, 1, 1]} : vector<8x8x16xf32> to vector<1x8x16xf32>
    %187 = vector.shape_cast %186 : vector<1x8x16xf32> to vector<8x16xf32>
    %188 = vector.extract_strided_slice %165 {offsets = [0, 2, 0], sizes = [8, 1, 16], strides = [1, 1, 1]} : vector<8x8x16xf32> to vector<8x1x16xf32>
    %189 = vector.shape_cast %188 : vector<8x1x16xf32> to vector<8x16xf32>
    %190 = arith.addf %187, %189 : vector<8x16xf32>
    %cst_114 = arith.constant 5.000000e-01 : f32
    %191 = vector.broadcast %cst_114 : f32 to vector<8x16xf32>
    %192 = arith.mulf %190, %191 : vector<8x16xf32>
    %c0_115 = arith.constant 0 : index
    %c2_116 = arith.constant 2 : index
    %c2_117 = arith.constant 2 : index
    %c0_118 = arith.constant 0 : index
    %c0_119 = arith.constant 0 : index
    %193 = vector.load %arg3[%c0_115, %c2_116, %c2_117, %c0_118, %c0_119] : memref<1x8x8x8x16xf32, #tpu.memory_space<vmem>>, vector<1x1x1x8x16xf32>
    %194 = vector.shape_cast %193 : vector<1x1x1x8x16xf32> to vector<8x16xf32>
    %195 = vector.shape_cast %192 : vector<8x16xf32> to vector<1x1x1x8x16xf32>
    tpu.vector_store %arg3[%c0_115, %c2_116, %c2_117, %c0_118, %c0_119], %195 {strides = array<i32>} : memref<1x8x8x8x16xf32, #tpu.memory_space<vmem>>, vector<1x1x1x8x16xf32>,
    %196 = vector.extract_strided_slice %165 {offsets = [3, 0, 0], sizes = [1, 8, 16], strides = [1, 1, 1]} : vector<8x8x16xf32> to vector<1x8x16xf32>
    %197 = vector.shape_cast %196 : vector<1x8x16xf32> to vector<8x16xf32>
    %198 = vector.extract_strided_slice %165 {offsets = [0, 3, 0], sizes = [8, 1, 16], strides = [1, 1, 1]} : vector<8x8x16xf32> to vector<8x1x16xf32>
    %199 = vector.shape_cast %198 : vector<8x1x16xf32> to vector<8x16xf32>
    %200 = arith.addf %197, %199 : vector<8x16xf32>
    %cst_120 = arith.constant 5.000000e-01 : f32
    %201 = vector.broadcast %cst_120 : f32 to vector<8x16xf32>
    %202 = arith.mulf %200, %201 : vector<8x16xf32>
    %c0_121 = arith.constant 0 : index
    %c3_122 = arith.constant 3 : index
    %c2_123 = arith.constant 2 : index
    %c0_124 = arith.constant 0 : index
    %c0_125 = arith.constant 0 : index
    %203 = vector.load %arg3[%c0_121, %c3_122, %c2_123, %c0_124, %c0_125] : memref<1x8x8x8x16xf32, #tpu.memory_space<vmem>>, vector<1x1x1x8x16xf32>
    %204 = vector.shape_cast %203 : vector<1x1x1x8x16xf32> to vector<8x16xf32>
    %205 = vector.shape_cast %202 : vector<8x16xf32> to vector<1x1x1x8x16xf32>
    tpu.vector_store %arg3[%c0_121, %c3_122, %c2_123, %c0_124, %c0_125], %205 {strides = array<i32>} : memref<1x8x8x8x16xf32, #tpu.memory_space<vmem>>, vector<1x1x1x8x16xf32>,
    %206 = vector.extract_strided_slice %165 {offsets = [4, 0, 0], sizes = [1, 8, 16], strides = [1, 1, 1]} : vector<8x8x16xf32> to vector<1x8x16xf32>
    %207 = vector.shape_cast %206 : vector<1x8x16xf32> to vector<8x16xf32>
    %208 = vector.extract_strided_slice %165 {offsets = [0, 4, 0], sizes = [8, 1, 16], strides = [1, 1, 1]} : vector<8x8x16xf32> to vector<8x1x16xf32>
    %209 = vector.shape_cast %208 : vector<8x1x16xf32> to vector<8x16xf32>
    %210 = arith.addf %207, %209 : vector<8x16xf32>
    %cst_126 = arith.constant 5.000000e-01 : f32
    %211 = vector.broadcast %cst_126 : f32 to vector<8x16xf32>
    %212 = arith.mulf %210, %211 : vector<8x16xf32>
    %c0_127 = arith.constant 0 : index
    %c4_128 = arith.constant 4 : index
    %c2_129 = arith.constant 2 : index
    %c0_130 = arith.constant 0 : index
    %c0_131 = arith.constant 0 : index
    %213 = vector.load %arg3[%c0_127, %c4_128, %c2_129, %c0_130, %c0_131] : memref<1x8x8x8x16xf32, #tpu.memory_space<vmem>>, vector<1x1x1x8x16xf32>
    %214 = vector.shape_cast %213 : vector<1x1x1x8x16xf32> to vector<8x16xf32>
    %215 = vector.shape_cast %212 : vector<8x16xf32> to vector<1x1x1x8x16xf32>
    tpu.vector_store %arg3[%c0_127, %c4_128, %c2_129, %c0_130, %c0_131], %215 {strides = array<i32>} : memref<1x8x8x8x16xf32, #tpu.memory_space<vmem>>, vector<1x1x1x8x16xf32>,
    %216 = vector.extract_strided_slice %165 {offsets = [5, 0, 0], sizes = [1, 8, 16], strides = [1, 1, 1]} : vector<8x8x16xf32> to vector<1x8x16xf32>
    %217 = vector.shape_cast %216 : vector<1x8x16xf32> to vector<8x16xf32>
    %218 = vector.extract_strided_slice %165 {offsets = [0, 5, 0], sizes = [8, 1, 16], strides = [1, 1, 1]} : vector<8x8x16xf32> to vector<8x1x16xf32>
    %219 = vector.shape_cast %218 : vector<8x1x16xf32> to vector<8x16xf32>
    %220 = arith.addf %217, %219 : vector<8x16xf32>
    %cst_132 = arith.constant 5.000000e-01 : f32
    %221 = vector.broadcast %cst_132 : f32 to vector<8x16xf32>
    %222 = arith.mulf %220, %221 : vector<8x16xf32>
    %c0_133 = arith.constant 0 : index
    %c5_134 = arith.constant 5 : index
    %c2_135 = arith.constant 2 : index
    %c0_136 = arith.constant 0 : index
    %c0_137 = arith.constant 0 : index
    %223 = vector.load %arg3[%c0_133, %c5_134, %c2_135, %c0_136, %c0_137] : memref<1x8x8x8x16xf32, #tpu.memory_space<vmem>>, vector<1x1x1x8x16xf32>
    %224 = vector.shape_cast %223 : vector<1x1x1x8x16xf32> to vector<8x16xf32>
    %225 = vector.shape_cast %222 : vector<8x16xf32> to vector<1x1x1x8x16xf32>
    tpu.vector_store %arg3[%c0_133, %c5_134, %c2_135, %c0_136, %c0_137], %225 {strides = array<i32>} : memref<1x8x8x8x16xf32, #tpu.memory_space<vmem>>, vector<1x1x1x8x16xf32>,
    %226 = vector.extract_strided_slice %165 {offsets = [6, 0, 0], sizes = [1, 8, 16], strides = [1, 1, 1]} : vector<8x8x16xf32> to vector<1x8x16xf32>
    %227 = vector.shape_cast %226 : vector<1x8x16xf32> to vector<8x16xf32>
    %228 = vector.extract_strided_slice %165 {offsets = [0, 6, 0], sizes = [8, 1, 16], strides = [1, 1, 1]} : vector<8x8x16xf32> to vector<8x1x16xf32>
    %229 = vector.shape_cast %228 : vector<8x1x16xf32> to vector<8x16xf32>
    %230 = arith.addf %227, %229 : vector<8x16xf32>
    %cst_138 = arith.constant 5.000000e-01 : f32
    %231 = vector.broadcast %cst_138 : f32 to vector<8x16xf32>
    %232 = arith.mulf %230, %231 : vector<8x16xf32>
    %c0_139 = arith.constant 0 : index
    %c6_140 = arith.constant 6 : index
    %c2_141 = arith.constant 2 : index
    %c0_142 = arith.constant 0 : index
    %c0_143 = arith.constant 0 : index
    %233 = vector.load %arg3[%c0_139, %c6_140, %c2_141, %c0_142, %c0_143] : memref<1x8x8x8x16xf32, #tpu.memory_space<vmem>>, vector<1x1x1x8x16xf32>
    %234 = vector.shape_cast %233 : vector<1x1x1x8x16xf32> to vector<8x16xf32>
    %235 = vector.shape_cast %232 : vector<8x16xf32> to vector<1x1x1x8x16xf32>
    tpu.vector_store %arg3[%c0_139, %c6_140, %c2_141, %c0_142, %c0_143], %235 {strides = array<i32>} : memref<1x8x8x8x16xf32, #tpu.memory_space<vmem>>, vector<1x1x1x8x16xf32>,
    %236 = vector.extract_strided_slice %165 {offsets = [7, 0, 0], sizes = [1, 8, 16], strides = [1, 1, 1]} : vector<8x8x16xf32> to vector<1x8x16xf32>
    %237 = vector.shape_cast %236 : vector<1x8x16xf32> to vector<8x16xf32>
    %238 = vector.extract_strided_slice %165 {offsets = [0, 7, 0], sizes = [8, 1, 16], strides = [1, 1, 1]} : vector<8x8x16xf32> to vector<8x1x16xf32>
    %239 = vector.shape_cast %238 : vector<8x1x16xf32> to vector<8x16xf32>
    %240 = arith.addf %237, %239 : vector<8x16xf32>
    %cst_144 = arith.constant 5.000000e-01 : f32
    %241 = vector.broadcast %cst_144 : f32 to vector<8x16xf32>
    %242 = arith.mulf %240, %241 : vector<8x16xf32>
    %c0_145 = arith.constant 0 : index
    %c7_146 = arith.constant 7 : index
    %c2_147 = arith.constant 2 : index
    %c0_148 = arith.constant 0 : index
    %c0_149 = arith.constant 0 : index
    %243 = vector.load %arg3[%c0_145, %c7_146, %c2_147, %c0_148, %c0_149] : memref<1x8x8x8x16xf32, #tpu.memory_space<vmem>>, vector<1x1x1x8x16xf32>
    %244 = vector.shape_cast %243 : vector<1x1x1x8x16xf32> to vector<8x16xf32>
    %245 = vector.shape_cast %242 : vector<8x16xf32> to vector<1x1x1x8x16xf32>
    tpu.vector_store %arg3[%c0_145, %c7_146, %c2_147, %c0_148, %c0_149], %245 {strides = array<i32>} : memref<1x8x8x8x16xf32, #tpu.memory_space<vmem>>, vector<1x1x1x8x16xf32>,
    %c0_150 = arith.constant 0 : index
    %c0_151 = arith.constant 0 : index
    %c3_152 = arith.constant 3 : index
    %c0_153 = arith.constant 0 : index
    %c0_154 = arith.constant 0 : index
    %246 = vector.load %arg2[%c0_150, %c0_151, %c3_152, %c0_153, %c0_154] : memref<1x8x8x8x16xf32, #tpu.memory_space<vmem>>, vector<1x8x1x8x16xf32>
    %247 = vector.shape_cast %246 : vector<1x8x1x8x16xf32> to vector<8x8x16xf32>
    %248 = vector.extract_strided_slice %247 {offsets = [0, 0, 0], sizes = [1, 8, 16], strides = [1, 1, 1]} : vector<8x8x16xf32> to vector<1x8x16xf32>
    %249 = vector.shape_cast %248 : vector<1x8x16xf32> to vector<8x16xf32>
    %250 = vector.extract_strided_slice %247 {offsets = [0, 0, 0], sizes = [8, 1, 16], strides = [1, 1, 1]} : vector<8x8x16xf32> to vector<8x1x16xf32>
    %251 = vector.shape_cast %250 : vector<8x1x16xf32> to vector<8x16xf32>
    %252 = arith.addf %249, %251 : vector<8x16xf32>
    %cst_155 = arith.constant 5.000000e-01 : f32
    %253 = vector.broadcast %cst_155 : f32 to vector<8x16xf32>
    %254 = arith.mulf %252, %253 : vector<8x16xf32>
    %c0_156 = arith.constant 0 : index
    %c0_157 = arith.constant 0 : index
    %c3_158 = arith.constant 3 : index
    %c0_159 = arith.constant 0 : index
    %c0_160 = arith.constant 0 : index
    %255 = vector.load %arg3[%c0_156, %c0_157, %c3_158, %c0_159, %c0_160] : memref<1x8x8x8x16xf32, #tpu.memory_space<vmem>>, vector<1x1x1x8x16xf32>
    %256 = vector.shape_cast %255 : vector<1x1x1x8x16xf32> to vector<8x16xf32>
    %257 = vector.shape_cast %254 : vector<8x16xf32> to vector<1x1x1x8x16xf32>
    tpu.vector_store %arg3[%c0_156, %c0_157, %c3_158, %c0_159, %c0_160], %257 {strides = array<i32>} : memref<1x8x8x8x16xf32, #tpu.memory_space<vmem>>, vector<1x1x1x8x16xf32>,
    %258 = vector.extract_strided_slice %247 {offsets = [1, 0, 0], sizes = [1, 8, 16], strides = [1, 1, 1]} : vector<8x8x16xf32> to vector<1x8x16xf32>
    %259 = vector.shape_cast %258 : vector<1x8x16xf32> to vector<8x16xf32>
    %260 = vector.extract_strided_slice %247 {offsets = [0, 1, 0], sizes = [8, 1, 16], strides = [1, 1, 1]} : vector<8x8x16xf32> to vector<8x1x16xf32>
    %261 = vector.shape_cast %260 : vector<8x1x16xf32> to vector<8x16xf32>
    %262 = arith.addf %259, %261 : vector<8x16xf32>
    %cst_161 = arith.constant 5.000000e-01 : f32
    %263 = vector.broadcast %cst_161 : f32 to vector<8x16xf32>
    %264 = arith.mulf %262, %263 : vector<8x16xf32>
    %c0_162 = arith.constant 0 : index
    %c1_163 = arith.constant 1 : index
    %c3_164 = arith.constant 3 : index
    %c0_165 = arith.constant 0 : index
    %c0_166 = arith.constant 0 : index
    %265 = vector.load %arg3[%c0_162, %c1_163, %c3_164, %c0_165, %c0_166] : memref<1x8x8x8x16xf32, #tpu.memory_space<vmem>>, vector<1x1x1x8x16xf32>
    %266 = vector.shape_cast %265 : vector<1x1x1x8x16xf32> to vector<8x16xf32>
    %267 = vector.shape_cast %264 : vector<8x16xf32> to vector<1x1x1x8x16xf32>
    tpu.vector_store %arg3[%c0_162, %c1_163, %c3_164, %c0_165, %c0_166], %267 {strides = array<i32>} : memref<1x8x8x8x16xf32, #tpu.memory_space<vmem>>, vector<1x1x1x8x16xf32>,
    %268 = vector.extract_strided_slice %247 {offsets = [2, 0, 0], sizes = [1, 8, 16], strides = [1, 1, 1]} : vector<8x8x16xf32> to vector<1x8x16xf32>
    %269 = vector.shape_cast %268 : vector<1x8x16xf32> to vector<8x16xf32>
    %270 = vector.extract_strided_slice %247 {offsets = [0, 2, 0], sizes = [8, 1, 16], strides = [1, 1, 1]} : vector<8x8x16xf32> to vector<8x1x16xf32>
    %271 = vector.shape_cast %270 : vector<8x1x16xf32> to vector<8x16xf32>
    %272 = arith.addf %269, %271 : vector<8x16xf32>
    %cst_167 = arith.constant 5.000000e-01 : f32
    %273 = vector.broadcast %cst_167 : f32 to vector<8x16xf32>
    %274 = arith.mulf %272, %273 : vector<8x16xf32>
    %c0_168 = arith.constant 0 : index
    %c2_169 = arith.constant 2 : index
    %c3_170 = arith.constant 3 : index
    %c0_171 = arith.constant 0 : index
    %c0_172 = arith.constant 0 : index
    %275 = vector.load %arg3[%c0_168, %c2_169, %c3_170, %c0_171, %c0_172] : memref<1x8x8x8x16xf32, #tpu.memory_space<vmem>>, vector<1x1x1x8x16xf32>
    %276 = vector.shape_cast %275 : vector<1x1x1x8x16xf32> to vector<8x16xf32>
    %277 = vector.shape_cast %274 : vector<8x16xf32> to vector<1x1x1x8x16xf32>
    tpu.vector_store %arg3[%c0_168, %c2_169, %c3_170, %c0_171, %c0_172], %277 {strides = array<i32>} : memref<1x8x8x8x16xf32, #tpu.memory_space<vmem>>, vector<1x1x1x8x16xf32>,
    %278 = vector.extract_strided_slice %247 {offsets = [3, 0, 0], sizes = [1, 8, 16], strides = [1, 1, 1]} : vector<8x8x16xf32> to vector<1x8x16xf32>
    %279 = vector.shape_cast %278 : vector<1x8x16xf32> to vector<8x16xf32>
    %280 = vector.extract_strided_slice %247 {offsets = [0, 3, 0], sizes = [8, 1, 16], strides = [1, 1, 1]} : vector<8x8x16xf32> to vector<8x1x16xf32>
    %281 = vector.shape_cast %280 : vector<8x1x16xf32> to vector<8x16xf32>
    %282 = arith.addf %279, %281 : vector<8x16xf32>
    %cst_173 = arith.constant 5.000000e-01 : f32
    %283 = vector.broadcast %cst_173 : f32 to vector<8x16xf32>
    %284 = arith.mulf %282, %283 : vector<8x16xf32>
    %c0_174 = arith.constant 0 : index
    %c3_175 = arith.constant 3 : index
    %c3_176 = arith.constant 3 : index
    %c0_177 = arith.constant 0 : index
    %c0_178 = arith.constant 0 : index
    %285 = vector.load %arg3[%c0_174, %c3_175, %c3_176, %c0_177, %c0_178] : memref<1x8x8x8x16xf32, #tpu.memory_space<vmem>>, vector<1x1x1x8x16xf32>
    %286 = vector.shape_cast %285 : vector<1x1x1x8x16xf32> to vector<8x16xf32>
    %287 = vector.shape_cast %284 : vector<8x16xf32> to vector<1x1x1x8x16xf32>
    tpu.vector_store %arg3[%c0_174, %c3_175, %c3_176, %c0_177, %c0_178], %287 {strides = array<i32>} : memref<1x8x8x8x16xf32, #tpu.memory_space<vmem>>, vector<1x1x1x8x16xf32>,
    %288 = vector.extract_strided_slice %247 {offsets = [4, 0, 0], sizes = [1, 8, 16], strides = [1, 1, 1]} : vector<8x8x16xf32> to vector<1x8x16xf32>
    %289 = vector.shape_cast %288 : vector<1x8x16xf32> to vector<8x16xf32>
    %290 = vector.extract_strided_slice %247 {offsets = [0, 4, 0], sizes = [8, 1, 16], strides = [1, 1, 1]} : vector<8x8x16xf32> to vector<8x1x16xf32>
    %291 = vector.shape_cast %290 : vector<8x1x16xf32> to vector<8x16xf32>
    %292 = arith.addf %289, %291 : vector<8x16xf32>
    %cst_179 = arith.constant 5.000000e-01 : f32
    %293 = vector.broadcast %cst_179 : f32 to vector<8x16xf32>
    %294 = arith.mulf %292, %293 : vector<8x16xf32>
    %c0_180 = arith.constant 0 : index
    %c4_181 = arith.constant 4 : index
    %c3_182 = arith.constant 3 : index
    %c0_183 = arith.constant 0 : index
    %c0_184 = arith.constant 0 : index
    %295 = vector.load %arg3[%c0_180, %c4_181, %c3_182, %c0_183, %c0_184] : memref<1x8x8x8x16xf32, #tpu.memory_space<vmem>>, vector<1x1x1x8x16xf32>
    %296 = vector.shape_cast %295 : vector<1x1x1x8x16xf32> to vector<8x16xf32>
    %297 = vector.shape_cast %294 : vector<8x16xf32> to vector<1x1x1x8x16xf32>
    tpu.vector_store %arg3[%c0_180, %c4_181, %c3_182, %c0_183, %c0_184], %297 {strides = array<i32>} : memref<1x8x8x8x16xf32, #tpu.memory_space<vmem>>, vector<1x1x1x8x16xf32>,
    %298 = vector.extract_strided_slice %247 {offsets = [5, 0, 0], sizes = [1, 8, 16], strides = [1, 1, 1]} : vector<8x8x16xf32> to vector<1x8x16xf32>
    %299 = vector.shape_cast %298 : vector<1x8x16xf32> to vector<8x16xf32>
    %300 = vector.extract_strided_slice %247 {offsets = [0, 5, 0], sizes = [8, 1, 16], strides = [1, 1, 1]} : vector<8x8x16xf32> to vector<8x1x16xf32>
    %301 = vector.shape_cast %300 : vector<8x1x16xf32> to vector<8x16xf32>
    %302 = arith.addf %299, %301 : vector<8x16xf32>
    %cst_185 = arith.constant 5.000000e-01 : f32
    %303 = vector.broadcast %cst_185 : f32 to vector<8x16xf32>
    %304 = arith.mulf %302, %303 : vector<8x16xf32>
    %c0_186 = arith.constant 0 : index
    %c5_187 = arith.constant 5 : index
    %c3_188 = arith.constant 3 : index
    %c0_189 = arith.constant 0 : index
    %c0_190 = arith.constant 0 : index
    %305 = vector.load %arg3[%c0_186, %c5_187, %c3_188, %c0_189, %c0_190] : memref<1x8x8x8x16xf32, #tpu.memory_space<vmem>>, vector<1x1x1x8x16xf32>
    %306 = vector.shape_cast %305 : vector<1x1x1x8x16xf32> to vector<8x16xf32>
    %307 = vector.shape_cast %304 : vector<8x16xf32> to vector<1x1x1x8x16xf32>
    tpu.vector_store %arg3[%c0_186, %c5_187, %c3_188, %c0_189, %c0_190], %307 {strides = array<i32>} : memref<1x8x8x8x16xf32, #tpu.memory_space<vmem>>, vector<1x1x1x8x16xf32>,
    %308 = vector.extract_strided_slice %247 {offsets = [6, 0, 0], sizes = [1, 8, 16], strides = [1, 1, 1]} : vector<8x8x16xf32> to vector<1x8x16xf32>
    %309 = vector.shape_cast %308 : vector<1x8x16xf32> to vector<8x16xf32>
    %310 = vector.extract_strided_slice %247 {offsets = [0, 6, 0], sizes = [8, 1, 16], strides = [1, 1, 1]} : vector<8x8x16xf32> to vector<8x1x16xf32>
    %311 = vector.shape_cast %310 : vector<8x1x16xf32> to vector<8x16xf32>
    %312 = arith.addf %309, %311 : vector<8x16xf32>
    %cst_191 = arith.constant 5.000000e-01 : f32
    %313 = vector.broadcast %cst_191 : f32 to vector<8x16xf32>
    %314 = arith.mulf %312, %313 : vector<8x16xf32>
    %c0_192 = arith.constant 0 : index
    %c6_193 = arith.constant 6 : index
    %c3_194 = arith.constant 3 : index
    %c0_195 = arith.constant 0 : index
    %c0_196 = arith.constant 0 : index
    %315 = vector.load %arg3[%c0_192, %c6_193, %c3_194, %c0_195, %c0_196] : memref<1x8x8x8x16xf32, #tpu.memory_space<vmem>>, vector<1x1x1x8x16xf32>
    %316 = vector.shape_cast %315 : vector<1x1x1x8x16xf32> to vector<8x16xf32>
    %317 = vector.shape_cast %314 : vector<8x16xf32> to vector<1x1x1x8x16xf32>
    tpu.vector_store %arg3[%c0_192, %c6_193, %c3_194, %c0_195, %c0_196], %317 {strides = array<i32>} : memref<1x8x8x8x16xf32, #tpu.memory_space<vmem>>, vector<1x1x1x8x16xf32>,
    %318 = vector.extract_strided_slice %247 {offsets = [7, 0, 0], sizes = [1, 8, 16], strides = [1, 1, 1]} : vector<8x8x16xf32> to vector<1x8x16xf32>
    %319 = vector.shape_cast %318 : vector<1x8x16xf32> to vector<8x16xf32>
    %320 = vector.extract_strided_slice %247 {offsets = [0, 7, 0], sizes = [8, 1, 16], strides = [1, 1, 1]} : vector<8x8x16xf32> to vector<8x1x16xf32>
    %321 = vector.shape_cast %320 : vector<8x1x16xf32> to vector<8x16xf32>
    %322 = arith.addf %319, %321 : vector<8x16xf32>
    %cst_197 = arith.constant 5.000000e-01 : f32
    %323 = vector.broadcast %cst_197 : f32 to vector<8x16xf32>
    %324 = arith.mulf %322, %323 : vector<8x16xf32>
    %c0_198 = arith.constant 0 : index
    %c7_199 = arith.constant 7 : index
    %c3_200 = arith.constant 3 : index
    %c0_201 = arith.constant 0 : index
    %c0_202 = arith.constant 0 : index
    %325 = vector.load %arg3[%c0_198, %c7_199, %c3_200, %c0_201, %c0_202] : memref<1x8x8x8x16xf32, #tpu.memory_space<vmem>>, vector<1x1x1x8x16xf32>
    %326 = vector.shape_cast %325 : vector<1x1x1x8x16xf32> to vector<8x16xf32>
    %327 = vector.shape_cast %324 : vector<8x16xf32> to vector<1x1x1x8x16xf32>
    tpu.vector_store %arg3[%c0_198, %c7_199, %c3_200, %c0_201, %c0_202], %327 {strides = array<i32>} : memref<1x8x8x8x16xf32, #tpu.memory_space<vmem>>, vector<1x1x1x8x16xf32>,
    %c0_203 = arith.constant 0 : index
    %c0_204 = arith.constant 0 : index
    %c4_205 = arith.constant 4 : index
    %c0_206 = arith.constant 0 : index
    %c0_207 = arith.constant 0 : index
    %328 = vector.load %arg2[%c0_203, %c0_204, %c4_205, %c0_206, %c0_207] : memref<1x8x8x8x16xf32, #tpu.memory_space<vmem>>, vector<1x8x1x8x16xf32>
    %329 = vector.shape_cast %328 : vector<1x8x1x8x16xf32> to vector<8x8x16xf32>
    %330 = vector.extract_strided_slice %329 {offsets = [0, 0, 0], sizes = [1, 8, 16], strides = [1, 1, 1]} : vector<8x8x16xf32> to vector<1x8x16xf32>
    %331 = vector.shape_cast %330 : vector<1x8x16xf32> to vector<8x16xf32>
    %332 = vector.extract_strided_slice %329 {offsets = [0, 0, 0], sizes = [8, 1, 16], strides = [1, 1, 1]} : vector<8x8x16xf32> to vector<8x1x16xf32>
    %333 = vector.shape_cast %332 : vector<8x1x16xf32> to vector<8x16xf32>
    %334 = arith.addf %331, %333 : vector<8x16xf32>
    %cst_208 = arith.constant 5.000000e-01 : f32
    %335 = vector.broadcast %cst_208 : f32 to vector<8x16xf32>
    %336 = arith.mulf %334, %335 : vector<8x16xf32>
    %c0_209 = arith.constant 0 : index
    %c0_210 = arith.constant 0 : index
    %c4_211 = arith.constant 4 : index
    %c0_212 = arith.constant 0 : index
    %c0_213 = arith.constant 0 : index
    %337 = vector.load %arg3[%c0_209, %c0_210, %c4_211, %c0_212, %c0_213] : memref<1x8x8x8x16xf32, #tpu.memory_space<vmem>>, vector<1x1x1x8x16xf32>
    %338 = vector.shape_cast %337 : vector<1x1x1x8x16xf32> to vector<8x16xf32>
    %339 = vector.shape_cast %336 : vector<8x16xf32> to vector<1x1x1x8x16xf32>
    tpu.vector_store %arg3[%c0_209, %c0_210, %c4_211, %c0_212, %c0_213], %339 {strides = array<i32>} : memref<1x8x8x8x16xf32, #tpu.memory_space<vmem>>, vector<1x1x1x8x16xf32>,
    %340 = vector.extract_strided_slice %329 {offsets = [1, 0, 0], sizes = [1, 8, 16], strides = [1, 1, 1]} : vector<8x8x16xf32> to vector<1x8x16xf32>
    %341 = vector.shape_cast %340 : vector<1x8x16xf32> to vector<8x16xf32>
    %342 = vector.extract_strided_slice %329 {offsets = [0, 1, 0], sizes = [8, 1, 16], strides = [1, 1, 1]} : vector<8x8x16xf32> to vector<8x1x16xf32>
    %343 = vector.shape_cast %342 : vector<8x1x16xf32> to vector<8x16xf32>
    %344 = arith.addf %341, %343 : vector<8x16xf32>
    %cst_214 = arith.constant 5.000000e-01 : f32
    %345 = vector.broadcast %cst_214 : f32 to vector<8x16xf32>
    %346 = arith.mulf %344, %345 : vector<8x16xf32>
    %c0_215 = arith.constant 0 : index
    %c1_216 = arith.constant 1 : index
    %c4_217 = arith.constant 4 : index
    %c0_218 = arith.constant 0 : index
    %c0_219 = arith.constant 0 : index
    %347 = vector.load %arg3[%c0_215, %c1_216, %c4_217, %c0_218, %c0_219] : memref<1x8x8x8x16xf32, #tpu.memory_space<vmem>>, vector<1x1x1x8x16xf32>
    %348 = vector.shape_cast %347 : vector<1x1x1x8x16xf32> to vector<8x16xf32>
    %349 = vector.shape_cast %346 : vector<8x16xf32> to vector<1x1x1x8x16xf32>
    tpu.vector_store %arg3[%c0_215, %c1_216, %c4_217, %c0_218, %c0_219], %349 {strides = array<i32>} : memref<1x8x8x8x16xf32, #tpu.memory_space<vmem>>, vector<1x1x1x8x16xf32>,
    %350 = vector.extract_strided_slice %329 {offsets = [2, 0, 0], sizes = [1, 8, 16], strides = [1, 1, 1]} : vector<8x8x16xf32> to vector<1x8x16xf32>
    %351 = vector.shape_cast %350 : vector<1x8x16xf32> to vector<8x16xf32>
    %352 = vector.extract_strided_slice %329 {offsets = [0, 2, 0], sizes = [8, 1, 16], strides = [1, 1, 1]} : vector<8x8x16xf32> to vector<8x1x16xf32>
    %353 = vector.shape_cast %352 : vector<8x1x16xf32> to vector<8x16xf32>
    %354 = arith.addf %351, %353 : vector<8x16xf32>
    %cst_220 = arith.constant 5.000000e-01 : f32
    %355 = vector.broadcast %cst_220 : f32 to vector<8x16xf32>
    %356 = arith.mulf %354, %355 : vector<8x16xf32>
    %c0_221 = arith.constant 0 : index
    %c2_222 = arith.constant 2 : index
    %c4_223 = arith.constant 4 : index
    %c0_224 = arith.constant 0 : index
    %c0_225 = arith.constant 0 : index
    %357 = vector.load %arg3[%c0_221, %c2_222, %c4_223, %c0_224, %c0_225] : memref<1x8x8x8x16xf32, #tpu.memory_space<vmem>>, vector<1x1x1x8x16xf32>
    %358 = vector.shape_cast %357 : vector<1x1x1x8x16xf32> to vector<8x16xf32>
    %359 = vector.shape_cast %356 : vector<8x16xf32> to vector<1x1x1x8x16xf32>
    tpu.vector_store %arg3[%c0_221, %c2_222, %c4_223, %c0_224, %c0_225], %359 {strides = array<i32>} : memref<1x8x8x8x16xf32, #tpu.memory_space<vmem>>, vector<1x1x1x8x16xf32>,
    %360 = vector.extract_strided_slice %329 {offsets = [3, 0, 0], sizes = [1, 8, 16], strides = [1, 1, 1]} : vector<8x8x16xf32> to vector<1x8x16xf32>
    %361 = vector.shape_cast %360 : vector<1x8x16xf32> to vector<8x16xf32>
    %362 = vector.extract_strided_slice %329 {offsets = [0, 3, 0], sizes = [8, 1, 16], strides = [1, 1, 1]} : vector<8x8x16xf32> to vector<8x1x16xf32>
    %363 = vector.shape_cast %362 : vector<8x1x16xf32> to vector<8x16xf32>
    %364 = arith.addf %361, %363 : vector<8x16xf32>
    %cst_226 = arith.constant 5.000000e-01 : f32
    %365 = vector.broadcast %cst_226 : f32 to vector<8x16xf32>
    %366 = arith.mulf %364, %365 : vector<8x16xf32>
    %c0_227 = arith.constant 0 : index
    %c3_228 = arith.constant 3 : index
    %c4_229 = arith.constant 4 : index
    %c0_230 = arith.constant 0 : index
    %c0_231 = arith.constant 0 : index
    %367 = vector.load %arg3[%c0_227, %c3_228, %c4_229, %c0_230, %c0_231] : memref<1x8x8x8x16xf32, #tpu.memory_space<vmem>>, vector<1x1x1x8x16xf32>
    %368 = vector.shape_cast %367 : vector<1x1x1x8x16xf32> to vector<8x16xf32>
    %369 = vector.shape_cast %366 : vector<8x16xf32> to vector<1x1x1x8x16xf32>
    tpu.vector_store %arg3[%c0_227, %c3_228, %c4_229, %c0_230, %c0_231], %369 {strides = array<i32>} : memref<1x8x8x8x16xf32, #tpu.memory_space<vmem>>, vector<1x1x1x8x16xf32>,
    %370 = vector.extract_strided_slice %329 {offsets = [4, 0, 0], sizes = [1, 8, 16], strides = [1, 1, 1]} : vector<8x8x16xf32> to vector<1x8x16xf32>
    %371 = vector.shape_cast %370 : vector<1x8x16xf32> to vector<8x16xf32>
    %372 = vector.extract_strided_slice %329 {offsets = [0, 4, 0], sizes = [8, 1, 16], strides = [1, 1, 1]} : vector<8x8x16xf32> to vector<8x1x16xf32>
    %373 = vector.shape_cast %372 : vector<8x1x16xf32> to vector<8x16xf32>
    %374 = arith.addf %371, %373 : vector<8x16xf32>
    %cst_232 = arith.constant 5.000000e-01 : f32
    %375 = vector.broadcast %cst_232 : f32 to vector<8x16xf32>
    %376 = arith.mulf %374, %375 : vector<8x16xf32>
    %c0_233 = arith.constant 0 : index
    %c4_234 = arith.constant 4 : index
    %c4_235 = arith.constant 4 : index
    %c0_236 = arith.constant 0 : index
    %c0_237 = arith.constant 0 : index
    %377 = vector.load %arg3[%c0_233, %c4_234, %c4_235, %c0_236, %c0_237] : memref<1x8x8x8x16xf32, #tpu.memory_space<vmem>>, vector<1x1x1x8x16xf32>
    %378 = vector.shape_cast %377 : vector<1x1x1x8x16xf32> to vector<8x16xf32>
    %379 = vector.shape_cast %376 : vector<8x16xf32> to vector<1x1x1x8x16xf32>
    tpu.vector_store %arg3[%c0_233, %c4_234, %c4_235, %c0_236, %c0_237], %379 {strides = array<i32>} : memref<1x8x8x8x16xf32, #tpu.memory_space<vmem>>, vector<1x1x1x8x16xf32>,
    %380 = vector.extract_strided_slice %329 {offsets = [5, 0, 0], sizes = [1, 8, 16], strides = [1, 1, 1]} : vector<8x8x16xf32> to vector<1x8x16xf32>
    %381 = vector.shape_cast %380 : vector<1x8x16xf32> to vector<8x16xf32>
    %382 = vector.extract_strided_slice %329 {offsets = [0, 5, 0], sizes = [8, 1, 16], strides = [1, 1, 1]} : vector<8x8x16xf32> to vector<8x1x16xf32>
    %383 = vector.shape_cast %382 : vector<8x1x16xf32> to vector<8x16xf32>
    %384 = arith.addf %381, %383 : vector<8x16xf32>
    %cst_238 = arith.constant 5.000000e-01 : f32
    %385 = vector.broadcast %cst_238 : f32 to vector<8x16xf32>
    %386 = arith.mulf %384, %385 : vector<8x16xf32>
    %c0_239 = arith.constant 0 : index
    %c5_240 = arith.constant 5 : index
    %c4_241 = arith.constant 4 : index
    %c0_242 = arith.constant 0 : index
    %c0_243 = arith.constant 0 : index
    %387 = vector.load %arg3[%c0_239, %c5_240, %c4_241, %c0_242, %c0_243] : memref<1x8x8x8x16xf32, #tpu.memory_space<vmem>>, vector<1x1x1x8x16xf32>
    %388 = vector.shape_cast %387 : vector<1x1x1x8x16xf32> to vector<8x16xf32>
    %389 = vector.shape_cast %386 : vector<8x16xf32> to vector<1x1x1x8x16xf32>
    tpu.vector_store %arg3[%c0_239, %c5_240, %c4_241, %c0_242, %c0_243], %389 {strides = array<i32>} : memref<1x8x8x8x16xf32, #tpu.memory_space<vmem>>, vector<1x1x1x8x16xf32>,
    %390 = vector.extract_strided_slice %329 {offsets = [6, 0, 0], sizes = [1, 8, 16], strides = [1, 1, 1]} : vector<8x8x16xf32> to vector<1x8x16xf32>
    %391 = vector.shape_cast %390 : vector<1x8x16xf32> to vector<8x16xf32>
    %392 = vector.extract_strided_slice %329 {offsets = [0, 6, 0], sizes = [8, 1, 16], strides = [1, 1, 1]} : vector<8x8x16xf32> to vector<8x1x16xf32>
    %393 = vector.shape_cast %392 : vector<8x1x16xf32> to vector<8x16xf32>
    %394 = arith.addf %391, %393 : vector<8x16xf32>
    %cst_244 = arith.constant 5.000000e-01 : f32
    %395 = vector.broadcast %cst_244 : f32 to vector<8x16xf32>
    %396 = arith.mulf %394, %395 : vector<8x16xf32>
    %c0_245 = arith.constant 0 : index
    %c6_246 = arith.constant 6 : index
    %c4_247 = arith.constant 4 : index
    %c0_248 = arith.constant 0 : index
    %c0_249 = arith.constant 0 : index
    %397 = vector.load %arg3[%c0_245, %c6_246, %c4_247, %c0_248, %c0_249] : memref<1x8x8x8x16xf32, #tpu.memory_space<vmem>>, vector<1x1x1x8x16xf32>
    %398 = vector.shape_cast %397 : vector<1x1x1x8x16xf32> to vector<8x16xf32>
    %399 = vector.shape_cast %396 : vector<8x16xf32> to vector<1x1x1x8x16xf32>
    tpu.vector_store %arg3[%c0_245, %c6_246, %c4_247, %c0_248, %c0_249], %399 {strides = array<i32>} : memref<1x8x8x8x16xf32, #tpu.memory_space<vmem>>, vector<1x1x1x8x16xf32>,
    %400 = vector.extract_strided_slice %329 {offsets = [7, 0, 0], sizes = [1, 8, 16], strides = [1, 1, 1]} : vector<8x8x16xf32> to vector<1x8x16xf32>
    %401 = vector.shape_cast %400 : vector<1x8x16xf32> to vector<8x16xf32>
    %402 = vector.extract_strided_slice %329 {offsets = [0, 7, 0], sizes = [8, 1, 16], strides = [1, 1, 1]} : vector<8x8x16xf32> to vector<8x1x16xf32>
    %403 = vector.shape_cast %402 : vector<8x1x16xf32> to vector<8x16xf32>
    %404 = arith.addf %401, %403 : vector<8x16xf32>
    %cst_250 = arith.constant 5.000000e-01 : f32
    %405 = vector.broadcast %cst_250 : f32 to vector<8x16xf32>
    %406 = arith.mulf %404, %405 : vector<8x16xf32>
    %c0_251 = arith.constant 0 : index
    %c7_252 = arith.constant 7 : index
    %c4_253 = arith.constant 4 : index
    %c0_254 = arith.constant 0 : index
    %c0_255 = arith.constant 0 : index
    %407 = vector.load %arg3[%c0_251, %c7_252, %c4_253, %c0_254, %c0_255] : memref<1x8x8x8x16xf32, #tpu.memory_space<vmem>>, vector<1x1x1x8x16xf32>
    %408 = vector.shape_cast %407 : vector<1x1x1x8x16xf32> to vector<8x16xf32>
    %409 = vector.shape_cast %406 : vector<8x16xf32> to vector<1x1x1x8x16xf32>
    tpu.vector_store %arg3[%c0_251, %c7_252, %c4_253, %c0_254, %c0_255], %409 {strides = array<i32>} : memref<1x8x8x8x16xf32, #tpu.memory_space<vmem>>, vector<1x1x1x8x16xf32>,
    %c0_256 = arith.constant 0 : index
    %c0_257 = arith.constant 0 : index
    %c5_258 = arith.constant 5 : index
    %c0_259 = arith.constant 0 : index
    %c0_260 = arith.constant 0 : index
    %410 = vector.load %arg2[%c0_256, %c0_257, %c5_258, %c0_259, %c0_260] : memref<1x8x8x8x16xf32, #tpu.memory_space<vmem>>, vector<1x8x1x8x16xf32>
    %411 = vector.shape_cast %410 : vector<1x8x1x8x16xf32> to vector<8x8x16xf32>
    %412 = vector.extract_strided_slice %411 {offsets = [0, 0, 0], sizes = [1, 8, 16], strides = [1, 1, 1]} : vector<8x8x16xf32> to vector<1x8x16xf32>
    %413 = vector.shape_cast %412 : vector<1x8x16xf32> to vector<8x16xf32>
    %414 = vector.extract_strided_slice %411 {offsets = [0, 0, 0], sizes = [8, 1, 16], strides = [1, 1, 1]} : vector<8x8x16xf32> to vector<8x1x16xf32>
    %415 = vector.shape_cast %414 : vector<8x1x16xf32> to vector<8x16xf32>
    %416 = arith.addf %413, %415 : vector<8x16xf32>
    %cst_261 = arith.constant 5.000000e-01 : f32
    %417 = vector.broadcast %cst_261 : f32 to vector<8x16xf32>
    %418 = arith.mulf %416, %417 : vector<8x16xf32>
    %c0_262 = arith.constant 0 : index
    %c0_263 = arith.constant 0 : index
    %c5_264 = arith.constant 5 : index
    %c0_265 = arith.constant 0 : index
    %c0_266 = arith.constant 0 : index
    %419 = vector.load %arg3[%c0_262, %c0_263, %c5_264, %c0_265, %c0_266] : memref<1x8x8x8x16xf32, #tpu.memory_space<vmem>>, vector<1x1x1x8x16xf32>
    %420 = vector.shape_cast %419 : vector<1x1x1x8x16xf32> to vector<8x16xf32>
    %421 = vector.shape_cast %418 : vector<8x16xf32> to vector<1x1x1x8x16xf32>
    tpu.vector_store %arg3[%c0_262, %c0_263, %c5_264, %c0_265, %c0_266], %421 {strides = array<i32>} : memref<1x8x8x8x16xf32, #tpu.memory_space<vmem>>, vector<1x1x1x8x16xf32>,
    %422 = vector.extract_strided_slice %411 {offsets = [1, 0, 0], sizes = [1, 8, 16], strides = [1, 1, 1]} : vector<8x8x16xf32> to vector<1x8x16xf32>
    %423 = vector.shape_cast %422 : vector<1x8x16xf32> to vector<8x16xf32>
    %424 = vector.extract_strided_slice %411 {offsets = [0, 1, 0], sizes = [8, 1, 16], strides = [1, 1, 1]} : vector<8x8x16xf32> to vector<8x1x16xf32>
    %425 = vector.shape_cast %424 : vector<8x1x16xf32> to vector<8x16xf32>
    %426 = arith.addf %423, %425 : vector<8x16xf32>
    %cst_267 = arith.constant 5.000000e-01 : f32
    %427 = vector.broadcast %cst_267 : f32 to vector<8x16xf32>
    %428 = arith.mulf %426, %427 : vector<8x16xf32>
    %c0_268 = arith.constant 0 : index
    %c1_269 = arith.constant 1 : index
    %c5_270 = arith.constant 5 : index
    %c0_271 = arith.constant 0 : index
    %c0_272 = arith.constant 0 : index
    %429 = vector.load %arg3[%c0_268, %c1_269, %c5_270, %c0_271, %c0_272] : memref<1x8x8x8x16xf32, #tpu.memory_space<vmem>>, vector<1x1x1x8x16xf32>
    %430 = vector.shape_cast %429 : vector<1x1x1x8x16xf32> to vector<8x16xf32>
    %431 = vector.shape_cast %428 : vector<8x16xf32> to vector<1x1x1x8x16xf32>
    tpu.vector_store %arg3[%c0_268, %c1_269, %c5_270, %c0_271, %c0_272], %431 {strides = array<i32>} : memref<1x8x8x8x16xf32, #tpu.memory_space<vmem>>, vector<1x1x1x8x16xf32>,
    %432 = vector.extract_strided_slice %411 {offsets = [2, 0, 0], sizes = [1, 8, 16], strides = [1, 1, 1]} : vector<8x8x16xf32> to vector<1x8x16xf32>
    %433 = vector.shape_cast %432 : vector<1x8x16xf32> to vector<8x16xf32>
    %434 = vector.extract_strided_slice %411 {offsets = [0, 2, 0], sizes = [8, 1, 16], strides = [1, 1, 1]} : vector<8x8x16xf32> to vector<8x1x16xf32>
    %435 = vector.shape_cast %434 : vector<8x1x16xf32> to vector<8x16xf32>
    %436 = arith.addf %433, %435 : vector<8x16xf32>
    %cst_273 = arith.constant 5.000000e-01 : f32
    %437 = vector.broadcast %cst_273 : f32 to vector<8x16xf32>
    %438 = arith.mulf %436, %437 : vector<8x16xf32>
    %c0_274 = arith.constant 0 : index
    %c2_275 = arith.constant 2 : index
    %c5_276 = arith.constant 5 : index
    %c0_277 = arith.constant 0 : index
    %c0_278 = arith.constant 0 : index
    %439 = vector.load %arg3[%c0_274, %c2_275, %c5_276, %c0_277, %c0_278] : memref<1x8x8x8x16xf32, #tpu.memory_space<vmem>>, vector<1x1x1x8x16xf32>
    %440 = vector.shape_cast %439 : vector<1x1x1x8x16xf32> to vector<8x16xf32>
    %441 = vector.shape_cast %438 : vector<8x16xf32> to vector<1x1x1x8x16xf32>
    tpu.vector_store %arg3[%c0_274, %c2_275, %c5_276, %c0_277, %c0_278], %441 {strides = array<i32>} : memref<1x8x8x8x16xf32, #tpu.memory_space<vmem>>, vector<1x1x1x8x16xf32>,
    %442 = vector.extract_strided_slice %411 {offsets = [3, 0, 0], sizes = [1, 8, 16], strides = [1, 1, 1]} : vector<8x8x16xf32> to vector<1x8x16xf32>
    %443 = vector.shape_cast %442 : vector<1x8x16xf32> to vector<8x16xf32>
    %444 = vector.extract_strided_slice %411 {offsets = [0, 3, 0], sizes = [8, 1, 16], strides = [1, 1, 1]} : vector<8x8x16xf32> to vector<8x1x16xf32>
    %445 = vector.shape_cast %444 : vector<8x1x16xf32> to vector<8x16xf32>
    %446 = arith.addf %443, %445 : vector<8x16xf32>
    %cst_279 = arith.constant 5.000000e-01 : f32
    %447 = vector.broadcast %cst_279 : f32 to vector<8x16xf32>
    %448 = arith.mulf %446, %447 : vector<8x16xf32>
    %c0_280 = arith.constant 0 : index
    %c3_281 = arith.constant 3 : index
    %c5_282 = arith.constant 5 : index
    %c0_283 = arith.constant 0 : index
    %c0_284 = arith.constant 0 : index
    %449 = vector.load %arg3[%c0_280, %c3_281, %c5_282, %c0_283, %c0_284] : memref<1x8x8x8x16xf32, #tpu.memory_space<vmem>>, vector<1x1x1x8x16xf32>
    %450 = vector.shape_cast %449 : vector<1x1x1x8x16xf32> to vector<8x16xf32>
    %451 = vector.shape_cast %448 : vector<8x16xf32> to vector<1x1x1x8x16xf32>
    tpu.vector_store %arg3[%c0_280, %c3_281, %c5_282, %c0_283, %c0_284], %451 {strides = array<i32>} : memref<1x8x8x8x16xf32, #tpu.memory_space<vmem>>, vector<1x1x1x8x16xf32>,
    %452 = vector.extract_strided_slice %411 {offsets = [4, 0, 0], sizes = [1, 8, 16], strides = [1, 1, 1]} : vector<8x8x16xf32> to vector<1x8x16xf32>
    %453 = vector.shape_cast %452 : vector<1x8x16xf32> to vector<8x16xf32>
    %454 = vector.extract_strided_slice %411 {offsets = [0, 4, 0], sizes = [8, 1, 16], strides = [1, 1, 1]} : vector<8x8x16xf32> to vector<8x1x16xf32>
    %455 = vector.shape_cast %454 : vector<8x1x16xf32> to vector<8x16xf32>
    %456 = arith.addf %453, %455 : vector<8x16xf32>
    %cst_285 = arith.constant 5.000000e-01 : f32
    %457 = vector.broadcast %cst_285 : f32 to vector<8x16xf32>
    %458 = arith.mulf %456, %457 : vector<8x16xf32>
    %c0_286 = arith.constant 0 : index
    %c4_287 = arith.constant 4 : index
    %c5_288 = arith.constant 5 : index
    %c0_289 = arith.constant 0 : index
    %c0_290 = arith.constant 0 : index
    %459 = vector.load %arg3[%c0_286, %c4_287, %c5_288, %c0_289, %c0_290] : memref<1x8x8x8x16xf32, #tpu.memory_space<vmem>>, vector<1x1x1x8x16xf32>
    %460 = vector.shape_cast %459 : vector<1x1x1x8x16xf32> to vector<8x16xf32>
    %461 = vector.shape_cast %458 : vector<8x16xf32> to vector<1x1x1x8x16xf32>
    tpu.vector_store %arg3[%c0_286, %c4_287, %c5_288, %c0_289, %c0_290], %461 {strides = array<i32>} : memref<1x8x8x8x16xf32, #tpu.memory_space<vmem>>, vector<1x1x1x8x16xf32>,
    %462 = vector.extract_strided_slice %411 {offsets = [5, 0, 0], sizes = [1, 8, 16], strides = [1, 1, 1]} : vector<8x8x16xf32> to vector<1x8x16xf32>
    %463 = vector.shape_cast %462 : vector<1x8x16xf32> to vector<8x16xf32>
    %464 = vector.extract_strided_slice %411 {offsets = [0, 5, 0], sizes = [8, 1, 16], strides = [1, 1, 1]} : vector<8x8x16xf32> to vector<8x1x16xf32>
    %465 = vector.shape_cast %464 : vector<8x1x16xf32> to vector<8x16xf32>
    %466 = arith.addf %463, %465 : vector<8x16xf32>
    %cst_291 = arith.constant 5.000000e-01 : f32
    %467 = vector.broadcast %cst_291 : f32 to vector<8x16xf32>
    %468 = arith.mulf %466, %467 : vector<8x16xf32>
    %c0_292 = arith.constant 0 : index
    %c5_293 = arith.constant 5 : index
    %c5_294 = arith.constant 5 : index
    %c0_295 = arith.constant 0 : index
    %c0_296 = arith.constant 0 : index
    %469 = vector.load %arg3[%c0_292, %c5_293, %c5_294, %c0_295, %c0_296] : memref<1x8x8x8x16xf32, #tpu.memory_space<vmem>>, vector<1x1x1x8x16xf32>
    %470 = vector.shape_cast %469 : vector<1x1x1x8x16xf32> to vector<8x16xf32>
    %471 = vector.shape_cast %468 : vector<8x16xf32> to vector<1x1x1x8x16xf32>
    tpu.vector_store %arg3[%c0_292, %c5_293, %c5_294, %c0_295, %c0_296], %471 {strides = array<i32>} : memref<1x8x8x8x16xf32, #tpu.memory_space<vmem>>, vector<1x1x1x8x16xf32>,
    %472 = vector.extract_strided_slice %411 {offsets = [6, 0, 0], sizes = [1, 8, 16], strides = [1, 1, 1]} : vector<8x8x16xf32> to vector<1x8x16xf32>
    %473 = vector.shape_cast %472 : vector<1x8x16xf32> to vector<8x16xf32>
    %474 = vector.extract_strided_slice %411 {offsets = [0, 6, 0], sizes = [8, 1, 16], strides = [1, 1, 1]} : vector<8x8x16xf32> to vector<8x1x16xf32>
    %475 = vector.shape_cast %474 : vector<8x1x16xf32> to vector<8x16xf32>
    %476 = arith.addf %473, %475 : vector<8x16xf32>
    %cst_297 = arith.constant 5.000000e-01 : f32
    %477 = vector.broadcast %cst_297 : f32 to vector<8x16xf32>
    %478 = arith.mulf %476, %477 : vector<8x16xf32>
    %c0_298 = arith.constant 0 : index
    %c6_299 = arith.constant 6 : index
    %c5_300 = arith.constant 5 : index
    %c0_301 = arith.constant 0 : index
    %c0_302 = arith.constant 0 : index
    %479 = vector.load %arg3[%c0_298, %c6_299, %c5_300, %c0_301, %c0_302] : memref<1x8x8x8x16xf32, #tpu.memory_space<vmem>>, vector<1x1x1x8x16xf32>
    %480 = vector.shape_cast %479 : vector<1x1x1x8x16xf32> to vector<8x16xf32>
    %481 = vector.shape_cast %478 : vector<8x16xf32> to vector<1x1x1x8x16xf32>
    tpu.vector_store %arg3[%c0_298, %c6_299, %c5_300, %c0_301, %c0_302], %481 {strides = array<i32>} : memref<1x8x8x8x16xf32, #tpu.memory_space<vmem>>, vector<1x1x1x8x16xf32>,
    %482 = vector.extract_strided_slice %411 {offsets = [7, 0, 0], sizes = [1, 8, 16], strides = [1, 1, 1]} : vector<8x8x16xf32> to vector<1x8x16xf32>
    %483 = vector.shape_cast %482 : vector<1x8x16xf32> to vector<8x16xf32>
    %484 = vector.extract_strided_slice %411 {offsets = [0, 7, 0], sizes = [8, 1, 16], strides = [1, 1, 1]} : vector<8x8x16xf32> to vector<8x1x16xf32>
    %485 = vector.shape_cast %484 : vector<8x1x16xf32> to vector<8x16xf32>
    %486 = arith.addf %483, %485 : vector<8x16xf32>
    %cst_303 = arith.constant 5.000000e-01 : f32
    %487 = vector.broadcast %cst_303 : f32 to vector<8x16xf32>
    %488 = arith.mulf %486, %487 : vector<8x16xf32>
    %c0_304 = arith.constant 0 : index
    %c7_305 = arith.constant 7 : index
    %c5_306 = arith.constant 5 : index
    %c0_307 = arith.constant 0 : index
    %c0_308 = arith.constant 0 : index
    %489 = vector.load %arg3[%c0_304, %c7_305, %c5_306, %c0_307, %c0_308] : memref<1x8x8x8x16xf32, #tpu.memory_space<vmem>>, vector<1x1x1x8x16xf32>
    %490 = vector.shape_cast %489 : vector<1x1x1x8x16xf32> to vector<8x16xf32>
    %491 = vector.shape_cast %488 : vector<8x16xf32> to vector<1x1x1x8x16xf32>
    tpu.vector_store %arg3[%c0_304, %c7_305, %c5_306, %c0_307, %c0_308], %491 {strides = array<i32>} : memref<1x8x8x8x16xf32, #tpu.memory_space<vmem>>, vector<1x1x1x8x16xf32>,
    %c0_309 = arith.constant 0 : index
    %c0_310 = arith.constant 0 : index
    %c6_311 = arith.constant 6 : index
    %c0_312 = arith.constant 0 : index
    %c0_313 = arith.constant 0 : index
    %492 = vector.load %arg2[%c0_309, %c0_310, %c6_311, %c0_312, %c0_313] : memref<1x8x8x8x16xf32, #tpu.memory_space<vmem>>, vector<1x8x1x8x16xf32>
    %493 = vector.shape_cast %492 : vector<1x8x1x8x16xf32> to vector<8x8x16xf32>
    %494 = vector.extract_strided_slice %493 {offsets = [0, 0, 0], sizes = [1, 8, 16], strides = [1, 1, 1]} : vector<8x8x16xf32> to vector<1x8x16xf32>
    %495 = vector.shape_cast %494 : vector<1x8x16xf32> to vector<8x16xf32>
    %496 = vector.extract_strided_slice %493 {offsets = [0, 0, 0], sizes = [8, 1, 16], strides = [1, 1, 1]} : vector<8x8x16xf32> to vector<8x1x16xf32>
    %497 = vector.shape_cast %496 : vector<8x1x16xf32> to vector<8x16xf32>
    %498 = arith.addf %495, %497 : vector<8x16xf32>
    %cst_314 = arith.constant 5.000000e-01 : f32
    %499 = vector.broadcast %cst_314 : f32 to vector<8x16xf32>
    %500 = arith.mulf %498, %499 : vector<8x16xf32>
    %c0_315 = arith.constant 0 : index
    %c0_316 = arith.constant 0 : index
    %c6_317 = arith.constant 6 : index
    %c0_318 = arith.constant 0 : index
    %c0_319 = arith.constant 0 : index
    %501 = vector.load %arg3[%c0_315, %c0_316, %c6_317, %c0_318, %c0_319] : memref<1x8x8x8x16xf32, #tpu.memory_space<vmem>>, vector<1x1x1x8x16xf32>
    %502 = vector.shape_cast %501 : vector<1x1x1x8x16xf32> to vector<8x16xf32>
    %503 = vector.shape_cast %500 : vector<8x16xf32> to vector<1x1x1x8x16xf32>
    tpu.vector_store %arg3[%c0_315, %c0_316, %c6_317, %c0_318, %c0_319], %503 {strides = array<i32>} : memref<1x8x8x8x16xf32, #tpu.memory_space<vmem>>, vector<1x1x1x8x16xf32>,
    %504 = vector.extract_strided_slice %493 {offsets = [1, 0, 0], sizes = [1, 8, 16], strides = [1, 1, 1]} : vector<8x8x16xf32> to vector<1x8x16xf32>
    %505 = vector.shape_cast %504 : vector<1x8x16xf32> to vector<8x16xf32>
    %506 = vector.extract_strided_slice %493 {offsets = [0, 1, 0], sizes = [8, 1, 16], strides = [1, 1, 1]} : vector<8x8x16xf32> to vector<8x1x16xf32>
    %507 = vector.shape_cast %506 : vector<8x1x16xf32> to vector<8x16xf32>
    %508 = arith.addf %505, %507 : vector<8x16xf32>
    %cst_320 = arith.constant 5.000000e-01 : f32
    %509 = vector.broadcast %cst_320 : f32 to vector<8x16xf32>
    %510 = arith.mulf %508, %509 : vector<8x16xf32>
    %c0_321 = arith.constant 0 : index
    %c1_322 = arith.constant 1 : index
    %c6_323 = arith.constant 6 : index
    %c0_324 = arith.constant 0 : index
    %c0_325 = arith.constant 0 : index
    %511 = vector.load %arg3[%c0_321, %c1_322, %c6_323, %c0_324, %c0_325] : memref<1x8x8x8x16xf32, #tpu.memory_space<vmem>>, vector<1x1x1x8x16xf32>
    %512 = vector.shape_cast %511 : vector<1x1x1x8x16xf32> to vector<8x16xf32>
    %513 = vector.shape_cast %510 : vector<8x16xf32> to vector<1x1x1x8x16xf32>
    tpu.vector_store %arg3[%c0_321, %c1_322, %c6_323, %c0_324, %c0_325], %513 {strides = array<i32>} : memref<1x8x8x8x16xf32, #tpu.memory_space<vmem>>, vector<1x1x1x8x16xf32>,
    %514 = vector.extract_strided_slice %493 {offsets = [2, 0, 0], sizes = [1, 8, 16], strides = [1, 1, 1]} : vector<8x8x16xf32> to vector<1x8x16xf32>
    %515 = vector.shape_cast %514 : vector<1x8x16xf32> to vector<8x16xf32>
    %516 = vector.extract_strided_slice %493 {offsets = [0, 2, 0], sizes = [8, 1, 16], strides = [1, 1, 1]} : vector<8x8x16xf32> to vector<8x1x16xf32>
    %517 = vector.shape_cast %516 : vector<8x1x16xf32> to vector<8x16xf32>
    %518 = arith.addf %515, %517 : vector<8x16xf32>
    %cst_326 = arith.constant 5.000000e-01 : f32
    %519 = vector.broadcast %cst_326 : f32 to vector<8x16xf32>
    %520 = arith.mulf %518, %519 : vector<8x16xf32>
    %c0_327 = arith.constant 0 : index
    %c2_328 = arith.constant 2 : index
    %c6_329 = arith.constant 6 : index
    %c0_330 = arith.constant 0 : index
    %c0_331 = arith.constant 0 : index
    %521 = vector.load %arg3[%c0_327, %c2_328, %c6_329, %c0_330, %c0_331] : memref<1x8x8x8x16xf32, #tpu.memory_space<vmem>>, vector<1x1x1x8x16xf32>
    %522 = vector.shape_cast %521 : vector<1x1x1x8x16xf32> to vector<8x16xf32>
    %523 = vector.shape_cast %520 : vector<8x16xf32> to vector<1x1x1x8x16xf32>
    tpu.vector_store %arg3[%c0_327, %c2_328, %c6_329, %c0_330, %c0_331], %523 {strides = array<i32>} : memref<1x8x8x8x16xf32, #tpu.memory_space<vmem>>, vector<1x1x1x8x16xf32>,
    %524 = vector.extract_strided_slice %493 {offsets = [3, 0, 0], sizes = [1, 8, 16], strides = [1, 1, 1]} : vector<8x8x16xf32> to vector<1x8x16xf32>
    %525 = vector.shape_cast %524 : vector<1x8x16xf32> to vector<8x16xf32>
    %526 = vector.extract_strided_slice %493 {offsets = [0, 3, 0], sizes = [8, 1, 16], strides = [1, 1, 1]} : vector<8x8x16xf32> to vector<8x1x16xf32>
    %527 = vector.shape_cast %526 : vector<8x1x16xf32> to vector<8x16xf32>
    %528 = arith.addf %525, %527 : vector<8x16xf32>
    %cst_332 = arith.constant 5.000000e-01 : f32
    %529 = vector.broadcast %cst_332 : f32 to vector<8x16xf32>
    %530 = arith.mulf %528, %529 : vector<8x16xf32>
    %c0_333 = arith.constant 0 : index
    %c3_334 = arith.constant 3 : index
    %c6_335 = arith.constant 6 : index
    %c0_336 = arith.constant 0 : index
    %c0_337 = arith.constant 0 : index
    %531 = vector.load %arg3[%c0_333, %c3_334, %c6_335, %c0_336, %c0_337] : memref<1x8x8x8x16xf32, #tpu.memory_space<vmem>>, vector<1x1x1x8x16xf32>
    %532 = vector.shape_cast %531 : vector<1x1x1x8x16xf32> to vector<8x16xf32>
    %533 = vector.shape_cast %530 : vector<8x16xf32> to vector<1x1x1x8x16xf32>
    tpu.vector_store %arg3[%c0_333, %c3_334, %c6_335, %c0_336, %c0_337], %533 {strides = array<i32>} : memref<1x8x8x8x16xf32, #tpu.memory_space<vmem>>, vector<1x1x1x8x16xf32>,
    %534 = vector.extract_strided_slice %493 {offsets = [4, 0, 0], sizes = [1, 8, 16], strides = [1, 1, 1]} : vector<8x8x16xf32> to vector<1x8x16xf32>
    %535 = vector.shape_cast %534 : vector<1x8x16xf32> to vector<8x16xf32>
    %536 = vector.extract_strided_slice %493 {offsets = [0, 4, 0], sizes = [8, 1, 16], strides = [1, 1, 1]} : vector<8x8x16xf32> to vector<8x1x16xf32>
    %537 = vector.shape_cast %536 : vector<8x1x16xf32> to vector<8x16xf32>
    %538 = arith.addf %535, %537 : vector<8x16xf32>
    %cst_338 = arith.constant 5.000000e-01 : f32
    %539 = vector.broadcast %cst_338 : f32 to vector<8x16xf32>
    %540 = arith.mulf %538, %539 : vector<8x16xf32>
    %c0_339 = arith.constant 0 : index
    %c4_340 = arith.constant 4 : index
    %c6_341 = arith.constant 6 : index
    %c0_342 = arith.constant 0 : index
    %c0_343 = arith.constant 0 : index
    %541 = vector.load %arg3[%c0_339, %c4_340, %c6_341, %c0_342, %c0_343] : memref<1x8x8x8x16xf32, #tpu.memory_space<vmem>>, vector<1x1x1x8x16xf32>
    %542 = vector.shape_cast %541 : vector<1x1x1x8x16xf32> to vector<8x16xf32>
    %543 = vector.shape_cast %540 : vector<8x16xf32> to vector<1x1x1x8x16xf32>
    tpu.vector_store %arg3[%c0_339, %c4_340, %c6_341, %c0_342, %c0_343], %543 {strides = array<i32>} : memref<1x8x8x8x16xf32, #tpu.memory_space<vmem>>, vector<1x1x1x8x16xf32>,
    %544 = vector.extract_strided_slice %493 {offsets = [5, 0, 0], sizes = [1, 8, 16], strides = [1, 1, 1]} : vector<8x8x16xf32> to vector<1x8x16xf32>
    %545 = vector.shape_cast %544 : vector<1x8x16xf32> to vector<8x16xf32>
    %546 = vector.extract_strided_slice %493 {offsets = [0, 5, 0], sizes = [8, 1, 16], strides = [1, 1, 1]} : vector<8x8x16xf32> to vector<8x1x16xf32>
    %547 = vector.shape_cast %546 : vector<8x1x16xf32> to vector<8x16xf32>
    %548 = arith.addf %545, %547 : vector<8x16xf32>
    %cst_344 = arith.constant 5.000000e-01 : f32
    %549 = vector.broadcast %cst_344 : f32 to vector<8x16xf32>
    %550 = arith.mulf %548, %549 : vector<8x16xf32>
    %c0_345 = arith.constant 0 : index
    %c5_346 = arith.constant 5 : index
    %c6_347 = arith.constant 6 : index
    %c0_348 = arith.constant 0 : index
    %c0_349 = arith.constant 0 : index
    %551 = vector.load %arg3[%c0_345, %c5_346, %c6_347, %c0_348, %c0_349] : memref<1x8x8x8x16xf32, #tpu.memory_space<vmem>>, vector<1x1x1x8x16xf32>
    %552 = vector.shape_cast %551 : vector<1x1x1x8x16xf32> to vector<8x16xf32>
    %553 = vector.shape_cast %550 : vector<8x16xf32> to vector<1x1x1x8x16xf32>
    tpu.vector_store %arg3[%c0_345, %c5_346, %c6_347, %c0_348, %c0_349], %553 {strides = array<i32>} : memref<1x8x8x8x16xf32, #tpu.memory_space<vmem>>, vector<1x1x1x8x16xf32>,
    %554 = vector.extract_strided_slice %493 {offsets = [6, 0, 0], sizes = [1, 8, 16], strides = [1, 1, 1]} : vector<8x8x16xf32> to vector<1x8x16xf32>
    %555 = vector.shape_cast %554 : vector<1x8x16xf32> to vector<8x16xf32>
    %556 = vector.extract_strided_slice %493 {offsets = [0, 6, 0], sizes = [8, 1, 16], strides = [1, 1, 1]} : vector<8x8x16xf32> to vector<8x1x16xf32>
    %557 = vector.shape_cast %556 : vector<8x1x16xf32> to vector<8x16xf32>
    %558 = arith.addf %555, %557 : vector<8x16xf32>
    %cst_350 = arith.constant 5.000000e-01 : f32
    %559 = vector.broadcast %cst_350 : f32 to vector<8x16xf32>
    %560 = arith.mulf %558, %559 : vector<8x16xf32>
    %c0_351 = arith.constant 0 : index
    %c6_352 = arith.constant 6 : index
    %c6_353 = arith.constant 6 : index
    %c0_354 = arith.constant 0 : index
    %c0_355 = arith.constant 0 : index
    %561 = vector.load %arg3[%c0_351, %c6_352, %c6_353, %c0_354, %c0_355] : memref<1x8x8x8x16xf32, #tpu.memory_space<vmem>>, vector<1x1x1x8x16xf32>
    %562 = vector.shape_cast %561 : vector<1x1x1x8x16xf32> to vector<8x16xf32>
    %563 = vector.shape_cast %560 : vector<8x16xf32> to vector<1x1x1x8x16xf32>
    tpu.vector_store %arg3[%c0_351, %c6_352, %c6_353, %c0_354, %c0_355], %563 {strides = array<i32>} : memref<1x8x8x8x16xf32, #tpu.memory_space<vmem>>, vector<1x1x1x8x16xf32>,
    %564 = vector.extract_strided_slice %493 {offsets = [7, 0, 0], sizes = [1, 8, 16], strides = [1, 1, 1]} : vector<8x8x16xf32> to vector<1x8x16xf32>
    %565 = vector.shape_cast %564 : vector<1x8x16xf32> to vector<8x16xf32>
    %566 = vector.extract_strided_slice %493 {offsets = [0, 7, 0], sizes = [8, 1, 16], strides = [1, 1, 1]} : vector<8x8x16xf32> to vector<8x1x16xf32>
    %567 = vector.shape_cast %566 : vector<8x1x16xf32> to vector<8x16xf32>
    %568 = arith.addf %565, %567 : vector<8x16xf32>
    %cst_356 = arith.constant 5.000000e-01 : f32
    %569 = vector.broadcast %cst_356 : f32 to vector<8x16xf32>
    %570 = arith.mulf %568, %569 : vector<8x16xf32>
    %c0_357 = arith.constant 0 : index
    %c7_358 = arith.constant 7 : index
    %c6_359 = arith.constant 6 : index
    %c0_360 = arith.constant 0 : index
    %c0_361 = arith.constant 0 : index
    %571 = vector.load %arg3[%c0_357, %c7_358, %c6_359, %c0_360, %c0_361] : memref<1x8x8x8x16xf32, #tpu.memory_space<vmem>>, vector<1x1x1x8x16xf32>
    %572 = vector.shape_cast %571 : vector<1x1x1x8x16xf32> to vector<8x16xf32>
    %573 = vector.shape_cast %570 : vector<8x16xf32> to vector<1x1x1x8x16xf32>
    tpu.vector_store %arg3[%c0_357, %c7_358, %c6_359, %c0_360, %c0_361], %573 {strides = array<i32>} : memref<1x8x8x8x16xf32, #tpu.memory_space<vmem>>, vector<1x1x1x8x16xf32>,
    %c0_362 = arith.constant 0 : index
    %c0_363 = arith.constant 0 : index
    %c7_364 = arith.constant 7 : index
    %c0_365 = arith.constant 0 : index
    %c0_366 = arith.constant 0 : index
    %574 = vector.load %arg2[%c0_362, %c0_363, %c7_364, %c0_365, %c0_366] : memref<1x8x8x8x16xf32, #tpu.memory_space<vmem>>, vector<1x8x1x8x16xf32>
    %575 = vector.shape_cast %574 : vector<1x8x1x8x16xf32> to vector<8x8x16xf32>
    %576 = vector.extract_strided_slice %575 {offsets = [0, 0, 0], sizes = [1, 8, 16], strides = [1, 1, 1]} : vector<8x8x16xf32> to vector<1x8x16xf32>
    %577 = vector.shape_cast %576 : vector<1x8x16xf32> to vector<8x16xf32>
    %578 = vector.extract_strided_slice %575 {offsets = [0, 0, 0], sizes = [8, 1, 16], strides = [1, 1, 1]} : vector<8x8x16xf32> to vector<8x1x16xf32>
    %579 = vector.shape_cast %578 : vector<8x1x16xf32> to vector<8x16xf32>
    %580 = arith.addf %577, %579 : vector<8x16xf32>
    %cst_367 = arith.constant 5.000000e-01 : f32
    %581 = vector.broadcast %cst_367 : f32 to vector<8x16xf32>
    %582 = arith.mulf %580, %581 : vector<8x16xf32>
    %c0_368 = arith.constant 0 : index
    %c0_369 = arith.constant 0 : index
    %c7_370 = arith.constant 7 : index
    %c0_371 = arith.constant 0 : index
    %c0_372 = arith.constant 0 : index
    %583 = vector.load %arg3[%c0_368, %c0_369, %c7_370, %c0_371, %c0_372] : memref<1x8x8x8x16xf32, #tpu.memory_space<vmem>>, vector<1x1x1x8x16xf32>
    %584 = vector.shape_cast %583 : vector<1x1x1x8x16xf32> to vector<8x16xf32>
    %585 = vector.shape_cast %582 : vector<8x16xf32> to vector<1x1x1x8x16xf32>
    tpu.vector_store %arg3[%c0_368, %c0_369, %c7_370, %c0_371, %c0_372], %585 {strides = array<i32>} : memref<1x8x8x8x16xf32, #tpu.memory_space<vmem>>, vector<1x1x1x8x16xf32>,
    %586 = vector.extract_strided_slice %575 {offsets = [1, 0, 0], sizes = [1, 8, 16], strides = [1, 1, 1]} : vector<8x8x16xf32> to vector<1x8x16xf32>
    %587 = vector.shape_cast %586 : vector<1x8x16xf32> to vector<8x16xf32>
    %588 = vector.extract_strided_slice %575 {offsets = [0, 1, 0], sizes = [8, 1, 16], strides = [1, 1, 1]} : vector<8x8x16xf32> to vector<8x1x16xf32>
    %589 = vector.shape_cast %588 : vector<8x1x16xf32> to vector<8x16xf32>
    %590 = arith.addf %587, %589 : vector<8x16xf32>
    %cst_373 = arith.constant 5.000000e-01 : f32
    %591 = vector.broadcast %cst_373 : f32 to vector<8x16xf32>
    %592 = arith.mulf %590, %591 : vector<8x16xf32>
    %c0_374 = arith.constant 0 : index
    %c1_375 = arith.constant 1 : index
    %c7_376 = arith.constant 7 : index
    %c0_377 = arith.constant 0 : index
    %c0_378 = arith.constant 0 : index
    %593 = vector.load %arg3[%c0_374, %c1_375, %c7_376, %c0_377, %c0_378] : memref<1x8x8x8x16xf32, #tpu.memory_space<vmem>>, vector<1x1x1x8x16xf32>
    %594 = vector.shape_cast %593 : vector<1x1x1x8x16xf32> to vector<8x16xf32>
    %595 = vector.shape_cast %592 : vector<8x16xf32> to vector<1x1x1x8x16xf32>
    tpu.vector_store %arg3[%c0_374, %c1_375, %c7_376, %c0_377, %c0_378], %595 {strides = array<i32>} : memref<1x8x8x8x16xf32, #tpu.memory_space<vmem>>, vector<1x1x1x8x16xf32>,
    %596 = vector.extract_strided_slice %575 {offsets = [2, 0, 0], sizes = [1, 8, 16], strides = [1, 1, 1]} : vector<8x8x16xf32> to vector<1x8x16xf32>
    %597 = vector.shape_cast %596 : vector<1x8x16xf32> to vector<8x16xf32>
    %598 = vector.extract_strided_slice %575 {offsets = [0, 2, 0], sizes = [8, 1, 16], strides = [1, 1, 1]} : vector<8x8x16xf32> to vector<8x1x16xf32>
    %599 = vector.shape_cast %598 : vector<8x1x16xf32> to vector<8x16xf32>
    %600 = arith.addf %597, %599 : vector<8x16xf32>
    %cst_379 = arith.constant 5.000000e-01 : f32
    %601 = vector.broadcast %cst_379 : f32 to vector<8x16xf32>
    %602 = arith.mulf %600, %601 : vector<8x16xf32>
    %c0_380 = arith.constant 0 : index
    %c2_381 = arith.constant 2 : index
    %c7_382 = arith.constant 7 : index
    %c0_383 = arith.constant 0 : index
    %c0_384 = arith.constant 0 : index
    %603 = vector.load %arg3[%c0_380, %c2_381, %c7_382, %c0_383, %c0_384] : memref<1x8x8x8x16xf32, #tpu.memory_space<vmem>>, vector<1x1x1x8x16xf32>
    %604 = vector.shape_cast %603 : vector<1x1x1x8x16xf32> to vector<8x16xf32>
    %605 = vector.shape_cast %602 : vector<8x16xf32> to vector<1x1x1x8x16xf32>
    tpu.vector_store %arg3[%c0_380, %c2_381, %c7_382, %c0_383, %c0_384], %605 {strides = array<i32>} : memref<1x8x8x8x16xf32, #tpu.memory_space<vmem>>, vector<1x1x1x8x16xf32>,
    %606 = vector.extract_strided_slice %575 {offsets = [3, 0, 0], sizes = [1, 8, 16], strides = [1, 1, 1]} : vector<8x8x16xf32> to vector<1x8x16xf32>
    %607 = vector.shape_cast %606 : vector<1x8x16xf32> to vector<8x16xf32>
    %608 = vector.extract_strided_slice %575 {offsets = [0, 3, 0], sizes = [8, 1, 16], strides = [1, 1, 1]} : vector<8x8x16xf32> to vector<8x1x16xf32>
    %609 = vector.shape_cast %608 : vector<8x1x16xf32> to vector<8x16xf32>
    %610 = arith.addf %607, %609 : vector<8x16xf32>
    %cst_385 = arith.constant 5.000000e-01 : f32
    %611 = vector.broadcast %cst_385 : f32 to vector<8x16xf32>
    %612 = arith.mulf %610, %611 : vector<8x16xf32>
    %c0_386 = arith.constant 0 : index
    %c3_387 = arith.constant 3 : index
    %c7_388 = arith.constant 7 : index
    %c0_389 = arith.constant 0 : index
    %c0_390 = arith.constant 0 : index
    %613 = vector.load %arg3[%c0_386, %c3_387, %c7_388, %c0_389, %c0_390] : memref<1x8x8x8x16xf32, #tpu.memory_space<vmem>>, vector<1x1x1x8x16xf32>
    %614 = vector.shape_cast %613 : vector<1x1x1x8x16xf32> to vector<8x16xf32>
    %615 = vector.shape_cast %612 : vector<8x16xf32> to vector<1x1x1x8x16xf32>
    tpu.vector_store %arg3[%c0_386, %c3_387, %c7_388, %c0_389, %c0_390], %615 {strides = array<i32>} : memref<1x8x8x8x16xf32, #tpu.memory_space<vmem>>, vector<1x1x1x8x16xf32>,
    %616 = vector.extract_strided_slice %575 {offsets = [4, 0, 0], sizes = [1, 8, 16], strides = [1, 1, 1]} : vector<8x8x16xf32> to vector<1x8x16xf32>
    %617 = vector.shape_cast %616 : vector<1x8x16xf32> to vector<8x16xf32>
    %618 = vector.extract_strided_slice %575 {offsets = [0, 4, 0], sizes = [8, 1, 16], strides = [1, 1, 1]} : vector<8x8x16xf32> to vector<8x1x16xf32>
    %619 = vector.shape_cast %618 : vector<8x1x16xf32> to vector<8x16xf32>
    %620 = arith.addf %617, %619 : vector<8x16xf32>
    %cst_391 = arith.constant 5.000000e-01 : f32
    %621 = vector.broadcast %cst_391 : f32 to vector<8x16xf32>
    %622 = arith.mulf %620, %621 : vector<8x16xf32>
    %c0_392 = arith.constant 0 : index
    %c4_393 = arith.constant 4 : index
    %c7_394 = arith.constant 7 : index
    %c0_395 = arith.constant 0 : index
    %c0_396 = arith.constant 0 : index
    %623 = vector.load %arg3[%c0_392, %c4_393, %c7_394, %c0_395, %c0_396] : memref<1x8x8x8x16xf32, #tpu.memory_space<vmem>>, vector<1x1x1x8x16xf32>
    %624 = vector.shape_cast %623 : vector<1x1x1x8x16xf32> to vector<8x16xf32>
    %625 = vector.shape_cast %622 : vector<8x16xf32> to vector<1x1x1x8x16xf32>
    tpu.vector_store %arg3[%c0_392, %c4_393, %c7_394, %c0_395, %c0_396], %625 {strides = array<i32>} : memref<1x8x8x8x16xf32, #tpu.memory_space<vmem>>, vector<1x1x1x8x16xf32>,
    %626 = vector.extract_strided_slice %575 {offsets = [5, 0, 0], sizes = [1, 8, 16], strides = [1, 1, 1]} : vector<8x8x16xf32> to vector<1x8x16xf32>
    %627 = vector.shape_cast %626 : vector<1x8x16xf32> to vector<8x16xf32>
    %628 = vector.extract_strided_slice %575 {offsets = [0, 5, 0], sizes = [8, 1, 16], strides = [1, 1, 1]} : vector<8x8x16xf32> to vector<8x1x16xf32>
    %629 = vector.shape_cast %628 : vector<8x1x16xf32> to vector<8x16xf32>
    %630 = arith.addf %627, %629 : vector<8x16xf32>
    %cst_397 = arith.constant 5.000000e-01 : f32
    %631 = vector.broadcast %cst_397 : f32 to vector<8x16xf32>
    %632 = arith.mulf %630, %631 : vector<8x16xf32>
    %c0_398 = arith.constant 0 : index
    %c5_399 = arith.constant 5 : index
    %c7_400 = arith.constant 7 : index
    %c0_401 = arith.constant 0 : index
    %c0_402 = arith.constant 0 : index
    %633 = vector.load %arg3[%c0_398, %c5_399, %c7_400, %c0_401, %c0_402] : memref<1x8x8x8x16xf32, #tpu.memory_space<vmem>>, vector<1x1x1x8x16xf32>
    %634 = vector.shape_cast %633 : vector<1x1x1x8x16xf32> to vector<8x16xf32>
    %635 = vector.shape_cast %632 : vector<8x16xf32> to vector<1x1x1x8x16xf32>
    tpu.vector_store %arg3[%c0_398, %c5_399, %c7_400, %c0_401, %c0_402], %635 {strides = array<i32>} : memref<1x8x8x8x16xf32, #tpu.memory_space<vmem>>, vector<1x1x1x8x16xf32>,
    %636 = vector.extract_strided_slice %575 {offsets = [6, 0, 0], sizes = [1, 8, 16], strides = [1, 1, 1]} : vector<8x8x16xf32> to vector<1x8x16xf32>
    %637 = vector.shape_cast %636 : vector<1x8x16xf32> to vector<8x16xf32>
    %638 = vector.extract_strided_slice %575 {offsets = [0, 6, 0], sizes = [8, 1, 16], strides = [1, 1, 1]} : vector<8x8x16xf32> to vector<8x1x16xf32>
    %639 = vector.shape_cast %638 : vector<8x1x16xf32> to vector<8x16xf32>
    %640 = arith.addf %637, %639 : vector<8x16xf32>
    %cst_403 = arith.constant 5.000000e-01 : f32
    %641 = vector.broadcast %cst_403 : f32 to vector<8x16xf32>
    %642 = arith.mulf %640, %641 : vector<8x16xf32>
    %c0_404 = arith.constant 0 : index
    %c6_405 = arith.constant 6 : index
    %c7_406 = arith.constant 7 : index
    %c0_407 = arith.constant 0 : index
    %c0_408 = arith.constant 0 : index
    %643 = vector.load %arg3[%c0_404, %c6_405, %c7_406, %c0_407, %c0_408] : memref<1x8x8x8x16xf32, #tpu.memory_space<vmem>>, vector<1x1x1x8x16xf32>
    %644 = vector.shape_cast %643 : vector<1x1x1x8x16xf32> to vector<8x16xf32>
    %645 = vector.shape_cast %642 : vector<8x16xf32> to vector<1x1x1x8x16xf32>
    tpu.vector_store %arg3[%c0_404, %c6_405, %c7_406, %c0_407, %c0_408], %645 {strides = array<i32>} : memref<1x8x8x8x16xf32, #tpu.memory_space<vmem>>, vector<1x1x1x8x16xf32>,
    %646 = vector.extract_strided_slice %575 {offsets = [7, 0, 0], sizes = [1, 8, 16], strides = [1, 1, 1]} : vector<8x8x16xf32> to vector<1x8x16xf32>
    %647 = vector.shape_cast %646 : vector<1x8x16xf32> to vector<8x16xf32>
    %648 = vector.extract_strided_slice %575 {offsets = [0, 7, 0], sizes = [8, 1, 16], strides = [1, 1, 1]} : vector<8x8x16xf32> to vector<8x1x16xf32>
    %649 = vector.shape_cast %648 : vector<8x1x16xf32> to vector<8x16xf32>
    %650 = arith.addf %647, %649 : vector<8x16xf32>
    %cst_409 = arith.constant 5.000000e-01 : f32
    %651 = vector.broadcast %cst_409 : f32 to vector<8x16xf32>
    %652 = arith.mulf %650, %651 : vector<8x16xf32>
    %c0_410 = arith.constant 0 : index
    %c7_411 = arith.constant 7 : index
    %c7_412 = arith.constant 7 : index
    %c0_413 = arith.constant 0 : index
    %c0_414 = arith.constant 0 : index
    %653 = vector.load %arg3[%c0_410, %c7_411, %c7_412, %c0_413, %c0_414] : memref<1x8x8x8x16xf32, #tpu.memory_space<vmem>>, vector<1x1x1x8x16xf32>
    %654 = vector.shape_cast %653 : vector<1x1x1x8x16xf32> to vector<8x16xf32>
    %655 = vector.shape_cast %652 : vector<8x16xf32> to vector<1x1x1x8x16xf32>
    tpu.vector_store %arg3[%c0_410, %c7_411, %c7_412, %c0_413, %c0_414], %655 {strides = array<i32>} : memref<1x8x8x8x16xf32, #tpu.memory_space<vmem>>, vector<1x1x1x8x16xf32>,
    return
  }
  func.func @transform_0(%arg0: i32, %arg1: i32) -> (i32, i32, i32, i32, i32) {
    %c0_i32 = arith.constant 0 : i32
    %c0_i32_0 = arith.constant 0 : i32
    %c0_i32_1 = arith.constant 0 : i32
    %c0_i32_2 = arith.constant 0 : i32
    return %arg0, %c0_i32, %arg1, %c0_i32_0, %c0_i32_1 : i32, i32, i32, i32, i32
  }
  func.func @transform_1(%arg0: i32, %arg1: i32) -> (i32, i32, i32, i32, i32) {
    %c0_i32 = arith.constant 0 : i32
    %c0_i32_0 = arith.constant 0 : i32
    %c0_i32_1 = arith.constant 0 : i32
    %c0_i32_2 = arith.constant 0 : i32
    return %arg0, %c0_i32, %arg1, %c0_i32_0, %c0_i32_1 : i32, i32, i32, i32, i32
  }
}

</mosaic_0001>

<llo_original>
// kernel: a_call__.2
$region0: #{a_call__.2}
  #allocation0 [shape = 'u32[]', space=smem, size = 0x4, offset = 0x4, fixed_abs, tag = 'smem constant byte address 0x4 - core index']
  #allocation1 [shape = 'u32[144,128]{1,0:T(1,128)}', space=vmem, size = 0x12000, scoped, tag = 'internal scratch']
  %s0 = inlined_call_operand.vmem [shape: f32[1,8,16,8,16], index: 0, kind: input, shape index: {}]
  %s1 = inlined_call_operand.vmem [shape: f32[1,8,16,8,16], index: 1, kind: output, shape index: {}]
  %s2 = sld [smem:[#allocation0]]
  $region109: #{a_call__.2} parent=0
    _
  %s4 = ssub.s32 1, %s2
  %s5 = scalar_select 0, %s4, %s2
  $region1: #{a_call__.2} parent=0
    #allocation2 [shape = 'u8[524288]{0}', space=vmem, size = 0x80000, scoped, tag = 'input window, operand 0']
    #allocation3 [shape = 'u8[524288]{0}', space=vmem, size = 0x80000, scoped, tag = 'output window, operand 0']
    loop: start=0, step=1, limit=4
    $region2: #{a_call__.2} parent=1 // loop_pre_header
      _
    $region3: #{a_call__.2} parent=1 // loop_header
      %s7 = sphi 0, %s11
      %p8 = scmp.ge.s32.totalorder %s7, 4
      %s14 = sphi 0, %s26
      %s15 = sphi 0, %s22
      %s16 = sphi 0, %s14
      %s17 = sphi 0, %s15
      %s18 = sphi 0, %s16
      %s19 = sphi 0, %s17
      %s31 = sphi 0, %s33
      %s34 = sphi 0, %s31
      %s35 = sphi 0, %s34
      %s51 = sphi 0, %s35
      %s59 = sphi 0, %s61
      %s62 = sphi 0, %s59
      %s63 = sphi 0, %s62
      %s79 = sphi 0, %s63
    $region4: #{a_call__.2} parent=1 // loop_header_branch
      %10 = sbr.rel (%p8) target = $region8
    $region5: #{a_call__.2} parent=1 // loop_body
      %s12 = ssub.s32 %s7, 1
      %s13 = ssub.s32 %s7, 2
      %s20 = sadd.s32 1, %s15
      %p21 = scmp.ge.s32.totalorder %s20, 2
      %s22 = scalar_select %p21, 0, %s20
      %s23 = sadd.s32 1, %s14
      %s24 = scalar_select %p21, %s23, %s14
      %p25 = scmp.ge.s32.totalorder %s24, 1
      %s26 = scalar_select %p25, 0, %s24
      %s27 = ssub.s32 %s14, %s26
      %s28 = ssub.s32 %s15, %s22
      %s29 = sor.u32 %s27, %s28
      %p30 = scmp.eq.s32.totalorder %s29, 0
      %s32 = sadd.s32 %s31, 1
      %s33 = scalar_select %p30, %s31, %s32
      %p36 = pneg %p30
      %p37 = scmp.eq.s32.totalorder %s7, 1
      %p38 = por %p36, %p37
      %p39 = scmp.ne.s32.totalorder %s31, %s34
      %p40 = scmp.eq.s32.totalorder %s7, 0
      %p41 = por %p39, %p40
      %p42 = scmp.ne.s32.totalorder %s31, %s34
      %p43 = scmp.eq.s32.totalorder %s12, 1
      %p44 = por %p42, %p43
      %p45 = scmp.ne.s32.totalorder %s34, %s35
      %p46 = scmp.eq.s32.totalorder %s12, 0
      %p47 = por %p45, %p46
      %p48 = scmp.ne.s32.totalorder %s34, %s35
      %p49 = scmp.eq.s32.totalorder %s13, 1
      %p50 = por %p48, %p49
      %p52 = scmp.ne.s32.totalorder %s35, %s51
      %p53 = scmp.eq.s32.totalorder %s13, 0
      %p54 = por %p52, %p53
      %s55 = ssub.s32 %s14, %s26
      %s56 = ssub.s32 %s15, %s22
      %s57 = sor.u32 %s55, %s56
      %p58 = scmp.eq.s32.totalorder %s57, 0
      %s60 = sadd.s32 %s59, 1
      %s61 = scalar_select %p58, %s59, %s60
      %p64 = pneg %p58
      %p65 = scmp.eq.s32.totalorder %s7, 1
      %p66 = por %p64, %p65
      %p67 = scmp.ne.s32.totalorder %s59, %s62
      %p68 = scmp.eq.s32.totalorder %s7, 0
      %p69 = por %p67, %p68
      %p70 = scmp.ne.s32.totalorder %s59, %s62
      %p71 = scmp.eq.s32.totalorder %s12, 1
      %p72 = por %p70, %p71
      %p73 = scmp.ne.s32.totalorder %s62, %s63
      %p74 = scmp.eq.s32.totalorder %s12, 0
      %p75 = por %p73, %p74
      %p76 = scmp.ne.s32.totalorder %s62, %s63
      %p77 = scmp.eq.s32.totalorder %s13, 1
      %p78 = por %p76, %p77
      %p80 = scmp.ne.s32.totalorder %s63, %s79
      %p81 = scmp.eq.s32.totalorder %s13, 0
      %p82 = por %p80, %p81
      %p83 = scmp.le.s32.totalorder 1, %s7
      %p84 = scmp.lt.s32.totalorder %s7, 3
      %p85 = pnand %p83, %p84
      %p86 = pneg %p85
      // Predicated region
      $region9: #{a_call__.2} parent=5 // pred_check
        _
      $region10: #{a_call__.2} parent=5 // pred_check_branch
        %88 = sbr.rel (%p85) target = $region12
      $region11: #{a_call__.2} parent=5 // pred_region
        %s89 = ssub.s32 %s7, 1
      $region12: #{a_call__.2} parent=5 // pred_fallthru
        _
      %p90 = scmp.lt.s32.totalorder %s7, 2
      // Predicated region
      $region13: #{a_call__.2} parent=5 // pred_check
        %p91 = pneg %p90
      $region14: #{a_call__.2} parent=5 // pred_check_branch
        %93 = sbr.rel (%p91) target = $region16
      $region15: #{a_call__.2} parent=5 // pred_region
        // Predicated region
        $region17: #{a_call__.2} parent=15 // pred_check
          %p94 = pneg %p41
        $region18: #{a_call__.2} parent=15 // pred_check_branch
          %96 = sbr.rel (%p94) target = $region20
        $region19: #{a_call__.2} parent=15 // pred_region
          %s97 = sand.u32 %s31, 1
          %s98 = sand.u32 %s31, 1
          %s99 = smul.addr %s98, 512
          %s100 = scalar_lea.vmem [#allocation2], %s99
          %s101 = smul.u32 8, %s15
          %s102 = smul.addr %s14, 128
          %s103 = sadd.s32 %s101, %s102
          %s104 = smul.addr %s103, 8
          %s105 = scalar_lea.vmem %s0, %s104
          // Predicated region
          $region21: #{a_call__.2} parent=19 // pred_check
            _
          $region22: #{a_call__.2} parent=19 // pred_check_branch
            %107 = sbr.rel (0) target = $region24
          $region23: #{a_call__.2} parent=19 // pred_region
            // Predicated region
            $region25: #{a_call__.2} parent=23 // pred_check
              _
            $region26: #{a_call__.2} parent=23 // pred_check_branch
              %109 = sbr.rel (0) target = $region28
            $region27: #{a_call__.2} parent=23 // pred_region
              // Predicated region
              $region40: #{a_call__.2} parent=27 // pred_check
                _
              $region41: #{a_call__.2} parent=27 // pred_check_branch
                %250 = sbr.rel (0) target = $region43
              $region42: #{a_call__.2} parent=27 // pred_region
                loop: start=0, step=1, limit=1
                $region44: #{a_call__.2} parent=42 // loop_pre_header
                  _
                $region45: #{a_call__.2} parent=42 // loop_header
                  %s252 = sphi 0, %s256
                  %p253 = scmp.ge.s32.totalorder %s252, 1
                  %s257 = sphi %s105, %s105
                  %s258 = sphi %s100, %s100
                $region46: #{a_call__.2} parent=42 // loop_header_branch
                  %255 = sbr.rel (%p253) target = $region50
                $region47: #{a_call__.2} parent=42 // loop_body
                  %v259 = vld [vmem:[%s257] sm:$0xff]
                  %260 = vst [vmem:[%s258] sm:$0xff] %v259
                  %v261 = vld [vmem:[%s257 + $0x8] sm:$0xff]
                  %262 = vst [vmem:[%s258 + $0x8] sm:$0xff] %v261
                  %v263 = vld [vmem:[%s257 + $0x10] sm:$0xff]
                  %264 = vst [vmem:[%s258 + $0x10] sm:$0xff] %v263
                  %v265 = vld [vmem:[%s257 + $0x18] sm:$0xff]
                  %266 = vst [vmem:[%s258 + $0x18] sm:$0xff] %v265
                  %v267 = vld [vmem:[%s257 + $0x20] sm:$0xff]
                  %268 = vst [vmem:[%s258 + $0x20] sm:$0xff] %v267
                  %v269 = vld [vmem:[%s257 + $0x28] sm:$0xff]
                  %270 = vst [vmem:[%s258 + $0x28] sm:$0xff] %v269
                  %v271 = vld [vmem:[%s257 + $0x30] sm:$0xff]
                  %272 = vst [vmem:[%s258 + $0x30] sm:$0xff] %v271
                  %v273 = vld [vmem:[%s257 + $0x38] sm:$0xff]
                  %274 = vst [vmem:[%s258 + $0x38] sm:$0xff] %v273
                  %v275 = vld [vmem:[%s257 + $0x80] sm:$0xff]
                  %276 = vst [vmem:[%s258 + $0x40] sm:$0xff] %v275
                  %v277 = vld [vmem:[%s257 + $0x88] sm:$0xff]
                  %278 = vst [vmem:[%s258 + $0x48] sm:$0xff] %v277
                  %v279 = vld [vmem:[%s257 + $0x90] sm:$0xff]
                  %280 = vst [vmem:[%s258 + $0x50] sm:$0xff] %v279
                  %v281 = vld [vmem:[%s257 + $0x98] sm:$0xff]
                  %282 = vst [vmem:[%s258 + $0x58] sm:$0xff] %v281
                  %v283 = vld [vmem:[%s257 + $0xa0] sm:$0xff]
                  %284 = vst [vmem:[%s258 + $0x60] sm:$0xff] %v283
                  %v285 = vld [vmem:[%s257 + $0xa8] sm:$0xff]
                  %286 = vst [vmem:[%s258 + $0x68] sm:$0xff] %v285
                  %v287 = vld [vmem:[%s257 + $0xb0] sm:$0xff]
                  %288 = vst [vmem:[%s258 + $0x70] sm:$0xff] %v287
                  %v289 = vld [vmem:[%s257 + $0xb8] sm:$0xff]
                  %290 = vst [vmem:[%s258 + $0x78] sm:$0xff] %v289
                  %v291 = vld [vmem:[%s257 + $0x100] sm:$0xff]
                  %292 = vst [vmem:[%s258 + $0x80] sm:$0xff] %v291
                  %v293 = vld [vmem:[%s257 + $0x108] sm:$0xff]
                  %294 = vst [vmem:[%s258 + $0x88] sm:$0xff] %v293
                  %v295 = vld [vmem:[%s257 + $0x110] sm:$0xff]
                  %296 = vst [vmem:[%s258 + $0x90] sm:$0xff] %v295
                  %v297 = vld [vmem:[%s257 + $0x118] sm:$0xff]
                  %298 = vst [vmem:[%s258 + $0x98] sm:$0xff] %v297
                  %v299 = vld [vmem:[%s257 + $0x120] sm:$0xff]
                  %300 = vst [vmem:[%s258 + $0xa0] sm:$0xff] %v299
                  %v301 = vld [vmem:[%s257 + $0x128] sm:$0xff]
                  %302 = vst [vmem:[%s258 + $0xa8] sm:$0xff] %v301
                  %v303 = vld [vmem:[%s257 + $0x130] sm:$0xff]
                  %304 = vst [vmem:[%s258 + $0xb0] sm:$0xff] %v303
                  %v305 = vld [vmem:[%s257 + $0x138] sm:$0xff]
                  %306 = vst [vmem:[%s258 + $0xb8] sm:$0xff] %v305
                  %v307 = vld [vmem:[%s257 + $0x180] sm:$0xff]
                  %308 = vst [vmem:[%s258 + $0xc0] sm:$0xff] %v307
                  %v309 = vld [vmem:[%s257 + $0x188] sm:$0xff]
                  %310 = vst [vmem:[%s258 + $0xc8] sm:$0xff] %v309
                  %v311 = vld [vmem:[%s257 + $0x190] sm:$0xff]
                  %312 = vst [vmem:[%s258 + $0xd0] sm:$0xff] %v311
                  %v313 = vld [vmem:[%s257 + $0x198] sm:$0xff]
                  %314 = vst [vmem:[%s258 + $0xd8] sm:$0xff] %v313
                  %v315 = vld [vmem:[%s257 + $0x1a0] sm:$0xff]
                  %316 = vst [vmem:[%s258 + $0xe0] sm:$0xff] %v315
                  %v317 = vld [vmem:[%s257 + $0x1a8] sm:$0xff]
                  %318 = vst [vmem:[%s258 + $0xe8] sm:$0xff] %v317
                  %v319 = vld [vmem:[%s257 + $0x1b0] sm:$0xff]
                  %320 = vst [vmem:[%s258 + $0xf0] sm:$0xff] %v319
                  %v321 = vld [vmem:[%s257 + $0x1b8] sm:$0xff]
                  %322 = vst [vmem:[%s258 + $0xf8] sm:$0xff] %v321
                  %v323 = vld [vmem:[%s257 + $0x200] sm:$0xff]
                  %324 = vst [vmem:[%s258 + $0x100] sm:$0xff] %v323
                  %v325 = vld [vmem:[%s257 + $0x208] sm:$0xff]
                  %326 = vst [vmem:[%s258 + $0x108] sm:$0xff] %v325
                  %v327 = vld [vmem:[%s257 + $0x210] sm:$0xff]
                  %328 = vst [vmem:[%s258 + $0x110] sm:$0xff] %v327
                  %v329 = vld [vmem:[%s257 + $0x218] sm:$0xff]
                  %330 = vst [vmem:[%s258 + $0x118] sm:$0xff] %v329
                  %v331 = vld [vmem:[%s257 + $0x220] sm:$0xff]
                  %332 = vst [vmem:[%s258 + $0x120] sm:$0xff] %v331
                  %v333 = vld [vmem:[%s257 + $0x228] sm:$0xff]
                  %334 = vst [vmem:[%s258 + $0x128] sm:$0xff] %v333
                  %v335 = vld [vmem:[%s257 + $0x230] sm:$0xff]
                  %336 = vst [vmem:[%s258 + $0x130] sm:$0xff] %v335
                  %v337 = vld [vmem:[%s257 + $0x238] sm:$0xff]
                  %338 = vst [vmem:[%s258 + $0x138] sm:$0xff] %v337
                  %v339 = vld [vmem:[%s257 + $0x280] sm:$0xff]
                  %340 = vst [vmem:[%s258 + $0x140] sm:$0xff] %v339
                  %v341 = vld [vmem:[%s257 + $0x288] sm:$0xff]
                  %342 = vst [vmem:[%s258 + $0x148] sm:$0xff] %v341
                  %v343 = vld [vmem:[%s257 + $0x290] sm:$0xff]
                  %344 = vst [vmem:[%s258 + $0x150] sm:$0xff] %v343
                  %v345 = vld [vmem:[%s257 + $0x298] sm:$0xff]
                  %346 = vst [vmem:[%s258 + $0x158] sm:$0xff] %v345
                  %v347 = vld [vmem:[%s257 + $0x2a0] sm:$0xff]
                  %348 = vst [vmem:[%s258 + $0x160] sm:$0xff] %v347
                  %v349 = vld [vmem:[%s257 + $0x2a8] sm:$0xff]
                  %350 = vst [vmem:[%s258 + $0x168] sm:$0xff] %v349
                  %v351 = vld [vmem:[%s257 + $0x2b0] sm:$0xff]
                  %352 = vst [vmem:[%s258 + $0x170] sm:$0xff] %v351
                  %v353 = vld [vmem:[%s257 + $0x2b8] sm:$0xff]
                  %354 = vst [vmem:[%s258 + $0x178] sm:$0xff] %v353
                  %v355 = vld [vmem:[%s257 + $0x300] sm:$0xff]
                  %356 = vst [vmem:[%s258 + $0x180] sm:$0xff] %v355
                  %v357 = vld [vmem:[%s257 + $0x308] sm:$0xff]
                  %358 = vst [vmem:[%s258 + $0x188] sm:$0xff] %v357
                  %v359 = vld [vmem:[%s257 + $0x310] sm:$0xff]
                  %360 = vst [vmem:[%s258 + $0x190] sm:$0xff] %v359
                  %v361 = vld [vmem:[%s257 + $0x318] sm:$0xff]
                  %362 = vst [vmem:[%s258 + $0x198] sm:$0xff] %v361
                  %v363 = vld [vmem:[%s257 + $0x320] sm:$0xff]
                  %364 = vst [vmem:[%s258 + $0x1a0] sm:$0xff] %v363
                  %v365 = vld [vmem:[%s257 + $0x328] sm:$0xff]
                  %366 = vst [vmem:[%s258 + $0x1a8] sm:$0xff] %v365
                  %v367 = vld [vmem:[%s257 + $0x330] sm:$0xff]
                  %368 = vst [vmem:[%s258 + $0x1b0] sm:$0xff] %v367
                  %v369 = vld [vmem:[%s257 + $0x338] sm:$0xff]
                  %370 = vst [vmem:[%s258 + $0x1b8] sm:$0xff] %v369
                  %v371 = vld [vmem:[%s257 + $0x380] sm:$0xff]
                  %372 = vst [vmem:[%s258 + $0x1c0] sm:$0xff] %v371
                  %v373 = vld [vmem:[%s257 + $0x388] sm:$0xff]
                  %374 = vst [vmem:[%s258 + $0x1c8] sm:$0xff] %v373
                  %v375 = vld [vmem:[%s257 + $0x390] sm:$0xff]
                  %376 = vst [vmem:[%s258 + $0x1d0] sm:$0xff] %v375
                  %v377 = vld [vmem:[%s257 + $0x398] sm:$0xff]
                  %378 = vst [vmem:[%s258 + $0x1d8] sm:$0xff] %v377
                  %v379 = vld [vmem:[%s257 + $0x3a0] sm:$0xff]
                  %380 = vst [vmem:[%s258 + $0x1e0] sm:$0xff] %v379
                  %v381 = vld [vmem:[%s257 + $0x3a8] sm:$0xff]
                  %382 = vst [vmem:[%s258 + $0x1e8] sm:$0xff] %v381
                  %v383 = vld [vmem:[%s257 + $0x3b0] sm:$0xff]
                  %384 = vst [vmem:[%s258 + $0x1f0] sm:$0xff] %v383
                  %v385 = vld [vmem:[%s257 + $0x3b8] sm:$0xff]
                  %386 = vst [vmem:[%s258 + $0x1f8] sm:$0xff] %v385
                $region48: #{a_call__.2} parent=42 // loop_footer
                  %s256 = sadd.s32 1, %s252
                $region49: #{a_call__.2} parent=42 // loop_footer_branch
                  %251 = sbr.rel target = $region45
                $region50: #{a_call__.2} parent=42 // loop_exit
                  _
              $region43: #{a_call__.2} parent=27 // pred_fallthru
                _
              // Predicated region
              $region51: #{a_call__.2} parent=27 // pred_check
                _
              $region52: #{a_call__.2} parent=27 // pred_check_branch
                %388 = sbr.rel target = $region54
              $region53: #{a_call__.2} parent=27 // pred_region
                _
              $region54: #{a_call__.2} parent=27 // pred_fallthru
                _
            $region28: #{a_call__.2} parent=23 // pred_fallthru
              _
            // Predicated region
            $region29: #{a_call__.2} parent=23 // pred_check
              _
            $region30: #{a_call__.2} parent=23 // pred_check_branch
              %111 = sbr.rel target = $region32
            $region31: #{a_call__.2} parent=23 // pred_region
              loop: start=0, step=1, limit=1
              $region33: #{a_call__.2} parent=31 // loop_pre_header
                _
              $region34: #{a_call__.2} parent=31 // loop_header
                %s114 = sphi 0, %s118
                %p115 = scmp.ge.s32.totalorder %s114, 1
                %s119 = sphi %s105, %s105
                %s120 = sphi %s100, %s100
              $region35: #{a_call__.2} parent=31 // loop_header_branch
                %117 = sbr.rel (%p115) target = $region39
              $region36: #{a_call__.2} parent=31 // loop_body
                %v121 = vld [vmem:[%s119] sm:$0xff]
                %122 = vst [vmem:[%s120] sm:$0xff] %v121
                %v123 = vld [vmem:[%s119 + $0x8] sm:$0xff]
                %124 = vst [vmem:[%s120 + $0x8] sm:$0xff] %v123
                %v125 = vld [vmem:[%s119 + $0x10] sm:$0xff]
                %126 = vst [vmem:[%s120 + $0x10] sm:$0xff] %v125
                %v127 = vld [vmem:[%s119 + $0x18] sm:$0xff]
                %128 = vst [vmem:[%s120 + $0x18] sm:$0xff] %v127
                %v129 = vld [vmem:[%s119 + $0x20] sm:$0xff]
                %130 = vst [vmem:[%s120 + $0x20] sm:$0xff] %v129
                %v131 = vld [vmem:[%s119 + $0x28] sm:$0xff]
                %132 = vst [vmem:[%s120 + $0x28] sm:$0xff] %v131
                %v133 = vld [vmem:[%s119 + $0x30] sm:$0xff]
                %134 = vst [vmem:[%s120 + $0x30] sm:$0xff] %v133
                %v135 = vld [vmem:[%s119 + $0x38] sm:$0xff]
                %136 = vst [vmem:[%s120 + $0x38] sm:$0xff] %v135
                %v137 = vld [vmem:[%s119 + $0x80] sm:$0xff]
                %138 = vst [vmem:[%s120 + $0x40] sm:$0xff] %v137
                %v139 = vld [vmem:[%s119 + $0x88] sm:$0xff]
                %140 = vst [vmem:[%s120 + $0x48] sm:$0xff] %v139
                %v141 = vld [vmem:[%s119 + $0x90] sm:$0xff]
                %142 = vst [vmem:[%s120 + $0x50] sm:$0xff] %v141
                %v143 = vld [vmem:[%s119 + $0x98] sm:$0xff]
                %144 = vst [vmem:[%s120 + $0x58] sm:$0xff] %v143
                %v145 = vld [vmem:[%s119 + $0xa0] sm:$0xff]
                %146 = vst [vmem:[%s120 + $0x60] sm:$0xff] %v145
                %v147 = vld [vmem:[%s119 + $0xa8] sm:$0xff]
                %148 = vst [vmem:[%s120 + $0x68] sm:$0xff] %v147
                %v149 = vld [vmem:[%s119 + $0xb0] sm:$0xff]
                %150 = vst [vmem:[%s120 + $0x70] sm:$0xff] %v149
                %v151 = vld [vmem:[%s119 + $0xb8] sm:$0xff]
                %152 = vst [vmem:[%s120 + $0x78] sm:$0xff] %v151
                %v153 = vld [vmem:[%s119 + $0x100] sm:$0xff]
                %154 = vst [vmem:[%s120 + $0x80] sm:$0xff] %v153
                %v155 = vld [vmem:[%s119 + $0x108] sm:$0xff]
                %156 = vst [vmem:[%s120 + $0x88] sm:$0xff] %v155
                %v157 = vld [vmem:[%s119 + $0x110] sm:$0xff]
                %158 = vst [vmem:[%s120 + $0x90] sm:$0xff] %v157
                %v159 = vld [vmem:[%s119 + $0x118] sm:$0xff]
                %160 = vst [vmem:[%s120 + $0x98] sm:$0xff] %v159
                %v161 = vld [vmem:[%s119 + $0x120] sm:$0xff]
                %162 = vst [vmem:[%s120 + $0xa0] sm:$0xff] %v161
                %v163 = vld [vmem:[%s119 + $0x128] sm:$0xff]
                %164 = vst [vmem:[%s120 + $0xa8] sm:$0xff] %v163
                %v165 = vld [vmem:[%s119 + $0x130] sm:$0xff]
                %166 = vst [vmem:[%s120 + $0xb0] sm:$0xff] %v165
                %v167 = vld [vmem:[%s119 + $0x138] sm:$0xff]
                %168 = vst [vmem:[%s120 + $0xb8] sm:$0xff] %v167
                %v169 = vld [vmem:[%s119 + $0x180] sm:$0xff]
                %170 = vst [vmem:[%s120 + $0xc0] sm:$0xff] %v169
                %v171 = vld [vmem:[%s119 + $0x188] sm:$0xff]
                %172 = vst [vmem:[%s120 + $0xc8] sm:$0xff] %v171
                %v173 = vld [vmem:[%s119 + $0x190] sm:$0xff]
                %174 = vst [vmem:[%s120 + $0xd0] sm:$0xff] %v173
                %v175 = vld [vmem:[%s119 + $0x198] sm:$0xff]
                %176 = vst [vmem:[%s120 + $0xd8] sm:$0xff] %v175
                %v177 = vld [vmem:[%s119 + $0x1a0] sm:$0xff]
                %178 = vst [vmem:[%s120 + $0xe0] sm:$0xff] %v177
                %v179 = vld [vmem:[%s119 + $0x1a8] sm:$0xff]
                %180 = vst [vmem:[%s120 + $0xe8] sm:$0xff] %v179
                %v181 = vld [vmem:[%s119 + $0x1b0] sm:$0xff]
                %182 = vst [vmem:[%s120 + $0xf0] sm:$0xff] %v181
                %v183 = vld [vmem:[%s119 + $0x1b8] sm:$0xff]
                %184 = vst [vmem:[%s120 + $0xf8] sm:$0xff] %v183
                %v185 = vld [vmem:[%s119 + $0x200] sm:$0xff]
                %186 = vst [vmem:[%s120 + $0x100] sm:$0xff] %v185
                %v187 = vld [vmem:[%s119 + $0x208] sm:$0xff]
                %188 = vst [vmem:[%s120 + $0x108] sm:$0xff] %v187
                %v189 = vld [vmem:[%s119 + $0x210] sm:$0xff]
                %190 = vst [vmem:[%s120 + $0x110] sm:$0xff] %v189
                %v191 = vld [vmem:[%s119 + $0x218] sm:$0xff]
                %192 = vst [vmem:[%s120 + $0x118] sm:$0xff] %v191
                %v193 = vld [vmem:[%s119 + $0x220] sm:$0xff]
                %194 = vst [vmem:[%s120 + $0x120] sm:$0xff] %v193
                %v195 = vld [vmem:[%s119 + $0x228] sm:$0xff]
                %196 = vst [vmem:[%s120 + $0x128] sm:$0xff] %v195
                %v197 = vld [vmem:[%s119 + $0x230] sm:$0xff]
                %198 = vst [vmem:[%s120 + $0x130] sm:$0xff] %v197
                %v199 = vld [vmem:[%s119 + $0x238] sm:$0xff]
                %200 = vst [vmem:[%s120 + $0x138] sm:$0xff] %v199
                %v201 = vld [vmem:[%s119 + $0x280] sm:$0xff]
                %202 = vst [vmem:[%s120 + $0x140] sm:$0xff] %v201
                %v203 = vld [vmem:[%s119 + $0x288] sm:$0xff]
                %204 = vst [vmem:[%s120 + $0x148] sm:$0xff] %v203
                %v205 = vld [vmem:[%s119 + $0x290] sm:$0xff]
                %206 = vst [vmem:[%s120 + $0x150] sm:$0xff] %v205
                %v207 = vld [vmem:[%s119 + $0x298] sm:$0xff]
                %208 = vst [vmem:[%s120 + $0x158] sm:$0xff] %v207
                %v209 = vld [vmem:[%s119 + $0x2a0] sm:$0xff]
                %210 = vst [vmem:[%s120 + $0x160] sm:$0xff] %v209
                %v211 = vld [vmem:[%s119 + $0x2a8] sm:$0xff]
                %212 = vst [vmem:[%s120 + $0x168] sm:$0xff] %v211
                %v213 = vld [vmem:[%s119 + $0x2b0] sm:$0xff]
                %214 = vst [vmem:[%s120 + $0x170] sm:$0xff] %v213
                %v215 = vld [vmem:[%s119 + $0x2b8] sm:$0xff]
                %216 = vst [vmem:[%s120 + $0x178] sm:$0xff] %v215
                %v217 = vld [vmem:[%s119 + $0x300] sm:$0xff]
                %218 = vst [vmem:[%s120 + $0x180] sm:$0xff] %v217
                %v219 = vld [vmem:[%s119 + $0x308] sm:$0xff]
                %220 = vst [vmem:[%s120 + $0x188] sm:$0xff] %v219
                %v221 = vld [vmem:[%s119 + $0x310] sm:$0xff]
                %222 = vst [vmem:[%s120 + $0x190] sm:$0xff] %v221
                %v223 = vld [vmem:[%s119 + $0x318] sm:$0xff]
                %224 = vst [vmem:[%s120 + $0x198] sm:$0xff] %v223
                %v225 = vld [vmem:[%s119 + $0x320] sm:$0xff]
                %226 = vst [vmem:[%s120 + $0x1a0] sm:$0xff] %v225
                %v227 = vld [vmem:[%s119 + $0x328] sm:$0xff]
                %228 = vst [vmem:[%s120 + $0x1a8] sm:$0xff] %v227
                %v229 = vld [vmem:[%s119 + $0x330] sm:$0xff]
                %230 = vst [vmem:[%s120 + $0x1b0] sm:$0xff] %v229
                %v231 = vld [vmem:[%s119 + $0x338] sm:$0xff]
                %232 = vst [vmem:[%s120 + $0x1b8] sm:$0xff] %v231
                %v233 = vld [vmem:[%s119 + $0x380] sm:$0xff]
                %234 = vst [vmem:[%s120 + $0x1c0] sm:$0xff] %v233
                %v235 = vld [vmem:[%s119 + $0x388] sm:$0xff]
                %236 = vst [vmem:[%s120 + $0x1c8] sm:$0xff] %v235
                %v237 = vld [vmem:[%s119 + $0x390] sm:$0xff]
                %238 = vst [vmem:[%s120 + $0x1d0] sm:$0xff] %v237
                %v239 = vld [vmem:[%s119 + $0x398] sm:$0xff]
                %240 = vst [vmem:[%s120 + $0x1d8] sm:$0xff] %v239
                %v241 = vld [vmem:[%s119 + $0x3a0] sm:$0xff]
                %242 = vst [vmem:[%s120 + $0x1e0] sm:$0xff] %v241
                %v243 = vld [vmem:[%s119 + $0x3a8] sm:$0xff]
                %244 = vst [vmem:[%s120 + $0x1e8] sm:$0xff] %v243
                %v245 = vld [vmem:[%s119 + $0x3b0] sm:$0xff]
                %246 = vst [vmem:[%s120 + $0x1f0] sm:$0xff] %v245
                %v247 = vld [vmem:[%s119 + $0x3b8] sm:$0xff]
                %248 = vst [vmem:[%s120 + $0x1f8] sm:$0xff] %v247
              $region37: #{a_call__.2} parent=31 // loop_footer
                %s118 = sadd.s32 1, %s114
              $region38: #{a_call__.2} parent=31 // loop_footer_branch
                %113 = sbr.rel target = $region34
              $region39: #{a_call__.2} parent=31 // loop_exit
                _
            $region32: #{a_call__.2} parent=23 // pred_fallthru
              _
          $region24: #{a_call__.2} parent=19 // pred_fallthru
            _
          %389 = vnop
        $region20: #{a_call__.2} parent=15 // pred_fallthru
          _
      $region16: #{a_call__.2} parent=5 // pred_fallthru
        _
      %p390 = scmp.le.s32.totalorder 1, %s7
      %p391 = scmp.lt.s32.totalorder %s7, 3
      %p392 = pnand %p390, %p391
      %p393 = pneg %p392
      // Predicated region
      $region55: #{a_call__.2} parent=5 // pred_check
        _
      $region56: #{a_call__.2} parent=5 // pred_check_branch
        %395 = sbr.rel (%p392) target = $region58
      $region57: #{a_call__.2} parent=5 // pred_region
        %s396 = ssub.s32 %s7, 1
        %s397 = sand.u32 %s34, 1
        %s398 = sand.u32 %s34, 1
        %s399 = smul.addr %s398, 512
        %s400 = scalar_lea.vmem [#allocation2], %s399
        // Predicated region
        $region59: #{a_call__.2} parent=57 // pred_check
          %p401 = pneg %p47
        $region60: #{a_call__.2} parent=57 // pred_check_branch
          %403 = sbr.rel (%p401) target = $region62
        $region61: #{a_call__.2} parent=57 // pred_region
          _
        $region62: #{a_call__.2} parent=57 // pred_fallthru
          _
        %s404 = sand.u32 %s34, 1
        %s405 = sand.u32 %s34, 1
        %s406 = smul.addr %s405, 512
        %s407 = scalar_lea.vmem [#allocation2], %s406
        %p408 = pneg %p47
        %p409 = pneg %p44
        %p410 = pneg %p75
        %p411 = pneg %p72
        %s412 = sand.u32 %s62, 1
        %s413 = sand.u32 %s62, 1
        %s414 = smul.addr %s413, 512
        %s415 = scalar_lea.vmem [#allocation3], %s414
        %s416 = smul.u32 8, %s17
        %s417 = smul.u32 8, %s17
        %v418 = vld [vmem:[%s400] sm:$0xff]
        %v419 = vld [vmem:[%s400 + $0x40] sm:$0xff]
        %v420 = vld [vmem:[%s400 + $0x80] sm:$0xff]
        %v421 = vld [vmem:[%s400 + $0xc0] sm:$0xff]
        %v422 = vld [vmem:[%s400 + $0x100] sm:$0xff]
        %v423 = vld [vmem:[%s400 + $0x140] sm:$0xff]
        %v424 = vld [vmem:[%s400 + $0x180] sm:$0xff]
        %v425 = vld [vmem:[%s400 + $0x1c0] sm:$0xff]
        %v434 = vrot.slane %v419, 7
        %vm435 = vcmask 1041409
        %v436 = vsel %vm435, %v434, %v418
        %v437 = vrot.slane %v420, 6
        %vm438 = vcmask 1042434
        %v439 = vsel %vm438, %v437, %v436
        %v440 = vrot.slane %v421, 5
        %vm441 = vcmask 1043459
        %v442 = vsel %vm441, %v440, %v439
        %v443 = vrot.slane %v422, 4
        %vm444 = vcmask 1044484
        %v445 = vsel %vm444, %v443, %v442
        %v446 = vrot.slane %v423, 3
        %vm447 = vcmask 1045509
        %v448 = vsel %vm447, %v446, %v445
        %v449 = vrot.slane %v424, 2
        %vm450 = vcmask 1046534
        %v451 = vsel %vm450, %v449, %v448
        %v452 = vrot.slane %v425, 1
        %vm453 = vcmask 1047559
        %v454 = vsel %vm453, %v452, %v451
        %v456 = vadd.f32 %v418, %v454
        %v457 = vmul.f32 %v456, 0.5
        %vm458 = vcmask 130048
        %459 = vst.msk [vmem:[%s415] sm:$0xff] %vm458, %v457
        %v460 = vrot.slane %v418, 1
        %v461 = vsel %vm435, %v419, %v460
        %v462 = vrot.slane %v420, 7
        %v463 = vsel %vm438, %v462, %v461
        %v464 = vrot.slane %v421, 6
        %v465 = vsel %vm441, %v464, %v463
        %v466 = vrot.slane %v422, 5
        %v467 = vsel %vm444, %v466, %v465
        %v468 = vrot.slane %v423, 4
        %v469 = vsel %vm447, %v468, %v467
        %v470 = vrot.slane %v424, 3
        %v471 = vsel %vm450, %v470, %v469
        %v472 = vrot.slane %v425, 2
        %v473 = vsel %vm453, %v472, %v471
        %v475 = vadd.f32 %v419, %v473
        %v476 = vmul.f32 %v475, 0.5
        %s477 = scalar_lea.vmem %s415, 64 [#allocation3]
        %478 = vst.msk [vmem:[%s477] sm:$0xff] %vm458, %v476
        %v479 = vrot.slane %v418, 2
        %v480 = vrot.slane %v419, 1
        %v481 = vsel %vm435, %v480, %v479
        %v482 = vsel %vm438, %v420, %v481
        %v483 = vrot.slane %v421, 7
        %v484 = vsel %vm441, %v483, %v482
        %v485 = vrot.slane %v422, 6
        %v486 = vsel %vm444, %v485, %v484
        %v487 = vrot.slane %v423, 5
        %v488 = vsel %vm447, %v487, %v486
        %v489 = vrot.slane %v424, 4
        %v490 = vsel %vm450, %v489, %v488
        %v491 = vrot.slane %v425, 3
        %v492 = vsel %vm453, %v491, %v490
        %v494 = vadd.f32 %v420, %v492
        %v495 = vmul.f32 %v494, 0.5
        %s496 = scalar_lea.vmem %s415, 128 [#allocation3]
        %497 = vst.msk [vmem:[%s496] sm:$0xff] %vm458, %v495
        %v498 = vrot.slane %v418, 3
        %v499 = vrot.slane %v419, 2
        %v500 = vsel %vm435, %v499, %v498
        %v501 = vrot.slane %v420, 1
        %v502 = vsel %vm438, %v501, %v500
        %v503 = vsel %vm441, %v421, %v502
        %v504 = vrot.slane %v422, 7
        %v505 = vsel %vm444, %v504, %v503
        %v506 = vrot.slane %v423, 6
        %v507 = vsel %vm447, %v506, %v505
        %v508 = vrot.slane %v424, 5
        %v509 = vsel %vm450, %v508, %v507
        %v510 = vrot.slane %v425, 4
        %v511 = vsel %vm453, %v510, %v509
        %v513 = vadd.f32 %v421, %v511
        %v514 = vmul.f32 %v513, 0.5
        %s515 = scalar_lea.vmem %s415, 192 [#allocation3]
        %516 = vst.msk [vmem:[%s515] sm:$0xff] %vm458, %v514
        %v517 = vrot.slane %v418, 4
        %v518 = vrot.slane %v419, 3
        %v519 = vsel %vm435, %v518, %v517
        %v520 = vrot.slane %v420, 2
        %v521 = vsel %vm438, %v520, %v519
        %v522 = vrot.slane %v421, 1
        %v523 = vsel %vm441, %v522, %v521
        %v524 = vsel %vm444, %v422, %v523
        %v525 = vrot.slane %v423, 7
        %v526 = vsel %vm447, %v525, %v524
        %v527 = vrot.slane %v424, 6
        %v528 = vsel %vm450, %v527, %v526
        %v529 = vrot.slane %v425, 5
        %v530 = vsel %vm453, %v529, %v528
        %v532 = vadd.f32 %v422, %v530
        %v533 = vmul.f32 %v532, 0.5
        %s534 = scalar_lea.vmem %s415, 256 [#allocation3]
        %535 = vst.msk [vmem:[%s534] sm:$0xff] %vm458, %v533
        %v536 = vrot.slane %v418, 5
        %v537 = vrot.slane %v419, 4
        %v538 = vsel %vm435, %v537, %v536
        %v539 = vrot.slane %v420, 3
        %v540 = vsel %vm438, %v539, %v538
        %v541 = vrot.slane %v421, 2
        %v542 = vsel %vm441, %v541, %v540
        %v543 = vrot.slane %v422, 1
        %v544 = vsel %vm444, %v543, %v542
        %v545 = vsel %vm447, %v423, %v544
        %v546 = vrot.slane %v424, 7
        %v547 = vsel %vm450, %v546, %v545
        %v548 = vrot.slane %v425, 6
        %v549 = vsel %vm453, %v548, %v547
        %v551 = vadd.f32 %v423, %v549
        %v552 = vmul.f32 %v551, 0.5
        %s553 = scalar_lea.vmem %s415, 320 [#allocation3]
        %554 = vst.msk [vmem:[%s553] sm:$0xff] %vm458, %v552
        %v555 = vrot.slane %v418, 6
        %v556 = vrot.slane %v419, 5
        %v557 = vsel %vm435, %v556, %v555
        %v558 = vrot.slane %v420, 4
        %v559 = vsel %vm438, %v558, %v557
        %v560 = vrot.slane %v421, 3
        %v561 = vsel %vm441, %v560, %v559
        %v562 = vrot.slane %v422, 2
        %v563 = vsel %vm444, %v562, %v561
        %v564 = vrot.slane %v423, 1
        %v565 = vsel %vm447, %v564, %v563
        %v566 = vsel %vm450, %v424, %v565
        %v567 = vrot.slane %v425, 7
        %v568 = vsel %vm453, %v567, %v566
        %v570 = vadd.f32 %v424, %v568
        %v571 = vmul.f32 %v570, 0.5
        %s572 = scalar_lea.vmem %s415, 384 [#allocation3]
        %573 = vst.msk [vmem:[%s572] sm:$0xff] %vm458, %v571
        %v574 = vrot.slane %v418, 7
        %v575 = vrot.slane %v419, 6
        %v576 = vsel %vm435, %v575, %v574
        %v577 = vrot.slane %v420, 5
        %v578 = vsel %vm438, %v577, %v576
        %v579 = vrot.slane %v421, 4
        %v580 = vsel %vm441, %v579, %v578
        %v581 = vrot.slane %v422, 3
        %v582 = vsel %vm444, %v581, %v580
        %v583 = vrot.slane %v423, 2
        %v584 = vsel %vm447, %v583, %v582
        %v585 = vrot.slane %v424, 1
        %v586 = vsel %vm450, %v585, %v584
        %v587 = vsel %vm453, %v425, %v586
        %v589 = vadd.f32 %v425, %v587
        %v590 = vmul.f32 %v589, 0.5
        %s591 = scalar_lea.vmem %s415, 448 [#allocation3]
        %592 = vst.msk [vmem:[%s591] sm:$0xff] %vm458, %v590
        %s593 = scalar_lea.vmem %s400, 8 [#allocation2]
        %v594 = vld [vmem:[%s593] sm:$0xff]
        %v595 = vld [vmem:[%s593 + $0x40] sm:$0xff]
        %v596 = vld [vmem:[%s593 + $0x80] sm:$0xff]
        %v597 = vld [vmem:[%s593 + $0xc0] sm:$0xff]
        %v598 = vld [vmem:[%s593 + $0x100] sm:$0xff]
        %v599 = vld [vmem:[%s593 + $0x140] sm:$0xff]
        %v600 = vld [vmem:[%s593 + $0x180] sm:$0xff]
        %v601 = vld [vmem:[%s593 + $0x1c0] sm:$0xff]
        %v610 = vrot.slane %v595, 7
        %v611 = vsel %vm435, %v610, %v594
        %v612 = vrot.slane %v596, 6
        %v613 = vsel %vm438, %v612, %v611
        %v614 = vrot.slane %v597, 5
        %v615 = vsel %vm441, %v614, %v613
        %v616 = vrot.slane %v598, 4
        %v617 = vsel %vm444, %v616, %v615
        %v618 = vrot.slane %v599, 3
        %v619 = vsel %vm447, %v618, %v617
        %v620 = vrot.slane %v600, 2
        %v621 = vsel %vm450, %v620, %v619
        %v622 = vrot.slane %v601, 1
        %v623 = vsel %vm453, %v622, %v621
        %v625 = vadd.f32 %v594, %v623
        %v626 = vmul.f32 %v625, 0.5
        %s627 = scalar_lea.vmem %s415, 8 [#allocation3]
        %628 = vst.msk [vmem:[%s627] sm:$0xff] %vm458, %v626
        %v629 = vrot.slane %v594, 1
        %v630 = vsel %vm435, %v595, %v629
        %v631 = vrot.slane %v596, 7
        %v632 = vsel %vm438, %v631, %v630
        %v633 = vrot.slane %v597, 6
        %v634 = vsel %vm441, %v633, %v632
        %v635 = vrot.slane %v598, 5
        %v636 = vsel %vm444, %v635, %v634
        %v637 = vrot.slane %v599, 4
        %v638 = vsel %vm447, %v637, %v636
        %v639 = vrot.slane %v600, 3
        %v640 = vsel %vm450, %v639, %v638
        %v641 = vrot.slane %v601, 2
        %v642 = vsel %vm453, %v641, %v640
        %v644 = vadd.f32 %v595, %v642
        %v645 = vmul.f32 %v644, 0.5
        %s646 = scalar_lea.vmem %s415, 72 [#allocation3]
        %647 = vst.msk [vmem:[%s646] sm:$0xff] %vm458, %v645
        %v648 = vrot.slane %v594, 2
        %v649 = vrot.slane %v595, 1
        %v650 = vsel %vm435, %v649, %v648
        %v651 = vsel %vm438, %v596, %v650
        %v652 = vrot.slane %v597, 7
        %v653 = vsel %vm441, %v652, %v651
        %v654 = vrot.slane %v598, 6
        %v655 = vsel %vm444, %v654, %v653
        %v656 = vrot.slane %v599, 5
        %v657 = vsel %vm447, %v656, %v655
        %v658 = vrot.slane %v600, 4
        %v659 = vsel %vm450, %v658, %v657
        %v660 = vrot.slane %v601, 3
        %v661 = vsel %vm453, %v660, %v659
        %v663 = vadd.f32 %v596, %v661
        %v664 = vmul.f32 %v663, 0.5
        %s665 = scalar_lea.vmem %s415, 136 [#allocation3]
        %666 = vst.msk [vmem:[%s665] sm:$0xff] %vm458, %v664
        %v667 = vrot.slane %v594, 3
        %v668 = vrot.slane %v595, 2
        %v669 = vsel %vm435, %v668, %v667
        %v670 = vrot.slane %v596, 1
        %v671 = vsel %vm438, %v670, %v669
        %v672 = vsel %vm441, %v597, %v671
        %v673 = vrot.slane %v598, 7
        %v674 = vsel %vm444, %v673, %v672
        %v675 = vrot.slane %v599, 6
        %v676 = vsel %vm447, %v675, %v674
        %v677 = vrot.slane %v600, 5
        %v678 = vsel %vm450, %v677, %v676
        %v679 = vrot.slane %v601, 4
        %v680 = vsel %vm453, %v679, %v678
        %v682 = vadd.f32 %v597, %v680
        %v683 = vmul.f32 %v682, 0.5
        %s684 = scalar_lea.vmem %s415, 200 [#allocation3]
        %685 = vst.msk [vmem:[%s684] sm:$0xff] %vm458, %v683
        %v686 = vrot.slane %v594, 4
        %v687 = vrot.slane %v595, 3
        %v688 = vsel %vm435, %v687, %v686
        %v689 = vrot.slane %v596, 2
        %v690 = vsel %vm438, %v689, %v688
        %v691 = vrot.slane %v597, 1
        %v692 = vsel %vm441, %v691, %v690
        %v693 = vsel %vm444, %v598, %v692
        %v694 = vrot.slane %v599, 7
        %v695 = vsel %vm447, %v694, %v693
        %v696 = vrot.slane %v600, 6
        %v697 = vsel %vm450, %v696, %v695
        %v698 = vrot.slane %v601, 5
        %v699 = vsel %vm453, %v698, %v697
        %v701 = vadd.f32 %v598, %v699
        %v702 = vmul.f32 %v701, 0.5
        %s703 = scalar_lea.vmem %s415, 264 [#allocation3]
        %704 = vst.msk [vmem:[%s703] sm:$0xff] %vm458, %v702
        %v705 = vrot.slane %v594, 5
        %v706 = vrot.slane %v595, 4
        %v707 = vsel %vm435, %v706, %v705
        %v708 = vrot.slane %v596, 3
        %v709 = vsel %vm438, %v708, %v707
        %v710 = vrot.slane %v597, 2
        %v711 = vsel %vm441, %v710, %v709
        %v712 = vrot.slane %v598, 1
        %v713 = vsel %vm444, %v712, %v711
        %v714 = vsel %vm447, %v599, %v713
        %v715 = vrot.slane %v600, 7
        %v716 = vsel %vm450, %v715, %v714
        %v717 = vrot.slane %v601, 6
        %v718 = vsel %vm453, %v717, %v716
        %v720 = vadd.f32 %v599, %v718
        %v721 = vmul.f32 %v720, 0.5
        %s722 = scalar_lea.vmem %s415, 328 [#allocation3]
        %723 = vst.msk [vmem:[%s722] sm:$0xff] %vm458, %v721
        %v724 = vrot.slane %v594, 6
        %v725 = vrot.slane %v595, 5
        %v726 = vsel %vm435, %v725, %v724
        %v727 = vrot.slane %v596, 4
        %v728 = vsel %vm438, %v727, %v726
        %v729 = vrot.slane %v597, 3
        %v730 = vsel %vm441, %v729, %v728
        %v731 = vrot.slane %v598, 2
        %v732 = vsel %vm444, %v731, %v730
        %v733 = vrot.slane %v599, 1
        %v734 = vsel %vm447, %v733, %v732
        %v735 = vsel %vm450, %v600, %v734
        %v736 = vrot.slane %v601, 7
        %v737 = vsel %vm453, %v736, %v735
        %v739 = vadd.f32 %v600, %v737
        %v740 = vmul.f32 %v739, 0.5
        %s741 = scalar_lea.vmem %s415, 392 [#allocation3]
        %742 = vst.msk [vmem:[%s741] sm:$0xff] %vm458, %v740
        %v743 = vrot.slane %v594, 7
        %v744 = vrot.slane %v595, 6
        %v745 = vsel %vm435, %v744, %v743
        %v746 = vrot.slane %v596, 5
        %v747 = vsel %vm438, %v746, %v745
        %v748 = vrot.slane %v597, 4
        %v749 = vsel %vm441, %v748, %v747
        %v750 = vrot.slane %v598, 3
        %v751 = vsel %vm444, %v750, %v749
        %v752 = vrot.slane %v599, 2
        %v753 = vsel %vm447, %v752, %v751
        %v754 = vrot.slane %v600, 1
        %v755 = vsel %vm450, %v754, %v753
        %v756 = vsel %vm453, %v601, %v755
        %v758 = vadd.f32 %v601, %v756
        %v759 = vmul.f32 %v758, 0.5
        %s760 = scalar_lea.vmem %s415, 456 [#allocation3]
        %761 = vst.msk [vmem:[%s760] sm:$0xff] %vm458, %v759
        %s762 = scalar_lea.vmem %s400, 16 [#allocation2]
        %v763 = vld [vmem:[%s762] sm:$0xff]
        %v764 = vld [vmem:[%s762 + $0x40] sm:$0xff]
        %v765 = vld [vmem:[%s762 + $0x80] sm:$0xff]
        %v766 = vld [vmem:[%s762 + $0xc0] sm:$0xff]
        %v767 = vld [vmem:[%s762 + $0x100] sm:$0xff]
        %v768 = vld [vmem:[%s762 + $0x140] sm:$0xff]
        %v769 = vld [vmem:[%s762 + $0x180] sm:$0xff]
        %v770 = vld [vmem:[%s762 + $0x1c0] sm:$0xff]
        %v779 = vrot.slane %v764, 7
        %v780 = vsel %vm435, %v779, %v763
        %v781 = vrot.slane %v765, 6
        %v782 = vsel %vm438, %v781, %v780
        %v783 = vrot.slane %v766, 5
        %v784 = vsel %vm441, %v783, %v782
        %v785 = vrot.slane %v767, 4
        %v786 = vsel %vm444, %v785, %v784
        %v787 = vrot.slane %v768, 3
        %v788 = vsel %vm447, %v787, %v786
        %v789 = vrot.slane %v769, 2
        %v790 = vsel %vm450, %v789, %v788
        %v791 = vrot.slane %v770, 1
        %v792 = vsel %vm453, %v791, %v790
        %v794 = vadd.f32 %v763, %v792
        %v795 = vmul.f32 %v794, 0.5
        %s796 = scalar_lea.vmem %s415, 16 [#allocation3]
        %797 = vst.msk [vmem:[%s796] sm:$0xff] %vm458, %v795
        %v798 = vrot.slane %v763, 1
        %v799 = vsel %vm435, %v764, %v798
        %v800 = vrot.slane %v765, 7
        %v801 = vsel %vm438, %v800, %v799
        %v802 = vrot.slane %v766, 6
        %v803 = vsel %vm441, %v802, %v801
        %v804 = vrot.slane %v767, 5
        %v805 = vsel %vm444, %v804, %v803
        %v806 = vrot.slane %v768, 4
        %v807 = vsel %vm447, %v806, %v805
        %v808 = vrot.slane %v769, 3
        %v809 = vsel %vm450, %v808, %v807
        %v810 = vrot.slane %v770, 2
        %v811 = vsel %vm453, %v810, %v809
        %v813 = vadd.f32 %v764, %v811
        %v814 = vmul.f32 %v813, 0.5
        %s815 = scalar_lea.vmem %s415, 80 [#allocation3]
        %816 = vst.msk [vmem:[%s815] sm:$0xff] %vm458, %v814
        %v817 = vrot.slane %v763, 2
        %v818 = vrot.slane %v764, 1
        %v819 = vsel %vm435, %v818, %v817
        %v820 = vsel %vm438, %v765, %v819
        %v821 = vrot.slane %v766, 7
        %v822 = vsel %vm441, %v821, %v820
        %v823 = vrot.slane %v767, 6
        %v824 = vsel %vm444, %v823, %v822
        %v825 = vrot.slane %v768, 5
        %v826 = vsel %vm447, %v825, %v824
        %v827 = vrot.slane %v769, 4
        %v828 = vsel %vm450, %v827, %v826
        %v829 = vrot.slane %v770, 3
        %v830 = vsel %vm453, %v829, %v828
        %v832 = vadd.f32 %v765, %v830
        %v833 = vmul.f32 %v832, 0.5
        %s834 = scalar_lea.vmem %s415, 144 [#allocation3]
        %835 = vst.msk [vmem:[%s834] sm:$0xff] %vm458, %v833
        %v836 = vrot.slane %v763, 3
        %v837 = vrot.slane %v764, 2
        %v838 = vsel %vm435, %v837, %v836
        %v839 = vrot.slane %v765, 1
        %v840 = vsel %vm438, %v839, %v838
        %v841 = vsel %vm441, %v766, %v840
        %v842 = vrot.slane %v767, 7
        %v843 = vsel %vm444, %v842, %v841
        %v844 = vrot.slane %v768, 6
        %v845 = vsel %vm447, %v844, %v843
        %v846 = vrot.slane %v769, 5
        %v847 = vsel %vm450, %v846, %v845
        %v848 = vrot.slane %v770, 4
        %v849 = vsel %vm453, %v848, %v847
        %v851 = vadd.f32 %v766, %v849
        %v852 = vmul.f32 %v851, 0.5
        %s853 = scalar_lea.vmem %s415, 208 [#allocation3]
        %854 = vst.msk [vmem:[%s853] sm:$0xff] %vm458, %v852
        %v855 = vrot.slane %v763, 4
        %v856 = vrot.slane %v764, 3
        %v857 = vsel %vm435, %v856, %v855
        %v858 = vrot.slane %v765, 2
        %v859 = vsel %vm438, %v858, %v857
        %v860 = vrot.slane %v766, 1
        %v861 = vsel %vm441, %v860, %v859
        %v862 = vsel %vm444, %v767, %v861
        %v863 = vrot.slane %v768, 7
        %v864 = vsel %vm447, %v863, %v862
        %v865 = vrot.slane %v769, 6
        %v866 = vsel %vm450, %v865, %v864
        %v867 = vrot.slane %v770, 5
        %v868 = vsel %vm453, %v867, %v866
        %v870 = vadd.f32 %v767, %v868
        %v871 = vmul.f32 %v870, 0.5
        %s872 = scalar_lea.vmem %s415, 272 [#allocation3]
        %873 = vst.msk [vmem:[%s872] sm:$0xff] %vm458, %v871
        %v874 = vrot.slane %v763, 5
        %v875 = vrot.slane %v764, 4
        %v876 = vsel %vm435, %v875, %v874
        %v877 = vrot.slane %v765, 3
        %v878 = vsel %vm438, %v877, %v876
        %v879 = vrot.slane %v766, 2
        %v880 = vsel %vm441, %v879, %v878
        %v881 = vrot.slane %v767, 1
        %v882 = vsel %vm444, %v881, %v880
        %v883 = vsel %vm447, %v768, %v882
        %v884 = vrot.slane %v769, 7
        %v885 = vsel %vm450, %v884, %v883
        %v886 = vrot.slane %v770, 6
        %v887 = vsel %vm453, %v886, %v885
        %v889 = vadd.f32 %v768, %v887
        %v890 = vmul.f32 %v889, 0.5
        %s891 = scalar_lea.vmem %s415, 336 [#allocation3]
        %892 = vst.msk [vmem:[%s891] sm:$0xff] %vm458, %v890
        %v893 = vrot.slane %v763, 6
        %v894 = vrot.slane %v764, 5
        %v895 = vsel %vm435, %v894, %v893
        %v896 = vrot.slane %v765, 4
        %v897 = vsel %vm438, %v896, %v895
        %v898 = vrot.slane %v766, 3
        %v899 = vsel %vm441, %v898, %v897
        %v900 = vrot.slane %v767, 2
        %v901 = vsel %vm444, %v900, %v899
        %v902 = vrot.slane %v768, 1
        %v903 = vsel %vm447, %v902, %v901
        %v904 = vsel %vm450, %v769, %v903
        %v905 = vrot.slane %v770, 7
        %v906 = vsel %vm453, %v905, %v904
        %v908 = vadd.f32 %v769, %v906
        %v909 = vmul.f32 %v908, 0.5
        %s910 = scalar_lea.vmem %s415, 400 [#allocation3]
        %911 = vst.msk [vmem:[%s910] sm:$0xff] %vm458, %v909
        %v912 = vrot.slane %v763, 7
        %v913 = vrot.slane %v764, 6
        %v914 = vsel %vm435, %v913, %v912
        %v915 = vrot.slane %v765, 5
        %v916 = vsel %vm438, %v915, %v914
        %v917 = vrot.slane %v766, 4
        %v918 = vsel %vm441, %v917, %v916
        %v919 = vrot.slane %v767, 3
        %v920 = vsel %vm444, %v919, %v918
        %v921 = vrot.slane %v768, 2
        %v922 = vsel %vm447, %v921, %v920
        %v923 = vrot.slane %v769, 1
        %v924 = vsel %vm450, %v923, %v922
        %v925 = vsel %vm453, %v770, %v924
        %v927 = vadd.f32 %v770, %v925
        %v928 = vmul.f32 %v927, 0.5
        %s929 = scalar_lea.vmem %s415, 464 [#allocation3]
        %930 = vst.msk [vmem:[%s929] sm:$0xff] %vm458, %v928
        %s931 = scalar_lea.vmem %s400, 24 [#allocation2]
        %v932 = vld [vmem:[%s931] sm:$0xff]
        %v933 = vld [vmem:[%s931 + $0x40] sm:$0xff]
        %v934 = vld [vmem:[%s931 + $0x80] sm:$0xff]
        %v935 = vld [vmem:[%s931 + $0xc0] sm:$0xff]
        %v936 = vld [vmem:[%s931 + $0x100] sm:$0xff]
        %v937 = vld [vmem:[%s931 + $0x140] sm:$0xff]
        %v938 = vld [vmem:[%s931 + $0x180] sm:$0xff]
        %v939 = vld [vmem:[%s931 + $0x1c0] sm:$0xff]
        %v948 = vrot.slane %v933, 7
        %v949 = vsel %vm435, %v948, %v932
        %v950 = vrot.slane %v934, 6
        %v951 = vsel %vm438, %v950, %v949
        %v952 = vrot.slane %v935, 5
        %v953 = vsel %vm441, %v952, %v951
        %v954 = vrot.slane %v936, 4
        %v955 = vsel %vm444, %v954, %v953
        %v956 = vrot.slane %v937, 3
        %v957 = vsel %vm447, %v956, %v955
        %v958 = vrot.slane %v938, 2
        %v959 = vsel %vm450, %v958, %v957
        %v960 = vrot.slane %v939, 1
        %v961 = vsel %vm453, %v960, %v959
        %v963 = vadd.f32 %v932, %v961
        %v964 = vmul.f32 %v963, 0.5
        %s965 = scalar_lea.vmem %s415, 24 [#allocation3]
        %966 = vst.msk [vmem:[%s965] sm:$0xff] %vm458, %v964
        %v967 = vrot.slane %v932, 1
        %v968 = vsel %vm435, %v933, %v967
        %v969 = vrot.slane %v934, 7
        %v970 = vsel %vm438, %v969, %v968
        %v971 = vrot.slane %v935, 6
        %v972 = vsel %vm441, %v971, %v970
        %v973 = vrot.slane %v936, 5
        %v974 = vsel %vm444, %v973, %v972
        %v975 = vrot.slane %v937, 4
        %v976 = vsel %vm447, %v975, %v974
        %v977 = vrot.slane %v938, 3
        %v978 = vsel %vm450, %v977, %v976
        %v979 = vrot.slane %v939, 2
        %v980 = vsel %vm453, %v979, %v978
        %v982 = vadd.f32 %v933, %v980
        %v983 = vmul.f32 %v982, 0.5
        %s984 = scalar_lea.vmem %s415, 88 [#allocation3]
        %985 = vst.msk [vmem:[%s984] sm:$0xff] %vm458, %v983
        %v986 = vrot.slane %v932, 2
        %v987 = vrot.slane %v933, 1
        %v988 = vsel %vm435, %v987, %v986
        %v989 = vsel %vm438, %v934, %v988
        %v990 = vrot.slane %v935, 7
        %v991 = vsel %vm441, %v990, %v989
        %v992 = vrot.slane %v936, 6
        %v993 = vsel %vm444, %v992, %v991
        %v994 = vrot.slane %v937, 5
        %v995 = vsel %vm447, %v994, %v993
        %v996 = vrot.slane %v938, 4
        %v997 = vsel %vm450, %v996, %v995
        %v998 = vrot.slane %v939, 3
        %v999 = vsel %vm453, %v998, %v997
        %v1001 = vadd.f32 %v934, %v999
        %v1002 = vmul.f32 %v1001, 0.5
        %s1003 = scalar_lea.vmem %s415, 152 [#allocation3]
        %1004 = vst.msk [vmem:[%s1003] sm:$0xff] %vm458, %v1002
        %v1005 = vrot.slane %v932, 3
        %v1006 = vrot.slane %v933, 2
        %v1007 = vsel %vm435, %v1006, %v1005
        %v1008 = vrot.slane %v934, 1
        %v1009 = vsel %vm438, %v1008, %v1007
        %v1010 = vsel %vm441, %v935, %v1009
        %v1011 = vrot.slane %v936, 7
        %v1012 = vsel %vm444, %v1011, %v1010
        %v1013 = vrot.slane %v937, 6
        %v1014 = vsel %vm447, %v1013, %v1012
        %v1015 = vrot.slane %v938, 5
        %v1016 = vsel %vm450, %v1015, %v1014
        %v1017 = vrot.slane %v939, 4
        %v1018 = vsel %vm453, %v1017, %v1016
        %v1020 = vadd.f32 %v935, %v1018
        %v1021 = vmul.f32 %v1020, 0.5
        %s1022 = scalar_lea.vmem %s415, 216 [#allocation3]
        %1023 = vst.msk [vmem:[%s1022] sm:$0xff] %vm458, %v1021
        %v1024 = vrot.slane %v932, 4
        %v1025 = vrot.slane %v933, 3
        %v1026 = vsel %vm435, %v1025, %v1024
        %v1027 = vrot.slane %v934, 2
        %v1028 = vsel %vm438, %v1027, %v1026
        %v1029 = vrot.slane %v935, 1
        %v1030 = vsel %vm441, %v1029, %v1028
        %v1031 = vsel %vm444, %v936, %v1030
        %v1032 = vrot.slane %v937, 7
        %v1033 = vsel %vm447, %v1032, %v1031
        %v1034 = vrot.slane %v938, 6
        %v1035 = vsel %vm450, %v1034, %v1033
        %v1036 = vrot.slane %v939, 5
        %v1037 = vsel %vm453, %v1036, %v1035
        %v1039 = vadd.f32 %v936, %v1037
        %v1040 = vmul.f32 %v1039, 0.5
        %s1041 = scalar_lea.vmem %s415, 280 [#allocation3]
        %1042 = vst.msk [vmem:[%s1041] sm:$0xff] %vm458, %v1040
        %v1043 = vrot.slane %v932, 5
        %v1044 = vrot.slane %v933, 4
        %v1045 = vsel %vm435, %v1044, %v1043
        %v1046 = vrot.slane %v934, 3
        %v1047 = vsel %vm438, %v1046, %v1045
        %v1048 = vrot.slane %v935, 2
        %v1049 = vsel %vm441, %v1048, %v1047
        %v1050 = vrot.slane %v936, 1
        %v1051 = vsel %vm444, %v1050, %v1049
        %v1052 = vsel %vm447, %v937, %v1051
        %v1053 = vrot.slane %v938, 7
        %v1054 = vsel %vm450, %v1053, %v1052
        %v1055 = vrot.slane %v939, 6
        %v1056 = vsel %vm453, %v1055, %v1054
        %v1058 = vadd.f32 %v937, %v1056
        %v1059 = vmul.f32 %v1058, 0.5
        %s1060 = scalar_lea.vmem %s415, 344 [#allocation3]
        %1061 = vst.msk [vmem:[%s1060] sm:$0xff] %vm458, %v1059
        %v1062 = vrot.slane %v932, 6
        %v1063 = vrot.slane %v933, 5
        %v1064 = vsel %vm435, %v1063, %v1062
        %v1065 = vrot.slane %v934, 4
        %v1066 = vsel %vm438, %v1065, %v1064
        %v1067 = vrot.slane %v935, 3
        %v1068 = vsel %vm441, %v1067, %v1066
        %v1069 = vrot.slane %v936, 2
        %v1070 = vsel %vm444, %v1069, %v1068
        %v1071 = vrot.slane %v937, 1
        %v1072 = vsel %vm447, %v1071, %v1070
        %v1073 = vsel %vm450, %v938, %v1072
        %v1074 = vrot.slane %v939, 7
        %v1075 = vsel %vm453, %v1074, %v1073
        %v1077 = vadd.f32 %v938, %v1075
        %v1078 = vmul.f32 %v1077, 0.5
        %s1079 = scalar_lea.vmem %s415, 408 [#allocation3]
        %1080 = vst.msk [vmem:[%s1079] sm:$0xff] %vm458, %v1078
        %v1081 = vrot.slane %v932, 7
        %v1082 = vrot.slane %v933, 6
        %v1083 = vsel %vm435, %v1082, %v1081
        %v1084 = vrot.slane %v934, 5
        %v1085 = vsel %vm438, %v1084, %v1083
        %v1086 = vrot.slane %v935, 4
        %v1087 = vsel %vm441, %v1086, %v1085
        %v1088 = vrot.slane %v936, 3
        %v1089 = vsel %vm444, %v1088, %v1087
        %v1090 = vrot.slane %v937, 2
        %v1091 = vsel %vm447, %v1090, %v1089
        %v1092 = vrot.slane %v938, 1
        %v1093 = vsel %vm450, %v1092, %v1091
        %v1094 = vsel %vm453, %v939, %v1093
        %v1096 = vadd.f32 %v939, %v1094
        %v1097 = vmul.f32 %v1096, 0.5
        %s1098 = scalar_lea.vmem %s415, 472 [#allocation3]
        %1099 = vst.msk [vmem:[%s1098] sm:$0xff] %vm458, %v1097
        %s1100 = scalar_lea.vmem %s400, 32 [#allocation2]
        %v1101 = vld [vmem:[%s1100] sm:$0xff]
        %v1102 = vld [vmem:[%s1100 + $0x40] sm:$0xff]
        %v1103 = vld [vmem:[%s1100 + $0x80] sm:$0xff]
        %v1104 = vld [vmem:[%s1100 + $0xc0] sm:$0xff]
        %v1105 = vld [vmem:[%s1100 + $0x100] sm:$0xff]
        %v1106 = vld [vmem:[%s1100 + $0x140] sm:$0xff]
        %v1107 = vld [vmem:[%s1100 + $0x180] sm:$0xff]
        %v1108 = vld [vmem:[%s1100 + $0x1c0] sm:$0xff]
        %v1117 = vrot.slane %v1102, 7
        %v1118 = vsel %vm435, %v1117, %v1101
        %v1119 = vrot.slane %v1103, 6
        %v1120 = vsel %vm438, %v1119, %v1118
        %v1121 = vrot.slane %v1104, 5
        %v1122 = vsel %vm441, %v1121, %v1120
        %v1123 = vrot.slane %v1105, 4
        %v1124 = vsel %vm444, %v1123, %v1122
        %v1125 = vrot.slane %v1106, 3
        %v1126 = vsel %vm447, %v1125, %v1124
        %v1127 = vrot.slane %v1107, 2
        %v1128 = vsel %vm450, %v1127, %v1126
        %v1129 = vrot.slane %v1108, 1
        %v1130 = vsel %vm453, %v1129, %v1128
        %v1132 = vadd.f32 %v1101, %v1130
        %v1133 = vmul.f32 %v1132, 0.5
        %s1134 = scalar_lea.vmem %s415, 32 [#allocation3]
        %1135 = vst.msk [vmem:[%s1134] sm:$0xff] %vm458, %v1133
        %v1136 = vrot.slane %v1101, 1
        %v1137 = vsel %vm435, %v1102, %v1136
        %v1138 = vrot.slane %v1103, 7
        %v1139 = vsel %vm438, %v1138, %v1137
        %v1140 = vrot.slane %v1104, 6
        %v1141 = vsel %vm441, %v1140, %v1139
        %v1142 = vrot.slane %v1105, 5
        %v1143 = vsel %vm444, %v1142, %v1141
        %v1144 = vrot.slane %v1106, 4
        %v1145 = vsel %vm447, %v1144, %v1143
        %v1146 = vrot.slane %v1107, 3
        %v1147 = vsel %vm450, %v1146, %v1145
        %v1148 = vrot.slane %v1108, 2
        %v1149 = vsel %vm453, %v1148, %v1147
        %v1151 = vadd.f32 %v1102, %v1149
        %v1152 = vmul.f32 %v1151, 0.5
        %s1153 = scalar_lea.vmem %s415, 96 [#allocation3]
        %1154 = vst.msk [vmem:[%s1153] sm:$0xff] %vm458, %v1152
        %v1155 = vrot.slane %v1101, 2
        %v1156 = vrot.slane %v1102, 1
        %v1157 = vsel %vm435, %v1156, %v1155
        %v1158 = vsel %vm438, %v1103, %v1157
        %v1159 = vrot.slane %v1104, 7
        %v1160 = vsel %vm441, %v1159, %v1158
        %v1161 = vrot.slane %v1105, 6
        %v1162 = vsel %vm444, %v1161, %v1160
        %v1163 = vrot.slane %v1106, 5
        %v1164 = vsel %vm447, %v1163, %v1162
        %v1165 = vrot.slane %v1107, 4
        %v1166 = vsel %vm450, %v1165, %v1164
        %v1167 = vrot.slane %v1108, 3
        %v1168 = vsel %vm453, %v1167, %v1166
        %v1170 = vadd.f32 %v1103, %v1168
        %v1171 = vmul.f32 %v1170, 0.5
        %s1172 = scalar_lea.vmem %s415, 160 [#allocation3]
        %1173 = vst.msk [vmem:[%s1172] sm:$0xff] %vm458, %v1171
        %v1174 = vrot.slane %v1101, 3
        %v1175 = vrot.slane %v1102, 2
        %v1176 = vsel %vm435, %v1175, %v1174
        %v1177 = vrot.slane %v1103, 1
        %v1178 = vsel %vm438, %v1177, %v1176
        %v1179 = vsel %vm441, %v1104, %v1178
        %v1180 = vrot.slane %v1105, 7
        %v1181 = vsel %vm444, %v1180, %v1179
        %v1182 = vrot.slane %v1106, 6
        %v1183 = vsel %vm447, %v1182, %v1181
        %v1184 = vrot.slane %v1107, 5
        %v1185 = vsel %vm450, %v1184, %v1183
        %v1186 = vrot.slane %v1108, 4
        %v1187 = vsel %vm453, %v1186, %v1185
        %v1189 = vadd.f32 %v1104, %v1187
        %v1190 = vmul.f32 %v1189, 0.5
        %s1191 = scalar_lea.vmem %s415, 224 [#allocation3]
        %1192 = vst.msk [vmem:[%s1191] sm:$0xff] %vm458, %v1190
        %v1193 = vrot.slane %v1101, 4
        %v1194 = vrot.slane %v1102, 3
        %v1195 = vsel %vm435, %v1194, %v1193
        %v1196 = vrot.slane %v1103, 2
        %v1197 = vsel %vm438, %v1196, %v1195
        %v1198 = vrot.slane %v1104, 1
        %v1199 = vsel %vm441, %v1198, %v1197
        %v1200 = vsel %vm444, %v1105, %v1199
        %v1201 = vrot.slane %v1106, 7
        %v1202 = vsel %vm447, %v1201, %v1200
        %v1203 = vrot.slane %v1107, 6
        %v1204 = vsel %vm450, %v1203, %v1202
        %v1205 = vrot.slane %v1108, 5
        %v1206 = vsel %vm453, %v1205, %v1204
        %v1208 = vadd.f32 %v1105, %v1206
        %v1209 = vmul.f32 %v1208, 0.5
        %s1210 = scalar_lea.vmem %s415, 288 [#allocation3]
        %1211 = vst.msk [vmem:[%s1210] sm:$0xff] %vm458, %v1209
        %v1212 = vrot.slane %v1101, 5
        %v1213 = vrot.slane %v1102, 4
        %v1214 = vsel %vm435, %v1213, %v1212
        %v1215 = vrot.slane %v1103, 3
        %v1216 = vsel %vm438, %v1215, %v1214
        %v1217 = vrot.slane %v1104, 2
        %v1218 = vsel %vm441, %v1217, %v1216
        %v1219 = vrot.slane %v1105, 1
        %v1220 = vsel %vm444, %v1219, %v1218
        %v1221 = vsel %vm447, %v1106, %v1220
        %v1222 = vrot.slane %v1107, 7
        %v1223 = vsel %vm450, %v1222, %v1221
        %v1224 = vrot.slane %v1108, 6
        %v1225 = vsel %vm453, %v1224, %v1223
        %v1227 = vadd.f32 %v1106, %v1225
        %v1228 = vmul.f32 %v1227, 0.5
        %s1229 = scalar_lea.vmem %s415, 352 [#allocation3]
        %1230 = vst.msk [vmem:[%s1229] sm:$0xff] %vm458, %v1228
        %v1231 = vrot.slane %v1101, 6
        %v1232 = vrot.slane %v1102, 5
        %v1233 = vsel %vm435, %v1232, %v1231
        %v1234 = vrot.slane %v1103, 4
        %v1235 = vsel %vm438, %v1234, %v1233
        %v1236 = vrot.slane %v1104, 3
        %v1237 = vsel %vm441, %v1236, %v1235
        %v1238 = vrot.slane %v1105, 2
        %v1239 = vsel %vm444, %v1238, %v1237
        %v1240 = vrot.slane %v1106, 1
        %v1241 = vsel %vm447, %v1240, %v1239
        %v1242 = vsel %vm450, %v1107, %v1241
        %v1243 = vrot.slane %v1108, 7
        %v1244 = vsel %vm453, %v1243, %v1242
        %v1246 = vadd.f32 %v1107, %v1244
        %v1247 = vmul.f32 %v1246, 0.5
        %s1248 = scalar_lea.vmem %s415, 416 [#allocation3]
        %1249 = vst.msk [vmem:[%s1248] sm:$0xff] %vm458, %v1247
        %v1250 = vrot.slane %v1101, 7
        %v1251 = vrot.slane %v1102, 6
        %v1252 = vsel %vm435, %v1251, %v1250
        %v1253 = vrot.slane %v1103, 5
        %v1254 = vsel %vm438, %v1253, %v1252
        %v1255 = vrot.slane %v1104, 4
        %v1256 = vsel %vm441, %v1255, %v1254
        %v1257 = vrot.slane %v1105, 3
        %v1258 = vsel %vm444, %v1257, %v1256
        %v1259 = vrot.slane %v1106, 2
        %v1260 = vsel %vm447, %v1259, %v1258
        %v1261 = vrot.slane %v1107, 1
        %v1262 = vsel %vm450, %v1261, %v1260
        %v1263 = vsel %vm453, %v1108, %v1262
        %v1265 = vadd.f32 %v1108, %v1263
        %v1266 = vmul.f32 %v1265, 0.5
        %s1267 = scalar_lea.vmem %s415, 480 [#allocation3]
        %1268 = vst.msk [vmem:[%s1267] sm:$0xff] %vm458, %v1266
        %s1269 = scalar_lea.vmem %s400, 40 [#allocation2]
        %v1270 = vld [vmem:[%s1269] sm:$0xff]
        %v1271 = vld [vmem:[%s1269 + $0x40] sm:$0xff]
        %v1272 = vld [vmem:[%s1269 + $0x80] sm:$0xff]
        %v1273 = vld [vmem:[%s1269 + $0xc0] sm:$0xff]
        %v1274 = vld [vmem:[%s1269 + $0x100] sm:$0xff]
        %v1275 = vld [vmem:[%s1269 + $0x140] sm:$0xff]
        %v1276 = vld [vmem:[%s1269 + $0x180] sm:$0xff]
        %v1277 = vld [vmem:[%s1269 + $0x1c0] sm:$0xff]
        %v1286 = vrot.slane %v1271, 7
        %v1287 = vsel %vm435, %v1286, %v1270
        %v1288 = vrot.slane %v1272, 6
        %v1289 = vsel %vm438, %v1288, %v1287
        %v1290 = vrot.slane %v1273, 5
        %v1291 = vsel %vm441, %v1290, %v1289
        %v1292 = vrot.slane %v1274, 4
        %v1293 = vsel %vm444, %v1292, %v1291
        %v1294 = vrot.slane %v1275, 3
        %v1295 = vsel %vm447, %v1294, %v1293
        %v1296 = vrot.slane %v1276, 2
        %v1297 = vsel %vm450, %v1296, %v1295
        %v1298 = vrot.slane %v1277, 1
        %v1299 = vsel %vm453, %v1298, %v1297
        %v1301 = vadd.f32 %v1270, %v1299
        %v1302 = vmul.f32 %v1301, 0.5
        %s1303 = scalar_lea.vmem %s415, 40 [#allocation3]
        %1304 = vst.msk [vmem:[%s1303] sm:$0xff] %vm458, %v1302
        %v1305 = vrot.slane %v1270, 1
        %v1306 = vsel %vm435, %v1271, %v1305
        %v1307 = vrot.slane %v1272, 7
        %v1308 = vsel %vm438, %v1307, %v1306
        %v1309 = vrot.slane %v1273, 6
        %v1310 = vsel %vm441, %v1309, %v1308
        %v1311 = vrot.slane %v1274, 5
        %v1312 = vsel %vm444, %v1311, %v1310
        %v1313 = vrot.slane %v1275, 4
        %v1314 = vsel %vm447, %v1313, %v1312
        %v1315 = vrot.slane %v1276, 3
        %v1316 = vsel %vm450, %v1315, %v1314
        %v1317 = vrot.slane %v1277, 2
        %v1318 = vsel %vm453, %v1317, %v1316
        %v1320 = vadd.f32 %v1271, %v1318
        %v1321 = vmul.f32 %v1320, 0.5
        %s1322 = scalar_lea.vmem %s415, 104 [#allocation3]
        %1323 = vst.msk [vmem:[%s1322] sm:$0xff] %vm458, %v1321
        %v1324 = vrot.slane %v1270, 2
        %v1325 = vrot.slane %v1271, 1
        %v1326 = vsel %vm435, %v1325, %v1324
        %v1327 = vsel %vm438, %v1272, %v1326
        %v1328 = vrot.slane %v1273, 7
        %v1329 = vsel %vm441, %v1328, %v1327
        %v1330 = vrot.slane %v1274, 6
        %v1331 = vsel %vm444, %v1330, %v1329
        %v1332 = vrot.slane %v1275, 5
        %v1333 = vsel %vm447, %v1332, %v1331
        %v1334 = vrot.slane %v1276, 4
        %v1335 = vsel %vm450, %v1334, %v1333
        %v1336 = vrot.slane %v1277, 3
        %v1337 = vsel %vm453, %v1336, %v1335
        %v1339 = vadd.f32 %v1272, %v1337
        %v1340 = vmul.f32 %v1339, 0.5
        %s1341 = scalar_lea.vmem %s415, 168 [#allocation3]
        %1342 = vst.msk [vmem:[%s1341] sm:$0xff] %vm458, %v1340
        %v1343 = vrot.slane %v1270, 3
        %v1344 = vrot.slane %v1271, 2
        %v1345 = vsel %vm435, %v1344, %v1343
        %v1346 = vrot.slane %v1272, 1
        %v1347 = vsel %vm438, %v1346, %v1345
        %v1348 = vsel %vm441, %v1273, %v1347
        %v1349 = vrot.slane %v1274, 7
        %v1350 = vsel %vm444, %v1349, %v1348
        %v1351 = vrot.slane %v1275, 6
        %v1352 = vsel %vm447, %v1351, %v1350
        %v1353 = vrot.slane %v1276, 5
        %v1354 = vsel %vm450, %v1353, %v1352
        %v1355 = vrot.slane %v1277, 4
        %v1356 = vsel %vm453, %v1355, %v1354
        %v1358 = vadd.f32 %v1273, %v1356
        %v1359 = vmul.f32 %v1358, 0.5
        %s1360 = scalar_lea.vmem %s415, 232 [#allocation3]
        %1361 = vst.msk [vmem:[%s1360] sm:$0xff] %vm458, %v1359
        %v1362 = vrot.slane %v1270, 4
        %v1363 = vrot.slane %v1271, 3
        %v1364 = vsel %vm435, %v1363, %v1362
        %v1365 = vrot.slane %v1272, 2
        %v1366 = vsel %vm438, %v1365, %v1364
        %v1367 = vrot.slane %v1273, 1
        %v1368 = vsel %vm441, %v1367, %v1366
        %v1369 = vsel %vm444, %v1274, %v1368
        %v1370 = vrot.slane %v1275, 7
        %v1371 = vsel %vm447, %v1370, %v1369
        %v1372 = vrot.slane %v1276, 6
        %v1373 = vsel %vm450, %v1372, %v1371
        %v1374 = vrot.slane %v1277, 5
        %v1375 = vsel %vm453, %v1374, %v1373
        %v1377 = vadd.f32 %v1274, %v1375
        %v1378 = vmul.f32 %v1377, 0.5
        %s1379 = scalar_lea.vmem %s415, 296 [#allocation3]
        %1380 = vst.msk [vmem:[%s1379] sm:$0xff] %vm458, %v1378
        %v1381 = vrot.slane %v1270, 5
        %v1382 = vrot.slane %v1271, 4
        %v1383 = vsel %vm435, %v1382, %v1381
        %v1384 = vrot.slane %v1272, 3
        %v1385 = vsel %vm438, %v1384, %v1383
        %v1386 = vrot.slane %v1273, 2
        %v1387 = vsel %vm441, %v1386, %v1385
        %v1388 = vrot.slane %v1274, 1
        %v1389 = vsel %vm444, %v1388, %v1387
        %v1390 = vsel %vm447, %v1275, %v1389
        %v1391 = vrot.slane %v1276, 7
        %v1392 = vsel %vm450, %v1391, %v1390
        %v1393 = vrot.slane %v1277, 6
        %v1394 = vsel %vm453, %v1393, %v1392
        %v1396 = vadd.f32 %v1275, %v1394
        %v1397 = vmul.f32 %v1396, 0.5
        %s1398 = scalar_lea.vmem %s415, 360 [#allocation3]
        %1399 = vst.msk [vmem:[%s1398] sm:$0xff] %vm458, %v1397
        %v1400 = vrot.slane %v1270, 6
        %v1401 = vrot.slane %v1271, 5
        %v1402 = vsel %vm435, %v1401, %v1400
        %v1403 = vrot.slane %v1272, 4
        %v1404 = vsel %vm438, %v1403, %v1402
        %v1405 = vrot.slane %v1273, 3
        %v1406 = vsel %vm441, %v1405, %v1404
        %v1407 = vrot.slane %v1274, 2
        %v1408 = vsel %vm444, %v1407, %v1406
        %v1409 = vrot.slane %v1275, 1
        %v1410 = vsel %vm447, %v1409, %v1408
        %v1411 = vsel %vm450, %v1276, %v1410
        %v1412 = vrot.slane %v1277, 7
        %v1413 = vsel %vm453, %v1412, %v1411
        %v1415 = vadd.f32 %v1276, %v1413
        %v1416 = vmul.f32 %v1415, 0.5
        %s1417 = scalar_lea.vmem %s415, 424 [#allocation3]
        %1418 = vst.msk [vmem:[%s1417] sm:$0xff] %vm458, %v1416
        %v1419 = vrot.slane %v1270, 7
        %v1420 = vrot.slane %v1271, 6
        %v1421 = vsel %vm435, %v1420, %v1419
        %v1422 = vrot.slane %v1272, 5
        %v1423 = vsel %vm438, %v1422, %v1421
        %v1424 = vrot.slane %v1273, 4
        %v1425 = vsel %vm441, %v1424, %v1423
        %v1426 = vrot.slane %v1274, 3
        %v1427 = vsel %vm444, %v1426, %v1425
        %v1428 = vrot.slane %v1275, 2
        %v1429 = vsel %vm447, %v1428, %v1427
        %v1430 = vrot.slane %v1276, 1
        %v1431 = vsel %vm450, %v1430, %v1429
        %v1432 = vsel %vm453, %v1277, %v1431
        %v1434 = vadd.f32 %v1277, %v1432
        %v1435 = vmul.f32 %v1434, 0.5
        %s1436 = scalar_lea.vmem %s415, 488 [#allocation3]
        %1437 = vst.msk [vmem:[%s1436] sm:$0xff] %vm458, %v1435
        %s1438 = scalar_lea.vmem %s400, 48 [#allocation2]
        %v1439 = vld [vmem:[%s1438] sm:$0xff]
        %v1440 = vld [vmem:[%s1438 + $0x40] sm:$0xff]
        %v1441 = vld [vmem:[%s1438 + $0x80] sm:$0xff]
        %v1442 = vld [vmem:[%s1438 + $0xc0] sm:$0xff]
        %v1443 = vld [vmem:[%s1438 + $0x100] sm:$0xff]
        %v1444 = vld [vmem:[%s1438 + $0x140] sm:$0xff]
        %v1445 = vld [vmem:[%s1438 + $0x180] sm:$0xff]
        %v1446 = vld [vmem:[%s1438 + $0x1c0] sm:$0xff]
        %v1455 = vrot.slane %v1440, 7
        %v1456 = vsel %vm435, %v1455, %v1439
        %v1457 = vrot.slane %v1441, 6
        %v1458 = vsel %vm438, %v1457, %v1456
        %v1459 = vrot.slane %v1442, 5
        %v1460 = vsel %vm441, %v1459, %v1458
        %v1461 = vrot.slane %v1443, 4
        %v1462 = vsel %vm444, %v1461, %v1460
        %v1463 = vrot.slane %v1444, 3
        %v1464 = vsel %vm447, %v1463, %v1462
        %v1465 = vrot.slane %v1445, 2
        %v1466 = vsel %vm450, %v1465, %v1464
        %v1467 = vrot.slane %v1446, 1
        %v1468 = vsel %vm453, %v1467, %v1466
        %v1470 = vadd.f32 %v1439, %v1468
        %v1471 = vmul.f32 %v1470, 0.5
        %s1472 = scalar_lea.vmem %s415, 48 [#allocation3]
        %1473 = vst.msk [vmem:[%s1472] sm:$0xff] %vm458, %v1471
        %v1474 = vrot.slane %v1439, 1
        %v1475 = vsel %vm435, %v1440, %v1474
        %v1476 = vrot.slane %v1441, 7
        %v1477 = vsel %vm438, %v1476, %v1475
        %v1478 = vrot.slane %v1442, 6
        %v1479 = vsel %vm441, %v1478, %v1477
        %v1480 = vrot.slane %v1443, 5
        %v1481 = vsel %vm444, %v1480, %v1479
        %v1482 = vrot.slane %v1444, 4
        %v1483 = vsel %vm447, %v1482, %v1481
        %v1484 = vrot.slane %v1445, 3
        %v1485 = vsel %vm450, %v1484, %v1483
        %v1486 = vrot.slane %v1446, 2
        %v1487 = vsel %vm453, %v1486, %v1485
        %v1489 = vadd.f32 %v1440, %v1487
        %v1490 = vmul.f32 %v1489, 0.5
        %s1491 = scalar_lea.vmem %s415, 112 [#allocation3]
        %1492 = vst.msk [vmem:[%s1491] sm:$0xff] %vm458, %v1490
        %v1493 = vrot.slane %v1439, 2
        %v1494 = vrot.slane %v1440, 1
        %v1495 = vsel %vm435, %v1494, %v1493
        %v1496 = vsel %vm438, %v1441, %v1495
        %v1497 = vrot.slane %v1442, 7
        %v1498 = vsel %vm441, %v1497, %v1496
        %v1499 = vrot.slane %v1443, 6
        %v1500 = vsel %vm444, %v1499, %v1498
        %v1501 = vrot.slane %v1444, 5
        %v1502 = vsel %vm447, %v1501, %v1500
        %v1503 = vrot.slane %v1445, 4
        %v1504 = vsel %vm450, %v1503, %v1502
        %v1505 = vrot.slane %v1446, 3
        %v1506 = vsel %vm453, %v1505, %v1504
        %v1508 = vadd.f32 %v1441, %v1506
        %v1509 = vmul.f32 %v1508, 0.5
        %s1510 = scalar_lea.vmem %s415, 176 [#allocation3]
        %1511 = vst.msk [vmem:[%s1510] sm:$0xff] %vm458, %v1509
        %v1512 = vrot.slane %v1439, 3
        %v1513 = vrot.slane %v1440, 2
        %v1514 = vsel %vm435, %v1513, %v1512
        %v1515 = vrot.slane %v1441, 1
        %v1516 = vsel %vm438, %v1515, %v1514
        %v1517 = vsel %vm441, %v1442, %v1516
        %v1518 = vrot.slane %v1443, 7
        %v1519 = vsel %vm444, %v1518, %v1517
        %v1520 = vrot.slane %v1444, 6
        %v1521 = vsel %vm447, %v1520, %v1519
        %v1522 = vrot.slane %v1445, 5
        %v1523 = vsel %vm450, %v1522, %v1521
        %v1524 = vrot.slane %v1446, 4
        %v1525 = vsel %vm453, %v1524, %v1523
        %v1527 = vadd.f32 %v1442, %v1525
        %v1528 = vmul.f32 %v1527, 0.5
        %s1529 = scalar_lea.vmem %s415, 240 [#allocation3]
        %1530 = vst.msk [vmem:[%s1529] sm:$0xff] %vm458, %v1528
        %v1531 = vrot.slane %v1439, 4
        %v1532 = vrot.slane %v1440, 3
        %v1533 = vsel %vm435, %v1532, %v1531
        %v1534 = vrot.slane %v1441, 2
        %v1535 = vsel %vm438, %v1534, %v1533
        %v1536 = vrot.slane %v1442, 1
        %v1537 = vsel %vm441, %v1536, %v1535
        %v1538 = vsel %vm444, %v1443, %v1537
        %v1539 = vrot.slane %v1444, 7
        %v1540 = vsel %vm447, %v1539, %v1538
        %v1541 = vrot.slane %v1445, 6
        %v1542 = vsel %vm450, %v1541, %v1540
        %v1543 = vrot.slane %v1446, 5
        %v1544 = vsel %vm453, %v1543, %v1542
        %v1546 = vadd.f32 %v1443, %v1544
        %v1547 = vmul.f32 %v1546, 0.5
        %s1548 = scalar_lea.vmem %s415, 304 [#allocation3]
        %1549 = vst.msk [vmem:[%s1548] sm:$0xff] %vm458, %v1547
        %v1550 = vrot.slane %v1439, 5
        %v1551 = vrot.slane %v1440, 4
        %v1552 = vsel %vm435, %v1551, %v1550
        %v1553 = vrot.slane %v1441, 3
        %v1554 = vsel %vm438, %v1553, %v1552
        %v1555 = vrot.slane %v1442, 2
        %v1556 = vsel %vm441, %v1555, %v1554
        %v1557 = vrot.slane %v1443, 1
        %v1558 = vsel %vm444, %v1557, %v1556
        %v1559 = vsel %vm447, %v1444, %v1558
        %v1560 = vrot.slane %v1445, 7
        %v1561 = vsel %vm450, %v1560, %v1559
        %v1562 = vrot.slane %v1446, 6
        %v1563 = vsel %vm453, %v1562, %v1561
        %v1565 = vadd.f32 %v1444, %v1563
        %v1566 = vmul.f32 %v1565, 0.5
        %s1567 = scalar_lea.vmem %s415, 368 [#allocation3]
        %1568 = vst.msk [vmem:[%s1567] sm:$0xff] %vm458, %v1566
        %v1569 = vrot.slane %v1439, 6
        %v1570 = vrot.slane %v1440, 5
        %v1571 = vsel %vm435, %v1570, %v1569
        %v1572 = vrot.slane %v1441, 4
        %v1573 = vsel %vm438, %v1572, %v1571
        %v1574 = vrot.slane %v1442, 3
        %v1575 = vsel %vm441, %v1574, %v1573
        %v1576 = vrot.slane %v1443, 2
        %v1577 = vsel %vm444, %v1576, %v1575
        %v1578 = vrot.slane %v1444, 1
        %v1579 = vsel %vm447, %v1578, %v1577
        %v1580 = vsel %vm450, %v1445, %v1579
        %v1581 = vrot.slane %v1446, 7
        %v1582 = vsel %vm453, %v1581, %v1580
        %v1584 = vadd.f32 %v1445, %v1582
        %v1585 = vmul.f32 %v1584, 0.5
        %s1586 = scalar_lea.vmem %s415, 432 [#allocation3]
        %1587 = vst.msk [vmem:[%s1586] sm:$0xff] %vm458, %v1585
        %v1588 = vrot.slane %v1439, 7
        %v1589 = vrot.slane %v1440, 6
        %v1590 = vsel %vm435, %v1589, %v1588
        %v1591 = vrot.slane %v1441, 5
        %v1592 = vsel %vm438, %v1591, %v1590
        %v1593 = vrot.slane %v1442, 4
        %v1594 = vsel %vm441, %v1593, %v1592
        %v1595 = vrot.slane %v1443, 3
        %v1596 = vsel %vm444, %v1595, %v1594
        %v1597 = vrot.slane %v1444, 2
        %v1598 = vsel %vm447, %v1597, %v1596
        %v1599 = vrot.slane %v1445, 1
        %v1600 = vsel %vm450, %v1599, %v1598
        %v1601 = vsel %vm453, %v1446, %v1600
        %v1603 = vadd.f32 %v1446, %v1601
        %v1604 = vmul.f32 %v1603, 0.5
        %s1605 = scalar_lea.vmem %s415, 496 [#allocation3]
        %1606 = vst.msk [vmem:[%s1605] sm:$0xff] %vm458, %v1604
        %s1607 = scalar_lea.vmem %s400, 56 [#allocation2]
        %v1608 = vld [vmem:[%s1607] sm:$0xff]
        %v1609 = vld [vmem:[%s1607 + $0x40] sm:$0xff]
        %v1610 = vld [vmem:[%s1607 + $0x80] sm:$0xff]
        %v1611 = vld [vmem:[%s1607 + $0xc0] sm:$0xff]
        %v1612 = vld [vmem:[%s1607 + $0x100] sm:$0xff]
        %v1613 = vld [vmem:[%s1607 + $0x140] sm:$0xff]
        %v1614 = vld [vmem:[%s1607 + $0x180] sm:$0xff]
        %v1615 = vld [vmem:[%s1607 + $0x1c0] sm:$0xff]
        %v1624 = vrot.slane %v1609, 7
        %v1625 = vsel %vm435, %v1624, %v1608
        %v1626 = vrot.slane %v1610, 6
        %v1627 = vsel %vm438, %v1626, %v1625
        %v1628 = vrot.slane %v1611, 5
        %v1629 = vsel %vm441, %v1628, %v1627
        %v1630 = vrot.slane %v1612, 4
        %v1631 = vsel %vm444, %v1630, %v1629
        %v1632 = vrot.slane %v1613, 3
        %v1633 = vsel %vm447, %v1632, %v1631
        %v1634 = vrot.slane %v1614, 2
        %v1635 = vsel %vm450, %v1634, %v1633
        %v1636 = vrot.slane %v1615, 1
        %v1637 = vsel %vm453, %v1636, %v1635
        %v1639 = vadd.f32 %v1608, %v1637
        %v1640 = vmul.f32 %v1639, 0.5
        %s1641 = scalar_lea.vmem %s415, 56 [#allocation3]
        %1642 = vst.msk [vmem:[%s1641] sm:$0xff] %vm458, %v1640
        %v1643 = vrot.slane %v1608, 1
        %v1644 = vsel %vm435, %v1609, %v1643
        %v1645 = vrot.slane %v1610, 7
        %v1646 = vsel %vm438, %v1645, %v1644
        %v1647 = vrot.slane %v1611, 6
        %v1648 = vsel %vm441, %v1647, %v1646
        %v1649 = vrot.slane %v1612, 5
        %v1650 = vsel %vm444, %v1649, %v1648
        %v1651 = vrot.slane %v1613, 4
        %v1652 = vsel %vm447, %v1651, %v1650
        %v1653 = vrot.slane %v1614, 3
        %v1654 = vsel %vm450, %v1653, %v1652
        %v1655 = vrot.slane %v1615, 2
        %v1656 = vsel %vm453, %v1655, %v1654
        %v1658 = vadd.f32 %v1609, %v1656
        %v1659 = vmul.f32 %v1658, 0.5
        %s1660 = scalar_lea.vmem %s415, 120 [#allocation3]
        %1661 = vst.msk [vmem:[%s1660] sm:$0xff] %vm458, %v1659
        %v1662 = vrot.slane %v1608, 2
        %v1663 = vrot.slane %v1609, 1
        %v1664 = vsel %vm435, %v1663, %v1662
        %v1665 = vsel %vm438, %v1610, %v1664
        %v1666 = vrot.slane %v1611, 7
        %v1667 = vsel %vm441, %v1666, %v1665
        %v1668 = vrot.slane %v1612, 6
        %v1669 = vsel %vm444, %v1668, %v1667
        %v1670 = vrot.slane %v1613, 5
        %v1671 = vsel %vm447, %v1670, %v1669
        %v1672 = vrot.slane %v1614, 4
        %v1673 = vsel %vm450, %v1672, %v1671
        %v1674 = vrot.slane %v1615, 3
        %v1675 = vsel %vm453, %v1674, %v1673
        %v1677 = vadd.f32 %v1610, %v1675
        %v1678 = vmul.f32 %v1677, 0.5
        %s1679 = scalar_lea.vmem %s415, 184 [#allocation3]
        %1680 = vst.msk [vmem:[%s1679] sm:$0xff] %vm458, %v1678
        %v1681 = vrot.slane %v1608, 3
        %v1682 = vrot.slane %v1609, 2
        %v1683 = vsel %vm435, %v1682, %v1681
        %v1684 = vrot.slane %v1610, 1
        %v1685 = vsel %vm438, %v1684, %v1683
        %v1686 = vsel %vm441, %v1611, %v1685
        %v1687 = vrot.slane %v1612, 7
        %v1688 = vsel %vm444, %v1687, %v1686
        %v1689 = vrot.slane %v1613, 6
        %v1690 = vsel %vm447, %v1689, %v1688
        %v1691 = vrot.slane %v1614, 5
        %v1692 = vsel %vm450, %v1691, %v1690
        %v1693 = vrot.slane %v1615, 4
        %v1694 = vsel %vm453, %v1693, %v1692
        %v1696 = vadd.f32 %v1611, %v1694
        %v1697 = vmul.f32 %v1696, 0.5
        %s1698 = scalar_lea.vmem %s415, 248 [#allocation3]
        %1699 = vst.msk [vmem:[%s1698] sm:$0xff] %vm458, %v1697
        %v1700 = vrot.slane %v1608, 4
        %v1701 = vrot.slane %v1609, 3
        %v1702 = vsel %vm435, %v1701, %v1700
        %v1703 = vrot.slane %v1610, 2
        %v1704 = vsel %vm438, %v1703, %v1702
        %v1705 = vrot.slane %v1611, 1
        %v1706 = vsel %vm441, %v1705, %v1704
        %v1707 = vsel %vm444, %v1612, %v1706
        %v1708 = vrot.slane %v1613, 7
        %v1709 = vsel %vm447, %v1708, %v1707
        %v1710 = vrot.slane %v1614, 6
        %v1711 = vsel %vm450, %v1710, %v1709
        %v1712 = vrot.slane %v1615, 5
        %v1713 = vsel %vm453, %v1712, %v1711
        %v1715 = vadd.f32 %v1612, %v1713
        %v1716 = vmul.f32 %v1715, 0.5
        %s1717 = scalar_lea.vmem %s415, 312 [#allocation3]
        %1718 = vst.msk [vmem:[%s1717] sm:$0xff] %vm458, %v1716
        %v1719 = vrot.slane %v1608, 5
        %v1720 = vrot.slane %v1609, 4
        %v1721 = vsel %vm435, %v1720, %v1719
        %v1722 = vrot.slane %v1610, 3
        %v1723 = vsel %vm438, %v1722, %v1721
        %v1724 = vrot.slane %v1611, 2
        %v1725 = vsel %vm441, %v1724, %v1723
        %v1726 = vrot.slane %v1612, 1
        %v1727 = vsel %vm444, %v1726, %v1725
        %v1728 = vsel %vm447, %v1613, %v1727
        %v1729 = vrot.slane %v1614, 7
        %v1730 = vsel %vm450, %v1729, %v1728
        %v1731 = vrot.slane %v1615, 6
        %v1732 = vsel %vm453, %v1731, %v1730
        %v1734 = vadd.f32 %v1613, %v1732
        %v1735 = vmul.f32 %v1734, 0.5
        %s1736 = scalar_lea.vmem %s415, 376 [#allocation3]
        %1737 = vst.msk [vmem:[%s1736] sm:$0xff] %vm458, %v1735
        %v1738 = vrot.slane %v1608, 6
        %v1739 = vrot.slane %v1609, 5
        %v1740 = vsel %vm435, %v1739, %v1738
        %v1741 = vrot.slane %v1610, 4
        %v1742 = vsel %vm438, %v1741, %v1740
        %v1743 = vrot.slane %v1611, 3
        %v1744 = vsel %vm441, %v1743, %v1742
        %v1745 = vrot.slane %v1612, 2
        %v1746 = vsel %vm444, %v1745, %v1744
        %v1747 = vrot.slane %v1613, 1
        %v1748 = vsel %vm447, %v1747, %v1746
        %v1749 = vsel %vm450, %v1614, %v1748
        %v1750 = vrot.slane %v1615, 7
        %v1751 = vsel %vm453, %v1750, %v1749
        %v1753 = vadd.f32 %v1614, %v1751
        %v1754 = vmul.f32 %v1753, 0.5
        %s1755 = scalar_lea.vmem %s415, 440 [#allocation3]
        %1756 = vst.msk [vmem:[%s1755] sm:$0xff] %vm458, %v1754
        %v1757 = vrot.slane %v1608, 7
        %v1758 = vrot.slane %v1609, 6
        %v1759 = vsel %vm435, %v1758, %v1757
        %v1760 = vrot.slane %v1610, 5
        %v1761 = vsel %vm438, %v1760, %v1759
        %v1762 = vrot.slane %v1611, 4
        %v1763 = vsel %vm441, %v1762, %v1761
        %v1764 = vrot.slane %v1612, 3
        %v1765 = vsel %vm444, %v1764, %v1763
        %v1766 = vrot.slane %v1613, 2
        %v1767 = vsel %vm447, %v1766, %v1765
        %v1768 = vrot.slane %v1614, 1
        %v1769 = vsel %vm450, %v1768, %v1767
        %v1770 = vsel %vm453, %v1615, %v1769
        %v1772 = vadd.f32 %v1615, %v1770
        %v1773 = vmul.f32 %v1772, 0.5
        %s1774 = scalar_lea.vmem %s415, 504 [#allocation3]
        %1775 = vst.msk [vmem:[%s1774] sm:$0xff] %vm458, %v1773
        %s1776 = sand.u32 %s62, 1
        %s1777 = sand.u32 %s62, 1
        %s1778 = smul.addr %s1777, 512
        %s1779 = scalar_lea.vmem [#allocation3], %s1778
        // Predicated region
        $region63: #{a_call__.2} parent=57 // pred_check
          %p1780 = pneg %p72
        $region64: #{a_call__.2} parent=57 // pred_check_branch
          %1782 = sbr.rel (%p1780) target = $region66
        $region65: #{a_call__.2} parent=57 // pred_region
          %s1783 = smul.u32 8, %s17
          %s1784 = smul.addr %s16, 128
          %s1785 = sadd.s32 %s1783, %s1784
          %s1786 = smul.addr %s1785, 8
          %s1787 = scalar_lea.vmem %s1, %s1786
          // Predicated region
          $region67: #{a_call__.2} parent=65 // pred_check
            _
          $region68: #{a_call__.2} parent=65 // pred_check_branch
            %1789 = sbr.rel (0) target = $region70
          $region69: #{a_call__.2} parent=65 // pred_region
            // Predicated region
            $region71: #{a_call__.2} parent=69 // pred_check
              _
            $region72: #{a_call__.2} parent=69 // pred_check_branch
              %1791 = sbr.rel (0) target = $region74
            $region73: #{a_call__.2} parent=69 // pred_region
              // Predicated region
              $region86: #{a_call__.2} parent=73 // pred_check
                _
              $region87: #{a_call__.2} parent=73 // pred_check_branch
                %1932 = sbr.rel (0) target = $region89
              $region88: #{a_call__.2} parent=73 // pred_region
                loop: start=0, step=1, limit=1
                $region90: #{a_call__.2} parent=88 // loop_pre_header
                  _
                $region91: #{a_call__.2} parent=88 // loop_header
                  %s1934 = sphi 0, %s1938
                  %p1935 = scmp.ge.s32.totalorder %s1934, 1
                  %s1939 = sphi %s1779, %s1779
                  %s1940 = sphi %s1787, %s1787
                $region92: #{a_call__.2} parent=88 // loop_header_branch
                  %1937 = sbr.rel (%p1935) target = $region96
                $region93: #{a_call__.2} parent=88 // loop_body
                  %v1941 = vld [vmem:[%s1939] sm:$0xff]
                  %1942 = vst [vmem:[%s1940] sm:$0xff] %v1941
                  %v1943 = vld [vmem:[%s1939 + $0x8] sm:$0xff]
                  %1944 = vst [vmem:[%s1940 + $0x8] sm:$0xff] %v1943
                  %v1945 = vld [vmem:[%s1939 + $0x10] sm:$0xff]
                  %1946 = vst [vmem:[%s1940 + $0x10] sm:$0xff] %v1945
                  %v1947 = vld [vmem:[%s1939 + $0x18] sm:$0xff]
                  %1948 = vst [vmem:[%s1940 + $0x18] sm:$0xff] %v1947
                  %v1949 = vld [vmem:[%s1939 + $0x20] sm:$0xff]
                  %1950 = vst [vmem:[%s1940 + $0x20] sm:$0xff] %v1949
                  %v1951 = vld [vmem:[%s1939 + $0x28] sm:$0xff]
                  %1952 = vst [vmem:[%s1940 + $0x28] sm:$0xff] %v1951
                  %v1953 = vld [vmem:[%s1939 + $0x30] sm:$0xff]
                  %1954 = vst [vmem:[%s1940 + $0x30] sm:$0xff] %v1953
                  %v1955 = vld [vmem:[%s1939 + $0x38] sm:$0xff]
                  %1956 = vst [vmem:[%s1940 + $0x38] sm:$0xff] %v1955
                  %v1957 = vld [vmem:[%s1939 + $0x40] sm:$0xff]
                  %1958 = vst [vmem:[%s1940 + $0x80] sm:$0xff] %v1957
                  %v1959 = vld [vmem:[%s1939 + $0x48] sm:$0xff]
                  %1960 = vst [vmem:[%s1940 + $0x88] sm:$0xff] %v1959
                  %v1961 = vld [vmem:[%s1939 + $0x50] sm:$0xff]
                  %1962 = vst [vmem:[%s1940 + $0x90] sm:$0xff] %v1961
                  %v1963 = vld [vmem:[%s1939 + $0x58] sm:$0xff]
                  %1964 = vst [vmem:[%s1940 + $0x98] sm:$0xff] %v1963
                  %v1965 = vld [vmem:[%s1939 + $0x60] sm:$0xff]
                  %1966 = vst [vmem:[%s1940 + $0xa0] sm:$0xff] %v1965
                  %v1967 = vld [vmem:[%s1939 + $0x68] sm:$0xff]
                  %1968 = vst [vmem:[%s1940 + $0xa8] sm:$0xff] %v1967
                  %v1969 = vld [vmem:[%s1939 + $0x70] sm:$0xff]
                  %1970 = vst [vmem:[%s1940 + $0xb0] sm:$0xff] %v1969
                  %v1971 = vld [vmem:[%s1939 + $0x78] sm:$0xff]
                  %1972 = vst [vmem:[%s1940 + $0xb8] sm:$0xff] %v1971
                  %v1973 = vld [vmem:[%s1939 + $0x80] sm:$0xff]
                  %1974 = vst [vmem:[%s1940 + $0x100] sm:$0xff] %v1973
                  %v1975 = vld [vmem:[%s1939 + $0x88] sm:$0xff]
                  %1976 = vst [vmem:[%s1940 + $0x108] sm:$0xff] %v1975
                  %v1977 = vld [vmem:[%s1939 + $0x90] sm:$0xff]
                  %1978 = vst [vmem:[%s1940 + $0x110] sm:$0xff] %v1977
                  %v1979 = vld [vmem:[%s1939 + $0x98] sm:$0xff]
                  %1980 = vst [vmem:[%s1940 + $0x118] sm:$0xff] %v1979
                  %v1981 = vld [vmem:[%s1939 + $0xa0] sm:$0xff]
                  %1982 = vst [vmem:[%s1940 + $0x120] sm:$0xff] %v1981
                  %v1983 = vld [vmem:[%s1939 + $0xa8] sm:$0xff]
                  %1984 = vst [vmem:[%s1940 + $0x128] sm:$0xff] %v1983
                  %v1985 = vld [vmem:[%s1939 + $0xb0] sm:$0xff]
                  %1986 = vst [vmem:[%s1940 + $0x130] sm:$0xff] %v1985
                  %v1987 = vld [vmem:[%s1939 + $0xb8] sm:$0xff]
                  %1988 = vst [vmem:[%s1940 + $0x138] sm:$0xff] %v1987
                  %v1989 = vld [vmem:[%s1939 + $0xc0] sm:$0xff]
                  %1990 = vst [vmem:[%s1940 + $0x180] sm:$0xff] %v1989
                  %v1991 = vld [vmem:[%s1939 + $0xc8] sm:$0xff]
                  %1992 = vst [vmem:[%s1940 + $0x188] sm:$0xff] %v1991
                  %v1993 = vld [vmem:[%s1939 + $0xd0] sm:$0xff]
                  %1994 = vst [vmem:[%s1940 + $0x190] sm:$0xff] %v1993
                  %v1995 = vld [vmem:[%s1939 + $0xd8] sm:$0xff]
                  %1996 = vst [vmem:[%s1940 + $0x198] sm:$0xff] %v1995
                  %v1997 = vld [vmem:[%s1939 + $0xe0] sm:$0xff]
                  %1998 = vst [vmem:[%s1940 + $0x1a0] sm:$0xff] %v1997
                  %v1999 = vld [vmem:[%s1939 + $0xe8] sm:$0xff]
                  %2000 = vst [vmem:[%s1940 + $0x1a8] sm:$0xff] %v1999
                  %v2001 = vld [vmem:[%s1939 + $0xf0] sm:$0xff]
                  %2002 = vst [vmem:[%s1940 + $0x1b0] sm:$0xff] %v2001
                  %v2003 = vld [vmem:[%s1939 + $0xf8] sm:$0xff]
                  %2004 = vst [vmem:[%s1940 + $0x1b8] sm:$0xff] %v2003
                  %v2005 = vld [vmem:[%s1939 + $0x100] sm:$0xff]
                  %2006 = vst [vmem:[%s1940 + $0x200] sm:$0xff] %v2005
                  %v2007 = vld [vmem:[%s1939 + $0x108] sm:$0xff]
                  %2008 = vst [vmem:[%s1940 + $0x208] sm:$0xff] %v2007
                  %v2009 = vld [vmem:[%s1939 + $0x110] sm:$0xff]
                  %2010 = vst [vmem:[%s1940 + $0x210] sm:$0xff] %v2009
                  %v2011 = vld [vmem:[%s1939 + $0x118] sm:$0xff]
                  %2012 = vst [vmem:[%s1940 + $0x218] sm:$0xff] %v2011
                  %v2013 = vld [vmem:[%s1939 + $0x120] sm:$0xff]
                  %2014 = vst [vmem:[%s1940 + $0x220] sm:$0xff] %v2013
                  %v2015 = vld [vmem:[%s1939 + $0x128] sm:$0xff]
                  %2016 = vst [vmem:[%s1940 + $0x228] sm:$0xff] %v2015
                  %v2017 = vld [vmem:[%s1939 + $0x130] sm:$0xff]
                  %2018 = vst [vmem:[%s1940 + $0x230] sm:$0xff] %v2017
                  %v2019 = vld [vmem:[%s1939 + $0x138] sm:$0xff]
                  %2020 = vst [vmem:[%s1940 + $0x238] sm:$0xff] %v2019
                  %v2021 = vld [vmem:[%s1939 + $0x140] sm:$0xff]
                  %2022 = vst [vmem:[%s1940 + $0x280] sm:$0xff] %v2021
                  %v2023 = vld [vmem:[%s1939 + $0x148] sm:$0xff]
                  %2024 = vst [vmem:[%s1940 + $0x288] sm:$0xff] %v2023
                  %v2025 = vld [vmem:[%s1939 + $0x150] sm:$0xff]
                  %2026 = vst [vmem:[%s1940 + $0x290] sm:$0xff] %v2025
                  %v2027 = vld [vmem:[%s1939 + $0x158] sm:$0xff]
                  %2028 = vst [vmem:[%s1940 + $0x298] sm:$0xff] %v2027
                  %v2029 = vld [vmem:[%s1939 + $0x160] sm:$0xff]
                  %2030 = vst [vmem:[%s1940 + $0x2a0] sm:$0xff] %v2029
                  %v2031 = vld [vmem:[%s1939 + $0x168] sm:$0xff]
                  %2032 = vst [vmem:[%s1940 + $0x2a8] sm:$0xff] %v2031
                  %v2033 = vld [vmem:[%s1939 + $0x170] sm:$0xff]
                  %2034 = vst [vmem:[%s1940 + $0x2b0] sm:$0xff] %v2033
                  %v2035 = vld [vmem:[%s1939 + $0x178] sm:$0xff]
                  %2036 = vst [vmem:[%s1940 + $0x2b8] sm:$0xff] %v2035
                  %v2037 = vld [vmem:[%s1939 + $0x180] sm:$0xff]
                  %2038 = vst [vmem:[%s1940 + $0x300] sm:$0xff] %v2037
                  %v2039 = vld [vmem:[%s1939 + $0x188] sm:$0xff]
                  %2040 = vst [vmem:[%s1940 + $0x308] sm:$0xff] %v2039
                  %v2041 = vld [vmem:[%s1939 + $0x190] sm:$0xff]
                  %2042 = vst [vmem:[%s1940 + $0x310] sm:$0xff] %v2041
                  %v2043 = vld [vmem:[%s1939 + $0x198] sm:$0xff]
                  %2044 = vst [vmem:[%s1940 + $0x318] sm:$0xff] %v2043
                  %v2045 = vld [vmem:[%s1939 + $0x1a0] sm:$0xff]
                  %2046 = vst [vmem:[%s1940 + $0x320] sm:$0xff] %v2045
                  %v2047 = vld [vmem:[%s1939 + $0x1a8] sm:$0xff]
                  %2048 = vst [vmem:[%s1940 + $0x328] sm:$0xff] %v2047
                  %v2049 = vld [vmem:[%s1939 + $0x1b0] sm:$0xff]
                  %2050 = vst [vmem:[%s1940 + $0x330] sm:$0xff] %v2049
                  %v2051 = vld [vmem:[%s1939 + $0x1b8] sm:$0xff]
                  %2052 = vst [vmem:[%s1940 + $0x338] sm:$0xff] %v2051
                  %v2053 = vld [vmem:[%s1939 + $0x1c0] sm:$0xff]
                  %2054 = vst [vmem:[%s1940 + $0x380] sm:$0xff] %v2053
                  %v2055 = vld [vmem:[%s1939 + $0x1c8] sm:$0xff]
                  %2056 = vst [vmem:[%s1940 + $0x388] sm:$0xff] %v2055
                  %v2057 = vld [vmem:[%s1939 + $0x1d0] sm:$0xff]
                  %2058 = vst [vmem:[%s1940 + $0x390] sm:$0xff] %v2057
                  %v2059 = vld [vmem:[%s1939 + $0x1d8] sm:$0xff]
                  %2060 = vst [vmem:[%s1940 + $0x398] sm:$0xff] %v2059
                  %v2061 = vld [vmem:[%s1939 + $0x1e0] sm:$0xff]
                  %2062 = vst [vmem:[%s1940 + $0x3a0] sm:$0xff] %v2061
                  %v2063 = vld [vmem:[%s1939 + $0x1e8] sm:$0xff]
                  %2064 = vst [vmem:[%s1940 + $0x3a8] sm:$0xff] %v2063
                  %v2065 = vld [vmem:[%s1939 + $0x1f0] sm:$0xff]
                  %2066 = vst [vmem:[%s1940 + $0x3b0] sm:$0xff] %v2065
                  %v2067 = vld [vmem:[%s1939 + $0x1f8] sm:$0xff]
                  %2068 = vst [vmem:[%s1940 + $0x3b8] sm:$0xff] %v2067
                $region94: #{a_call__.2} parent=88 // loop_footer
                  %s1938 = sadd.s32 1, %s1934
                $region95: #{a_call__.2} parent=88 // loop_footer_branch
                  %1933 = sbr.rel target = $region91
                $region96: #{a_call__.2} parent=88 // loop_exit
                  _
              $region89: #{a_call__.2} parent=73 // pred_fallthru
                _
              // Predicated region
              $region97: #{a_call__.2} parent=73 // pred_check
                _
              $region98: #{a_call__.2} parent=73 // pred_check_branch
                %2070 = sbr.rel target = $region100
              $region99: #{a_call__.2} parent=73 // pred_region
                _
              $region100: #{a_call__.2} parent=73 // pred_fallthru
                _
            $region74: #{a_call__.2} parent=69 // pred_fallthru
              _
            // Predicated region
            $region75: #{a_call__.2} parent=69 // pred_check
              _
            $region76: #{a_call__.2} parent=69 // pred_check_branch
              %1793 = sbr.rel target = $region78
            $region77: #{a_call__.2} parent=69 // pred_region
              loop: start=0, step=1, limit=1
              $region79: #{a_call__.2} parent=77 // loop_pre_header
                _
              $region80: #{a_call__.2} parent=77 // loop_header
                %s1796 = sphi 0, %s1800
                %p1797 = scmp.ge.s32.totalorder %s1796, 1
                %s1801 = sphi %s1779, %s1779
                %s1802 = sphi %s1787, %s1787
              $region81: #{a_call__.2} parent=77 // loop_header_branch
                %1799 = sbr.rel (%p1797) target = $region85
              $region82: #{a_call__.2} parent=77 // loop_body
                %v1803 = vld [vmem:[%s1801] sm:$0xff]
                %1804 = vst [vmem:[%s1802] sm:$0xff] %v1803
                %v1805 = vld [vmem:[%s1801 + $0x8] sm:$0xff]
                %1806 = vst [vmem:[%s1802 + $0x8] sm:$0xff] %v1805
                %v1807 = vld [vmem:[%s1801 + $0x10] sm:$0xff]
                %1808 = vst [vmem:[%s1802 + $0x10] sm:$0xff] %v1807
                %v1809 = vld [vmem:[%s1801 + $0x18] sm:$0xff]
                %1810 = vst [vmem:[%s1802 + $0x18] sm:$0xff] %v1809
                %v1811 = vld [vmem:[%s1801 + $0x20] sm:$0xff]
                %1812 = vst [vmem:[%s1802 + $0x20] sm:$0xff] %v1811
                %v1813 = vld [vmem:[%s1801 + $0x28] sm:$0xff]
                %1814 = vst [vmem:[%s1802 + $0x28] sm:$0xff] %v1813
                %v1815 = vld [vmem:[%s1801 + $0x30] sm:$0xff]
                %1816 = vst [vmem:[%s1802 + $0x30] sm:$0xff] %v1815
                %v1817 = vld [vmem:[%s1801 + $0x38] sm:$0xff]
                %1818 = vst [vmem:[%s1802 + $0x38] sm:$0xff] %v1817
                %v1819 = vld [vmem:[%s1801 + $0x40] sm:$0xff]
                %1820 = vst [vmem:[%s1802 + $0x80] sm:$0xff] %v1819
                %v1821 = vld [vmem:[%s1801 + $0x48] sm:$0xff]
                %1822 = vst [vmem:[%s1802 + $0x88] sm:$0xff] %v1821
                %v1823 = vld [vmem:[%s1801 + $0x50] sm:$0xff]
                %1824 = vst [vmem:[%s1802 + $0x90] sm:$0xff] %v1823
                %v1825 = vld [vmem:[%s1801 + $0x58] sm:$0xff]
                %1826 = vst [vmem:[%s1802 + $0x98] sm:$0xff] %v1825
                %v1827 = vld [vmem:[%s1801 + $0x60] sm:$0xff]
                %1828 = vst [vmem:[%s1802 + $0xa0] sm:$0xff] %v1827
                %v1829 = vld [vmem:[%s1801 + $0x68] sm:$0xff]
                %1830 = vst [vmem:[%s1802 + $0xa8] sm:$0xff] %v1829
                %v1831 = vld [vmem:[%s1801 + $0x70] sm:$0xff]
                %1832 = vst [vmem:[%s1802 + $0xb0] sm:$0xff] %v1831
                %v1833 = vld [vmem:[%s1801 + $0x78] sm:$0xff]
                %1834 = vst [vmem:[%s1802 + $0xb8] sm:$0xff] %v1833
                %v1835 = vld [vmem:[%s1801 + $0x80] sm:$0xff]
                %1836 = vst [vmem:[%s1802 + $0x100] sm:$0xff] %v1835
                %v1837 = vld [vmem:[%s1801 + $0x88] sm:$0xff]
                %1838 = vst [vmem:[%s1802 + $0x108] sm:$0xff] %v1837
                %v1839 = vld [vmem:[%s1801 + $0x90] sm:$0xff]
                %1840 = vst [vmem:[%s1802 + $0x110] sm:$0xff] %v1839
                %v1841 = vld [vmem:[%s1801 + $0x98] sm:$0xff]
                %1842 = vst [vmem:[%s1802 + $0x118] sm:$0xff] %v1841
                %v1843 = vld [vmem:[%s1801 + $0xa0] sm:$0xff]
                %1844 = vst [vmem:[%s1802 + $0x120] sm:$0xff] %v1843
                %v1845 = vld [vmem:[%s1801 + $0xa8] sm:$0xff]
                %1846 = vst [vmem:[%s1802 + $0x128] sm:$0xff] %v1845
                %v1847 = vld [vmem:[%s1801 + $0xb0] sm:$0xff]
                %1848 = vst [vmem:[%s1802 + $0x130] sm:$0xff] %v1847
                %v1849 = vld [vmem:[%s1801 + $0xb8] sm:$0xff]
                %1850 = vst [vmem:[%s1802 + $0x138] sm:$0xff] %v1849
                %v1851 = vld [vmem:[%s1801 + $0xc0] sm:$0xff]
                %1852 = vst [vmem:[%s1802 + $0x180] sm:$0xff] %v1851
                %v1853 = vld [vmem:[%s1801 + $0xc8] sm:$0xff]
                %1854 = vst [vmem:[%s1802 + $0x188] sm:$0xff] %v1853
                %v1855 = vld [vmem:[%s1801 + $0xd0] sm:$0xff]
                %1856 = vst [vmem:[%s1802 + $0x190] sm:$0xff] %v1855
                %v1857 = vld [vmem:[%s1801 + $0xd8] sm:$0xff]
                %1858 = vst [vmem:[%s1802 + $0x198] sm:$0xff] %v1857
                %v1859 = vld [vmem:[%s1801 + $0xe0] sm:$0xff]
                %1860 = vst [vmem:[%s1802 + $0x1a0] sm:$0xff] %v1859
                %v1861 = vld [vmem:[%s1801 + $0xe8] sm:$0xff]
                %1862 = vst [vmem:[%s1802 + $0x1a8] sm:$0xff] %v1861
                %v1863 = vld [vmem:[%s1801 + $0xf0] sm:$0xff]
                %1864 = vst [vmem:[%s1802 + $0x1b0] sm:$0xff] %v1863
                %v1865 = vld [vmem:[%s1801 + $0xf8] sm:$0xff]
                %1866 = vst [vmem:[%s1802 + $0x1b8] sm:$0xff] %v1865
                %v1867 = vld [vmem:[%s1801 + $0x100] sm:$0xff]
                %1868 = vst [vmem:[%s1802 + $0x200] sm:$0xff] %v1867
                %v1869 = vld [vmem:[%s1801 + $0x108] sm:$0xff]
                %1870 = vst [vmem:[%s1802 + $0x208] sm:$0xff] %v1869
                %v1871 = vld [vmem:[%s1801 + $0x110] sm:$0xff]
                %1872 = vst [vmem:[%s1802 + $0x210] sm:$0xff] %v1871
                %v1873 = vld [vmem:[%s1801 + $0x118] sm:$0xff]
                %1874 = vst [vmem:[%s1802 + $0x218] sm:$0xff] %v1873
                %v1875 = vld [vmem:[%s1801 + $0x120] sm:$0xff]
                %1876 = vst [vmem:[%s1802 + $0x220] sm:$0xff] %v1875
                %v1877 = vld [vmem:[%s1801 + $0x128] sm:$0xff]
                %1878 = vst [vmem:[%s1802 + $0x228] sm:$0xff] %v1877
                %v1879 = vld [vmem:[%s1801 + $0x130] sm:$0xff]
                %1880 = vst [vmem:[%s1802 + $0x230] sm:$0xff] %v1879
                %v1881 = vld [vmem:[%s1801 + $0x138] sm:$0xff]
                %1882 = vst [vmem:[%s1802 + $0x238] sm:$0xff] %v1881
                %v1883 = vld [vmem:[%s1801 + $0x140] sm:$0xff]
                %1884 = vst [vmem:[%s1802 + $0x280] sm:$0xff] %v1883
                %v1885 = vld [vmem:[%s1801 + $0x148] sm:$0xff]
                %1886 = vst [vmem:[%s1802 + $0x288] sm:$0xff] %v1885
                %v1887 = vld [vmem:[%s1801 + $0x150] sm:$0xff]
                %1888 = vst [vmem:[%s1802 + $0x290] sm:$0xff] %v1887
                %v1889 = vld [vmem:[%s1801 + $0x158] sm:$0xff]
                %1890 = vst [vmem:[%s1802 + $0x298] sm:$0xff] %v1889
                %v1891 = vld [vmem:[%s1801 + $0x160] sm:$0xff]
                %1892 = vst [vmem:[%s1802 + $0x2a0] sm:$0xff] %v1891
                %v1893 = vld [vmem:[%s1801 + $0x168] sm:$0xff]
                %1894 = vst [vmem:[%s1802 + $0x2a8] sm:$0xff] %v1893
                %v1895 = vld [vmem:[%s1801 + $0x170] sm:$0xff]
                %1896 = vst [vmem:[%s1802 + $0x2b0] sm:$0xff] %v1895
                %v1897 = vld [vmem:[%s1801 + $0x178] sm:$0xff]
                %1898 = vst [vmem:[%s1802 + $0x2b8] sm:$0xff] %v1897
                %v1899 = vld [vmem:[%s1801 + $0x180] sm:$0xff]
                %1900 = vst [vmem:[%s1802 + $0x300] sm:$0xff] %v1899
                %v1901 = vld [vmem:[%s1801 + $0x188] sm:$0xff]
                %1902 = vst [vmem:[%s1802 + $0x308] sm:$0xff] %v1901
                %v1903 = vld [vmem:[%s1801 + $0x190] sm:$0xff]
                %1904 = vst [vmem:[%s1802 + $0x310] sm:$0xff] %v1903
                %v1905 = vld [vmem:[%s1801 + $0x198] sm:$0xff]
                %1906 = vst [vmem:[%s1802 + $0x318] sm:$0xff] %v1905
                %v1907 = vld [vmem:[%s1801 + $0x1a0] sm:$0xff]
                %1908 = vst [vmem:[%s1802 + $0x320] sm:$0xff] %v1907
                %v1909 = vld [vmem:[%s1801 + $0x1a8] sm:$0xff]
                %1910 = vst [vmem:[%s1802 + $0x328] sm:$0xff] %v1909
                %v1911 = vld [vmem:[%s1801 + $0x1b0] sm:$0xff]
                %1912 = vst [vmem:[%s1802 + $0x330] sm:$0xff] %v1911
                %v1913 = vld [vmem:[%s1801 + $0x1b8] sm:$0xff]
                %1914 = vst [vmem:[%s1802 + $0x338] sm:$0xff] %v1913
                %v1915 = vld [vmem:[%s1801 + $0x1c0] sm:$0xff]
                %1916 = vst [vmem:[%s1802 + $0x380] sm:$0xff] %v1915
                %v1917 = vld [vmem:[%s1801 + $0x1c8] sm:$0xff]
                %1918 = vst [vmem:[%s1802 + $0x388] sm:$0xff] %v1917
                %v1919 = vld [vmem:[%s1801 + $0x1d0] sm:$0xff]
                %1920 = vst [vmem:[%s1802 + $0x390] sm:$0xff] %v1919
                %v1921 = vld [vmem:[%s1801 + $0x1d8] sm:$0xff]
                %1922 = vst [vmem:[%s1802 + $0x398] sm:$0xff] %v1921
                %v1923 = vld [vmem:[%s1801 + $0x1e0] sm:$0xff]
                %1924 = vst [vmem:[%s1802 + $0x3a0] sm:$0xff] %v1923
                %v1925 = vld [vmem:[%s1801 + $0x1e8] sm:$0xff]
                %1926 = vst [vmem:[%s1802 + $0x3a8] sm:$0xff] %v1925
                %v1927 = vld [vmem:[%s1801 + $0x1f0] sm:$0xff]
                %1928 = vst [vmem:[%s1802 + $0x3b0] sm:$0xff] %v1927
                %v1929 = vld [vmem:[%s1801 + $0x1f8] sm:$0xff]
                %1930 = vst [vmem:[%s1802 + $0x3b8] sm:$0xff] %v1929
              $region83: #{a_call__.2} parent=77 // loop_footer
                %s1800 = sadd.s32 1, %s1796
              $region84: #{a_call__.2} parent=77 // loop_footer_branch
                %1795 = sbr.rel target = $region80
              $region85: #{a_call__.2} parent=77 // loop_exit
                _
            $region78: #{a_call__.2} parent=69 // pred_fallthru
              _
          $region70: #{a_call__.2} parent=65 // pred_fallthru
            _
          %2071 = vnop
        $region66: #{a_call__.2} parent=57 // pred_fallthru
          _
      $region58: #{a_call__.2} parent=5 // pred_fallthru
        _
      %p2072 = scmp.le.s32.totalorder 2, %s7
      // Predicated region
      $region101: #{a_call__.2} parent=5 // pred_check
        %p2073 = pneg %p2072
      $region102: #{a_call__.2} parent=5 // pred_check_branch
        %2075 = sbr.rel (%p2073) target = $region104
      $region103: #{a_call__.2} parent=5 // pred_region
        %s2076 = ssub.s32 %s7, 2
        // Predicated region
        $region105: #{a_call__.2} parent=103 // pred_check
          %p2077 = pneg %p78
        $region106: #{a_call__.2} parent=103 // pred_check_branch
          %2079 = sbr.rel (%p2077) target = $region108
        $region107: #{a_call__.2} parent=103 // pred_region
          %s2080 = sand.u32 %s63, 1
          %s2081 = sand.u32 %s63, 1
          %s2082 = smul.addr %s2081, 512
          %s2083 = scalar_lea.vmem [#allocation3], %s2082
        $region108: #{a_call__.2} parent=103 // pred_fallthru
          _
      $region104: #{a_call__.2} parent=5 // pred_fallthru
        _
    $region6: #{a_call__.2} parent=1 // loop_footer
      %s11 = sadd.s32 1, %s7
    $region7: #{a_call__.2} parent=1 // loop_footer_branch
      %6 = sbr.rel target = $region3
    $region8: #{a_call__.2} parent=1 // loop_exit
      _

// kernel: a_call__.3
$region0: #{a_call__.3}
  #allocation0 [shape = 'u32[]', space=smem, size = 0x4, offset = 0x4, fixed_abs, tag = 'smem constant byte address 0x4 - core index']
  #allocation1 [shape = 'u32[144,128]{1,0:T(1,128)}', space=vmem, size = 0x12000, scoped, tag = 'internal scratch']
  %s0 = inlined_call_operand.vmem [shape: f32[8,16,128], index: 0, kind: input, shape index: {}]
  %s1 = inlined_call_operand.hbm [shape: f32[8,16,128], index: 1, kind: output, shape index: {}]
  %s2 = sld [smem:[#allocation0]]
  $region37: #{a_call__.3} parent=0
    _
  %s4 = ssub.s32 1, %s2
  %s5 = scalar_select 0, %s4, %s2
  $region1: #{a_call__.3} parent=0
    #allocation2 [shape = 'u8[65536]{0}', space=vmem, size = 0x10000, scoped, tag = 'output window, operand 0']
    #allocation3 [shape = 's32[2]{0}', space=sflag, size = 0x8, scoped, tag = 'scoped memory for a_call__.3']
    %6 = vsyncpa [#allocation3], 0
    %s7 = scalar_lea.sflag [#allocation3], 1
    %8 = vsyncpa %s7, 0
    loop: start=0, step=1, limit=4
    $region2: #{a_call__.3} parent=1 // loop_pre_header
      _
    $region3: #{a_call__.3} parent=1 // loop_header
      %s10 = sphi 0, %s14
      %p11 = scmp.ge.s32.totalorder %s10, 4
      %s17 = sphi 0, %s29
      %s18 = sphi 0, %s25
      %s19 = sphi 0, %s17
      %s20 = sphi 0, %s18
      %s21 = sphi 0, %s19
      %s22 = sphi 0, %s20
      %s34 = sphi 0, %s36
      %s37 = sphi 0, %s34
      %s38 = sphi 0, %s37
      %s54 = sphi 0, %s38
      %s62 = sphi 0, %s64
      %s65 = sphi 0, %s62
      %s66 = sphi 0, %s65
      %s82 = sphi 0, %s66
    $region4: #{a_call__.3} parent=1 // loop_header_branch
      %13 = sbr.rel (%p11) target = $region8
    $region5: #{a_call__.3} parent=1 // loop_body
      %s15 = ssub.s32 %s10, 1
      %s16 = ssub.s32 %s10, 2
      %s23 = sadd.s32 1, %s18
      %p24 = scmp.ge.s32.totalorder %s23, 1
      %s25 = scalar_select %p24, 0, %s23
      %s26 = sadd.s32 1, %s17
      %s27 = scalar_select %p24, %s26, %s17
      %p28 = scmp.ge.s32.totalorder %s27, 2
      %s29 = scalar_select %p28, 0, %s27
      %s30 = ssub.s32 %s17, %s29
      %s31 = ssub.s32 %s18, %s25
      %s32 = sor.u32 %s30, %s31
      %p33 = scmp.eq.s32.totalorder %s32, 0
      %s35 = sadd.s32 %s34, 1
      %s36 = scalar_select %p33, %s34, %s35
      %p39 = pneg %p33
      %p40 = scmp.eq.s32.totalorder %s10, 1
      %p41 = por %p39, %p40
      %p42 = scmp.ne.s32.totalorder %s34, %s37
      %p43 = scmp.eq.s32.totalorder %s10, 0
      %p44 = por %p42, %p43
      %p45 = scmp.ne.s32.totalorder %s34, %s37
      %p46 = scmp.eq.s32.totalorder %s15, 1
      %p47 = por %p45, %p46
      %p48 = scmp.ne.s32.totalorder %s37, %s38
      %p49 = scmp.eq.s32.totalorder %s15, 0
      %p50 = por %p48, %p49
      %p51 = scmp.ne.s32.totalorder %s37, %s38
      %p52 = scmp.eq.s32.totalorder %s16, 1
      %p53 = por %p51, %p52
      %p55 = scmp.ne.s32.totalorder %s38, %s54
      %p56 = scmp.eq.s32.totalorder %s16, 0
      %p57 = por %p55, %p56
      %s58 = ssub.s32 %s17, %s29
      %s59 = ssub.s32 %s18, %s25
      %s60 = sor.u32 %s58, %s59
      %p61 = scmp.eq.s32.totalorder %s60, 0
      %s63 = sadd.s32 %s62, 1
      %s64 = scalar_select %p61, %s62, %s63
      %p67 = pneg %p61
      %p68 = scmp.eq.s32.totalorder %s10, 1
      %p69 = por %p67, %p68
      %p70 = scmp.ne.s32.totalorder %s62, %s65
      %p71 = scmp.eq.s32.totalorder %s10, 0
      %p72 = por %p70, %p71
      %p73 = scmp.ne.s32.totalorder %s62, %s65
      %p74 = scmp.eq.s32.totalorder %s15, 1
      %p75 = por %p73, %p74
      %p76 = scmp.ne.s32.totalorder %s65, %s66
      %p77 = scmp.eq.s32.totalorder %s15, 0
      %p78 = por %p76, %p77
      %p79 = scmp.ne.s32.totalorder %s65, %s66
      %p80 = scmp.eq.s32.totalorder %s16, 1
      %p81 = por %p79, %p80
      %p83 = scmp.ne.s32.totalorder %s66, %s82
      %p84 = scmp.eq.s32.totalorder %s16, 0
      %p85 = por %p83, %p84
      %p86 = scmp.le.s32.totalorder 1, %s10
      %p87 = scmp.lt.s32.totalorder %s10, 3
      %p88 = pnand %p86, %p87
      %p89 = pneg %p88
      // Predicated region
      $region9: #{a_call__.3} parent=5 // pred_check
        _
      $region10: #{a_call__.3} parent=5 // pred_check_branch
        %91 = sbr.rel (%p88) target = $region12
      $region11: #{a_call__.3} parent=5 // pred_region
        %s92 = ssub.s32 %s10, 1
      $region12: #{a_call__.3} parent=5 // pred_fallthru
        _
      %p93 = scmp.lt.s32.totalorder %s10, 2
      // Predicated region
      $region13: #{a_call__.3} parent=5 // pred_check
        %p94 = pneg %p93
      $region14: #{a_call__.3} parent=5 // pred_check_branch
        %96 = sbr.rel (%p94) target = $region16
      $region15: #{a_call__.3} parent=5 // pred_region
        // Predicated region
        $region17: #{a_call__.3} parent=15 // pred_check
          %p97 = pneg %p44
        $region18: #{a_call__.3} parent=15 // pred_check_branch
          %99 = sbr.rel (%p97) target = $region20
        $region19: #{a_call__.3} parent=15 // pred_region
          %s100 = smul.u32 4, %s17
          %p101 = scmp.lt.s32.totalorder %s100, 7
          %s102 = scalar_select %p101, %s100, 7
          %p103 = scmp.lt.s32.totalorder %s18, 0
          %s104 = scalar_select %p103, %s18, 0
          %s105 = smul.addr %s102, 2
          %s106 = sadd.s32 %s104, %s105
          %s107 = smul.addr %s106, 8
          %s108 = scalar_lea.vmem %s0, %s107
          %s109 = smul.u32 4, %s17
        $region20: #{a_call__.3} parent=15 // pred_fallthru
          _
      $region16: #{a_call__.3} parent=5 // pred_fallthru
        _
      %p110 = scmp.le.s32.totalorder 1, %s10
      %p111 = scmp.lt.s32.totalorder %s10, 3
      %p112 = pnand %p110, %p111
      %p113 = pneg %p112
      // Predicated region
      $region21: #{a_call__.3} parent=5 // pred_check
        _
      $region22: #{a_call__.3} parent=5 // pred_check_branch
        %115 = sbr.rel (%p112) target = $region24
      $region23: #{a_call__.3} parent=5 // pred_region
        %s116 = ssub.s32 %s10, 1
        %s117 = smul.u32 4, %s19
        %p118 = scmp.lt.s32.totalorder %s117, 7
        %s119 = scalar_select %p118, %s117, 7
        %p120 = scmp.lt.s32.totalorder %s20, 0
        %s121 = scalar_select %p120, %s20, 0
        %s122 = smul.addr %s119, 2
        %s123 = sadd.s32 %s121, %s122
        %s124 = smul.addr %s123, 8
        %s125 = scalar_lea.vmem %s0, %s124
        %p126 = pneg %p50
        %p127 = pneg %p47
        %p128 = pneg %p78
        %p129 = pneg %p75
        %s130 = sand.u32 %s65, 1
        %s131 = scalar_lea.sflag [#allocation3], %s130
        %s132 = sand.u32 %s65, 1
        %s133 = smul.addr %s132, 64
        %s134 = scalar_lea.vmem [#allocation2], %s133
        %s135 = smul.u32 4, %s19
        %p136 = scmp.lt.s32.totalorder %s135, 7
        %s137 = scalar_select %p136, %s135, 7
        %p138 = scmp.lt.s32.totalorder %s20, 0
        %s139 = scalar_select %p138, %s20, 0
        %s140 = smul.addr %s137, 2
        %s141 = sadd.s32 %s139, %s140
        %s142 = smul.addr %s141, 8
        %s143 = scalar_lea.vmem %s0, %s142
        %s144 = smul.u32 4, %s19
        %s145 = smul.u32 4, %s19
        %v146 = vlaneseq
        %v147 = vshrl.u32 %v146, 7
        %v148 = vadd.s32 %v147, 8
        %v149 = vlaneseq
        %v150 = vand.u32 %v149, 127
        %vm151 = vcmp.eq.s32.totalorder %v147, %v150
        %vm152 = vcmp.eq.s32.totalorder %v148, %v150
        %v153 = vsel %vm151, 1, 0
        %v154 = vsel %vm152, 1, 0
        %v155 = vcvt.s32.f32 %v153
        %v156 = vcvt.s32.f32 %v154
        %v157 = vld [vmem:[%s143] sm:$0xff]
        %v158 = vld [vmem:[%s143 + $0x8] sm:$0xff]
        %159 = vxpose.xlu0.b32.start [1/16] %v157, 128
        %160 = vxpose.xlu0.b32.cont [2/16] %v158, 128
        %161 = vxpose.xlu0.b32.cont [3/16] 0.0, 128
        %162 = vxpose.xlu0.b32.cont [4/16] 0.0, 128
        %163 = vxpose.xlu0.b32.cont [5/16] 0.0, 128
        %164 = vxpose.xlu0.b32.cont [6/16] 0.0, 128
        %165 = vxpose.xlu0.b32.cont [7/16] 0.0, 128
        %166 = vxpose.xlu0.b32.cont [8/16] 0.0, 128
        %167 = vxpose.xlu0.b32.cont [9/16] 0.0, 128
        %168 = vxpose.xlu0.b32.cont [10/16] 0.0, 128
        %169 = vxpose.xlu0.b32.cont [11/16] 0.0, 128
        %170 = vxpose.xlu0.b32.cont [12/16] 0.0, 128
        %171 = vxpose.xlu0.b32.cont [13/16] 0.0, 128
        %172 = vxpose.xlu0.b32.cont [14/16] 0.0, 128
        %173 = vxpose.xlu0.b32.cont [15/16] 0.0, 128
        %174 = vxpose.xlu0.b32.end [16/16] 0.0, 128
        %v175 = vpop.trf.xlu0
        %v176 = vpop.trf.xlu0
        %v177 = vpop.trf.xlu0
        %v178 = vpop.trf.xlu0
        %v179 = vpop.trf.xlu0
        %v180 = vpop.trf.xlu0
        %v181 = vpop.trf.xlu0
        %v182 = vpop.trf.xlu0
        %v183 = vpop.trf.xlu0
        %v184 = vpop.trf.xlu0
        %v185 = vpop.trf.xlu0
        %v186 = vpop.trf.xlu0
        %v187 = vpop.trf.xlu0
        %v188 = vpop.trf.xlu0
        %v189 = vpop.trf.xlu0
        %v190 = vpop.trf.xlu0
        %vm191 = vcmask 130048
        %v193 = vsel %vm191, %v175, 0
        %v196 = vsel %vm191, %v176, 0
        %198 = vmatprep.subr.mxu0 0.0
        %199 = vmatpush1.msra.mxu0 %v155
        %200 = vmatprep.subr.mxu0 0.0
        %201 = vmatpush1.msra.mxu0 %v156
        %202 = vmatprep.subr.mxu0 0.0
        %203 = vmatpush1.msra.mxu0 0.0
        %204 = vmatprep.subr.mxu0 0.0
        %205 = vmatpush1.msra.mxu0 0.0
        %206 = vmatprep.subr.mxu0 0.0
        %207 = vmatpush1.msra.mxu0 0.0
        %208 = vmatprep.subr.mxu0 0.0
        %209 = vmatpush1.msra.mxu0 0.0
        %210 = vmatprep.subr.mxu0 0.0
        %211 = vmatpush1.msra.mxu0 0.0
        %212 = vmatprep.subr.mxu0 0.0
        %213 = vmatpush1.msra.mxu0 0.0
        %214 = vmatprep.subr.mxu0 0.0
        %215 = vmatpush1.msra.mxu0 0.0
        %216 = vmatprep.subr.mxu0 0.0
        %217 = vmatpush1.msra.mxu0 0.0
        %218 = vmatprep.subr.mxu0 0.0
        %219 = vmatpush1.msra.mxu0 0.0
        %220 = vmatprep.subr.mxu0 0.0
        %221 = vmatpush1.msra.mxu0 0.0
        %222 = vmatprep.subr.mxu0 0.0
        %223 = vmatpush1.msra.mxu0 0.0
        %224 = vmatprep.subr.mxu0 0.0
        %225 = vmatpush1.msra.mxu0 0.0
        %226 = vmatprep.subr.mxu0 0.0
        %227 = vmatpush1.msra.mxu0 0.0
        %228 = vmatprep.subr.mxu0 0.0
        %229 = vmatpush1.msra.mxu0 0.0
        %230 = vmatprep.subr.mxu0 0.0
        %231 = vmatpush1.msra.mxu0 0.0
        %232 = vmatprep.subr.mxu0 0.0
        %233 = vmatpush1.msra.mxu0 0.0
        %234 = vmatprep.subr.mxu0 0.0
        %235 = vmatpush1.msra.mxu0 0.0
        %236 = vmatprep.subr.mxu0 0.0
        %237 = vmatpush1.msra.mxu0 0.0
        %238 = vmatprep.subr.mxu0 0.0
        %239 = vmatpush1.msra.mxu0 0.0
        %240 = vmatprep.subr.mxu0 0.0
        %241 = vmatpush1.msra.mxu0 0.0
        %242 = vmatprep.subr.mxu0 0.0
        %243 = vmatpush1.msra.mxu0 0.0
        %244 = vmatprep.subr.mxu0 0.0
        %245 = vmatpush1.msra.mxu0 0.0
        %246 = vmatprep.subr.mxu0 0.0
        %247 = vmatpush1.msra.mxu0 0.0
        %248 = vmatprep.subr.mxu0 0.0
        %249 = vmatpush1.msra.mxu0 0.0
        %250 = vmatprep.subr.mxu0 0.0
        %251 = vmatpush1.msra.mxu0 0.0
        %252 = vmatprep.subr.mxu0 0.0
        %253 = vmatpush1.msra.mxu0 0.0
        %254 = vmatprep.subr.mxu0 0.0
        %255 = vmatpush1.msra.mxu0 0.0
        %256 = vmatprep.subr.mxu0 0.0
        %257 = vmatpush1.msra.mxu0 0.0
        %258 = vmatprep.subr.mxu0 0.0
        %259 = vmatpush1.msra.mxu0 0.0
        %260 = vmatprep.subr.mxu0 0.0
        %261 = vmatpush1.msra.mxu0 0.0
        %262 = vmatprep.mubr.f32.mxu0 0.0
        %263 = vmatmul.mubr.f32.gmra.mrb[0].mxu0 %v193
        %v264 = vpop.f32.mrb[0].mxu0
        %v265 = vadd.f32 0.0, %v264
        %v266 = vpop.f32.mrb[0].mxu0
        %267 = vmatprep.mubr.f32.mxu0 0.0
        %268 = vmatmul.mubr.f32.gmra.mrb[0].mxu0 %v196
        %v269 = vpop.f32.mrb[0].mxu0
        %v270 = vadd.f32 0.0, %v269
        %v271 = vpop.f32.mrb[0].mxu0
        %272 = vdwg.mxu0
        %v273 = vadd.f32 %v157, %v265
        %v274 = vadd.f32 %v158, %v270
        %v275 = vmul.f32 %v273, 0.5
        %v276 = vmul.f32 %v274, 0.5
        %277 = vst.msk [vmem:[%s134] sm:$0xff] %vm191, %v275
        %278 = vst.msk [vmem:[%s134 + $0x8] sm:$0xff] %vm191, %v276
        %v279 = vld [vmem:[%s143] sm:$0xff]
        %v280 = vld [vmem:[%s143 + $0x8] sm:$0xff]
        %283 = vrot.lane.b32.xlu0 %v279, 112
        %v284 = vpop.permute.xlu0 %283
        %285 = vrot.lane.b32.xlu0 %v280, 112
        %v286 = vpop.permute.xlu0 %285
        %289 = vxpose.xlu0.b32.start [1/16] %v284, 128
        %290 = vxpose.xlu0.b32.cont [2/16] %v286, 128
        %291 = vxpose.xlu0.b32.cont [3/16] 0.0, 128
        %292 = vxpose.xlu0.b32.cont [4/16] 0.0, 128
        %293 = vxpose.xlu0.b32.cont [5/16] 0.0, 128
        %294 = vxpose.xlu0.b32.cont [6/16] 0.0, 128
        %295 = vxpose.xlu0.b32.cont [7/16] 0.0, 128
        %296 = vxpose.xlu0.b32.cont [8/16] 0.0, 128
        %297 = vxpose.xlu0.b32.cont [9/16] 0.0, 128
        %298 = vxpose.xlu0.b32.cont [10/16] 0.0, 128
        %299 = vxpose.xlu0.b32.cont [11/16] 0.0, 128
        %300 = vxpose.xlu0.b32.cont [12/16] 0.0, 128
        %301 = vxpose.xlu0.b32.cont [13/16] 0.0, 128
        %302 = vxpose.xlu0.b32.cont [14/16] 0.0, 128
        %303 = vxpose.xlu0.b32.cont [15/16] 0.0, 128
        %304 = vxpose.xlu0.b32.end [16/16] 0.0, 128
        %v305 = vpop.trf.xlu0
        %v306 = vpop.trf.xlu0
        %v307 = vpop.trf.xlu0
        %v308 = vpop.trf.xlu0
        %v309 = vpop.trf.xlu0
        %v310 = vpop.trf.xlu0
        %v311 = vpop.trf.xlu0
        %v312 = vpop.trf.xlu0
        %v313 = vpop.trf.xlu0
        %v314 = vpop.trf.xlu0
        %v315 = vpop.trf.xlu0
        %v316 = vpop.trf.xlu0
        %v317 = vpop.trf.xlu0
        %v318 = vpop.trf.xlu0
        %v319 = vpop.trf.xlu0
        %v320 = vpop.trf.xlu0
        %v322 = vsel %vm191, %v305, 0
        %v325 = vsel %vm191, %v306, 0
        %327 = vmatprep.subr.mxu0 0.0
        %328 = vmatpush1.msra.mxu0 %v155
        %329 = vmatprep.subr.mxu0 0.0
        %330 = vmatpush1.msra.mxu0 %v156
        %331 = vmatprep.subr.mxu0 0.0
        %332 = vmatpush1.msra.mxu0 0.0
        %333 = vmatprep.subr.mxu0 0.0
        %334 = vmatpush1.msra.mxu0 0.0
        %335 = vmatprep.subr.mxu0 0.0
        %336 = vmatpush1.msra.mxu0 0.0
        %337 = vmatprep.subr.mxu0 0.0
        %338 = vmatpush1.msra.mxu0 0.0
        %339 = vmatprep.subr.mxu0 0.0
        %340 = vmatpush1.msra.mxu0 0.0
        %341 = vmatprep.subr.mxu0 0.0
        %342 = vmatpush1.msra.mxu0 0.0
        %343 = vmatprep.subr.mxu0 0.0
        %344 = vmatpush1.msra.mxu0 0.0
        %345 = vmatprep.subr.mxu0 0.0
        %346 = vmatpush1.msra.mxu0 0.0
        %347 = vmatprep.subr.mxu0 0.0
        %348 = vmatpush1.msra.mxu0 0.0
        %349 = vmatprep.subr.mxu0 0.0
        %350 = vmatpush1.msra.mxu0 0.0
        %351 = vmatprep.subr.mxu0 0.0
        %352 = vmatpush1.msra.mxu0 0.0
        %353 = vmatprep.subr.mxu0 0.0
        %354 = vmatpush1.msra.mxu0 0.0
        %355 = vmatprep.subr.mxu0 0.0
        %356 = vmatpush1.msra.mxu0 0.0
        %357 = vmatprep.subr.mxu0 0.0
        %358 = vmatpush1.msra.mxu0 0.0
        %359 = vmatprep.subr.mxu0 0.0
        %360 = vmatpush1.msra.mxu0 0.0
        %361 = vmatprep.subr.mxu0 0.0
        %362 = vmatpush1.msra.mxu0 0.0
        %363 = vmatprep.subr.mxu0 0.0
        %364 = vmatpush1.msra.mxu0 0.0
        %365 = vmatprep.subr.mxu0 0.0
        %366 = vmatpush1.msra.mxu0 0.0
        %367 = vmatprep.subr.mxu0 0.0
        %368 = vmatpush1.msra.mxu0 0.0
        %369 = vmatprep.subr.mxu0 0.0
        %370 = vmatpush1.msra.mxu0 0.0
        %371 = vmatprep.subr.mxu0 0.0
        %372 = vmatpush1.msra.mxu0 0.0
        %373 = vmatprep.subr.mxu0 0.0
        %374 = vmatpush1.msra.mxu0 0.0
        %375 = vmatprep.subr.mxu0 0.0
        %376 = vmatpush1.msra.mxu0 0.0
        %377 = vmatprep.subr.mxu0 0.0
        %378 = vmatpush1.msra.mxu0 0.0
        %379 = vmatprep.subr.mxu0 0.0
        %380 = vmatpush1.msra.mxu0 0.0
        %381 = vmatprep.subr.mxu0 0.0
        %382 = vmatpush1.msra.mxu0 0.0
        %383 = vmatprep.subr.mxu0 0.0
        %384 = vmatpush1.msra.mxu0 0.0
        %385 = vmatprep.subr.mxu0 0.0
        %386 = vmatpush1.msra.mxu0 0.0
        %387 = vmatprep.subr.mxu0 0.0
        %388 = vmatpush1.msra.mxu0 0.0
        %389 = vmatprep.subr.mxu0 0.0
        %390 = vmatpush1.msra.mxu0 0.0
        %391 = vmatprep.mubr.f32.mxu0 0.0
        %392 = vmatmul.mubr.f32.gmra.mrb[0].mxu0 %v322
        %v393 = vpop.f32.mrb[0].mxu0
        %v394 = vadd.f32 0.0, %v393
        %v395 = vpop.f32.mrb[0].mxu0
        %396 = vmatprep.mubr.f32.mxu0 0.0
        %397 = vmatmul.mubr.f32.gmra.mrb[0].mxu0 %v325
        %v398 = vpop.f32.mrb[0].mxu0
        %v399 = vadd.f32 0.0, %v398
        %v400 = vpop.f32.mrb[0].mxu0
        %401 = vdwg.mxu0
        %404 = vrot.lane.b32.xlu0 %v394, 16
        %v405 = vpop.permute.xlu0 %404
        %406 = vrot.lane.b32.xlu0 %v399, 16
        %v407 = vpop.permute.xlu0 %406
        %v410 = vadd.f32 %v279, %v405
        %v411 = vadd.f32 %v280, %v407
        %v412 = vmul.f32 %v410, 0.5
        %v413 = vmul.f32 %v411, 0.5
        %vm414 = vcmask 261248
        %415 = vst.msk [vmem:[%s134] sm:$0xff] %vm414, %v412
        %416 = vst.msk [vmem:[%s134 + $0x8] sm:$0xff] %vm414, %v413
        %v417 = vld [vmem:[%s143] sm:$0xff]
        %v418 = vld [vmem:[%s143 + $0x8] sm:$0xff]
        %421 = vrot.lane.b32.xlu0 %v417, 96
        %v422 = vpop.permute.xlu0 %421
        %423 = vrot.lane.b32.xlu0 %v418, 96
        %v424 = vpop.permute.xlu0 %423
        %427 = vxpose.xlu0.b32.start [1/16] %v422, 128
        %428 = vxpose.xlu0.b32.cont [2/16] %v424, 128
        %429 = vxpose.xlu0.b32.cont [3/16] 0.0, 128
        %430 = vxpose.xlu0.b32.cont [4/16] 0.0, 128
        %431 = vxpose.xlu0.b32.cont [5/16] 0.0, 128
        %432 = vxpose.xlu0.b32.cont [6/16] 0.0, 128
        %433 = vxpose.xlu0.b32.cont [7/16] 0.0, 128
        %434 = vxpose.xlu0.b32.cont [8/16] 0.0, 128
        %435 = vxpose.xlu0.b32.cont [9/16] 0.0, 128
        %436 = vxpose.xlu0.b32.cont [10/16] 0.0, 128
        %437 = vxpose.xlu0.b32.cont [11/16] 0.0, 128
        %438 = vxpose.xlu0.b32.cont [12/16] 0.0, 128
        %439 = vxpose.xlu0.b32.cont [13/16] 0.0, 128
        %440 = vxpose.xlu0.b32.cont [14/16] 0.0, 128
        %441 = vxpose.xlu0.b32.cont [15/16] 0.0, 128
        %442 = vxpose.xlu0.b32.end [16/16] 0.0, 128
        %v443 = vpop.trf.xlu0
        %v444 = vpop.trf.xlu0
        %v445 = vpop.trf.xlu0
        %v446 = vpop.trf.xlu0
        %v447 = vpop.trf.xlu0
        %v448 = vpop.trf.xlu0
        %v449 = vpop.trf.xlu0
        %v450 = vpop.trf.xlu0
        %v451 = vpop.trf.xlu0
        %v452 = vpop.trf.xlu0
        %v453 = vpop.trf.xlu0
        %v454 = vpop.trf.xlu0
        %v455 = vpop.trf.xlu0
        %v456 = vpop.trf.xlu0
        %v457 = vpop.trf.xlu0
        %v458 = vpop.trf.xlu0
        %v460 = vsel %vm191, %v443, 0
        %v463 = vsel %vm191, %v444, 0
        %465 = vmatprep.subr.mxu0 0.0
        %466 = vmatpush1.msra.mxu0 %v155
        %467 = vmatprep.subr.mxu0 0.0
        %468 = vmatpush1.msra.mxu0 %v156
        %469 = vmatprep.subr.mxu0 0.0
        %470 = vmatpush1.msra.mxu0 0.0
        %471 = vmatprep.subr.mxu0 0.0
        %472 = vmatpush1.msra.mxu0 0.0
        %473 = vmatprep.subr.mxu0 0.0
        %474 = vmatpush1.msra.mxu0 0.0
        %475 = vmatprep.subr.mxu0 0.0
        %476 = vmatpush1.msra.mxu0 0.0
        %477 = vmatprep.subr.mxu0 0.0
        %478 = vmatpush1.msra.mxu0 0.0
        %479 = vmatprep.subr.mxu0 0.0
        %480 = vmatpush1.msra.mxu0 0.0
        %481 = vmatprep.subr.mxu0 0.0
        %482 = vmatpush1.msra.mxu0 0.0
        %483 = vmatprep.subr.mxu0 0.0
        %484 = vmatpush1.msra.mxu0 0.0
        %485 = vmatprep.subr.mxu0 0.0
        %486 = vmatpush1.msra.mxu0 0.0
        %487 = vmatprep.subr.mxu0 0.0
        %488 = vmatpush1.msra.mxu0 0.0
        %489 = vmatprep.subr.mxu0 0.0
        %490 = vmatpush1.msra.mxu0 0.0
        %491 = vmatprep.subr.mxu0 0.0
        %492 = vmatpush1.msra.mxu0 0.0
        %493 = vmatprep.subr.mxu0 0.0
        %494 = vmatpush1.msra.mxu0 0.0
        %495 = vmatprep.subr.mxu0 0.0
        %496 = vmatpush1.msra.mxu0 0.0
        %497 = vmatprep.subr.mxu0 0.0
        %498 = vmatpush1.msra.mxu0 0.0
        %499 = vmatprep.subr.mxu0 0.0
        %500 = vmatpush1.msra.mxu0 0.0
        %501 = vmatprep.subr.mxu0 0.0
        %502 = vmatpush1.msra.mxu0 0.0
        %503 = vmatprep.subr.mxu0 0.0
        %504 = vmatpush1.msra.mxu0 0.0
        %505 = vmatprep.subr.mxu0 0.0
        %506 = vmatpush1.msra.mxu0 0.0
        %507 = vmatprep.subr.mxu0 0.0
        %508 = vmatpush1.msra.mxu0 0.0
        %509 = vmatprep.subr.mxu0 0.0
        %510 = vmatpush1.msra.mxu0 0.0
        %511 = vmatprep.subr.mxu0 0.0
        %512 = vmatpush1.msra.mxu0 0.0
        %513 = vmatprep.subr.mxu0 0.0
        %514 = vmatpush1.msra.mxu0 0.0
        %515 = vmatprep.subr.mxu0 0.0
        %516 = vmatpush1.msra.mxu0 0.0
        %517 = vmatprep.subr.mxu0 0.0
        %518 = vmatpush1.msra.mxu0 0.0
        %519 = vmatprep.subr.mxu0 0.0
        %520 = vmatpush1.msra.mxu0 0.0
        %521 = vmatprep.subr.mxu0 0.0
        %522 = vmatpush1.msra.mxu0 0.0
        %523 = vmatprep.subr.mxu0 0.0
        %524 = vmatpush1.msra.mxu0 0.0
        %525 = vmatprep.subr.mxu0 0.0
        %526 = vmatpush1.msra.mxu0 0.0
        %527 = vmatprep.subr.mxu0 0.0
        %528 = vmatpush1.msra.mxu0 0.0
        %529 = vmatprep.mubr.f32.mxu0 0.0
        %530 = vmatmul.mubr.f32.gmra.mrb[0].mxu0 %v460
        %v531 = vpop.f32.mrb[0].mxu0
        %v532 = vadd.f32 0.0, %v531
        %v533 = vpop.f32.mrb[0].mxu0
        %534 = vmatprep.mubr.f32.mxu0 0.0
        %535 = vmatmul.mubr.f32.gmra.mrb[0].mxu0 %v463
        %v536 = vpop.f32.mrb[0].mxu0
        %v537 = vadd.f32 0.0, %v536
        %v538 = vpop.f32.mrb[0].mxu0
        %539 = vdwg.mxu0
        %542 = vrot.lane.b32.xlu0 %v532, 32
        %v543 = vpop.permute.xlu0 %542
        %544 = vrot.lane.b32.xlu0 %v537, 32
        %v545 = vpop.permute.xlu0 %544
        %v548 = vadd.f32 %v417, %v543
        %v549 = vadd.f32 %v418, %v545
        %v550 = vmul.f32 %v548, 0.5
        %v551 = vmul.f32 %v549, 0.5
        %vm552 = vcmask 392448
        %553 = vst.msk [vmem:[%s134] sm:$0xff] %vm552, %v550
        %554 = vst.msk [vmem:[%s134 + $0x8] sm:$0xff] %vm552, %v551
        %v555 = vld [vmem:[%s143] sm:$0xff]
        %v556 = vld [vmem:[%s143 + $0x8] sm:$0xff]
        %559 = vrot.lane.b32.xlu0 %v555, 80
        %v560 = vpop.permute.xlu0 %559
        %561 = vrot.lane.b32.xlu0 %v556, 80
        %v562 = vpop.permute.xlu0 %561
        %565 = vxpose.xlu0.b32.start [1/16] %v560, 128
        %566 = vxpose.xlu0.b32.cont [2/16] %v562, 128
        %567 = vxpose.xlu0.b32.cont [3/16] 0.0, 128
        %568 = vxpose.xlu0.b32.cont [4/16] 0.0, 128
        %569 = vxpose.xlu0.b32.cont [5/16] 0.0, 128
        %570 = vxpose.xlu0.b32.cont [6/16] 0.0, 128
        %571 = vxpose.xlu0.b32.cont [7/16] 0.0, 128
        %572 = vxpose.xlu0.b32.cont [8/16] 0.0, 128
        %573 = vxpose.xlu0.b32.cont [9/16] 0.0, 128
        %574 = vxpose.xlu0.b32.cont [10/16] 0.0, 128
        %575 = vxpose.xlu0.b32.cont [11/16] 0.0, 128
        %576 = vxpose.xlu0.b32.cont [12/16] 0.0, 128
        %577 = vxpose.xlu0.b32.cont [13/16] 0.0, 128
        %578 = vxpose.xlu0.b32.cont [14/16] 0.0, 128
        %579 = vxpose.xlu0.b32.cont [15/16] 0.0, 128
        %580 = vxpose.xlu0.b32.end [16/16] 0.0, 128
        %v581 = vpop.trf.xlu0
        %v582 = vpop.trf.xlu0
        %v583 = vpop.trf.xlu0
        %v584 = vpop.trf.xlu0
        %v585 = vpop.trf.xlu0
        %v586 = vpop.trf.xlu0
        %v587 = vpop.trf.xlu0
        %v588 = vpop.trf.xlu0
        %v589 = vpop.trf.xlu0
        %v590 = vpop.trf.xlu0
        %v591 = vpop.trf.xlu0
        %v592 = vpop.trf.xlu0
        %v593 = vpop.trf.xlu0
        %v594 = vpop.trf.xlu0
        %v595 = vpop.trf.xlu0
        %v596 = vpop.trf.xlu0
        %v598 = vsel %vm191, %v581, 0
        %v601 = vsel %vm191, %v582, 0
        %603 = vmatprep.subr.mxu0 0.0
        %604 = vmatpush1.msra.mxu0 %v155
        %605 = vmatprep.subr.mxu0 0.0
        %606 = vmatpush1.msra.mxu0 %v156
        %607 = vmatprep.subr.mxu0 0.0
        %608 = vmatpush1.msra.mxu0 0.0
        %609 = vmatprep.subr.mxu0 0.0
        %610 = vmatpush1.msra.mxu0 0.0
        %611 = vmatprep.subr.mxu0 0.0
        %612 = vmatpush1.msra.mxu0 0.0
        %613 = vmatprep.subr.mxu0 0.0
        %614 = vmatpush1.msra.mxu0 0.0
        %615 = vmatprep.subr.mxu0 0.0
        %616 = vmatpush1.msra.mxu0 0.0
        %617 = vmatprep.subr.mxu0 0.0
        %618 = vmatpush1.msra.mxu0 0.0
        %619 = vmatprep.subr.mxu0 0.0
        %620 = vmatpush1.msra.mxu0 0.0
        %621 = vmatprep.subr.mxu0 0.0
        %622 = vmatpush1.msra.mxu0 0.0
        %623 = vmatprep.subr.mxu0 0.0
        %624 = vmatpush1.msra.mxu0 0.0
        %625 = vmatprep.subr.mxu0 0.0
        %626 = vmatpush1.msra.mxu0 0.0
        %627 = vmatprep.subr.mxu0 0.0
        %628 = vmatpush1.msra.mxu0 0.0
        %629 = vmatprep.subr.mxu0 0.0
        %630 = vmatpush1.msra.mxu0 0.0
        %631 = vmatprep.subr.mxu0 0.0
        %632 = vmatpush1.msra.mxu0 0.0
        %633 = vmatprep.subr.mxu0 0.0
        %634 = vmatpush1.msra.mxu0 0.0
        %635 = vmatprep.subr.mxu0 0.0
        %636 = vmatpush1.msra.mxu0 0.0
        %637 = vmatprep.subr.mxu0 0.0
        %638 = vmatpush1.msra.mxu0 0.0
        %639 = vmatprep.subr.mxu0 0.0
        %640 = vmatpush1.msra.mxu0 0.0
        %641 = vmatprep.subr.mxu0 0.0
        %642 = vmatpush1.msra.mxu0 0.0
        %643 = vmatprep.subr.mxu0 0.0
        %644 = vmatpush1.msra.mxu0 0.0
        %645 = vmatprep.subr.mxu0 0.0
        %646 = vmatpush1.msra.mxu0 0.0
        %647 = vmatprep.subr.mxu0 0.0
        %648 = vmatpush1.msra.mxu0 0.0
        %649 = vmatprep.subr.mxu0 0.0
        %650 = vmatpush1.msra.mxu0 0.0
        %651 = vmatprep.subr.mxu0 0.0
        %652 = vmatpush1.msra.mxu0 0.0
        %653 = vmatprep.subr.mxu0 0.0
        %654 = vmatpush1.msra.mxu0 0.0
        %655 = vmatprep.subr.mxu0 0.0
        %656 = vmatpush1.msra.mxu0 0.0
        %657 = vmatprep.subr.mxu0 0.0
        %658 = vmatpush1.msra.mxu0 0.0
        %659 = vmatprep.subr.mxu0 0.0
        %660 = vmatpush1.msra.mxu0 0.0
        %661 = vmatprep.subr.mxu0 0.0
        %662 = vmatpush1.msra.mxu0 0.0
        %663 = vmatprep.subr.mxu0 0.0
        %664 = vmatpush1.msra.mxu0 0.0
        %665 = vmatprep.subr.mxu0 0.0
        %666 = vmatpush1.msra.mxu0 0.0
        %667 = vmatprep.mubr.f32.mxu0 0.0
        %668 = vmatmul.mubr.f32.gmra.mrb[0].mxu0 %v598
        %v669 = vpop.f32.mrb[0].mxu0
        %v670 = vadd.f32 0.0, %v669
        %v671 = vpop.f32.mrb[0].mxu0
        %672 = vmatprep.mubr.f32.mxu0 0.0
        %673 = vmatmul.mubr.f32.gmra.mrb[0].mxu0 %v601
        %v674 = vpop.f32.mrb[0].mxu0
        %v675 = vadd.f32 0.0, %v674
        %v676 = vpop.f32.mrb[0].mxu0
        %677 = vdwg.mxu0
        %680 = vrot.lane.b32.xlu0 %v670, 48
        %v681 = vpop.permute.xlu0 %680
        %682 = vrot.lane.b32.xlu0 %v675, 48
        %v683 = vpop.permute.xlu0 %682
        %v686 = vadd.f32 %v555, %v681
        %v687 = vadd.f32 %v556, %v683
        %v688 = vmul.f32 %v686, 0.5
        %v689 = vmul.f32 %v687, 0.5
        %vm690 = vcmask 523648
        %691 = vst.msk [vmem:[%s134] sm:$0xff] %vm690, %v688
        %692 = vst.msk [vmem:[%s134 + $0x8] sm:$0xff] %vm690, %v689
        %v693 = vld [vmem:[%s143] sm:$0xff]
        %v694 = vld [vmem:[%s143 + $0x8] sm:$0xff]
        %697 = vrot.lane.b32.xlu0 %v693, 64
        %v698 = vpop.permute.xlu0 %697
        %699 = vrot.lane.b32.xlu0 %v694, 64
        %v700 = vpop.permute.xlu0 %699
        %703 = vxpose.xlu0.b32.start [1/16] %v698, 128
        %704 = vxpose.xlu0.b32.cont [2/16] %v700, 128
        %705 = vxpose.xlu0.b32.cont [3/16] 0.0, 128
        %706 = vxpose.xlu0.b32.cont [4/16] 0.0, 128
        %707 = vxpose.xlu0.b32.cont [5/16] 0.0, 128
        %708 = vxpose.xlu0.b32.cont [6/16] 0.0, 128
        %709 = vxpose.xlu0.b32.cont [7/16] 0.0, 128
        %710 = vxpose.xlu0.b32.cont [8/16] 0.0, 128
        %711 = vxpose.xlu0.b32.cont [9/16] 0.0, 128
        %712 = vxpose.xlu0.b32.cont [10/16] 0.0, 128
        %713 = vxpose.xlu0.b32.cont [11/16] 0.0, 128
        %714 = vxpose.xlu0.b32.cont [12/16] 0.0, 128
        %715 = vxpose.xlu0.b32.cont [13/16] 0.0, 128
        %716 = vxpose.xlu0.b32.cont [14/16] 0.0, 128
        %717 = vxpose.xlu0.b32.cont [15/16] 0.0, 128
        %718 = vxpose.xlu0.b32.end [16/16] 0.0, 128
        %v719 = vpop.trf.xlu0
        %v720 = vpop.trf.xlu0
        %v721 = vpop.trf.xlu0
        %v722 = vpop.trf.xlu0
        %v723 = vpop.trf.xlu0
        %v724 = vpop.trf.xlu0
        %v725 = vpop.trf.xlu0
        %v726 = vpop.trf.xlu0
        %v727 = vpop.trf.xlu0
        %v728 = vpop.trf.xlu0
        %v729 = vpop.trf.xlu0
        %v730 = vpop.trf.xlu0
        %v731 = vpop.trf.xlu0
        %v732 = vpop.trf.xlu0
        %v733 = vpop.trf.xlu0
        %v734 = vpop.trf.xlu0
        %v736 = vsel %vm191, %v719, 0
        %v739 = vsel %vm191, %v720, 0
        %741 = vmatprep.subr.mxu0 0.0
        %742 = vmatpush1.msra.mxu0 %v155
        %743 = vmatprep.subr.mxu0 0.0
        %744 = vmatpush1.msra.mxu0 %v156
        %745 = vmatprep.subr.mxu0 0.0
        %746 = vmatpush1.msra.mxu0 0.0
        %747 = vmatprep.subr.mxu0 0.0
        %748 = vmatpush1.msra.mxu0 0.0
        %749 = vmatprep.subr.mxu0 0.0
        %750 = vmatpush1.msra.mxu0 0.0
        %751 = vmatprep.subr.mxu0 0.0
        %752 = vmatpush1.msra.mxu0 0.0
        %753 = vmatprep.subr.mxu0 0.0
        %754 = vmatpush1.msra.mxu0 0.0
        %755 = vmatprep.subr.mxu0 0.0
        %756 = vmatpush1.msra.mxu0 0.0
        %757 = vmatprep.subr.mxu0 0.0
        %758 = vmatpush1.msra.mxu0 0.0
        %759 = vmatprep.subr.mxu0 0.0
        %760 = vmatpush1.msra.mxu0 0.0
        %761 = vmatprep.subr.mxu0 0.0
        %762 = vmatpush1.msra.mxu0 0.0
        %763 = vmatprep.subr.mxu0 0.0
        %764 = vmatpush1.msra.mxu0 0.0
        %765 = vmatprep.subr.mxu0 0.0
        %766 = vmatpush1.msra.mxu0 0.0
        %767 = vmatprep.subr.mxu0 0.0
        %768 = vmatpush1.msra.mxu0 0.0
        %769 = vmatprep.subr.mxu0 0.0
        %770 = vmatpush1.msra.mxu0 0.0
        %771 = vmatprep.subr.mxu0 0.0
        %772 = vmatpush1.msra.mxu0 0.0
        %773 = vmatprep.subr.mxu0 0.0
        %774 = vmatpush1.msra.mxu0 0.0
        %775 = vmatprep.subr.mxu0 0.0
        %776 = vmatpush1.msra.mxu0 0.0
        %777 = vmatprep.subr.mxu0 0.0
        %778 = vmatpush1.msra.mxu0 0.0
        %779 = vmatprep.subr.mxu0 0.0
        %780 = vmatpush1.msra.mxu0 0.0
        %781 = vmatprep.subr.mxu0 0.0
        %782 = vmatpush1.msra.mxu0 0.0
        %783 = vmatprep.subr.mxu0 0.0
        %784 = vmatpush1.msra.mxu0 0.0
        %785 = vmatprep.subr.mxu0 0.0
        %786 = vmatpush1.msra.mxu0 0.0
        %787 = vmatprep.subr.mxu0 0.0
        %788 = vmatpush1.msra.mxu0 0.0
        %789 = vmatprep.subr.mxu0 0.0
        %790 = vmatpush1.msra.mxu0 0.0
        %791 = vmatprep.subr.mxu0 0.0
        %792 = vmatpush1.msra.mxu0 0.0
        %793 = vmatprep.subr.mxu0 0.0
        %794 = vmatpush1.msra.mxu0 0.0
        %795 = vmatprep.subr.mxu0 0.0
        %796 = vmatpush1.msra.mxu0 0.0
        %797 = vmatprep.subr.mxu0 0.0
        %798 = vmatpush1.msra.mxu0 0.0
        %799 = vmatprep.subr.mxu0 0.0
        %800 = vmatpush1.msra.mxu0 0.0
        %801 = vmatprep.subr.mxu0 0.0
        %802 = vmatpush1.msra.mxu0 0.0
        %803 = vmatprep.subr.mxu0 0.0
        %804 = vmatpush1.msra.mxu0 0.0
        %805 = vmatprep.mubr.f32.mxu0 0.0
        %806 = vmatmul.mubr.f32.gmra.mrb[0].mxu0 %v736
        %v807 = vpop.f32.mrb[0].mxu0
        %v808 = vadd.f32 0.0, %v807
        %v809 = vpop.f32.mrb[0].mxu0
        %810 = vmatprep.mubr.f32.mxu0 0.0
        %811 = vmatmul.mubr.f32.gmra.mrb[0].mxu0 %v739
        %v812 = vpop.f32.mrb[0].mxu0
        %v813 = vadd.f32 0.0, %v812
        %v814 = vpop.f32.mrb[0].mxu0
        %815 = vdwg.mxu0
        %818 = vrot.lane.b32.xlu0 %v808, 64
        %v819 = vpop.permute.xlu0 %818
        %820 = vrot.lane.b32.xlu0 %v813, 64
        %v821 = vpop.permute.xlu0 %820
        %v824 = vadd.f32 %v693, %v819
        %v825 = vadd.f32 %v694, %v821
        %v826 = vmul.f32 %v824, 0.5
        %v827 = vmul.f32 %v825, 0.5
        %vm828 = vcmask 654848
        %829 = vst.msk [vmem:[%s134] sm:$0xff] %vm828, %v826
        %830 = vst.msk [vmem:[%s134 + $0x8] sm:$0xff] %vm828, %v827
        %v831 = vld [vmem:[%s143] sm:$0xff]
        %v832 = vld [vmem:[%s143 + $0x8] sm:$0xff]
        %835 = vrot.lane.b32.xlu0 %v831, 48
        %v836 = vpop.permute.xlu0 %835
        %837 = vrot.lane.b32.xlu0 %v832, 48
        %v838 = vpop.permute.xlu0 %837
        %841 = vxpose.xlu0.b32.start [1/16] %v836, 128
        %842 = vxpose.xlu0.b32.cont [2/16] %v838, 128
        %843 = vxpose.xlu0.b32.cont [3/16] 0.0, 128
        %844 = vxpose.xlu0.b32.cont [4/16] 0.0, 128
        %845 = vxpose.xlu0.b32.cont [5/16] 0.0, 128
        %846 = vxpose.xlu0.b32.cont [6/16] 0.0, 128
        %847 = vxpose.xlu0.b32.cont [7/16] 0.0, 128
        %848 = vxpose.xlu0.b32.cont [8/16] 0.0, 128
        %849 = vxpose.xlu0.b32.cont [9/16] 0.0, 128
        %850 = vxpose.xlu0.b32.cont [10/16] 0.0, 128
        %851 = vxpose.xlu0.b32.cont [11/16] 0.0, 128
        %852 = vxpose.xlu0.b32.cont [12/16] 0.0, 128
        %853 = vxpose.xlu0.b32.cont [13/16] 0.0, 128
        %854 = vxpose.xlu0.b32.cont [14/16] 0.0, 128
        %855 = vxpose.xlu0.b32.cont [15/16] 0.0, 128
        %856 = vxpose.xlu0.b32.end [16/16] 0.0, 128
        %v857 = vpop.trf.xlu0
        %v858 = vpop.trf.xlu0
        %v859 = vpop.trf.xlu0
        %v860 = vpop.trf.xlu0
        %v861 = vpop.trf.xlu0
        %v862 = vpop.trf.xlu0
        %v863 = vpop.trf.xlu0
        %v864 = vpop.trf.xlu0
        %v865 = vpop.trf.xlu0
        %v866 = vpop.trf.xlu0
        %v867 = vpop.trf.xlu0
        %v868 = vpop.trf.xlu0
        %v869 = vpop.trf.xlu0
        %v870 = vpop.trf.xlu0
        %v871 = vpop.trf.xlu0
        %v872 = vpop.trf.xlu0
        %v874 = vsel %vm191, %v857, 0
        %v877 = vsel %vm191, %v858, 0
        %879 = vmatprep.subr.mxu0 0.0
        %880 = vmatpush1.msra.mxu0 %v155
        %881 = vmatprep.subr.mxu0 0.0
        %882 = vmatpush1.msra.mxu0 %v156
        %883 = vmatprep.subr.mxu0 0.0
        %884 = vmatpush1.msra.mxu0 0.0
        %885 = vmatprep.subr.mxu0 0.0
        %886 = vmatpush1.msra.mxu0 0.0
        %887 = vmatprep.subr.mxu0 0.0
        %888 = vmatpush1.msra.mxu0 0.0
        %889 = vmatprep.subr.mxu0 0.0
        %890 = vmatpush1.msra.mxu0 0.0
        %891 = vmatprep.subr.mxu0 0.0
        %892 = vmatpush1.msra.mxu0 0.0
        %893 = vmatprep.subr.mxu0 0.0
        %894 = vmatpush1.msra.mxu0 0.0
        %895 = vmatprep.subr.mxu0 0.0
        %896 = vmatpush1.msra.mxu0 0.0
        %897 = vmatprep.subr.mxu0 0.0
        %898 = vmatpush1.msra.mxu0 0.0
        %899 = vmatprep.subr.mxu0 0.0
        %900 = vmatpush1.msra.mxu0 0.0
        %901 = vmatprep.subr.mxu0 0.0
        %902 = vmatpush1.msra.mxu0 0.0
        %903 = vmatprep.subr.mxu0 0.0
        %904 = vmatpush1.msra.mxu0 0.0
        %905 = vmatprep.subr.mxu0 0.0
        %906 = vmatpush1.msra.mxu0 0.0
        %907 = vmatprep.subr.mxu0 0.0
        %908 = vmatpush1.msra.mxu0 0.0
        %909 = vmatprep.subr.mxu0 0.0
        %910 = vmatpush1.msra.mxu0 0.0
        %911 = vmatprep.subr.mxu0 0.0
        %912 = vmatpush1.msra.mxu0 0.0
        %913 = vmatprep.subr.mxu0 0.0
        %914 = vmatpush1.msra.mxu0 0.0
        %915 = vmatprep.subr.mxu0 0.0
        %916 = vmatpush1.msra.mxu0 0.0
        %917 = vmatprep.subr.mxu0 0.0
        %918 = vmatpush1.msra.mxu0 0.0
        %919 = vmatprep.subr.mxu0 0.0
        %920 = vmatpush1.msra.mxu0 0.0
        %921 = vmatprep.subr.mxu0 0.0
        %922 = vmatpush1.msra.mxu0 0.0
        %923 = vmatprep.subr.mxu0 0.0
        %924 = vmatpush1.msra.mxu0 0.0
        %925 = vmatprep.subr.mxu0 0.0
        %926 = vmatpush1.msra.mxu0 0.0
        %927 = vmatprep.subr.mxu0 0.0
        %928 = vmatpush1.msra.mxu0 0.0
        %929 = vmatprep.subr.mxu0 0.0
        %930 = vmatpush1.msra.mxu0 0.0
        %931 = vmatprep.subr.mxu0 0.0
        %932 = vmatpush1.msra.mxu0 0.0
        %933 = vmatprep.subr.mxu0 0.0
        %934 = vmatpush1.msra.mxu0 0.0
        %935 = vmatprep.subr.mxu0 0.0
        %936 = vmatpush1.msra.mxu0 0.0
        %937 = vmatprep.subr.mxu0 0.0
        %938 = vmatpush1.msra.mxu0 0.0
        %939 = vmatprep.subr.mxu0 0.0
        %940 = vmatpush1.msra.mxu0 0.0
        %941 = vmatprep.subr.mxu0 0.0
        %942 = vmatpush1.msra.mxu0 0.0
        %943 = vmatprep.mubr.f32.mxu0 0.0
        %944 = vmatmul.mubr.f32.gmra.mrb[0].mxu0 %v874
        %v945 = vpop.f32.mrb[0].mxu0
        %v946 = vadd.f32 0.0, %v945
        %v947 = vpop.f32.mrb[0].mxu0
        %948 = vmatprep.mubr.f32.mxu0 0.0
        %949 = vmatmul.mubr.f32.gmra.mrb[0].mxu0 %v877
        %v950 = vpop.f32.mrb[0].mxu0
        %v951 = vadd.f32 0.0, %v950
        %v952 = vpop.f32.mrb[0].mxu0
        %953 = vdwg.mxu0
        %956 = vrot.lane.b32.xlu0 %v946, 80
        %v957 = vpop.permute.xlu0 %956
        %958 = vrot.lane.b32.xlu0 %v951, 80
        %v959 = vpop.permute.xlu0 %958
        %v962 = vadd.f32 %v831, %v957
        %v963 = vadd.f32 %v832, %v959
        %v964 = vmul.f32 %v962, 0.5
        %v965 = vmul.f32 %v963, 0.5
        %vm966 = vcmask 786048
        %967 = vst.msk [vmem:[%s134] sm:$0xff] %vm966, %v964
        %968 = vst.msk [vmem:[%s134 + $0x8] sm:$0xff] %vm966, %v965
        %v969 = vld [vmem:[%s143] sm:$0xff]
        %v970 = vld [vmem:[%s143 + $0x8] sm:$0xff]
        %973 = vrot.lane.b32.xlu0 %v969, 32
        %v974 = vpop.permute.xlu0 %973
        %975 = vrot.lane.b32.xlu0 %v970, 32
        %v976 = vpop.permute.xlu0 %975
        %979 = vxpose.xlu0.b32.start [1/16] %v974, 128
        %980 = vxpose.xlu0.b32.cont [2/16] %v976, 128
        %981 = vxpose.xlu0.b32.cont [3/16] 0.0, 128
        %982 = vxpose.xlu0.b32.cont [4/16] 0.0, 128
        %983 = vxpose.xlu0.b32.cont [5/16] 0.0, 128
        %984 = vxpose.xlu0.b32.cont [6/16] 0.0, 128
        %985 = vxpose.xlu0.b32.cont [7/16] 0.0, 128
        %986 = vxpose.xlu0.b32.cont [8/16] 0.0, 128
        %987 = vxpose.xlu0.b32.cont [9/16] 0.0, 128
        %988 = vxpose.xlu0.b32.cont [10/16] 0.0, 128
        %989 = vxpose.xlu0.b32.cont [11/16] 0.0, 128
        %990 = vxpose.xlu0.b32.cont [12/16] 0.0, 128
        %991 = vxpose.xlu0.b32.cont [13/16] 0.0, 128
        %992 = vxpose.xlu0.b32.cont [14/16] 0.0, 128
        %993 = vxpose.xlu0.b32.cont [15/16] 0.0, 128
        %994 = vxpose.xlu0.b32.end [16/16] 0.0, 128
        %v995 = vpop.trf.xlu0
        %v996 = vpop.trf.xlu0
        %v997 = vpop.trf.xlu0
        %v998 = vpop.trf.xlu0
        %v999 = vpop.trf.xlu0
        %v1000 = vpop.trf.xlu0
        %v1001 = vpop.trf.xlu0
        %v1002 = vpop.trf.xlu0
        %v1003 = vpop.trf.xlu0
        %v1004 = vpop.trf.xlu0
        %v1005 = vpop.trf.xlu0
        %v1006 = vpop.trf.xlu0
        %v1007 = vpop.trf.xlu0
        %v1008 = vpop.trf.xlu0
        %v1009 = vpop.trf.xlu0
        %v1010 = vpop.trf.xlu0
        %v1012 = vsel %vm191, %v995, 0
        %v1015 = vsel %vm191, %v996, 0
        %1017 = vmatprep.subr.mxu0 0.0
        %1018 = vmatpush1.msra.mxu0 %v155
        %1019 = vmatprep.subr.mxu0 0.0
        %1020 = vmatpush1.msra.mxu0 %v156
        %1021 = vmatprep.subr.mxu0 0.0
        %1022 = vmatpush1.msra.mxu0 0.0
        %1023 = vmatprep.subr.mxu0 0.0
        %1024 = vmatpush1.msra.mxu0 0.0
        %1025 = vmatprep.subr.mxu0 0.0
        %1026 = vmatpush1.msra.mxu0 0.0
        %1027 = vmatprep.subr.mxu0 0.0
        %1028 = vmatpush1.msra.mxu0 0.0
        %1029 = vmatprep.subr.mxu0 0.0
        %1030 = vmatpush1.msra.mxu0 0.0
        %1031 = vmatprep.subr.mxu0 0.0
        %1032 = vmatpush1.msra.mxu0 0.0
        %1033 = vmatprep.subr.mxu0 0.0
        %1034 = vmatpush1.msra.mxu0 0.0
        %1035 = vmatprep.subr.mxu0 0.0
        %1036 = vmatpush1.msra.mxu0 0.0
        %1037 = vmatprep.subr.mxu0 0.0
        %1038 = vmatpush1.msra.mxu0 0.0
        %1039 = vmatprep.subr.mxu0 0.0
        %1040 = vmatpush1.msra.mxu0 0.0
        %1041 = vmatprep.subr.mxu0 0.0
        %1042 = vmatpush1.msra.mxu0 0.0
        %1043 = vmatprep.subr.mxu0 0.0
        %1044 = vmatpush1.msra.mxu0 0.0
        %1045 = vmatprep.subr.mxu0 0.0
        %1046 = vmatpush1.msra.mxu0 0.0
        %1047 = vmatprep.subr.mxu0 0.0
        %1048 = vmatpush1.msra.mxu0 0.0
        %1049 = vmatprep.subr.mxu0 0.0
        %1050 = vmatpush1.msra.mxu0 0.0
        %1051 = vmatprep.subr.mxu0 0.0
        %1052 = vmatpush1.msra.mxu0 0.0
        %1053 = vmatprep.subr.mxu0 0.0
        %1054 = vmatpush1.msra.mxu0 0.0
        %1055 = vmatprep.subr.mxu0 0.0
        %1056 = vmatpush1.msra.mxu0 0.0
        %1057 = vmatprep.subr.mxu0 0.0
        %1058 = vmatpush1.msra.mxu0 0.0
        %1059 = vmatprep.subr.mxu0 0.0
        %1060 = vmatpush1.msra.mxu0 0.0
        %1061 = vmatprep.subr.mxu0 0.0
        %1062 = vmatpush1.msra.mxu0 0.0
        %1063 = vmatprep.subr.mxu0 0.0
        %1064 = vmatpush1.msra.mxu0 0.0
        %1065 = vmatprep.subr.mxu0 0.0
        %1066 = vmatpush1.msra.mxu0 0.0
        %1067 = vmatprep.subr.mxu0 0.0
        %1068 = vmatpush1.msra.mxu0 0.0
        %1069 = vmatprep.subr.mxu0 0.0
        %1070 = vmatpush1.msra.mxu0 0.0
        %1071 = vmatprep.subr.mxu0 0.0
        %1072 = vmatpush1.msra.mxu0 0.0
        %1073 = vmatprep.subr.mxu0 0.0
        %1074 = vmatpush1.msra.mxu0 0.0
        %1075 = vmatprep.subr.mxu0 0.0
        %1076 = vmatpush1.msra.mxu0 0.0
        %1077 = vmatprep.subr.mxu0 0.0
        %1078 = vmatpush1.msra.mxu0 0.0
        %1079 = vmatprep.subr.mxu0 0.0
        %1080 = vmatpush1.msra.mxu0 0.0
        %1081 = vmatprep.mubr.f32.mxu0 0.0
        %1082 = vmatmul.mubr.f32.gmra.mrb[0].mxu0 %v1012
        %v1083 = vpop.f32.mrb[0].mxu0
        %v1084 = vadd.f32 0.0, %v1083
        %v1085 = vpop.f32.mrb[0].mxu0
        %1086 = vmatprep.mubr.f32.mxu0 0.0
        %1087 = vmatmul.mubr.f32.gmra.mrb[0].mxu0 %v1015
        %v1088 = vpop.f32.mrb[0].mxu0
        %v1089 = vadd.f32 0.0, %v1088
        %v1090 = vpop.f32.mrb[0].mxu0
        %1091 = vdwg.mxu0
        %1094 = vrot.lane.b32.xlu0 %v1084, 96
        %v1095 = vpop.permute.xlu0 %1094
        %1096 = vrot.lane.b32.xlu0 %v1089, 96
        %v1097 = vpop.permute.xlu0 %1096
        %v1100 = vadd.f32 %v969, %v1095
        %v1101 = vadd.f32 %v970, %v1097
        %v1102 = vmul.f32 %v1100, 0.5
        %v1103 = vmul.f32 %v1101, 0.5
        %vm1104 = vcmask 917248
        %1105 = vst.msk [vmem:[%s134] sm:$0xff] %vm1104, %v1102
        %1106 = vst.msk [vmem:[%s134 + $0x8] sm:$0xff] %vm1104, %v1103
        %v1107 = vld [vmem:[%s143] sm:$0xff]
        %v1108 = vld [vmem:[%s143 + $0x8] sm:$0xff]
        %1111 = vrot.lane.b32.xlu0 %v1107, 16
        %v1112 = vpop.permute.xlu0 %1111
        %1113 = vrot.lane.b32.xlu0 %v1108, 16
        %v1114 = vpop.permute.xlu0 %1113
        %1117 = vxpose.xlu0.b32.start [1/16] %v1112, 128
        %1118 = vxpose.xlu0.b32.cont [2/16] %v1114, 128
        %1119 = vxpose.xlu0.b32.cont [3/16] 0.0, 128
        %1120 = vxpose.xlu0.b32.cont [4/16] 0.0, 128
        %1121 = vxpose.xlu0.b32.cont [5/16] 0.0, 128
        %1122 = vxpose.xlu0.b32.cont [6/16] 0.0, 128
        %1123 = vxpose.xlu0.b32.cont [7/16] 0.0, 128
        %1124 = vxpose.xlu0.b32.cont [8/16] 0.0, 128
        %1125 = vxpose.xlu0.b32.cont [9/16] 0.0, 128
        %1126 = vxpose.xlu0.b32.cont [10/16] 0.0, 128
        %1127 = vxpose.xlu0.b32.cont [11/16] 0.0, 128
        %1128 = vxpose.xlu0.b32.cont [12/16] 0.0, 128
        %1129 = vxpose.xlu0.b32.cont [13/16] 0.0, 128
        %1130 = vxpose.xlu0.b32.cont [14/16] 0.0, 128
        %1131 = vxpose.xlu0.b32.cont [15/16] 0.0, 128
        %1132 = vxpose.xlu0.b32.end [16/16] 0.0, 128
        %v1133 = vpop.trf.xlu0
        %v1134 = vpop.trf.xlu0
        %v1135 = vpop.trf.xlu0
        %v1136 = vpop.trf.xlu0
        %v1137 = vpop.trf.xlu0
        %v1138 = vpop.trf.xlu0
        %v1139 = vpop.trf.xlu0
        %v1140 = vpop.trf.xlu0
        %v1141 = vpop.trf.xlu0
        %v1142 = vpop.trf.xlu0
        %v1143 = vpop.trf.xlu0
        %v1144 = vpop.trf.xlu0
        %v1145 = vpop.trf.xlu0
        %v1146 = vpop.trf.xlu0
        %v1147 = vpop.trf.xlu0
        %v1148 = vpop.trf.xlu0
        %v1150 = vsel %vm191, %v1133, 0
        %v1153 = vsel %vm191, %v1134, 0
        %1155 = vmatprep.subr.mxu0 0.0
        %1156 = vmatpush1.msra.mxu0 %v155
        %1157 = vmatprep.subr.mxu0 0.0
        %1158 = vmatpush1.msra.mxu0 %v156
        %1159 = vmatprep.subr.mxu0 0.0
        %1160 = vmatpush1.msra.mxu0 0.0
        %1161 = vmatprep.subr.mxu0 0.0
        %1162 = vmatpush1.msra.mxu0 0.0
        %1163 = vmatprep.subr.mxu0 0.0
        %1164 = vmatpush1.msra.mxu0 0.0
        %1165 = vmatprep.subr.mxu0 0.0
        %1166 = vmatpush1.msra.mxu0 0.0
        %1167 = vmatprep.subr.mxu0 0.0
        %1168 = vmatpush1.msra.mxu0 0.0
        %1169 = vmatprep.subr.mxu0 0.0
        %1170 = vmatpush1.msra.mxu0 0.0
        %1171 = vmatprep.subr.mxu0 0.0
        %1172 = vmatpush1.msra.mxu0 0.0
        %1173 = vmatprep.subr.mxu0 0.0
        %1174 = vmatpush1.msra.mxu0 0.0
        %1175 = vmatprep.subr.mxu0 0.0
        %1176 = vmatpush1.msra.mxu0 0.0
        %1177 = vmatprep.subr.mxu0 0.0
        %1178 = vmatpush1.msra.mxu0 0.0
        %1179 = vmatprep.subr.mxu0 0.0
        %1180 = vmatpush1.msra.mxu0 0.0
        %1181 = vmatprep.subr.mxu0 0.0
        %1182 = vmatpush1.msra.mxu0 0.0
        %1183 = vmatprep.subr.mxu0 0.0
        %1184 = vmatpush1.msra.mxu0 0.0
        %1185 = vmatprep.subr.mxu0 0.0
        %1186 = vmatpush1.msra.mxu0 0.0
        %1187 = vmatprep.subr.mxu0 0.0
        %1188 = vmatpush1.msra.mxu0 0.0
        %1189 = vmatprep.subr.mxu0 0.0
        %1190 = vmatpush1.msra.mxu0 0.0
        %1191 = vmatprep.subr.mxu0 0.0
        %1192 = vmatpush1.msra.mxu0 0.0
        %1193 = vmatprep.subr.mxu0 0.0
        %1194 = vmatpush1.msra.mxu0 0.0
        %1195 = vmatprep.subr.mxu0 0.0
        %1196 = vmatpush1.msra.mxu0 0.0
        %1197 = vmatprep.subr.mxu0 0.0
        %1198 = vmatpush1.msra.mxu0 0.0
        %1199 = vmatprep.subr.mxu0 0.0
        %1200 = vmatpush1.msra.mxu0 0.0
        %1201 = vmatprep.subr.mxu0 0.0
        %1202 = vmatpush1.msra.mxu0 0.0
        %1203 = vmatprep.subr.mxu0 0.0
        %1204 = vmatpush1.msra.mxu0 0.0
        %1205 = vmatprep.subr.mxu0 0.0
        %1206 = vmatpush1.msra.mxu0 0.0
        %1207 = vmatprep.subr.mxu0 0.0
        %1208 = vmatpush1.msra.mxu0 0.0
        %1209 = vmatprep.subr.mxu0 0.0
        %1210 = vmatpush1.msra.mxu0 0.0
        %1211 = vmatprep.subr.mxu0 0.0
        %1212 = vmatpush1.msra.mxu0 0.0
        %1213 = vmatprep.subr.mxu0 0.0
        %1214 = vmatpush1.msra.mxu0 0.0
        %1215 = vmatprep.subr.mxu0 0.0
        %1216 = vmatpush1.msra.mxu0 0.0
        %1217 = vmatprep.subr.mxu0 0.0
        %1218 = vmatpush1.msra.mxu0 0.0
        %1219 = vmatprep.mubr.f32.mxu0 0.0
        %1220 = vmatmul.mubr.f32.gmra.mrb[0].mxu0 %v1150
        %v1221 = vpop.f32.mrb[0].mxu0
        %v1222 = vadd.f32 0.0, %v1221
        %v1223 = vpop.f32.mrb[0].mxu0
        %1224 = vmatprep.mubr.f32.mxu0 0.0
        %1225 = vmatmul.mubr.f32.gmra.mrb[0].mxu0 %v1153
        %v1226 = vpop.f32.mrb[0].mxu0
        %v1227 = vadd.f32 0.0, %v1226
        %v1228 = vpop.f32.mrb[0].mxu0
        %1229 = vdwg.mxu0
        %1232 = vrot.lane.b32.xlu0 %v1222, 112
        %v1233 = vpop.permute.xlu0 %1232
        %1234 = vrot.lane.b32.xlu0 %v1227, 112
        %v1235 = vpop.permute.xlu0 %1234
        %v1238 = vadd.f32 %v1107, %v1233
        %v1239 = vadd.f32 %v1108, %v1235
        %v1240 = vmul.f32 %v1238, 0.5
        %v1241 = vmul.f32 %v1239, 0.5
        %vm1242 = vcmask 1048448
        %1243 = vst.msk [vmem:[%s134] sm:$0xff] %vm1242, %v1240
        %1244 = vst.msk [vmem:[%s134 + $0x8] sm:$0xff] %vm1242, %v1241
        %s1245 = scalar_lea.vmem %s143, 16
        %v1246 = vld [vmem:[%s1245] sm:$0xff]
        %v1247 = vld [vmem:[%s1245 + $0x8] sm:$0xff]
        %1248 = vxpose.xlu0.b32.start [1/16] %v1246, 128
        %1249 = vxpose.xlu0.b32.cont [2/16] %v1247, 128
        %1250 = vxpose.xlu0.b32.cont [3/16] 0.0, 128
        %1251 = vxpose.xlu0.b32.cont [4/16] 0.0, 128
        %1252 = vxpose.xlu0.b32.cont [5/16] 0.0, 128
        %1253 = vxpose.xlu0.b32.cont [6/16] 0.0, 128
        %1254 = vxpose.xlu0.b32.cont [7/16] 0.0, 128
        %1255 = vxpose.xlu0.b32.cont [8/16] 0.0, 128
        %1256 = vxpose.xlu0.b32.cont [9/16] 0.0, 128
        %1257 = vxpose.xlu0.b32.cont [10/16] 0.0, 128
        %1258 = vxpose.xlu0.b32.cont [11/16] 0.0, 128
        %1259 = vxpose.xlu0.b32.cont [12/16] 0.0, 128
        %1260 = vxpose.xlu0.b32.cont [13/16] 0.0, 128
        %1261 = vxpose.xlu0.b32.cont [14/16] 0.0, 128
        %1262 = vxpose.xlu0.b32.cont [15/16] 0.0, 128
        %1263 = vxpose.xlu0.b32.end [16/16] 0.0, 128
        %v1264 = vpop.trf.xlu0
        %v1265 = vpop.trf.xlu0
        %v1266 = vpop.trf.xlu0
        %v1267 = vpop.trf.xlu0
        %v1268 = vpop.trf.xlu0
        %v1269 = vpop.trf.xlu0
        %v1270 = vpop.trf.xlu0
        %v1271 = vpop.trf.xlu0
        %v1272 = vpop.trf.xlu0
        %v1273 = vpop.trf.xlu0
        %v1274 = vpop.trf.xlu0
        %v1275 = vpop.trf.xlu0
        %v1276 = vpop.trf.xlu0
        %v1277 = vpop.trf.xlu0
        %v1278 = vpop.trf.xlu0
        %v1279 = vpop.trf.xlu0
        %v1281 = vsel %vm191, %v1264, 0
        %v1284 = vsel %vm191, %v1265, 0
        %1286 = vmatprep.subr.mxu0 0.0
        %1287 = vmatpush1.msra.mxu0 %v155
        %1288 = vmatprep.subr.mxu0 0.0
        %1289 = vmatpush1.msra.mxu0 %v156
        %1290 = vmatprep.subr.mxu0 0.0
        %1291 = vmatpush1.msra.mxu0 0.0
        %1292 = vmatprep.subr.mxu0 0.0
        %1293 = vmatpush1.msra.mxu0 0.0
        %1294 = vmatprep.subr.mxu0 0.0
        %1295 = vmatpush1.msra.mxu0 0.0
        %1296 = vmatprep.subr.mxu0 0.0
        %1297 = vmatpush1.msra.mxu0 0.0
        %1298 = vmatprep.subr.mxu0 0.0
        %1299 = vmatpush1.msra.mxu0 0.0
        %1300 = vmatprep.subr.mxu0 0.0
        %1301 = vmatpush1.msra.mxu0 0.0
        %1302 = vmatprep.subr.mxu0 0.0
        %1303 = vmatpush1.msra.mxu0 0.0
        %1304 = vmatprep.subr.mxu0 0.0
        %1305 = vmatpush1.msra.mxu0 0.0
        %1306 = vmatprep.subr.mxu0 0.0
        %1307 = vmatpush1.msra.mxu0 0.0
        %1308 = vmatprep.subr.mxu0 0.0
        %1309 = vmatpush1.msra.mxu0 0.0
        %1310 = vmatprep.subr.mxu0 0.0
        %1311 = vmatpush1.msra.mxu0 0.0
        %1312 = vmatprep.subr.mxu0 0.0
        %1313 = vmatpush1.msra.mxu0 0.0
        %1314 = vmatprep.subr.mxu0 0.0
        %1315 = vmatpush1.msra.mxu0 0.0
        %1316 = vmatprep.subr.mxu0 0.0
        %1317 = vmatpush1.msra.mxu0 0.0
        %1318 = vmatprep.subr.mxu0 0.0
        %1319 = vmatpush1.msra.mxu0 0.0
        %1320 = vmatprep.subr.mxu0 0.0
        %1321 = vmatpush1.msra.mxu0 0.0
        %1322 = vmatprep.subr.mxu0 0.0
        %1323 = vmatpush1.msra.mxu0 0.0
        %1324 = vmatprep.subr.mxu0 0.0
        %1325 = vmatpush1.msra.mxu0 0.0
        %1326 = vmatprep.subr.mxu0 0.0
        %1327 = vmatpush1.msra.mxu0 0.0
        %1328 = vmatprep.subr.mxu0 0.0
        %1329 = vmatpush1.msra.mxu0 0.0
        %1330 = vmatprep.subr.mxu0 0.0
        %1331 = vmatpush1.msra.mxu0 0.0
        %1332 = vmatprep.subr.mxu0 0.0
        %1333 = vmatpush1.msra.mxu0 0.0
        %1334 = vmatprep.subr.mxu0 0.0
        %1335 = vmatpush1.msra.mxu0 0.0
        %1336 = vmatprep.subr.mxu0 0.0
        %1337 = vmatpush1.msra.mxu0 0.0
        %1338 = vmatprep.subr.mxu0 0.0
        %1339 = vmatpush1.msra.mxu0 0.0
        %1340 = vmatprep.subr.mxu0 0.0
        %1341 = vmatpush1.msra.mxu0 0.0
        %1342 = vmatprep.subr.mxu0 0.0
        %1343 = vmatpush1.msra.mxu0 0.0
        %1344 = vmatprep.subr.mxu0 0.0
        %1345 = vmatpush1.msra.mxu0 0.0
        %1346 = vmatprep.subr.mxu0 0.0
        %1347 = vmatpush1.msra.mxu0 0.0
        %1348 = vmatprep.subr.mxu0 0.0
        %1349 = vmatpush1.msra.mxu0 0.0
        %1350 = vmatprep.mubr.f32.mxu0 0.0
        %1351 = vmatmul.mubr.f32.gmra.mrb[0].mxu0 %v1281
        %v1352 = vpop.f32.mrb[0].mxu0
        %v1353 = vadd.f32 0.0, %v1352
        %v1354 = vpop.f32.mrb[0].mxu0
        %1355 = vmatprep.mubr.f32.mxu0 0.0
        %1356 = vmatmul.mubr.f32.gmra.mrb[0].mxu0 %v1284
        %v1357 = vpop.f32.mrb[0].mxu0
        %v1358 = vadd.f32 0.0, %v1357
        %v1359 = vpop.f32.mrb[0].mxu0
        %1360 = vdwg.mxu0
        %v1361 = vadd.f32 %v1246, %v1353
        %v1362 = vadd.f32 %v1247, %v1358
        %v1363 = vmul.f32 %v1361, 0.5
        %v1364 = vmul.f32 %v1362, 0.5
        %s1365 = scalar_lea.vmem %s134, 16 [#allocation2]
        %1366 = vst.msk [vmem:[%s1365] sm:$0xff] %vm191, %v1363
        %1367 = vst.msk [vmem:[%s1365 + $0x8] sm:$0xff] %vm191, %v1364
        %v1368 = vld [vmem:[%s1245] sm:$0xff]
        %v1369 = vld [vmem:[%s1245 + $0x8] sm:$0xff]
        %1372 = vrot.lane.b32.xlu0 %v1368, 112
        %v1373 = vpop.permute.xlu0 %1372
        %1374 = vrot.lane.b32.xlu0 %v1369, 112
        %v1375 = vpop.permute.xlu0 %1374
        %1378 = vxpose.xlu0.b32.start [1/16] %v1373, 128
        %1379 = vxpose.xlu0.b32.cont [2/16] %v1375, 128
        %1380 = vxpose.xlu0.b32.cont [3/16] 0.0, 128
        %1381 = vxpose.xlu0.b32.cont [4/16] 0.0, 128
        %1382 = vxpose.xlu0.b32.cont [5/16] 0.0, 128
        %1383 = vxpose.xlu0.b32.cont [6/16] 0.0, 128
        %1384 = vxpose.xlu0.b32.cont [7/16] 0.0, 128
        %1385 = vxpose.xlu0.b32.cont [8/16] 0.0, 128
        %1386 = vxpose.xlu0.b32.cont [9/16] 0.0, 128
        %1387 = vxpose.xlu0.b32.cont [10/16] 0.0, 128
        %1388 = vxpose.xlu0.b32.cont [11/16] 0.0, 128
        %1389 = vxpose.xlu0.b32.cont [12/16] 0.0, 128
        %1390 = vxpose.xlu0.b32.cont [13/16] 0.0, 128
        %1391 = vxpose.xlu0.b32.cont [14/16] 0.0, 128
        %1392 = vxpose.xlu0.b32.cont [15/16] 0.0, 128
        %1393 = vxpose.xlu0.b32.end [16/16] 0.0, 128
        %v1394 = vpop.trf.xlu0
        %v1395 = vpop.trf.xlu0
        %v1396 = vpop.trf.xlu0
        %v1397 = vpop.trf.xlu0
        %v1398 = vpop.trf.xlu0
        %v1399 = vpop.trf.xlu0
        %v1400 = vpop.trf.xlu0
        %v1401 = vpop.trf.xlu0
        %v1402 = vpop.trf.xlu0
        %v1403 = vpop.trf.xlu0
        %v1404 = vpop.trf.xlu0
        %v1405 = vpop.trf.xlu0
        %v1406 = vpop.trf.xlu0
        %v1407 = vpop.trf.xlu0
        %v1408 = vpop.trf.xlu0
        %v1409 = vpop.trf.xlu0
        %v1411 = vsel %vm191, %v1394, 0
        %v1414 = vsel %vm191, %v1395, 0
        %1416 = vmatprep.subr.mxu0 0.0
        %1417 = vmatpush1.msra.mxu0 %v155
        %1418 = vmatprep.subr.mxu0 0.0
        %1419 = vmatpush1.msra.mxu0 %v156
        %1420 = vmatprep.subr.mxu0 0.0
        %1421 = vmatpush1.msra.mxu0 0.0
        %1422 = vmatprep.subr.mxu0 0.0
        %1423 = vmatpush1.msra.mxu0 0.0
        %1424 = vmatprep.subr.mxu0 0.0
        %1425 = vmatpush1.msra.mxu0 0.0
        %1426 = vmatprep.subr.mxu0 0.0
        %1427 = vmatpush1.msra.mxu0 0.0
        %1428 = vmatprep.subr.mxu0 0.0
        %1429 = vmatpush1.msra.mxu0 0.0
        %1430 = vmatprep.subr.mxu0 0.0
        %1431 = vmatpush1.msra.mxu0 0.0
        %1432 = vmatprep.subr.mxu0 0.0
        %1433 = vmatpush1.msra.mxu0 0.0
        %1434 = vmatprep.subr.mxu0 0.0
        %1435 = vmatpush1.msra.mxu0 0.0
        %1436 = vmatprep.subr.mxu0 0.0
        %1437 = vmatpush1.msra.mxu0 0.0
        %1438 = vmatprep.subr.mxu0 0.0
        %1439 = vmatpush1.msra.mxu0 0.0
        %1440 = vmatprep.subr.mxu0 0.0
        %1441 = vmatpush1.msra.mxu0 0.0
        %1442 = vmatprep.subr.mxu0 0.0
        %1443 = vmatpush1.msra.mxu0 0.0
        %1444 = vmatprep.subr.mxu0 0.0
        %1445 = vmatpush1.msra.mxu0 0.0
        %1446 = vmatprep.subr.mxu0 0.0
        %1447 = vmatpush1.msra.mxu0 0.0
        %1448 = vmatprep.subr.mxu0 0.0
        %1449 = vmatpush1.msra.mxu0 0.0
        %1450 = vmatprep.subr.mxu0 0.0
        %1451 = vmatpush1.msra.mxu0 0.0
        %1452 = vmatprep.subr.mxu0 0.0
        %1453 = vmatpush1.msra.mxu0 0.0
        %1454 = vmatprep.subr.mxu0 0.0
        %1455 = vmatpush1.msra.mxu0 0.0
        %1456 = vmatprep.subr.mxu0 0.0
        %1457 = vmatpush1.msra.mxu0 0.0
        %1458 = vmatprep.subr.mxu0 0.0
        %1459 = vmatpush1.msra.mxu0 0.0
        %1460 = vmatprep.subr.mxu0 0.0
        %1461 = vmatpush1.msra.mxu0 0.0
        %1462 = vmatprep.subr.mxu0 0.0
        %1463 = vmatpush1.msra.mxu0 0.0
        %1464 = vmatprep.subr.mxu0 0.0
        %1465 = vmatpush1.msra.mxu0 0.0
        %1466 = vmatprep.subr.mxu0 0.0
        %1467 = vmatpush1.msra.mxu0 0.0
        %1468 = vmatprep.subr.mxu0 0.0
        %1469 = vmatpush1.msra.mxu0 0.0
        %1470 = vmatprep.subr.mxu0 0.0
        %1471 = vmatpush1.msra.mxu0 0.0
        %1472 = vmatprep.subr.mxu0 0.0
        %1473 = vmatpush1.msra.mxu0 0.0
        %1474 = vmatprep.subr.mxu0 0.0
        %1475 = vmatpush1.msra.mxu0 0.0
        %1476 = vmatprep.subr.mxu0 0.0
        %1477 = vmatpush1.msra.mxu0 0.0
        %1478 = vmatprep.subr.mxu0 0.0
        %1479 = vmatpush1.msra.mxu0 0.0
        %1480 = vmatprep.mubr.f32.mxu0 0.0
        %1481 = vmatmul.mubr.f32.gmra.mrb[0].mxu0 %v1411
        %v1482 = vpop.f32.mrb[0].mxu0
        %v1483 = vadd.f32 0.0, %v1482
        %v1484 = vpop.f32.mrb[0].mxu0
        %1485 = vmatprep.mubr.f32.mxu0 0.0
        %1486 = vmatmul.mubr.f32.gmra.mrb[0].mxu0 %v1414
        %v1487 = vpop.f32.mrb[0].mxu0
        %v1488 = vadd.f32 0.0, %v1487
        %v1489 = vpop.f32.mrb[0].mxu0
        %1490 = vdwg.mxu0
        %1493 = vrot.lane.b32.xlu0 %v1483, 16
        %v1494 = vpop.permute.xlu0 %1493
        %1495 = vrot.lane.b32.xlu0 %v1488, 16
        %v1496 = vpop.permute.xlu0 %1495
        %v1499 = vadd.f32 %v1368, %v1494
        %v1500 = vadd.f32 %v1369, %v1496
        %v1501 = vmul.f32 %v1499, 0.5
        %v1502 = vmul.f32 %v1500, 0.5
        %1503 = vst.msk [vmem:[%s1365] sm:$0xff] %vm414, %v1501
        %1504 = vst.msk [vmem:[%s1365 + $0x8] sm:$0xff] %vm414, %v1502
        %v1505 = vld [vmem:[%s1245] sm:$0xff]
        %v1506 = vld [vmem:[%s1245 + $0x8] sm:$0xff]
        %1509 = vrot.lane.b32.xlu0 %v1505, 96
        %v1510 = vpop.permute.xlu0 %1509
        %1511 = vrot.lane.b32.xlu0 %v1506, 96
        %v1512 = vpop.permute.xlu0 %1511
        %1515 = vxpose.xlu0.b32.start [1/16] %v1510, 128
        %1516 = vxpose.xlu0.b32.cont [2/16] %v1512, 128
        %1517 = vxpose.xlu0.b32.cont [3/16] 0.0, 128
        %1518 = vxpose.xlu0.b32.cont [4/16] 0.0, 128
        %1519 = vxpose.xlu0.b32.cont [5/16] 0.0, 128
        %1520 = vxpose.xlu0.b32.cont [6/16] 0.0, 128
        %1521 = vxpose.xlu0.b32.cont [7/16] 0.0, 128
        %1522 = vxpose.xlu0.b32.cont [8/16] 0.0, 128
        %1523 = vxpose.xlu0.b32.cont [9/16] 0.0, 128
        %1524 = vxpose.xlu0.b32.cont [10/16] 0.0, 128
        %1525 = vxpose.xlu0.b32.cont [11/16] 0.0, 128
        %1526 = vxpose.xlu0.b32.cont [12/16] 0.0, 128
        %1527 = vxpose.xlu0.b32.cont [13/16] 0.0, 128
        %1528 = vxpose.xlu0.b32.cont [14/16] 0.0, 128
        %1529 = vxpose.xlu0.b32.cont [15/16] 0.0, 128
        %1530 = vxpose.xlu0.b32.end [16/16] 0.0, 128
        %v1531 = vpop.trf.xlu0
        %v1532 = vpop.trf.xlu0
        %v1533 = vpop.trf.xlu0
        %v1534 = vpop.trf.xlu0
        %v1535 = vpop.trf.xlu0
        %v1536 = vpop.trf.xlu0
        %v1537 = vpop.trf.xlu0
        %v1538 = vpop.trf.xlu0
        %v1539 = vpop.trf.xlu0
        %v1540 = vpop.trf.xlu0
        %v1541 = vpop.trf.xlu0
        %v1542 = vpop.trf.xlu0
        %v1543 = vpop.trf.xlu0
        %v1544 = vpop.trf.xlu0
        %v1545 = vpop.trf.xlu0
        %v1546 = vpop.trf.xlu0
        %v1548 = vsel %vm191, %v1531, 0
        %v1551 = vsel %vm191, %v1532, 0
        %1553 = vmatprep.subr.mxu0 0.0
        %1554 = vmatpush1.msra.mxu0 %v155
        %1555 = vmatprep.subr.mxu0 0.0
        %1556 = vmatpush1.msra.mxu0 %v156
        %1557 = vmatprep.subr.mxu0 0.0
        %1558 = vmatpush1.msra.mxu0 0.0
        %1559 = vmatprep.subr.mxu0 0.0
        %1560 = vmatpush1.msra.mxu0 0.0
        %1561 = vmatprep.subr.mxu0 0.0
        %1562 = vmatpush1.msra.mxu0 0.0
        %1563 = vmatprep.subr.mxu0 0.0
        %1564 = vmatpush1.msra.mxu0 0.0
        %1565 = vmatprep.subr.mxu0 0.0
        %1566 = vmatpush1.msra.mxu0 0.0
        %1567 = vmatprep.subr.mxu0 0.0
        %1568 = vmatpush1.msra.mxu0 0.0
        %1569 = vmatprep.subr.mxu0 0.0
        %1570 = vmatpush1.msra.mxu0 0.0
        %1571 = vmatprep.subr.mxu0 0.0
        %1572 = vmatpush1.msra.mxu0 0.0
        %1573 = vmatprep.subr.mxu0 0.0
        %1574 = vmatpush1.msra.mxu0 0.0
        %1575 = vmatprep.subr.mxu0 0.0
        %1576 = vmatpush1.msra.mxu0 0.0
        %1577 = vmatprep.subr.mxu0 0.0
        %1578 = vmatpush1.msra.mxu0 0.0
        %1579 = vmatprep.subr.mxu0 0.0
        %1580 = vmatpush1.msra.mxu0 0.0
        %1581 = vmatprep.subr.mxu0 0.0
        %1582 = vmatpush1.msra.mxu0 0.0
        %1583 = vmatprep.subr.mxu0 0.0
        %1584 = vmatpush1.msra.mxu0 0.0
        %1585 = vmatprep.subr.mxu0 0.0
        %1586 = vmatpush1.msra.mxu0 0.0
        %1587 = vmatprep.subr.mxu0 0.0
        %1588 = vmatpush1.msra.mxu0 0.0
        %1589 = vmatprep.subr.mxu0 0.0
        %1590 = vmatpush1.msra.mxu0 0.0
        %1591 = vmatprep.subr.mxu0 0.0
        %1592 = vmatpush1.msra.mxu0 0.0
        %1593 = vmatprep.subr.mxu0 0.0
        %1594 = vmatpush1.msra.mxu0 0.0
        %1595 = vmatprep.subr.mxu0 0.0
        %1596 = vmatpush1.msra.mxu0 0.0
        %1597 = vmatprep.subr.mxu0 0.0
        %1598 = vmatpush1.msra.mxu0 0.0
        %1599 = vmatprep.subr.mxu0 0.0
        %1600 = vmatpush1.msra.mxu0 0.0
        %1601 = vmatprep.subr.mxu0 0.0
        %1602 = vmatpush1.msra.mxu0 0.0
        %1603 = vmatprep.subr.mxu0 0.0
        %1604 = vmatpush1.msra.mxu0 0.0
        %1605 = vmatprep.subr.mxu0 0.0
        %1606 = vmatpush1.msra.mxu0 0.0
        %1607 = vmatprep.subr.mxu0 0.0
        %1608 = vmatpush1.msra.mxu0 0.0
        %1609 = vmatprep.subr.mxu0 0.0
        %1610 = vmatpush1.msra.mxu0 0.0
        %1611 = vmatprep.subr.mxu0 0.0
        %1612 = vmatpush1.msra.mxu0 0.0
        %1613 = vmatprep.subr.mxu0 0.0
        %1614 = vmatpush1.msra.mxu0 0.0
        %1615 = vmatprep.subr.mxu0 0.0
        %1616 = vmatpush1.msra.mxu0 0.0
        %1617 = vmatprep.mubr.f32.mxu0 0.0
        %1618 = vmatmul.mubr.f32.gmra.mrb[0].mxu0 %v1548
        %v1619 = vpop.f32.mrb[0].mxu0
        %v1620 = vadd.f32 0.0, %v1619
        %v1621 = vpop.f32.mrb[0].mxu0
        %1622 = vmatprep.mubr.f32.mxu0 0.0
        %1623 = vmatmul.mubr.f32.gmra.mrb[0].mxu0 %v1551
        %v1624 = vpop.f32.mrb[0].mxu0
        %v1625 = vadd.f32 0.0, %v1624
        %v1626 = vpop.f32.mrb[0].mxu0
        %1627 = vdwg.mxu0
        %1630 = vrot.lane.b32.xlu0 %v1620, 32
        %v1631 = vpop.permute.xlu0 %1630
        %1632 = vrot.lane.b32.xlu0 %v1625, 32
        %v1633 = vpop.permute.xlu0 %1632
        %v1636 = vadd.f32 %v1505, %v1631
        %v1637 = vadd.f32 %v1506, %v1633
        %v1638 = vmul.f32 %v1636, 0.5
        %v1639 = vmul.f32 %v1637, 0.5
        %1640 = vst.msk [vmem:[%s1365] sm:$0xff] %vm552, %v1638
        %1641 = vst.msk [vmem:[%s1365 + $0x8] sm:$0xff] %vm552, %v1639
        %v1642 = vld [vmem:[%s1245] sm:$0xff]
        %v1643 = vld [vmem:[%s1245 + $0x8] sm:$0xff]
        %1646 = vrot.lane.b32.xlu0 %v1642, 80
        %v1647 = vpop.permute.xlu0 %1646
        %1648 = vrot.lane.b32.xlu0 %v1643, 80
        %v1649 = vpop.permute.xlu0 %1648
        %1652 = vxpose.xlu0.b32.start [1/16] %v1647, 128
        %1653 = vxpose.xlu0.b32.cont [2/16] %v1649, 128
        %1654 = vxpose.xlu0.b32.cont [3/16] 0.0, 128
        %1655 = vxpose.xlu0.b32.cont [4/16] 0.0, 128
        %1656 = vxpose.xlu0.b32.cont [5/16] 0.0, 128
        %1657 = vxpose.xlu0.b32.cont [6/16] 0.0, 128
        %1658 = vxpose.xlu0.b32.cont [7/16] 0.0, 128
        %1659 = vxpose.xlu0.b32.cont [8/16] 0.0, 128
        %1660 = vxpose.xlu0.b32.cont [9/16] 0.0, 128
        %1661 = vxpose.xlu0.b32.cont [10/16] 0.0, 128
        %1662 = vxpose.xlu0.b32.cont [11/16] 0.0, 128
        %1663 = vxpose.xlu0.b32.cont [12/16] 0.0, 128
        %1664 = vxpose.xlu0.b32.cont [13/16] 0.0, 128
        %1665 = vxpose.xlu0.b32.cont [14/16] 0.0, 128
        %1666 = vxpose.xlu0.b32.cont [15/16] 0.0, 128
        %1667 = vxpose.xlu0.b32.end [16/16] 0.0, 128
        %v1668 = vpop.trf.xlu0
        %v1669 = vpop.trf.xlu0
        %v1670 = vpop.trf.xlu0
        %v1671 = vpop.trf.xlu0
        %v1672 = vpop.trf.xlu0
        %v1673 = vpop.trf.xlu0
        %v1674 = vpop.trf.xlu0
        %v1675 = vpop.trf.xlu0
        %v1676 = vpop.trf.xlu0
        %v1677 = vpop.trf.xlu0
        %v1678 = vpop.trf.xlu0
        %v1679 = vpop.trf.xlu0
        %v1680 = vpop.trf.xlu0
        %v1681 = vpop.trf.xlu0
        %v1682 = vpop.trf.xlu0
        %v1683 = vpop.trf.xlu0
        %v1685 = vsel %vm191, %v1668, 0
        %v1688 = vsel %vm191, %v1669, 0
        %1690 = vmatprep.subr.mxu0 0.0
        %1691 = vmatpush1.msra.mxu0 %v155
        %1692 = vmatprep.subr.mxu0 0.0
        %1693 = vmatpush1.msra.mxu0 %v156
        %1694 = vmatprep.subr.mxu0 0.0
        %1695 = vmatpush1.msra.mxu0 0.0
        %1696 = vmatprep.subr.mxu0 0.0
        %1697 = vmatpush1.msra.mxu0 0.0
        %1698 = vmatprep.subr.mxu0 0.0
        %1699 = vmatpush1.msra.mxu0 0.0
        %1700 = vmatprep.subr.mxu0 0.0
        %1701 = vmatpush1.msra.mxu0 0.0
        %1702 = vmatprep.subr.mxu0 0.0
        %1703 = vmatpush1.msra.mxu0 0.0
        %1704 = vmatprep.subr.mxu0 0.0
        %1705 = vmatpush1.msra.mxu0 0.0
        %1706 = vmatprep.subr.mxu0 0.0
        %1707 = vmatpush1.msra.mxu0 0.0
        %1708 = vmatprep.subr.mxu0 0.0
        %1709 = vmatpush1.msra.mxu0 0.0
        %1710 = vmatprep.subr.mxu0 0.0
        %1711 = vmatpush1.msra.mxu0 0.0
        %1712 = vmatprep.subr.mxu0 0.0
        %1713 = vmatpush1.msra.mxu0 0.0
        %1714 = vmatprep.subr.mxu0 0.0
        %1715 = vmatpush1.msra.mxu0 0.0
        %1716 = vmatprep.subr.mxu0 0.0
        %1717 = vmatpush1.msra.mxu0 0.0
        %1718 = vmatprep.subr.mxu0 0.0
        %1719 = vmatpush1.msra.mxu0 0.0
        %1720 = vmatprep.subr.mxu0 0.0
        %1721 = vmatpush1.msra.mxu0 0.0
        %1722 = vmatprep.subr.mxu0 0.0
        %1723 = vmatpush1.msra.mxu0 0.0
        %1724 = vmatprep.subr.mxu0 0.0
        %1725 = vmatpush1.msra.mxu0 0.0
        %1726 = vmatprep.subr.mxu0 0.0
        %1727 = vmatpush1.msra.mxu0 0.0
        %1728 = vmatprep.subr.mxu0 0.0
        %1729 = vmatpush1.msra.mxu0 0.0
        %1730 = vmatprep.subr.mxu0 0.0
        %1731 = vmatpush1.msra.mxu0 0.0
        %1732 = vmatprep.subr.mxu0 0.0
        %1733 = vmatpush1.msra.mxu0 0.0
        %1734 = vmatprep.subr.mxu0 0.0
        %1735 = vmatpush1.msra.mxu0 0.0
        %1736 = vmatprep.subr.mxu0 0.0
        %1737 = vmatpush1.msra.mxu0 0.0
        %1738 = vmatprep.subr.mxu0 0.0
        %1739 = vmatpush1.msra.mxu0 0.0
        %1740 = vmatprep.subr.mxu0 0.0
        %1741 = vmatpush1.msra.mxu0 0.0
        %1742 = vmatprep.subr.mxu0 0.0
        %1743 = vmatpush1.msra.mxu0 0.0
        %1744 = vmatprep.subr.mxu0 0.0
        %1745 = vmatpush1.msra.mxu0 0.0
        %1746 = vmatprep.subr.mxu0 0.0
        %1747 = vmatpush1.msra.mxu0 0.0
        %1748 = vmatprep.subr.mxu0 0.0
        %1749 = vmatpush1.msra.mxu0 0.0
        %1750 = vmatprep.subr.mxu0 0.0
        %1751 = vmatpush1.msra.mxu0 0.0
        %1752 = vmatprep.subr.mxu0 0.0
        %1753 = vmatpush1.msra.mxu0 0.0
        %1754 = vmatprep.mubr.f32.mxu0 0.0
        %1755 = vmatmul.mubr.f32.gmra.mrb[0].mxu0 %v1685
        %v1756 = vpop.f32.mrb[0].mxu0
        %v1757 = vadd.f32 0.0, %v1756
        %v1758 = vpop.f32.mrb[0].mxu0
        %1759 = vmatprep.mubr.f32.mxu0 0.0
        %1760 = vmatmul.mubr.f32.gmra.mrb[0].mxu0 %v1688
        %v1761 = vpop.f32.mrb[0].mxu0
        %v1762 = vadd.f32 0.0, %v1761
        %v1763 = vpop.f32.mrb[0].mxu0
        %1764 = vdwg.mxu0
        %1767 = vrot.lane.b32.xlu0 %v1757, 48
        %v1768 = vpop.permute.xlu0 %1767
        %1769 = vrot.lane.b32.xlu0 %v1762, 48
        %v1770 = vpop.permute.xlu0 %1769
        %v1773 = vadd.f32 %v1642, %v1768
        %v1774 = vadd.f32 %v1643, %v1770
        %v1775 = vmul.f32 %v1773, 0.5
        %v1776 = vmul.f32 %v1774, 0.5
        %1777 = vst.msk [vmem:[%s1365] sm:$0xff] %vm690, %v1775
        %1778 = vst.msk [vmem:[%s1365 + $0x8] sm:$0xff] %vm690, %v1776
        %v1779 = vld [vmem:[%s1245] sm:$0xff]
        %v1780 = vld [vmem:[%s1245 + $0x8] sm:$0xff]
        %1783 = vrot.lane.b32.xlu0 %v1779, 64
        %v1784 = vpop.permute.xlu0 %1783
        %1785 = vrot.lane.b32.xlu0 %v1780, 64
        %v1786 = vpop.permute.xlu0 %1785
        %1789 = vxpose.xlu0.b32.start [1/16] %v1784, 128
        %1790 = vxpose.xlu0.b32.cont [2/16] %v1786, 128
        %1791 = vxpose.xlu0.b32.cont [3/16] 0.0, 128
        %1792 = vxpose.xlu0.b32.cont [4/16] 0.0, 128
        %1793 = vxpose.xlu0.b32.cont [5/16] 0.0, 128
        %1794 = vxpose.xlu0.b32.cont [6/16] 0.0, 128
        %1795 = vxpose.xlu0.b32.cont [7/16] 0.0, 128
        %1796 = vxpose.xlu0.b32.cont [8/16] 0.0, 128
        %1797 = vxpose.xlu0.b32.cont [9/16] 0.0, 128
        %1798 = vxpose.xlu0.b32.cont [10/16] 0.0, 128
        %1799 = vxpose.xlu0.b32.cont [11/16] 0.0, 128
        %1800 = vxpose.xlu0.b32.cont [12/16] 0.0, 128
        %1801 = vxpose.xlu0.b32.cont [13/16] 0.0, 128
        %1802 = vxpose.xlu0.b32.cont [14/16] 0.0, 128
        %1803 = vxpose.xlu0.b32.cont [15/16] 0.0, 128
        %1804 = vxpose.xlu0.b32.end [16/16] 0.0, 128
        %v1805 = vpop.trf.xlu0
        %v1806 = vpop.trf.xlu0
        %v1807 = vpop.trf.xlu0
        %v1808 = vpop.trf.xlu0
        %v1809 = vpop.trf.xlu0
        %v1810 = vpop.trf.xlu0
        %v1811 = vpop.trf.xlu0
        %v1812 = vpop.trf.xlu0
        %v1813 = vpop.trf.xlu0
        %v1814 = vpop.trf.xlu0
        %v1815 = vpop.trf.xlu0
        %v1816 = vpop.trf.xlu0
        %v1817 = vpop.trf.xlu0
        %v1818 = vpop.trf.xlu0
        %v1819 = vpop.trf.xlu0
        %v1820 = vpop.trf.xlu0
        %v1822 = vsel %vm191, %v1805, 0
        %v1825 = vsel %vm191, %v1806, 0
        %1827 = vmatprep.subr.mxu0 0.0
        %1828 = vmatpush1.msra.mxu0 %v155
        %1829 = vmatprep.subr.mxu0 0.0
        %1830 = vmatpush1.msra.mxu0 %v156
        %1831 = vmatprep.subr.mxu0 0.0
        %1832 = vmatpush1.msra.mxu0 0.0
        %1833 = vmatprep.subr.mxu0 0.0
        %1834 = vmatpush1.msra.mxu0 0.0
        %1835 = vmatprep.subr.mxu0 0.0
        %1836 = vmatpush1.msra.mxu0 0.0
        %1837 = vmatprep.subr.mxu0 0.0
        %1838 = vmatpush1.msra.mxu0 0.0
        %1839 = vmatprep.subr.mxu0 0.0
        %1840 = vmatpush1.msra.mxu0 0.0
        %1841 = vmatprep.subr.mxu0 0.0
        %1842 = vmatpush1.msra.mxu0 0.0
        %1843 = vmatprep.subr.mxu0 0.0
        %1844 = vmatpush1.msra.mxu0 0.0
        %1845 = vmatprep.subr.mxu0 0.0
        %1846 = vmatpush1.msra.mxu0 0.0
        %1847 = vmatprep.subr.mxu0 0.0
        %1848 = vmatpush1.msra.mxu0 0.0
        %1849 = vmatprep.subr.mxu0 0.0
        %1850 = vmatpush1.msra.mxu0 0.0
        %1851 = vmatprep.subr.mxu0 0.0
        %1852 = vmatpush1.msra.mxu0 0.0
        %1853 = vmatprep.subr.mxu0 0.0
        %1854 = vmatpush1.msra.mxu0 0.0
        %1855 = vmatprep.subr.mxu0 0.0
        %1856 = vmatpush1.msra.mxu0 0.0
        %1857 = vmatprep.subr.mxu0 0.0
        %1858 = vmatpush1.msra.mxu0 0.0
        %1859 = vmatprep.subr.mxu0 0.0
        %1860 = vmatpush1.msra.mxu0 0.0
        %1861 = vmatprep.subr.mxu0 0.0
        %1862 = vmatpush1.msra.mxu0 0.0
        %1863 = vmatprep.subr.mxu0 0.0
        %1864 = vmatpush1.msra.mxu0 0.0
        %1865 = vmatprep.subr.mxu0 0.0
        %1866 = vmatpush1.msra.mxu0 0.0
        %1867 = vmatprep.subr.mxu0 0.0
        %1868 = vmatpush1.msra.mxu0 0.0
        %1869 = vmatprep.subr.mxu0 0.0
        %1870 = vmatpush1.msra.mxu0 0.0
        %1871 = vmatprep.subr.mxu0 0.0
        %1872 = vmatpush1.msra.mxu0 0.0
        %1873 = vmatprep.subr.mxu0 0.0
        %1874 = vmatpush1.msra.mxu0 0.0
        %1875 = vmatprep.subr.mxu0 0.0
        %1876 = vmatpush1.msra.mxu0 0.0
        %1877 = vmatprep.subr.mxu0 0.0
        %1878 = vmatpush1.msra.mxu0 0.0
        %1879 = vmatprep.subr.mxu0 0.0
        %1880 = vmatpush1.msra.mxu0 0.0
        %1881 = vmatprep.subr.mxu0 0.0
        %1882 = vmatpush1.msra.mxu0 0.0
        %1883 = vmatprep.subr.mxu0 0.0
        %1884 = vmatpush1.msra.mxu0 0.0
        %1885 = vmatprep.subr.mxu0 0.0
        %1886 = vmatpush1.msra.mxu0 0.0
        %1887 = vmatprep.subr.mxu0 0.0
        %1888 = vmatpush1.msra.mxu0 0.0
        %1889 = vmatprep.subr.mxu0 0.0
        %1890 = vmatpush1.msra.mxu0 0.0
        %1891 = vmatprep.mubr.f32.mxu0 0.0
        %1892 = vmatmul.mubr.f32.gmra.mrb[0].mxu0 %v1822
        %v1893 = vpop.f32.mrb[0].mxu0
        %v1894 = vadd.f32 0.0, %v1893
        %v1895 = vpop.f32.mrb[0].mxu0
        %1896 = vmatprep.mubr.f32.mxu0 0.0
        %1897 = vmatmul.mubr.f32.gmra.mrb[0].mxu0 %v1825
        %v1898 = vpop.f32.mrb[0].mxu0
        %v1899 = vadd.f32 0.0, %v1898
        %v1900 = vpop.f32.mrb[0].mxu0
        %1901 = vdwg.mxu0
        %1904 = vrot.lane.b32.xlu0 %v1894, 64
        %v1905 = vpop.permute.xlu0 %1904
        %1906 = vrot.lane.b32.xlu0 %v1899, 64
        %v1907 = vpop.permute.xlu0 %1906
        %v1910 = vadd.f32 %v1779, %v1905
        %v1911 = vadd.f32 %v1780, %v1907
        %v1912 = vmul.f32 %v1910, 0.5
        %v1913 = vmul.f32 %v1911, 0.5
        %1914 = vst.msk [vmem:[%s1365] sm:$0xff] %vm828, %v1912
        %1915 = vst.msk [vmem:[%s1365 + $0x8] sm:$0xff] %vm828, %v1913
        %v1916 = vld [vmem:[%s1245] sm:$0xff]
        %v1917 = vld [vmem:[%s1245 + $0x8] sm:$0xff]
        %1920 = vrot.lane.b32.xlu0 %v1916, 48
        %v1921 = vpop.permute.xlu0 %1920
        %1922 = vrot.lane.b32.xlu0 %v1917, 48
        %v1923 = vpop.permute.xlu0 %1922
        %1926 = vxpose.xlu0.b32.start [1/16] %v1921, 128
        %1927 = vxpose.xlu0.b32.cont [2/16] %v1923, 128
        %1928 = vxpose.xlu0.b32.cont [3/16] 0.0, 128
        %1929 = vxpose.xlu0.b32.cont [4/16] 0.0, 128
        %1930 = vxpose.xlu0.b32.cont [5/16] 0.0, 128
        %1931 = vxpose.xlu0.b32.cont [6/16] 0.0, 128
        %1932 = vxpose.xlu0.b32.cont [7/16] 0.0, 128
        %1933 = vxpose.xlu0.b32.cont [8/16] 0.0, 128
        %1934 = vxpose.xlu0.b32.cont [9/16] 0.0, 128
        %1935 = vxpose.xlu0.b32.cont [10/16] 0.0, 128
        %1936 = vxpose.xlu0.b32.cont [11/16] 0.0, 128
        %1937 = vxpose.xlu0.b32.cont [12/16] 0.0, 128
        %1938 = vxpose.xlu0.b32.cont [13/16] 0.0, 128
        %1939 = vxpose.xlu0.b32.cont [14/16] 0.0, 128
        %1940 = vxpose.xlu0.b32.cont [15/16] 0.0, 128
        %1941 = vxpose.xlu0.b32.end [16/16] 0.0, 128
        %v1942 = vpop.trf.xlu0
        %v1943 = vpop.trf.xlu0
        %v1944 = vpop.trf.xlu0
        %v1945 = vpop.trf.xlu0
        %v1946 = vpop.trf.xlu0
        %v1947 = vpop.trf.xlu0
        %v1948 = vpop.trf.xlu0
        %v1949 = vpop.trf.xlu0
        %v1950 = vpop.trf.xlu0
        %v1951 = vpop.trf.xlu0
        %v1952 = vpop.trf.xlu0
        %v1953 = vpop.trf.xlu0
        %v1954 = vpop.trf.xlu0
        %v1955 = vpop.trf.xlu0
        %v1956 = vpop.trf.xlu0
        %v1957 = vpop.trf.xlu0
        %v1959 = vsel %vm191, %v1942, 0
        %v1962 = vsel %vm191, %v1943, 0
        %1964 = vmatprep.subr.mxu0 0.0
        %1965 = vmatpush1.msra.mxu0 %v155
        %1966 = vmatprep.subr.mxu0 0.0
        %1967 = vmatpush1.msra.mxu0 %v156
        %1968 = vmatprep.subr.mxu0 0.0
        %1969 = vmatpush1.msra.mxu0 0.0
        %1970 = vmatprep.subr.mxu0 0.0
        %1971 = vmatpush1.msra.mxu0 0.0
        %1972 = vmatprep.subr.mxu0 0.0
        %1973 = vmatpush1.msra.mxu0 0.0
        %1974 = vmatprep.subr.mxu0 0.0
        %1975 = vmatpush1.msra.mxu0 0.0
        %1976 = vmatprep.subr.mxu0 0.0
        %1977 = vmatpush1.msra.mxu0 0.0
        %1978 = vmatprep.subr.mxu0 0.0
        %1979 = vmatpush1.msra.mxu0 0.0
        %1980 = vmatprep.subr.mxu0 0.0
        %1981 = vmatpush1.msra.mxu0 0.0
        %1982 = vmatprep.subr.mxu0 0.0
        %1983 = vmatpush1.msra.mxu0 0.0
        %1984 = vmatprep.subr.mxu0 0.0
        %1985 = vmatpush1.msra.mxu0 0.0
        %1986 = vmatprep.subr.mxu0 0.0
        %1987 = vmatpush1.msra.mxu0 0.0
        %1988 = vmatprep.subr.mxu0 0.0
        %1989 = vmatpush1.msra.mxu0 0.0
        %1990 = vmatprep.subr.mxu0 0.0
        %1991 = vmatpush1.msra.mxu0 0.0
        %1992 = vmatprep.subr.mxu0 0.0
        %1993 = vmatpush1.msra.mxu0 0.0
        %1994 = vmatprep.subr.mxu0 0.0
        %1995 = vmatpush1.msra.mxu0 0.0
        %1996 = vmatprep.subr.mxu0 0.0
        %1997 = vmatpush1.msra.mxu0 0.0
        %1998 = vmatprep.subr.mxu0 0.0
        %1999 = vmatpush1.msra.mxu0 0.0
        %2000 = vmatprep.subr.mxu0 0.0
        %2001 = vmatpush1.msra.mxu0 0.0
        %2002 = vmatprep.subr.mxu0 0.0
        %2003 = vmatpush1.msra.mxu0 0.0
        %2004 = vmatprep.subr.mxu0 0.0
        %2005 = vmatpush1.msra.mxu0 0.0
        %2006 = vmatprep.subr.mxu0 0.0
        %2007 = vmatpush1.msra.mxu0 0.0
        %2008 = vmatprep.subr.mxu0 0.0
        %2009 = vmatpush1.msra.mxu0 0.0
        %2010 = vmatprep.subr.mxu0 0.0
        %2011 = vmatpush1.msra.mxu0 0.0
        %2012 = vmatprep.subr.mxu0 0.0
        %2013 = vmatpush1.msra.mxu0 0.0
        %2014 = vmatprep.subr.mxu0 0.0
        %2015 = vmatpush1.msra.mxu0 0.0
        %2016 = vmatprep.subr.mxu0 0.0
        %2017 = vmatpush1.msra.mxu0 0.0
        %2018 = vmatprep.subr.mxu0 0.0
        %2019 = vmatpush1.msra.mxu0 0.0
        %2020 = vmatprep.subr.mxu0 0.0
        %2021 = vmatpush1.msra.mxu0 0.0
        %2022 = vmatprep.subr.mxu0 0.0
        %2023 = vmatpush1.msra.mxu0 0.0
        %2024 = vmatprep.subr.mxu0 0.0
        %2025 = vmatpush1.msra.mxu0 0.0
        %2026 = vmatprep.subr.mxu0 0.0
        %2027 = vmatpush1.msra.mxu0 0.0
        %2028 = vmatprep.mubr.f32.mxu0 0.0
        %2029 = vmatmul.mubr.f32.gmra.mrb[0].mxu0 %v1959
        %v2030 = vpop.f32.mrb[0].mxu0
        %v2031 = vadd.f32 0.0, %v2030
        %v2032 = vpop.f32.mrb[0].mxu0
        %2033 = vmatprep.mubr.f32.mxu0 0.0
        %2034 = vmatmul.mubr.f32.gmra.mrb[0].mxu0 %v1962
        %v2035 = vpop.f32.mrb[0].mxu0
        %v2036 = vadd.f32 0.0, %v2035
        %v2037 = vpop.f32.mrb[0].mxu0
        %2038 = vdwg.mxu0
        %2041 = vrot.lane.b32.xlu0 %v2031, 80
        %v2042 = vpop.permute.xlu0 %2041
        %2043 = vrot.lane.b32.xlu0 %v2036, 80
        %v2044 = vpop.permute.xlu0 %2043
        %v2047 = vadd.f32 %v1916, %v2042
        %v2048 = vadd.f32 %v1917, %v2044
        %v2049 = vmul.f32 %v2047, 0.5
        %v2050 = vmul.f32 %v2048, 0.5
        %2051 = vst.msk [vmem:[%s1365] sm:$0xff] %vm966, %v2049
        %2052 = vst.msk [vmem:[%s1365 + $0x8] sm:$0xff] %vm966, %v2050
        %v2053 = vld [vmem:[%s1245] sm:$0xff]
        %v2054 = vld [vmem:[%s1245 + $0x8] sm:$0xff]
        %2057 = vrot.lane.b32.xlu0 %v2053, 32
        %v2058 = vpop.permute.xlu0 %2057
        %2059 = vrot.lane.b32.xlu0 %v2054, 32
        %v2060 = vpop.permute.xlu0 %2059
        %2063 = vxpose.xlu0.b32.start [1/16] %v2058, 128
        %2064 = vxpose.xlu0.b32.cont [2/16] %v2060, 128
        %2065 = vxpose.xlu0.b32.cont [3/16] 0.0, 128
        %2066 = vxpose.xlu0.b32.cont [4/16] 0.0, 128
        %2067 = vxpose.xlu0.b32.cont [5/16] 0.0, 128
        %2068 = vxpose.xlu0.b32.cont [6/16] 0.0, 128
        %2069 = vxpose.xlu0.b32.cont [7/16] 0.0, 128
        %2070 = vxpose.xlu0.b32.cont [8/16] 0.0, 128
        %2071 = vxpose.xlu0.b32.cont [9/16] 0.0, 128
        %2072 = vxpose.xlu0.b32.cont [10/16] 0.0, 128
        %2073 = vxpose.xlu0.b32.cont [11/16] 0.0, 128
        %2074 = vxpose.xlu0.b32.cont [12/16] 0.0, 128
        %2075 = vxpose.xlu0.b32.cont [13/16] 0.0, 128
        %2076 = vxpose.xlu0.b32.cont [14/16] 0.0, 128
        %2077 = vxpose.xlu0.b32.cont [15/16] 0.0, 128
        %2078 = vxpose.xlu0.b32.end [16/16] 0.0, 128
        %v2079 = vpop.trf.xlu0
        %v2080 = vpop.trf.xlu0
        %v2081 = vpop.trf.xlu0
        %v2082 = vpop.trf.xlu0
        %v2083 = vpop.trf.xlu0
        %v2084 = vpop.trf.xlu0
        %v2085 = vpop.trf.xlu0
        %v2086 = vpop.trf.xlu0
        %v2087 = vpop.trf.xlu0
        %v2088 = vpop.trf.xlu0
        %v2089 = vpop.trf.xlu0
        %v2090 = vpop.trf.xlu0
        %v2091 = vpop.trf.xlu0
        %v2092 = vpop.trf.xlu0
        %v2093 = vpop.trf.xlu0
        %v2094 = vpop.trf.xlu0
        %v2096 = vsel %vm191, %v2079, 0
        %v2099 = vsel %vm191, %v2080, 0
        %2101 = vmatprep.subr.mxu0 0.0
        %2102 = vmatpush1.msra.mxu0 %v155
        %2103 = vmatprep.subr.mxu0 0.0
        %2104 = vmatpush1.msra.mxu0 %v156
        %2105 = vmatprep.subr.mxu0 0.0
        %2106 = vmatpush1.msra.mxu0 0.0
        %2107 = vmatprep.subr.mxu0 0.0
        %2108 = vmatpush1.msra.mxu0 0.0
        %2109 = vmatprep.subr.mxu0 0.0
        %2110 = vmatpush1.msra.mxu0 0.0
        %2111 = vmatprep.subr.mxu0 0.0
        %2112 = vmatpush1.msra.mxu0 0.0
        %2113 = vmatprep.subr.mxu0 0.0
        %2114 = vmatpush1.msra.mxu0 0.0
        %2115 = vmatprep.subr.mxu0 0.0
        %2116 = vmatpush1.msra.mxu0 0.0
        %2117 = vmatprep.subr.mxu0 0.0
        %2118 = vmatpush1.msra.mxu0 0.0
        %2119 = vmatprep.subr.mxu0 0.0
        %2120 = vmatpush1.msra.mxu0 0.0
        %2121 = vmatprep.subr.mxu0 0.0
        %2122 = vmatpush1.msra.mxu0 0.0
        %2123 = vmatprep.subr.mxu0 0.0
        %2124 = vmatpush1.msra.mxu0 0.0
        %2125 = vmatprep.subr.mxu0 0.0
        %2126 = vmatpush1.msra.mxu0 0.0
        %2127 = vmatprep.subr.mxu0 0.0
        %2128 = vmatpush1.msra.mxu0 0.0
        %2129 = vmatprep.subr.mxu0 0.0
        %2130 = vmatpush1.msra.mxu0 0.0
        %2131 = vmatprep.subr.mxu0 0.0
        %2132 = vmatpush1.msra.mxu0 0.0
        %2133 = vmatprep.subr.mxu0 0.0
        %2134 = vmatpush1.msra.mxu0 0.0
        %2135 = vmatprep.subr.mxu0 0.0
        %2136 = vmatpush1.msra.mxu0 0.0
        %2137 = vmatprep.subr.mxu0 0.0
        %2138 = vmatpush1.msra.mxu0 0.0
        %2139 = vmatprep.subr.mxu0 0.0
        %2140 = vmatpush1.msra.mxu0 0.0
        %2141 = vmatprep.subr.mxu0 0.0
        %2142 = vmatpush1.msra.mxu0 0.0
        %2143 = vmatprep.subr.mxu0 0.0
        %2144 = vmatpush1.msra.mxu0 0.0
        %2145 = vmatprep.subr.mxu0 0.0
        %2146 = vmatpush1.msra.mxu0 0.0
        %2147 = vmatprep.subr.mxu0 0.0
        %2148 = vmatpush1.msra.mxu0 0.0
        %2149 = vmatprep.subr.mxu0 0.0
        %2150 = vmatpush1.msra.mxu0 0.0
        %2151 = vmatprep.subr.mxu0 0.0
        %2152 = vmatpush1.msra.mxu0 0.0
        %2153 = vmatprep.subr.mxu0 0.0
        %2154 = vmatpush1.msra.mxu0 0.0
        %2155 = vmatprep.subr.mxu0 0.0
        %2156 = vmatpush1.msra.mxu0 0.0
        %2157 = vmatprep.subr.mxu0 0.0
        %2158 = vmatpush1.msra.mxu0 0.0
        %2159 = vmatprep.subr.mxu0 0.0
        %2160 = vmatpush1.msra.mxu0 0.0
        %2161 = vmatprep.subr.mxu0 0.0
        %2162 = vmatpush1.msra.mxu0 0.0
        %2163 = vmatprep.subr.mxu0 0.0
        %2164 = vmatpush1.msra.mxu0 0.0
        %2165 = vmatprep.mubr.f32.mxu0 0.0
        %2166 = vmatmul.mubr.f32.gmra.mrb[0].mxu0 %v2096
        %v2167 = vpop.f32.mrb[0].mxu0
        %v2168 = vadd.f32 0.0, %v2167
        %v2169 = vpop.f32.mrb[0].mxu0
        %2170 = vmatprep.mubr.f32.mxu0 0.0
        %2171 = vmatmul.mubr.f32.gmra.mrb[0].mxu0 %v2099
        %v2172 = vpop.f32.mrb[0].mxu0
        %v2173 = vadd.f32 0.0, %v2172
        %v2174 = vpop.f32.mrb[0].mxu0
        %2175 = vdwg.mxu0
        %2178 = vrot.lane.b32.xlu0 %v2168, 96
        %v2179 = vpop.permute.xlu0 %2178
        %2180 = vrot.lane.b32.xlu0 %v2173, 96
        %v2181 = vpop.permute.xlu0 %2180
        %v2184 = vadd.f32 %v2053, %v2179
        %v2185 = vadd.f32 %v2054, %v2181
        %v2186 = vmul.f32 %v2184, 0.5
        %v2187 = vmul.f32 %v2185, 0.5
        %2188 = vst.msk [vmem:[%s1365] sm:$0xff] %vm1104, %v2186
        %2189 = vst.msk [vmem:[%s1365 + $0x8] sm:$0xff] %vm1104, %v2187
        %v2190 = vld [vmem:[%s1245] sm:$0xff]
        %v2191 = vld [vmem:[%s1245 + $0x8] sm:$0xff]
        %2194 = vrot.lane.b32.xlu0 %v2190, 16
        %v2195 = vpop.permute.xlu0 %2194
        %2196 = vrot.lane.b32.xlu0 %v2191, 16
        %v2197 = vpop.permute.xlu0 %2196
        %2200 = vxpose.xlu0.b32.start [1/16] %v2195, 128
        %2201 = vxpose.xlu0.b32.cont [2/16] %v2197, 128
        %2202 = vxpose.xlu0.b32.cont [3/16] 0.0, 128
        %2203 = vxpose.xlu0.b32.cont [4/16] 0.0, 128
        %2204 = vxpose.xlu0.b32.cont [5/16] 0.0, 128
        %2205 = vxpose.xlu0.b32.cont [6/16] 0.0, 128
        %2206 = vxpose.xlu0.b32.cont [7/16] 0.0, 128
        %2207 = vxpose.xlu0.b32.cont [8/16] 0.0, 128
        %2208 = vxpose.xlu0.b32.cont [9/16] 0.0, 128
        %2209 = vxpose.xlu0.b32.cont [10/16] 0.0, 128
        %2210 = vxpose.xlu0.b32.cont [11/16] 0.0, 128
        %2211 = vxpose.xlu0.b32.cont [12/16] 0.0, 128
        %2212 = vxpose.xlu0.b32.cont [13/16] 0.0, 128
        %2213 = vxpose.xlu0.b32.cont [14/16] 0.0, 128
        %2214 = vxpose.xlu0.b32.cont [15/16] 0.0, 128
        %2215 = vxpose.xlu0.b32.end [16/16] 0.0, 128
        %v2216 = vpop.trf.xlu0
        %v2217 = vpop.trf.xlu0
        %v2218 = vpop.trf.xlu0
        %v2219 = vpop.trf.xlu0
        %v2220 = vpop.trf.xlu0
        %v2221 = vpop.trf.xlu0
        %v2222 = vpop.trf.xlu0
        %v2223 = vpop.trf.xlu0
        %v2224 = vpop.trf.xlu0
        %v2225 = vpop.trf.xlu0
        %v2226 = vpop.trf.xlu0
        %v2227 = vpop.trf.xlu0
        %v2228 = vpop.trf.xlu0
        %v2229 = vpop.trf.xlu0
        %v2230 = vpop.trf.xlu0
        %v2231 = vpop.trf.xlu0
        %v2233 = vsel %vm191, %v2216, 0
        %v2236 = vsel %vm191, %v2217, 0
        %2238 = vmatprep.subr.mxu0 0.0
        %2239 = vmatpush1.msra.mxu0 %v155
        %2240 = vmatprep.subr.mxu0 0.0
        %2241 = vmatpush1.msra.mxu0 %v156
        %2242 = vmatprep.subr.mxu0 0.0
        %2243 = vmatpush1.msra.mxu0 0.0
        %2244 = vmatprep.subr.mxu0 0.0
        %2245 = vmatpush1.msra.mxu0 0.0
        %2246 = vmatprep.subr.mxu0 0.0
        %2247 = vmatpush1.msra.mxu0 0.0
        %2248 = vmatprep.subr.mxu0 0.0
        %2249 = vmatpush1.msra.mxu0 0.0
        %2250 = vmatprep.subr.mxu0 0.0
        %2251 = vmatpush1.msra.mxu0 0.0
        %2252 = vmatprep.subr.mxu0 0.0
        %2253 = vmatpush1.msra.mxu0 0.0
        %2254 = vmatprep.subr.mxu0 0.0
        %2255 = vmatpush1.msra.mxu0 0.0
        %2256 = vmatprep.subr.mxu0 0.0
        %2257 = vmatpush1.msra.mxu0 0.0
        %2258 = vmatprep.subr.mxu0 0.0
        %2259 = vmatpush1.msra.mxu0 0.0
        %2260 = vmatprep.subr.mxu0 0.0
        %2261 = vmatpush1.msra.mxu0 0.0
        %2262 = vmatprep.subr.mxu0 0.0
        %2263 = vmatpush1.msra.mxu0 0.0
        %2264 = vmatprep.subr.mxu0 0.0
        %2265 = vmatpush1.msra.mxu0 0.0
        %2266 = vmatprep.subr.mxu0 0.0
        %2267 = vmatpush1.msra.mxu0 0.0
        %2268 = vmatprep.subr.mxu0 0.0
        %2269 = vmatpush1.msra.mxu0 0.0
        %2270 = vmatprep.subr.mxu0 0.0
        %2271 = vmatpush1.msra.mxu0 0.0
        %2272 = vmatprep.subr.mxu0 0.0
        %2273 = vmatpush1.msra.mxu0 0.0
        %2274 = vmatprep.subr.mxu0 0.0
        %2275 = vmatpush1.msra.mxu0 0.0
        %2276 = vmatprep.subr.mxu0 0.0
        %2277 = vmatpush1.msra.mxu0 0.0
        %2278 = vmatprep.subr.mxu0 0.0
        %2279 = vmatpush1.msra.mxu0 0.0
        %2280 = vmatprep.subr.mxu0 0.0
        %2281 = vmatpush1.msra.mxu0 0.0
        %2282 = vmatprep.subr.mxu0 0.0
        %2283 = vmatpush1.msra.mxu0 0.0
        %2284 = vmatprep.subr.mxu0 0.0
        %2285 = vmatpush1.msra.mxu0 0.0
        %2286 = vmatprep.subr.mxu0 0.0
        %2287 = vmatpush1.msra.mxu0 0.0
        %2288 = vmatprep.subr.mxu0 0.0
        %2289 = vmatpush1.msra.mxu0 0.0
        %2290 = vmatprep.subr.mxu0 0.0
        %2291 = vmatpush1.msra.mxu0 0.0
        %2292 = vmatprep.subr.mxu0 0.0
        %2293 = vmatpush1.msra.mxu0 0.0
        %2294 = vmatprep.subr.mxu0 0.0
        %2295 = vmatpush1.msra.mxu0 0.0
        %2296 = vmatprep.subr.mxu0 0.0
        %2297 = vmatpush1.msra.mxu0 0.0
        %2298 = vmatprep.subr.mxu0 0.0
        %2299 = vmatpush1.msra.mxu0 0.0
        %2300 = vmatprep.subr.mxu0 0.0
        %2301 = vmatpush1.msra.mxu0 0.0
        %2302 = vmatprep.mubr.f32.mxu0 0.0
        %2303 = vmatmul.mubr.f32.gmra.mrb[0].mxu0 %v2233
        %v2304 = vpop.f32.mrb[0].mxu0
        %v2305 = vadd.f32 0.0, %v2304
        %v2306 = vpop.f32.mrb[0].mxu0
        %2307 = vmatprep.mubr.f32.mxu0 0.0
        %2308 = vmatmul.mubr.f32.gmra.mrb[0].mxu0 %v2236
        %v2309 = vpop.f32.mrb[0].mxu0
        %v2310 = vadd.f32 0.0, %v2309
        %v2311 = vpop.f32.mrb[0].mxu0
        %2312 = vdwg.mxu0
        %2315 = vrot.lane.b32.xlu0 %v2305, 112
        %v2316 = vpop.permute.xlu0 %2315
        %2317 = vrot.lane.b32.xlu0 %v2310, 112
        %v2318 = vpop.permute.xlu0 %2317
        %v2321 = vadd.f32 %v2190, %v2316
        %v2322 = vadd.f32 %v2191, %v2318
        %v2323 = vmul.f32 %v2321, 0.5
        %v2324 = vmul.f32 %v2322, 0.5
        %2325 = vst.msk [vmem:[%s1365] sm:$0xff] %vm1242, %v2323
        %2326 = vst.msk [vmem:[%s1365 + $0x8] sm:$0xff] %vm1242, %v2324
        %s2327 = scalar_lea.vmem %s143, 32
        %v2328 = vld [vmem:[%s2327] sm:$0xff]
        %v2329 = vld [vmem:[%s2327 + $0x8] sm:$0xff]
        %2330 = vxpose.xlu0.b32.start [1/16] %v2328, 128
        %2331 = vxpose.xlu0.b32.cont [2/16] %v2329, 128
        %2332 = vxpose.xlu0.b32.cont [3/16] 0.0, 128
        %2333 = vxpose.xlu0.b32.cont [4/16] 0.0, 128
        %2334 = vxpose.xlu0.b32.cont [5/16] 0.0, 128
        %2335 = vxpose.xlu0.b32.cont [6/16] 0.0, 128
        %2336 = vxpose.xlu0.b32.cont [7/16] 0.0, 128
        %2337 = vxpose.xlu0.b32.cont [8/16] 0.0, 128
        %2338 = vxpose.xlu0.b32.cont [9/16] 0.0, 128
        %2339 = vxpose.xlu0.b32.cont [10/16] 0.0, 128
        %2340 = vxpose.xlu0.b32.cont [11/16] 0.0, 128
        %2341 = vxpose.xlu0.b32.cont [12/16] 0.0, 128
        %2342 = vxpose.xlu0.b32.cont [13/16] 0.0, 128
        %2343 = vxpose.xlu0.b32.cont [14/16] 0.0, 128
        %2344 = vxpose.xlu0.b32.cont [15/16] 0.0, 128
        %2345 = vxpose.xlu0.b32.end [16/16] 0.0, 128
        %v2346 = vpop.trf.xlu0
        %v2347 = vpop.trf.xlu0
        %v2348 = vpop.trf.xlu0
        %v2349 = vpop.trf.xlu0
        %v2350 = vpop.trf.xlu0
        %v2351 = vpop.trf.xlu0
        %v2352 = vpop.trf.xlu0
        %v2353 = vpop.trf.xlu0
        %v2354 = vpop.trf.xlu0
        %v2355 = vpop.trf.xlu0
        %v2356 = vpop.trf.xlu0
        %v2357 = vpop.trf.xlu0
        %v2358 = vpop.trf.xlu0
        %v2359 = vpop.trf.xlu0
        %v2360 = vpop.trf.xlu0
        %v2361 = vpop.trf.xlu0
        %v2363 = vsel %vm191, %v2346, 0
        %v2366 = vsel %vm191, %v2347, 0
        %2368 = vmatprep.subr.mxu0 0.0
        %2369 = vmatpush1.msra.mxu0 %v155
        %2370 = vmatprep.subr.mxu0 0.0
        %2371 = vmatpush1.msra.mxu0 %v156
        %2372 = vmatprep.subr.mxu0 0.0
        %2373 = vmatpush1.msra.mxu0 0.0
        %2374 = vmatprep.subr.mxu0 0.0
        %2375 = vmatpush1.msra.mxu0 0.0
        %2376 = vmatprep.subr.mxu0 0.0
        %2377 = vmatpush1.msra.mxu0 0.0
        %2378 = vmatprep.subr.mxu0 0.0
        %2379 = vmatpush1.msra.mxu0 0.0
        %2380 = vmatprep.subr.mxu0 0.0
        %2381 = vmatpush1.msra.mxu0 0.0
        %2382 = vmatprep.subr.mxu0 0.0
        %2383 = vmatpush1.msra.mxu0 0.0
        %2384 = vmatprep.subr.mxu0 0.0
        %2385 = vmatpush1.msra.mxu0 0.0
        %2386 = vmatprep.subr.mxu0 0.0
        %2387 = vmatpush1.msra.mxu0 0.0
        %2388 = vmatprep.subr.mxu0 0.0
        %2389 = vmatpush1.msra.mxu0 0.0
        %2390 = vmatprep.subr.mxu0 0.0
        %2391 = vmatpush1.msra.mxu0 0.0
        %2392 = vmatprep.subr.mxu0 0.0
        %2393 = vmatpush1.msra.mxu0 0.0
        %2394 = vmatprep.subr.mxu0 0.0
        %2395 = vmatpush1.msra.mxu0 0.0
        %2396 = vmatprep.subr.mxu0 0.0
        %2397 = vmatpush1.msra.mxu0 0.0
        %2398 = vmatprep.subr.mxu0 0.0
        %2399 = vmatpush1.msra.mxu0 0.0
        %2400 = vmatprep.subr.mxu0 0.0
        %2401 = vmatpush1.msra.mxu0 0.0
        %2402 = vmatprep.subr.mxu0 0.0
        %2403 = vmatpush1.msra.mxu0 0.0
        %2404 = vmatprep.subr.mxu0 0.0
        %2405 = vmatpush1.msra.mxu0 0.0
        %2406 = vmatprep.subr.mxu0 0.0
        %2407 = vmatpush1.msra.mxu0 0.0
        %2408 = vmatprep.subr.mxu0 0.0
        %2409 = vmatpush1.msra.mxu0 0.0
        %2410 = vmatprep.subr.mxu0 0.0
        %2411 = vmatpush1.msra.mxu0 0.0
        %2412 = vmatprep.subr.mxu0 0.0
        %2413 = vmatpush1.msra.mxu0 0.0
        %2414 = vmatprep.subr.mxu0 0.0
        %2415 = vmatpush1.msra.mxu0 0.0
        %2416 = vmatprep.subr.mxu0 0.0
        %2417 = vmatpush1.msra.mxu0 0.0
        %2418 = vmatprep.subr.mxu0 0.0
        %2419 = vmatpush1.msra.mxu0 0.0
        %2420 = vmatprep.subr.mxu0 0.0
        %2421 = vmatpush1.msra.mxu0 0.0
        %2422 = vmatprep.subr.mxu0 0.0
        %2423 = vmatpush1.msra.mxu0 0.0
        %2424 = vmatprep.subr.mxu0 0.0
        %2425 = vmatpush1.msra.mxu0 0.0
        %2426 = vmatprep.subr.mxu0 0.0
        %2427 = vmatpush1.msra.mxu0 0.0
        %2428 = vmatprep.subr.mxu0 0.0
        %2429 = vmatpush1.msra.mxu0 0.0
        %2430 = vmatprep.subr.mxu0 0.0
        %2431 = vmatpush1.msra.mxu0 0.0
        %2432 = vmatprep.mubr.f32.mxu0 0.0
        %2433 = vmatmul.mubr.f32.gmra.mrb[0].mxu0 %v2363
        %v2434 = vpop.f32.mrb[0].mxu0
        %v2435 = vadd.f32 0.0, %v2434
        %v2436 = vpop.f32.mrb[0].mxu0
        %2437 = vmatprep.mubr.f32.mxu0 0.0
        %2438 = vmatmul.mubr.f32.gmra.mrb[0].mxu0 %v2366
        %v2439 = vpop.f32.mrb[0].mxu0
        %v2440 = vadd.f32 0.0, %v2439
        %v2441 = vpop.f32.mrb[0].mxu0
        %2442 = vdwg.mxu0
        %v2443 = vadd.f32 %v2328, %v2435
        %v2444 = vadd.f32 %v2329, %v2440
        %v2445 = vmul.f32 %v2443, 0.5
        %v2446 = vmul.f32 %v2444, 0.5
        %s2447 = scalar_lea.vmem %s134, 32 [#allocation2]
        %2448 = vst.msk [vmem:[%s2447] sm:$0xff] %vm191, %v2445
        %2449 = vst.msk [vmem:[%s2447 + $0x8] sm:$0xff] %vm191, %v2446
        %v2450 = vld [vmem:[%s2327] sm:$0xff]
        %v2451 = vld [vmem:[%s2327 + $0x8] sm:$0xff]
        %2454 = vrot.lane.b32.xlu0 %v2450, 112
        %v2455 = vpop.permute.xlu0 %2454
        %2456 = vrot.lane.b32.xlu0 %v2451, 112
        %v2457 = vpop.permute.xlu0 %2456
        %2460 = vxpose.xlu0.b32.start [1/16] %v2455, 128
        %2461 = vxpose.xlu0.b32.cont [2/16] %v2457, 128
        %2462 = vxpose.xlu0.b32.cont [3/16] 0.0, 128
        %2463 = vxpose.xlu0.b32.cont [4/16] 0.0, 128
        %2464 = vxpose.xlu0.b32.cont [5/16] 0.0, 128
        %2465 = vxpose.xlu0.b32.cont [6/16] 0.0, 128
        %2466 = vxpose.xlu0.b32.cont [7/16] 0.0, 128
        %2467 = vxpose.xlu0.b32.cont [8/16] 0.0, 128
        %2468 = vxpose.xlu0.b32.cont [9/16] 0.0, 128
        %2469 = vxpose.xlu0.b32.cont [10/16] 0.0, 128
        %2470 = vxpose.xlu0.b32.cont [11/16] 0.0, 128
        %2471 = vxpose.xlu0.b32.cont [12/16] 0.0, 128
        %2472 = vxpose.xlu0.b32.cont [13/16] 0.0, 128
        %2473 = vxpose.xlu0.b32.cont [14/16] 0.0, 128
        %2474 = vxpose.xlu0.b32.cont [15/16] 0.0, 128
        %2475 = vxpose.xlu0.b32.end [16/16] 0.0, 128
        %v2476 = vpop.trf.xlu0
        %v2477 = vpop.trf.xlu0
        %v2478 = vpop.trf.xlu0
        %v2479 = vpop.trf.xlu0
        %v2480 = vpop.trf.xlu0
        %v2481 = vpop.trf.xlu0
        %v2482 = vpop.trf.xlu0
        %v2483 = vpop.trf.xlu0
        %v2484 = vpop.trf.xlu0
        %v2485 = vpop.trf.xlu0
        %v2486 = vpop.trf.xlu0
        %v2487 = vpop.trf.xlu0
        %v2488 = vpop.trf.xlu0
        %v2489 = vpop.trf.xlu0
        %v2490 = vpop.trf.xlu0
        %v2491 = vpop.trf.xlu0
        %v2493 = vsel %vm191, %v2476, 0
        %v2496 = vsel %vm191, %v2477, 0
        %2498 = vmatprep.subr.mxu0 0.0
        %2499 = vmatpush1.msra.mxu0 %v155
        %2500 = vmatprep.subr.mxu0 0.0
        %2501 = vmatpush1.msra.mxu0 %v156
        %2502 = vmatprep.subr.mxu0 0.0
        %2503 = vmatpush1.msra.mxu0 0.0
        %2504 = vmatprep.subr.mxu0 0.0
        %2505 = vmatpush1.msra.mxu0 0.0
        %2506 = vmatprep.subr.mxu0 0.0
        %2507 = vmatpush1.msra.mxu0 0.0
        %2508 = vmatprep.subr.mxu0 0.0
        %2509 = vmatpush1.msra.mxu0 0.0
        %2510 = vmatprep.subr.mxu0 0.0
        %2511 = vmatpush1.msra.mxu0 0.0
        %2512 = vmatprep.subr.mxu0 0.0
        %2513 = vmatpush1.msra.mxu0 0.0
        %2514 = vmatprep.subr.mxu0 0.0
        %2515 = vmatpush1.msra.mxu0 0.0
        %2516 = vmatprep.subr.mxu0 0.0
        %2517 = vmatpush1.msra.mxu0 0.0
        %2518 = vmatprep.subr.mxu0 0.0
        %2519 = vmatpush1.msra.mxu0 0.0
        %2520 = vmatprep.subr.mxu0 0.0
        %2521 = vmatpush1.msra.mxu0 0.0
        %2522 = vmatprep.subr.mxu0 0.0
        %2523 = vmatpush1.msra.mxu0 0.0
        %2524 = vmatprep.subr.mxu0 0.0
        %2525 = vmatpush1.msra.mxu0 0.0
        %2526 = vmatprep.subr.mxu0 0.0
        %2527 = vmatpush1.msra.mxu0 0.0
        %2528 = vmatprep.subr.mxu0 0.0
        %2529 = vmatpush1.msra.mxu0 0.0
        %2530 = vmatprep.subr.mxu0 0.0
        %2531 = vmatpush1.msra.mxu0 0.0
        %2532 = vmatprep.subr.mxu0 0.0
        %2533 = vmatpush1.msra.mxu0 0.0
        %2534 = vmatprep.subr.mxu0 0.0
        %2535 = vmatpush1.msra.mxu0 0.0
        %2536 = vmatprep.subr.mxu0 0.0
        %2537 = vmatpush1.msra.mxu0 0.0
        %2538 = vmatprep.subr.mxu0 0.0
        %2539 = vmatpush1.msra.mxu0 0.0
        %2540 = vmatprep.subr.mxu0 0.0
        %2541 = vmatpush1.msra.mxu0 0.0
        %2542 = vmatprep.subr.mxu0 0.0
        %2543 = vmatpush1.msra.mxu0 0.0
        %2544 = vmatprep.subr.mxu0 0.0
        %2545 = vmatpush1.msra.mxu0 0.0
        %2546 = vmatprep.subr.mxu0 0.0
        %2547 = vmatpush1.msra.mxu0 0.0
        %2548 = vmatprep.subr.mxu0 0.0
        %2549 = vmatpush1.msra.mxu0 0.0
        %2550 = vmatprep.subr.mxu0 0.0
        %2551 = vmatpush1.msra.mxu0 0.0
        %2552 = vmatprep.subr.mxu0 0.0
        %2553 = vmatpush1.msra.mxu0 0.0
        %2554 = vmatprep.subr.mxu0 0.0
        %2555 = vmatpush1.msra.mxu0 0.0
        %2556 = vmatprep.subr.mxu0 0.0
        %2557 = vmatpush1.msra.mxu0 0.0
        %2558 = vmatprep.subr.mxu0 0.0
        %2559 = vmatpush1.msra.mxu0 0.0
        %2560 = vmatprep.subr.mxu0 0.0
        %2561 = vmatpush1.msra.mxu0 0.0
        %2562 = vmatprep.mubr.f32.mxu0 0.0
        %2563 = vmatmul.mubr.f32.gmra.mrb[0].mxu0 %v2493
        %v2564 = vpop.f32.mrb[0].mxu0
        %v2565 = vadd.f32 0.0, %v2564
        %v2566 = vpop.f32.mrb[0].mxu0
        %2567 = vmatprep.mubr.f32.mxu0 0.0
        %2568 = vmatmul.mubr.f32.gmra.mrb[0].mxu0 %v2496
        %v2569 = vpop.f32.mrb[0].mxu0
        %v2570 = vadd.f32 0.0, %v2569
        %v2571 = vpop.f32.mrb[0].mxu0
        %2572 = vdwg.mxu0
        %2575 = vrot.lane.b32.xlu0 %v2565, 16
        %v2576 = vpop.permute.xlu0 %2575
        %2577 = vrot.lane.b32.xlu0 %v2570, 16
        %v2578 = vpop.permute.xlu0 %2577
        %v2581 = vadd.f32 %v2450, %v2576
        %v2582 = vadd.f32 %v2451, %v2578
        %v2583 = vmul.f32 %v2581, 0.5
        %v2584 = vmul.f32 %v2582, 0.5
        %2585 = vst.msk [vmem:[%s2447] sm:$0xff] %vm414, %v2583
        %2586 = vst.msk [vmem:[%s2447 + $0x8] sm:$0xff] %vm414, %v2584
        %v2587 = vld [vmem:[%s2327] sm:$0xff]
        %v2588 = vld [vmem:[%s2327 + $0x8] sm:$0xff]
        %2591 = vrot.lane.b32.xlu0 %v2587, 96
        %v2592 = vpop.permute.xlu0 %2591
        %2593 = vrot.lane.b32.xlu0 %v2588, 96
        %v2594 = vpop.permute.xlu0 %2593
        %2597 = vxpose.xlu0.b32.start [1/16] %v2592, 128
        %2598 = vxpose.xlu0.b32.cont [2/16] %v2594, 128
        %2599 = vxpose.xlu0.b32.cont [3/16] 0.0, 128
        %2600 = vxpose.xlu0.b32.cont [4/16] 0.0, 128
        %2601 = vxpose.xlu0.b32.cont [5/16] 0.0, 128
        %2602 = vxpose.xlu0.b32.cont [6/16] 0.0, 128
        %2603 = vxpose.xlu0.b32.cont [7/16] 0.0, 128
        %2604 = vxpose.xlu0.b32.cont [8/16] 0.0, 128
        %2605 = vxpose.xlu0.b32.cont [9/16] 0.0, 128
        %2606 = vxpose.xlu0.b32.cont [10/16] 0.0, 128
        %2607 = vxpose.xlu0.b32.cont [11/16] 0.0, 128
        %2608 = vxpose.xlu0.b32.cont [12/16] 0.0, 128
        %2609 = vxpose.xlu0.b32.cont [13/16] 0.0, 128
        %2610 = vxpose.xlu0.b32.cont [14/16] 0.0, 128
        %2611 = vxpose.xlu0.b32.cont [15/16] 0.0, 128
        %2612 = vxpose.xlu0.b32.end [16/16] 0.0, 128
        %v2613 = vpop.trf.xlu0
        %v2614 = vpop.trf.xlu0
        %v2615 = vpop.trf.xlu0
        %v2616 = vpop.trf.xlu0
        %v2617 = vpop.trf.xlu0
        %v2618 = vpop.trf.xlu0
        %v2619 = vpop.trf.xlu0
        %v2620 = vpop.trf.xlu0
        %v2621 = vpop.trf.xlu0
        %v2622 = vpop.trf.xlu0
        %v2623 = vpop.trf.xlu0
        %v2624 = vpop.trf.xlu0
        %v2625 = vpop.trf.xlu0
        %v2626 = vpop.trf.xlu0
        %v2627 = vpop.trf.xlu0
        %v2628 = vpop.trf.xlu0
        %v2630 = vsel %vm191, %v2613, 0
        %v2633 = vsel %vm191, %v2614, 0
        %2635 = vmatprep.subr.mxu0 0.0
        %2636 = vmatpush1.msra.mxu0 %v155
        %2637 = vmatprep.subr.mxu0 0.0
        %2638 = vmatpush1.msra.mxu0 %v156
        %2639 = vmatprep.subr.mxu0 0.0
        %2640 = vmatpush1.msra.mxu0 0.0
        %2641 = vmatprep.subr.mxu0 0.0
        %2642 = vmatpush1.msra.mxu0 0.0
        %2643 = vmatprep.subr.mxu0 0.0
        %2644 = vmatpush1.msra.mxu0 0.0
        %2645 = vmatprep.subr.mxu0 0.0
        %2646 = vmatpush1.msra.mxu0 0.0
        %2647 = vmatprep.subr.mxu0 0.0
        %2648 = vmatpush1.msra.mxu0 0.0
        %2649 = vmatprep.subr.mxu0 0.0
        %2650 = vmatpush1.msra.mxu0 0.0
        %2651 = vmatprep.subr.mxu0 0.0
        %2652 = vmatpush1.msra.mxu0 0.0
        %2653 = vmatprep.subr.mxu0 0.0
        %2654 = vmatpush1.msra.mxu0 0.0
        %2655 = vmatprep.subr.mxu0 0.0
        %2656 = vmatpush1.msra.mxu0 0.0
        %2657 = vmatprep.subr.mxu0 0.0
        %2658 = vmatpush1.msra.mxu0 0.0
        %2659 = vmatprep.subr.mxu0 0.0
        %2660 = vmatpush1.msra.mxu0 0.0
        %2661 = vmatprep.subr.mxu0 0.0
        %2662 = vmatpush1.msra.mxu0 0.0
        %2663 = vmatprep.subr.mxu0 0.0
        %2664 = vmatpush1.msra.mxu0 0.0
        %2665 = vmatprep.subr.mxu0 0.0
        %2666 = vmatpush1.msra.mxu0 0.0
        %2667 = vmatprep.subr.mxu0 0.0
        %2668 = vmatpush1.msra.mxu0 0.0
        %2669 = vmatprep.subr.mxu0 0.0
        %2670 = vmatpush1.msra.mxu0 0.0
        %2671 = vmatprep.subr.mxu0 0.0
        %2672 = vmatpush1.msra.mxu0 0.0
        %2673 = vmatprep.subr.mxu0 0.0
        %2674 = vmatpush1.msra.mxu0 0.0
        %2675 = vmatprep.subr.mxu0 0.0
        %2676 = vmatpush1.msra.mxu0 0.0
        %2677 = vmatprep.subr.mxu0 0.0
        %2678 = vmatpush1.msra.mxu0 0.0
        %2679 = vmatprep.subr.mxu0 0.0
        %2680 = vmatpush1.msra.mxu0 0.0
        %2681 = vmatprep.subr.mxu0 0.0
        %2682 = vmatpush1.msra.mxu0 0.0
        %2683 = vmatprep.subr.mxu0 0.0
        %2684 = vmatpush1.msra.mxu0 0.0
        %2685 = vmatprep.subr.mxu0 0.0
        %2686 = vmatpush1.msra.mxu0 0.0
        %2687 = vmatprep.subr.mxu0 0.0
        %2688 = vmatpush1.msra.mxu0 0.0
        %2689 = vmatprep.subr.mxu0 0.0
        %2690 = vmatpush1.msra.mxu0 0.0
        %2691 = vmatprep.subr.mxu0 0.0
        %2692 = vmatpush1.msra.mxu0 0.0
        %2693 = vmatprep.subr.mxu0 0.0
        %2694 = vmatpush1.msra.mxu0 0.0
        %2695 = vmatprep.subr.mxu0 0.0
        %2696 = vmatpush1.msra.mxu0 0.0
        %2697 = vmatprep.subr.mxu0 0.0
        %2698 = vmatpush1.msra.mxu0 0.0
        %2699 = vmatprep.mubr.f32.mxu0 0.0
        %2700 = vmatmul.mubr.f32.gmra.mrb[0].mxu0 %v2630
        %v2701 = vpop.f32.mrb[0].mxu0
        %v2702 = vadd.f32 0.0, %v2701
        %v2703 = vpop.f32.mrb[0].mxu0
        %2704 = vmatprep.mubr.f32.mxu0 0.0
        %2705 = vmatmul.mubr.f32.gmra.mrb[0].mxu0 %v2633
        %v2706 = vpop.f32.mrb[0].mxu0
        %v2707 = vadd.f32 0.0, %v2706
        %v2708 = vpop.f32.mrb[0].mxu0
        %2709 = vdwg.mxu0
        %2712 = vrot.lane.b32.xlu0 %v2702, 32
        %v2713 = vpop.permute.xlu0 %2712
        %2714 = vrot.lane.b32.xlu0 %v2707, 32
        %v2715 = vpop.permute.xlu0 %2714
        %v2718 = vadd.f32 %v2587, %v2713
        %v2719 = vadd.f32 %v2588, %v2715
        %v2720 = vmul.f32 %v2718, 0.5
        %v2721 = vmul.f32 %v2719, 0.5
        %2722 = vst.msk [vmem:[%s2447] sm:$0xff] %vm552, %v2720
        %2723 = vst.msk [vmem:[%s2447 + $0x8] sm:$0xff] %vm552, %v2721
        %v2724 = vld [vmem:[%s2327] sm:$0xff]
        %v2725 = vld [vmem:[%s2327 + $0x8] sm:$0xff]
        %2728 = vrot.lane.b32.xlu0 %v2724, 80
        %v2729 = vpop.permute.xlu0 %2728
        %2730 = vrot.lane.b32.xlu0 %v2725, 80
        %v2731 = vpop.permute.xlu0 %2730
        %2734 = vxpose.xlu0.b32.start [1/16] %v2729, 128
        %2735 = vxpose.xlu0.b32.cont [2/16] %v2731, 128
        %2736 = vxpose.xlu0.b32.cont [3/16] 0.0, 128
        %2737 = vxpose.xlu0.b32.cont [4/16] 0.0, 128
        %2738 = vxpose.xlu0.b32.cont [5/16] 0.0, 128
        %2739 = vxpose.xlu0.b32.cont [6/16] 0.0, 128
        %2740 = vxpose.xlu0.b32.cont [7/16] 0.0, 128
        %2741 = vxpose.xlu0.b32.cont [8/16] 0.0, 128
        %2742 = vxpose.xlu0.b32.cont [9/16] 0.0, 128
        %2743 = vxpose.xlu0.b32.cont [10/16] 0.0, 128
        %2744 = vxpose.xlu0.b32.cont [11/16] 0.0, 128
        %2745 = vxpose.xlu0.b32.cont [12/16] 0.0, 128
        %2746 = vxpose.xlu0.b32.cont [13/16] 0.0, 128
        %2747 = vxpose.xlu0.b32.cont [14/16] 0.0, 128
        %2748 = vxpose.xlu0.b32.cont [15/16] 0.0, 128
        %2749 = vxpose.xlu0.b32.end [16/16] 0.0, 128
        %v2750 = vpop.trf.xlu0
        %v2751 = vpop.trf.xlu0
        %v2752 = vpop.trf.xlu0
        %v2753 = vpop.trf.xlu0
        %v2754 = vpop.trf.xlu0
        %v2755 = vpop.trf.xlu0
        %v2756 = vpop.trf.xlu0
        %v2757 = vpop.trf.xlu0
        %v2758 = vpop.trf.xlu0
        %v2759 = vpop.trf.xlu0
        %v2760 = vpop.trf.xlu0
        %v2761 = vpop.trf.xlu0
        %v2762 = vpop.trf.xlu0
        %v2763 = vpop.trf.xlu0
        %v2764 = vpop.trf.xlu0
        %v2765 = vpop.trf.xlu0
        %v2767 = vsel %vm191, %v2750, 0
        %v2770 = vsel %vm191, %v2751, 0
        %2772 = vmatprep.subr.mxu0 0.0
        %2773 = vmatpush1.msra.mxu0 %v155
        %2774 = vmatprep.subr.mxu0 0.0
        %2775 = vmatpush1.msra.mxu0 %v156
        %2776 = vmatprep.subr.mxu0 0.0
        %2777 = vmatpush1.msra.mxu0 0.0
        %2778 = vmatprep.subr.mxu0 0.0
        %2779 = vmatpush1.msra.mxu0 0.0
        %2780 = vmatprep.subr.mxu0 0.0
        %2781 = vmatpush1.msra.mxu0 0.0
        %2782 = vmatprep.subr.mxu0 0.0
        %2783 = vmatpush1.msra.mxu0 0.0
        %2784 = vmatprep.subr.mxu0 0.0
        %2785 = vmatpush1.msra.mxu0 0.0
        %2786 = vmatprep.subr.mxu0 0.0
        %2787 = vmatpush1.msra.mxu0 0.0
        %2788 = vmatprep.subr.mxu0 0.0
        %2789 = vmatpush1.msra.mxu0 0.0
        %2790 = vmatprep.subr.mxu0 0.0
        %2791 = vmatpush1.msra.mxu0 0.0
        %2792 = vmatprep.subr.mxu0 0.0
        %2793 = vmatpush1.msra.mxu0 0.0
        %2794 = vmatprep.subr.mxu0 0.0
        %2795 = vmatpush1.msra.mxu0 0.0
        %2796 = vmatprep.subr.mxu0 0.0
        %2797 = vmatpush1.msra.mxu0 0.0
        %2798 = vmatprep.subr.mxu0 0.0
        %2799 = vmatpush1.msra.mxu0 0.0
        %2800 = vmatprep.subr.mxu0 0.0
        %2801 = vmatpush1.msra.mxu0 0.0
        %2802 = vmatprep.subr.mxu0 0.0
        %2803 = vmatpush1.msra.mxu0 0.0
        %2804 = vmatprep.subr.mxu0 0.0
        %2805 = vmatpush1.msra.mxu0 0.0
        %2806 = vmatprep.subr.mxu0 0.0
        %2807 = vmatpush1.msra.mxu0 0.0
        %2808 = vmatprep.subr.mxu0 0.0
        %2809 = vmatpush1.msra.mxu0 0.0
        %2810 = vmatprep.subr.mxu0 0.0
        %2811 = vmatpush1.msra.mxu0 0.0
        %2812 = vmatprep.subr.mxu0 0.0
        %2813 = vmatpush1.msra.mxu0 0.0
        %2814 = vmatprep.subr.mxu0 0.0
        %2815 = vmatpush1.msra.mxu0 0.0
        %2816 = vmatprep.subr.mxu0 0.0
        %2817 = vmatpush1.msra.mxu0 0.0
        %2818 = vmatprep.subr.mxu0 0.0
        %2819 = vmatpush1.msra.mxu0 0.0
        %2820 = vmatprep.subr.mxu0 0.0
        %2821 = vmatpush1.msra.mxu0 0.0
        %2822 = vmatprep.subr.mxu0 0.0
        %2823 = vmatpush1.msra.mxu0 0.0
        %2824 = vmatprep.subr.mxu0 0.0
        %2825 = vmatpush1.msra.mxu0 0.0
        %2826 = vmatprep.subr.mxu0 0.0
        %2827 = vmatpush1.msra.mxu0 0.0
        %2828 = vmatprep.subr.mxu0 0.0
        %2829 = vmatpush1.msra.mxu0 0.0
        %2830 = vmatprep.subr.mxu0 0.0
        %2831 = vmatpush1.msra.mxu0 0.0
        %2832 = vmatprep.subr.mxu0 0.0
        %2833 = vmatpush1.msra.mxu0 0.0
        %2834 = vmatprep.subr.mxu0 0.0
        %2835 = vmatpush1.msra.mxu0 0.0
        %2836 = vmatprep.mubr.f32.mxu0 0.0
        %2837 = vmatmul.mubr.f32.gmra.mrb[0].mxu0 %v2767
        %v2838 = vpop.f32.mrb[0].mxu0
        %v2839 = vadd.f32 0.0, %v2838
        %v2840 = vpop.f32.mrb[0].mxu0
        %2841 = vmatprep.mubr.f32.mxu0 0.0
        %2842 = vmatmul.mubr.f32.gmra.mrb[0].mxu0 %v2770
        %v2843 = vpop.f32.mrb[0].mxu0
        %v2844 = vadd.f32 0.0, %v2843
        %v2845 = vpop.f32.mrb[0].mxu0
        %2846 = vdwg.mxu0
        %2849 = vrot.lane.b32.xlu0 %v2839, 48
        %v2850 = vpop.permute.xlu0 %2849
        %2851 = vrot.lane.b32.xlu0 %v2844, 48
        %v2852 = vpop.permute.xlu0 %2851
        %v2855 = vadd.f32 %v2724, %v2850
        %v2856 = vadd.f32 %v2725, %v2852
        %v2857 = vmul.f32 %v2855, 0.5
        %v2858 = vmul.f32 %v2856, 0.5
        %2859 = vst.msk [vmem:[%s2447] sm:$0xff] %vm690, %v2857
        %2860 = vst.msk [vmem:[%s2447 + $0x8] sm:$0xff] %vm690, %v2858
        %v2861 = vld [vmem:[%s2327] sm:$0xff]
        %v2862 = vld [vmem:[%s2327 + $0x8] sm:$0xff]
        %2865 = vrot.lane.b32.xlu0 %v2861, 64
        %v2866 = vpop.permute.xlu0 %2865
        %2867 = vrot.lane.b32.xlu0 %v2862, 64
        %v2868 = vpop.permute.xlu0 %2867
        %2871 = vxpose.xlu0.b32.start [1/16] %v2866, 128
        %2872 = vxpose.xlu0.b32.cont [2/16] %v2868, 128
        %2873 = vxpose.xlu0.b32.cont [3/16] 0.0, 128
        %2874 = vxpose.xlu0.b32.cont [4/16] 0.0, 128
        %2875 = vxpose.xlu0.b32.cont [5/16] 0.0, 128
        %2876 = vxpose.xlu0.b32.cont [6/16] 0.0, 128
        %2877 = vxpose.xlu0.b32.cont [7/16] 0.0, 128
        %2878 = vxpose.xlu0.b32.cont [8/16] 0.0, 128
        %2879 = vxpose.xlu0.b32.cont [9/16] 0.0, 128
        %2880 = vxpose.xlu0.b32.cont [10/16] 0.0, 128
        %2881 = vxpose.xlu0.b32.cont [11/16] 0.0, 128
        %2882 = vxpose.xlu0.b32.cont [12/16] 0.0, 128
        %2883 = vxpose.xlu0.b32.cont [13/16] 0.0, 128
        %2884 = vxpose.xlu0.b32.cont [14/16] 0.0, 128
        %2885 = vxpose.xlu0.b32.cont [15/16] 0.0, 128
        %2886 = vxpose.xlu0.b32.end [16/16] 0.0, 128
        %v2887 = vpop.trf.xlu0
        %v2888 = vpop.trf.xlu0
        %v2889 = vpop.trf.xlu0
        %v2890 = vpop.trf.xlu0
        %v2891 = vpop.trf.xlu0
        %v2892 = vpop.trf.xlu0
        %v2893 = vpop.trf.xlu0
        %v2894 = vpop.trf.xlu0
        %v2895 = vpop.trf.xlu0
        %v2896 = vpop.trf.xlu0
        %v2897 = vpop.trf.xlu0
        %v2898 = vpop.trf.xlu0
        %v2899 = vpop.trf.xlu0
        %v2900 = vpop.trf.xlu0
        %v2901 = vpop.trf.xlu0
        %v2902 = vpop.trf.xlu0
        %v2904 = vsel %vm191, %v2887, 0
        %v2907 = vsel %vm191, %v2888, 0
        %2909 = vmatprep.subr.mxu0 0.0
        %2910 = vmatpush1.msra.mxu0 %v155
        %2911 = vmatprep.subr.mxu0 0.0
        %2912 = vmatpush1.msra.mxu0 %v156
        %2913 = vmatprep.subr.mxu0 0.0
        %2914 = vmatpush1.msra.mxu0 0.0
        %2915 = vmatprep.subr.mxu0 0.0
        %2916 = vmatpush1.msra.mxu0 0.0
        %2917 = vmatprep.subr.mxu0 0.0
        %2918 = vmatpush1.msra.mxu0 0.0
        %2919 = vmatprep.subr.mxu0 0.0
        %2920 = vmatpush1.msra.mxu0 0.0
        %2921 = vmatprep.subr.mxu0 0.0
        %2922 = vmatpush1.msra.mxu0 0.0
        %2923 = vmatprep.subr.mxu0 0.0
        %2924 = vmatpush1.msra.mxu0 0.0
        %2925 = vmatprep.subr.mxu0 0.0
        %2926 = vmatpush1.msra.mxu0 0.0
        %2927 = vmatprep.subr.mxu0 0.0
        %2928 = vmatpush1.msra.mxu0 0.0
        %2929 = vmatprep.subr.mxu0 0.0
        %2930 = vmatpush1.msra.mxu0 0.0
        %2931 = vmatprep.subr.mxu0 0.0
        %2932 = vmatpush1.msra.mxu0 0.0
        %2933 = vmatprep.subr.mxu0 0.0
        %2934 = vmatpush1.msra.mxu0 0.0
        %2935 = vmatprep.subr.mxu0 0.0
        %2936 = vmatpush1.msra.mxu0 0.0
        %2937 = vmatprep.subr.mxu0 0.0
        %2938 = vmatpush1.msra.mxu0 0.0
        %2939 = vmatprep.subr.mxu0 0.0
        %2940 = vmatpush1.msra.mxu0 0.0
        %2941 = vmatprep.subr.mxu0 0.0
        %2942 = vmatpush1.msra.mxu0 0.0
        %2943 = vmatprep.subr.mxu0 0.0
        %2944 = vmatpush1.msra.mxu0 0.0
        %2945 = vmatprep.subr.mxu0 0.0
        %2946 = vmatpush1.msra.mxu0 0.0
        %2947 = vmatprep.subr.mxu0 0.0
        %2948 = vmatpush1.msra.mxu0 0.0
        %2949 = vmatprep.subr.mxu0 0.0
        %2950 = vmatpush1.msra.mxu0 0.0
        %2951 = vmatprep.subr.mxu0 0.0
        %2952 = vmatpush1.msra.mxu0 0.0
        %2953 = vmatprep.subr.mxu0 0.0
        %2954 = vmatpush1.msra.mxu0 0.0
        %2955 = vmatprep.subr.mxu0 0.0
        %2956 = vmatpush1.msra.mxu0 0.0
        %2957 = vmatprep.subr.mxu0 0.0
        %2958 = vmatpush1.msra.mxu0 0.0
        %2959 = vmatprep.subr.mxu0 0.0
        %2960 = vmatpush1.msra.mxu0 0.0
        %2961 = vmatprep.subr.mxu0 0.0
        %2962 = vmatpush1.msra.mxu0 0.0
        %2963 = vmatprep.subr.mxu0 0.0
        %2964 = vmatpush1.msra.mxu0 0.0
        %2965 = vmatprep.subr.mxu0 0.0
        %2966 = vmatpush1.msra.mxu0 0.0
        %2967 = vmatprep.subr.mxu0 0.0
        %2968 = vmatpush1.msra.mxu0 0.0
        %2969 = vmatprep.subr.mxu0 0.0
        %2970 = vmatpush1.msra.mxu0 0.0
        %2971 = vmatprep.subr.mxu0 0.0
        %2972 = vmatpush1.msra.mxu0 0.0
        %2973 = vmatprep.mubr.f32.mxu0 0.0
        %2974 = vmatmul.mubr.f32.gmra.mrb[0].mxu0 %v2904
        %v2975 = vpop.f32.mrb[0].mxu0
        %v2976 = vadd.f32 0.0, %v2975
        %v2977 = vpop.f32.mrb[0].mxu0
        %2978 = vmatprep.mubr.f32.mxu0 0.0
        %2979 = vmatmul.mubr.f32.gmra.mrb[0].mxu0 %v2907
        %v2980 = vpop.f32.mrb[0].mxu0
        %v2981 = vadd.f32 0.0, %v2980
        %v2982 = vpop.f32.mrb[0].mxu0
        %2983 = vdwg.mxu0
        %2986 = vrot.lane.b32.xlu0 %v2976, 64
        %v2987 = vpop.permute.xlu0 %2986
        %2988 = vrot.lane.b32.xlu0 %v2981, 64
        %v2989 = vpop.permute.xlu0 %2988
        %v2992 = vadd.f32 %v2861, %v2987
        %v2993 = vadd.f32 %v2862, %v2989
        %v2994 = vmul.f32 %v2992, 0.5
        %v2995 = vmul.f32 %v2993, 0.5
        %2996 = vst.msk [vmem:[%s2447] sm:$0xff] %vm828, %v2994
        %2997 = vst.msk [vmem:[%s2447 + $0x8] sm:$0xff] %vm828, %v2995
        %v2998 = vld [vmem:[%s2327] sm:$0xff]
        %v2999 = vld [vmem:[%s2327 + $0x8] sm:$0xff]
        %3002 = vrot.lane.b32.xlu0 %v2998, 48
        %v3003 = vpop.permute.xlu0 %3002
        %3004 = vrot.lane.b32.xlu0 %v2999, 48
        %v3005 = vpop.permute.xlu0 %3004
        %3008 = vxpose.xlu0.b32.start [1/16] %v3003, 128
        %3009 = vxpose.xlu0.b32.cont [2/16] %v3005, 128
        %3010 = vxpose.xlu0.b32.cont [3/16] 0.0, 128
        %3011 = vxpose.xlu0.b32.cont [4/16] 0.0, 128
        %3012 = vxpose.xlu0.b32.cont [5/16] 0.0, 128
        %3013 = vxpose.xlu0.b32.cont [6/16] 0.0, 128
        %3014 = vxpose.xlu0.b32.cont [7/16] 0.0, 128
        %3015 = vxpose.xlu0.b32.cont [8/16] 0.0, 128
        %3016 = vxpose.xlu0.b32.cont [9/16] 0.0, 128
        %3017 = vxpose.xlu0.b32.cont [10/16] 0.0, 128
        %3018 = vxpose.xlu0.b32.cont [11/16] 0.0, 128
        %3019 = vxpose.xlu0.b32.cont [12/16] 0.0, 128
        %3020 = vxpose.xlu0.b32.cont [13/16] 0.0, 128
        %3021 = vxpose.xlu0.b32.cont [14/16] 0.0, 128
        %3022 = vxpose.xlu0.b32.cont [15/16] 0.0, 128
        %3023 = vxpose.xlu0.b32.end [16/16] 0.0, 128
        %v3024 = vpop.trf.xlu0
        %v3025 = vpop.trf.xlu0
        %v3026 = vpop.trf.xlu0
        %v3027 = vpop.trf.xlu0
        %v3028 = vpop.trf.xlu0
        %v3029 = vpop.trf.xlu0
        %v3030 = vpop.trf.xlu0
        %v3031 = vpop.trf.xlu0
        %v3032 = vpop.trf.xlu0
        %v3033 = vpop.trf.xlu0
        %v3034 = vpop.trf.xlu0
        %v3035 = vpop.trf.xlu0
        %v3036 = vpop.trf.xlu0
        %v3037 = vpop.trf.xlu0
        %v3038 = vpop.trf.xlu0
        %v3039 = vpop.trf.xlu0
        %v3041 = vsel %vm191, %v3024, 0
        %v3044 = vsel %vm191, %v3025, 0
        %3046 = vmatprep.subr.mxu0 0.0
        %3047 = vmatpush1.msra.mxu0 %v155
        %3048 = vmatprep.subr.mxu0 0.0
        %3049 = vmatpush1.msra.mxu0 %v156
        %3050 = vmatprep.subr.mxu0 0.0
        %3051 = vmatpush1.msra.mxu0 0.0
        %3052 = vmatprep.subr.mxu0 0.0
        %3053 = vmatpush1.msra.mxu0 0.0
        %3054 = vmatprep.subr.mxu0 0.0
        %3055 = vmatpush1.msra.mxu0 0.0
        %3056 = vmatprep.subr.mxu0 0.0
        %3057 = vmatpush1.msra.mxu0 0.0
        %3058 = vmatprep.subr.mxu0 0.0
        %3059 = vmatpush1.msra.mxu0 0.0
        %3060 = vmatprep.subr.mxu0 0.0
        %3061 = vmatpush1.msra.mxu0 0.0
        %3062 = vmatprep.subr.mxu0 0.0
        %3063 = vmatpush1.msra.mxu0 0.0
        %3064 = vmatprep.subr.mxu0 0.0
        %3065 = vmatpush1.msra.mxu0 0.0
        %3066 = vmatprep.subr.mxu0 0.0
        %3067 = vmatpush1.msra.mxu0 0.0
        %3068 = vmatprep.subr.mxu0 0.0
        %3069 = vmatpush1.msra.mxu0 0.0
        %3070 = vmatprep.subr.mxu0 0.0
        %3071 = vmatpush1.msra.mxu0 0.0
        %3072 = vmatprep.subr.mxu0 0.0
        %3073 = vmatpush1.msra.mxu0 0.0
        %3074 = vmatprep.subr.mxu0 0.0
        %3075 = vmatpush1.msra.mxu0 0.0
        %3076 = vmatprep.subr.mxu0 0.0
        %3077 = vmatpush1.msra.mxu0 0.0
        %3078 = vmatprep.subr.mxu0 0.0
        %3079 = vmatpush1.msra.mxu0 0.0
        %3080 = vmatprep.subr.mxu0 0.0
        %3081 = vmatpush1.msra.mxu0 0.0
        %3082 = vmatprep.subr.mxu0 0.0
        %3083 = vmatpush1.msra.mxu0 0.0
        %3084 = vmatprep.subr.mxu0 0.0
        %3085 = vmatpush1.msra.mxu0 0.0
        %3086 = vmatprep.subr.mxu0 0.0
        %3087 = vmatpush1.msra.mxu0 0.0
        %3088 = vmatprep.subr.mxu0 0.0
        %3089 = vmatpush1.msra.mxu0 0.0
        %3090 = vmatprep.subr.mxu0 0.0
        %3091 = vmatpush1.msra.mxu0 0.0
        %3092 = vmatprep.subr.mxu0 0.0
        %3093 = vmatpush1.msra.mxu0 0.0
        %3094 = vmatprep.subr.mxu0 0.0
        %3095 = vmatpush1.msra.mxu0 0.0
        %3096 = vmatprep.subr.mxu0 0.0
        %3097 = vmatpush1.msra.mxu0 0.0
        %3098 = vmatprep.subr.mxu0 0.0
        %3099 = vmatpush1.msra.mxu0 0.0
        %3100 = vmatprep.subr.mxu0 0.0
        %3101 = vmatpush1.msra.mxu0 0.0
        %3102 = vmatprep.subr.mxu0 0.0
        %3103 = vmatpush1.msra.mxu0 0.0
        %3104 = vmatprep.subr.mxu0 0.0
        %3105 = vmatpush1.msra.mxu0 0.0
        %3106 = vmatprep.subr.mxu0 0.0
        %3107 = vmatpush1.msra.mxu0 0.0
        %3108 = vmatprep.subr.mxu0 0.0
        %3109 = vmatpush1.msra.mxu0 0.0
        %3110 = vmatprep.mubr.f32.mxu0 0.0
        %3111 = vmatmul.mubr.f32.gmra.mrb[0].mxu0 %v3041
        %v3112 = vpop.f32.mrb[0].mxu0
        %v3113 = vadd.f32 0.0, %v3112
        %v3114 = vpop.f32.mrb[0].mxu0
        %3115 = vmatprep.mubr.f32.mxu0 0.0
        %3116 = vmatmul.mubr.f32.gmra.mrb[0].mxu0 %v3044
        %v3117 = vpop.f32.mrb[0].mxu0
        %v3118 = vadd.f32 0.0, %v3117
        %v3119 = vpop.f32.mrb[0].mxu0
        %3120 = vdwg.mxu0
        %3123 = vrot.lane.b32.xlu0 %v3113, 80
        %v3124 = vpop.permute.xlu0 %3123
        %3125 = vrot.lane.b32.xlu0 %v3118, 80
        %v3126 = vpop.permute.xlu0 %3125
        %v3129 = vadd.f32 %v2998, %v3124
        %v3130 = vadd.f32 %v2999, %v3126
        %v3131 = vmul.f32 %v3129, 0.5
        %v3132 = vmul.f32 %v3130, 0.5
        %3133 = vst.msk [vmem:[%s2447] sm:$0xff] %vm966, %v3131
        %3134 = vst.msk [vmem:[%s2447 + $0x8] sm:$0xff] %vm966, %v3132
        %v3135 = vld [vmem:[%s2327] sm:$0xff]
        %v3136 = vld [vmem:[%s2327 + $0x8] sm:$0xff]
        %3139 = vrot.lane.b32.xlu0 %v3135, 32
        %v3140 = vpop.permute.xlu0 %3139
        %3141 = vrot.lane.b32.xlu0 %v3136, 32
        %v3142 = vpop.permute.xlu0 %3141
        %3145 = vxpose.xlu0.b32.start [1/16] %v3140, 128
        %3146 = vxpose.xlu0.b32.cont [2/16] %v3142, 128
        %3147 = vxpose.xlu0.b32.cont [3/16] 0.0, 128
        %3148 = vxpose.xlu0.b32.cont [4/16] 0.0, 128
        %3149 = vxpose.xlu0.b32.cont [5/16] 0.0, 128
        %3150 = vxpose.xlu0.b32.cont [6/16] 0.0, 128
        %3151 = vxpose.xlu0.b32.cont [7/16] 0.0, 128
        %3152 = vxpose.xlu0.b32.cont [8/16] 0.0, 128
        %3153 = vxpose.xlu0.b32.cont [9/16] 0.0, 128
        %3154 = vxpose.xlu0.b32.cont [10/16] 0.0, 128
        %3155 = vxpose.xlu0.b32.cont [11/16] 0.0, 128
        %3156 = vxpose.xlu0.b32.cont [12/16] 0.0, 128
        %3157 = vxpose.xlu0.b32.cont [13/16] 0.0, 128
        %3158 = vxpose.xlu0.b32.cont [14/16] 0.0, 128
        %3159 = vxpose.xlu0.b32.cont [15/16] 0.0, 128
        %3160 = vxpose.xlu0.b32.end [16/16] 0.0, 128
        %v3161 = vpop.trf.xlu0
        %v3162 = vpop.trf.xlu0
        %v3163 = vpop.trf.xlu0
        %v3164 = vpop.trf.xlu0
        %v3165 = vpop.trf.xlu0
        %v3166 = vpop.trf.xlu0
        %v3167 = vpop.trf.xlu0
        %v3168 = vpop.trf.xlu0
        %v3169 = vpop.trf.xlu0
        %v3170 = vpop.trf.xlu0
        %v3171 = vpop.trf.xlu0
        %v3172 = vpop.trf.xlu0
        %v3173 = vpop.trf.xlu0
        %v3174 = vpop.trf.xlu0
        %v3175 = vpop.trf.xlu0
        %v3176 = vpop.trf.xlu0
        %v3178 = vsel %vm191, %v3161, 0
        %v3181 = vsel %vm191, %v3162, 0
        %3183 = vmatprep.subr.mxu0 0.0
        %3184 = vmatpush1.msra.mxu0 %v155
        %3185 = vmatprep.subr.mxu0 0.0
        %3186 = vmatpush1.msra.mxu0 %v156
        %3187 = vmatprep.subr.mxu0 0.0
        %3188 = vmatpush1.msra.mxu0 0.0
        %3189 = vmatprep.subr.mxu0 0.0
        %3190 = vmatpush1.msra.mxu0 0.0
        %3191 = vmatprep.subr.mxu0 0.0
        %3192 = vmatpush1.msra.mxu0 0.0
        %3193 = vmatprep.subr.mxu0 0.0
        %3194 = vmatpush1.msra.mxu0 0.0
        %3195 = vmatprep.subr.mxu0 0.0
        %3196 = vmatpush1.msra.mxu0 0.0
        %3197 = vmatprep.subr.mxu0 0.0
        %3198 = vmatpush1.msra.mxu0 0.0
        %3199 = vmatprep.subr.mxu0 0.0
        %3200 = vmatpush1.msra.mxu0 0.0
        %3201 = vmatprep.subr.mxu0 0.0
        %3202 = vmatpush1.msra.mxu0 0.0
        %3203 = vmatprep.subr.mxu0 0.0
        %3204 = vmatpush1.msra.mxu0 0.0
        %3205 = vmatprep.subr.mxu0 0.0
        %3206 = vmatpush1.msra.mxu0 0.0
        %3207 = vmatprep.subr.mxu0 0.0
        %3208 = vmatpush1.msra.mxu0 0.0
        %3209 = vmatprep.subr.mxu0 0.0
        %3210 = vmatpush1.msra.mxu0 0.0
        %3211 = vmatprep.subr.mxu0 0.0
        %3212 = vmatpush1.msra.mxu0 0.0
        %3213 = vmatprep.subr.mxu0 0.0
        %3214 = vmatpush1.msra.mxu0 0.0
        %3215 = vmatprep.subr.mxu0 0.0
        %3216 = vmatpush1.msra.mxu0 0.0
        %3217 = vmatprep.subr.mxu0 0.0
        %3218 = vmatpush1.msra.mxu0 0.0
        %3219 = vmatprep.subr.mxu0 0.0
        %3220 = vmatpush1.msra.mxu0 0.0
        %3221 = vmatprep.subr.mxu0 0.0
        %3222 = vmatpush1.msra.mxu0 0.0
        %3223 = vmatprep.subr.mxu0 0.0
        %3224 = vmatpush1.msra.mxu0 0.0
        %3225 = vmatprep.subr.mxu0 0.0
        %3226 = vmatpush1.msra.mxu0 0.0
        %3227 = vmatprep.subr.mxu0 0.0
        %3228 = vmatpush1.msra.mxu0 0.0
        %3229 = vmatprep.subr.mxu0 0.0
        %3230 = vmatpush1.msra.mxu0 0.0
        %3231 = vmatprep.subr.mxu0 0.0
        %3232 = vmatpush1.msra.mxu0 0.0
        %3233 = vmatprep.subr.mxu0 0.0
        %3234 = vmatpush1.msra.mxu0 0.0
        %3235 = vmatprep.subr.mxu0 0.0
        %3236 = vmatpush1.msra.mxu0 0.0
        %3237 = vmatprep.subr.mxu0 0.0
        %3238 = vmatpush1.msra.mxu0 0.0
        %3239 = vmatprep.subr.mxu0 0.0
        %3240 = vmatpush1.msra.mxu0 0.0
        %3241 = vmatprep.subr.mxu0 0.0
        %3242 = vmatpush1.msra.mxu0 0.0
        %3243 = vmatprep.subr.mxu0 0.0
        %3244 = vmatpush1.msra.mxu0 0.0
        %3245 = vmatprep.subr.mxu0 0.0
        %3246 = vmatpush1.msra.mxu0 0.0
        %3247 = vmatprep.mubr.f32.mxu0 0.0
        %3248 = vmatmul.mubr.f32.gmra.mrb[0].mxu0 %v3178
        %v3249 = vpop.f32.mrb[0].mxu0
        %v3250 = vadd.f32 0.0, %v3249
        %v3251 = vpop.f32.mrb[0].mxu0
        %3252 = vmatprep.mubr.f32.mxu0 0.0
        %3253 = vmatmul.mubr.f32.gmra.mrb[0].mxu0 %v3181
        %v3254 = vpop.f32.mrb[0].mxu0
        %v3255 = vadd.f32 0.0, %v3254
        %v3256 = vpop.f32.mrb[0].mxu0
        %3257 = vdwg.mxu0
        %3260 = vrot.lane.b32.xlu0 %v3250, 96
        %v3261 = vpop.permute.xlu0 %3260
        %3262 = vrot.lane.b32.xlu0 %v3255, 96
        %v3263 = vpop.permute.xlu0 %3262
        %v3266 = vadd.f32 %v3135, %v3261
        %v3267 = vadd.f32 %v3136, %v3263
        %v3268 = vmul.f32 %v3266, 0.5
        %v3269 = vmul.f32 %v3267, 0.5
        %3270 = vst.msk [vmem:[%s2447] sm:$0xff] %vm1104, %v3268
        %3271 = vst.msk [vmem:[%s2447 + $0x8] sm:$0xff] %vm1104, %v3269
        %v3272 = vld [vmem:[%s2327] sm:$0xff]
        %v3273 = vld [vmem:[%s2327 + $0x8] sm:$0xff]
        %3276 = vrot.lane.b32.xlu0 %v3272, 16
        %v3277 = vpop.permute.xlu0 %3276
        %3278 = vrot.lane.b32.xlu0 %v3273, 16
        %v3279 = vpop.permute.xlu0 %3278
        %3282 = vxpose.xlu0.b32.start [1/16] %v3277, 128
        %3283 = vxpose.xlu0.b32.cont [2/16] %v3279, 128
        %3284 = vxpose.xlu0.b32.cont [3/16] 0.0, 128
        %3285 = vxpose.xlu0.b32.cont [4/16] 0.0, 128
        %3286 = vxpose.xlu0.b32.cont [5/16] 0.0, 128
        %3287 = vxpose.xlu0.b32.cont [6/16] 0.0, 128
        %3288 = vxpose.xlu0.b32.cont [7/16] 0.0, 128
        %3289 = vxpose.xlu0.b32.cont [8/16] 0.0, 128
        %3290 = vxpose.xlu0.b32.cont [9/16] 0.0, 128
        %3291 = vxpose.xlu0.b32.cont [10/16] 0.0, 128
        %3292 = vxpose.xlu0.b32.cont [11/16] 0.0, 128
        %3293 = vxpose.xlu0.b32.cont [12/16] 0.0, 128
        %3294 = vxpose.xlu0.b32.cont [13/16] 0.0, 128
        %3295 = vxpose.xlu0.b32.cont [14/16] 0.0, 128
        %3296 = vxpose.xlu0.b32.cont [15/16] 0.0, 128
        %3297 = vxpose.xlu0.b32.end [16/16] 0.0, 128
        %v3298 = vpop.trf.xlu0
        %v3299 = vpop.trf.xlu0
        %v3300 = vpop.trf.xlu0
        %v3301 = vpop.trf.xlu0
        %v3302 = vpop.trf.xlu0
        %v3303 = vpop.trf.xlu0
        %v3304 = vpop.trf.xlu0
        %v3305 = vpop.trf.xlu0
        %v3306 = vpop.trf.xlu0
        %v3307 = vpop.trf.xlu0
        %v3308 = vpop.trf.xlu0
        %v3309 = vpop.trf.xlu0
        %v3310 = vpop.trf.xlu0
        %v3311 = vpop.trf.xlu0
        %v3312 = vpop.trf.xlu0
        %v3313 = vpop.trf.xlu0
        %v3315 = vsel %vm191, %v3298, 0
        %v3318 = vsel %vm191, %v3299, 0
        %3320 = vmatprep.subr.mxu0 0.0
        %3321 = vmatpush1.msra.mxu0 %v155
        %3322 = vmatprep.subr.mxu0 0.0
        %3323 = vmatpush1.msra.mxu0 %v156
        %3324 = vmatprep.subr.mxu0 0.0
        %3325 = vmatpush1.msra.mxu0 0.0
        %3326 = vmatprep.subr.mxu0 0.0
        %3327 = vmatpush1.msra.mxu0 0.0
        %3328 = vmatprep.subr.mxu0 0.0
        %3329 = vmatpush1.msra.mxu0 0.0
        %3330 = vmatprep.subr.mxu0 0.0
        %3331 = vmatpush1.msra.mxu0 0.0
        %3332 = vmatprep.subr.mxu0 0.0
        %3333 = vmatpush1.msra.mxu0 0.0
        %3334 = vmatprep.subr.mxu0 0.0
        %3335 = vmatpush1.msra.mxu0 0.0
        %3336 = vmatprep.subr.mxu0 0.0
        %3337 = vmatpush1.msra.mxu0 0.0
        %3338 = vmatprep.subr.mxu0 0.0
        %3339 = vmatpush1.msra.mxu0 0.0
        %3340 = vmatprep.subr.mxu0 0.0
        %3341 = vmatpush1.msra.mxu0 0.0
        %3342 = vmatprep.subr.mxu0 0.0
        %3343 = vmatpush1.msra.mxu0 0.0
        %3344 = vmatprep.subr.mxu0 0.0
        %3345 = vmatpush1.msra.mxu0 0.0
        %3346 = vmatprep.subr.mxu0 0.0
        %3347 = vmatpush1.msra.mxu0 0.0
        %3348 = vmatprep.subr.mxu0 0.0
        %3349 = vmatpush1.msra.mxu0 0.0
        %3350 = vmatprep.subr.mxu0 0.0
        %3351 = vmatpush1.msra.mxu0 0.0
        %3352 = vmatprep.subr.mxu0 0.0
        %3353 = vmatpush1.msra.mxu0 0.0
        %3354 = vmatprep.subr.mxu0 0.0
        %3355 = vmatpush1.msra.mxu0 0.0
        %3356 = vmatprep.subr.mxu0 0.0
        %3357 = vmatpush1.msra.mxu0 0.0
        %3358 = vmatprep.subr.mxu0 0.0
        %3359 = vmatpush1.msra.mxu0 0.0
        %3360 = vmatprep.subr.mxu0 0.0
        %3361 = vmatpush1.msra.mxu0 0.0
        %3362 = vmatprep.subr.mxu0 0.0
        %3363 = vmatpush1.msra.mxu0 0.0
        %3364 = vmatprep.subr.mxu0 0.0
        %3365 = vmatpush1.msra.mxu0 0.0
        %3366 = vmatprep.subr.mxu0 0.0
        %3367 = vmatpush1.msra.mxu0 0.0
        %3368 = vmatprep.subr.mxu0 0.0
        %3369 = vmatpush1.msra.mxu0 0.0
        %3370 = vmatprep.subr.mxu0 0.0
        %3371 = vmatpush1.msra.mxu0 0.0
        %3372 = vmatprep.subr.mxu0 0.0
        %3373 = vmatpush1.msra.mxu0 0.0
        %3374 = vmatprep.subr.mxu0 0.0
        %3375 = vmatpush1.msra.mxu0 0.0
        %3376 = vmatprep.subr.mxu0 0.0
        %3377 = vmatpush1.msra.mxu0 0.0
        %3378 = vmatprep.subr.mxu0 0.0
        %3379 = vmatpush1.msra.mxu0 0.0
        %3380 = vmatprep.subr.mxu0 0.0
        %3381 = vmatpush1.msra.mxu0 0.0
        %3382 = vmatprep.subr.mxu0 0.0
        %3383 = vmatpush1.msra.mxu0 0.0
        %3384 = vmatprep.mubr.f32.mxu0 0.0
        %3385 = vmatmul.mubr.f32.gmra.mrb[0].mxu0 %v3315
        %v3386 = vpop.f32.mrb[0].mxu0
        %v3387 = vadd.f32 0.0, %v3386
        %v3388 = vpop.f32.mrb[0].mxu0
        %3389 = vmatprep.mubr.f32.mxu0 0.0
        %3390 = vmatmul.mubr.f32.gmra.mrb[0].mxu0 %v3318
        %v3391 = vpop.f32.mrb[0].mxu0
        %v3392 = vadd.f32 0.0, %v3391
        %v3393 = vpop.f32.mrb[0].mxu0
        %3394 = vdwg.mxu0
        %3397 = vrot.lane.b32.xlu0 %v3387, 112
        %v3398 = vpop.permute.xlu0 %3397
        %3399 = vrot.lane.b32.xlu0 %v3392, 112
        %v3400 = vpop.permute.xlu0 %3399
        %v3403 = vadd.f32 %v3272, %v3398
        %v3404 = vadd.f32 %v3273, %v3400
        %v3405 = vmul.f32 %v3403, 0.5
        %v3406 = vmul.f32 %v3404, 0.5
        %3407 = vst.msk [vmem:[%s2447] sm:$0xff] %vm1242, %v3405
        %3408 = vst.msk [vmem:[%s2447 + $0x8] sm:$0xff] %vm1242, %v3406
        %s3409 = scalar_lea.vmem %s143, 48
        %v3410 = vld [vmem:[%s3409] sm:$0xff]
        %v3411 = vld [vmem:[%s3409 + $0x8] sm:$0xff]
        %3412 = vxpose.xlu0.b32.start [1/16] %v3410, 128
        %3413 = vxpose.xlu0.b32.cont [2/16] %v3411, 128
        %3414 = vxpose.xlu0.b32.cont [3/16] 0.0, 128
        %3415 = vxpose.xlu0.b32.cont [4/16] 0.0, 128
        %3416 = vxpose.xlu0.b32.cont [5/16] 0.0, 128
        %3417 = vxpose.xlu0.b32.cont [6/16] 0.0, 128
        %3418 = vxpose.xlu0.b32.cont [7/16] 0.0, 128
        %3419 = vxpose.xlu0.b32.cont [8/16] 0.0, 128
        %3420 = vxpose.xlu0.b32.cont [9/16] 0.0, 128
        %3421 = vxpose.xlu0.b32.cont [10/16] 0.0, 128
        %3422 = vxpose.xlu0.b32.cont [11/16] 0.0, 128
        %3423 = vxpose.xlu0.b32.cont [12/16] 0.0, 128
        %3424 = vxpose.xlu0.b32.cont [13/16] 0.0, 128
        %3425 = vxpose.xlu0.b32.cont [14/16] 0.0, 128
        %3426 = vxpose.xlu0.b32.cont [15/16] 0.0, 128
        %3427 = vxpose.xlu0.b32.end [16/16] 0.0, 128
        %v3428 = vpop.trf.xlu0
        %v3429 = vpop.trf.xlu0
        %v3430 = vpop.trf.xlu0
        %v3431 = vpop.trf.xlu0
        %v3432 = vpop.trf.xlu0
        %v3433 = vpop.trf.xlu0
        %v3434 = vpop.trf.xlu0
        %v3435 = vpop.trf.xlu0
        %v3436 = vpop.trf.xlu0
        %v3437 = vpop.trf.xlu0
        %v3438 = vpop.trf.xlu0
        %v3439 = vpop.trf.xlu0
        %v3440 = vpop.trf.xlu0
        %v3441 = vpop.trf.xlu0
        %v3442 = vpop.trf.xlu0
        %v3443 = vpop.trf.xlu0
        %v3445 = vsel %vm191, %v3428, 0
        %v3448 = vsel %vm191, %v3429, 0
        %3450 = vmatprep.subr.mxu0 0.0
        %3451 = vmatpush1.msra.mxu0 %v155
        %3452 = vmatprep.subr.mxu0 0.0
        %3453 = vmatpush1.msra.mxu0 %v156
        %3454 = vmatprep.subr.mxu0 0.0
        %3455 = vmatpush1.msra.mxu0 0.0
        %3456 = vmatprep.subr.mxu0 0.0
        %3457 = vmatpush1.msra.mxu0 0.0
        %3458 = vmatprep.subr.mxu0 0.0
        %3459 = vmatpush1.msra.mxu0 0.0
        %3460 = vmatprep.subr.mxu0 0.0
        %3461 = vmatpush1.msra.mxu0 0.0
        %3462 = vmatprep.subr.mxu0 0.0
        %3463 = vmatpush1.msra.mxu0 0.0
        %3464 = vmatprep.subr.mxu0 0.0
        %3465 = vmatpush1.msra.mxu0 0.0
        %3466 = vmatprep.subr.mxu0 0.0
        %3467 = vmatpush1.msra.mxu0 0.0
        %3468 = vmatprep.subr.mxu0 0.0
        %3469 = vmatpush1.msra.mxu0 0.0
        %3470 = vmatprep.subr.mxu0 0.0
        %3471 = vmatpush1.msra.mxu0 0.0
        %3472 = vmatprep.subr.mxu0 0.0
        %3473 = vmatpush1.msra.mxu0 0.0
        %3474 = vmatprep.subr.mxu0 0.0
        %3475 = vmatpush1.msra.mxu0 0.0
        %3476 = vmatprep.subr.mxu0 0.0
        %3477 = vmatpush1.msra.mxu0 0.0
        %3478 = vmatprep.subr.mxu0 0.0
        %3479 = vmatpush1.msra.mxu0 0.0
        %3480 = vmatprep.subr.mxu0 0.0
        %3481 = vmatpush1.msra.mxu0 0.0
        %3482 = vmatprep.subr.mxu0 0.0
        %3483 = vmatpush1.msra.mxu0 0.0
        %3484 = vmatprep.subr.mxu0 0.0
        %3485 = vmatpush1.msra.mxu0 0.0
        %3486 = vmatprep.subr.mxu0 0.0
        %3487 = vmatpush1.msra.mxu0 0.0
        %3488 = vmatprep.subr.mxu0 0.0
        %3489 = vmatpush1.msra.mxu0 0.0
        %3490 = vmatprep.subr.mxu0 0.0
        %3491 = vmatpush1.msra.mxu0 0.0
        %3492 = vmatprep.subr.mxu0 0.0
        %3493 = vmatpush1.msra.mxu0 0.0
        %3494 = vmatprep.subr.mxu0 0.0
        %3495 = vmatpush1.msra.mxu0 0.0
        %3496 = vmatprep.subr.mxu0 0.0
        %3497 = vmatpush1.msra.mxu0 0.0
        %3498 = vmatprep.subr.mxu0 0.0
        %3499 = vmatpush1.msra.mxu0 0.0
        %3500 = vmatprep.subr.mxu0 0.0
        %3501 = vmatpush1.msra.mxu0 0.0
        %3502 = vmatprep.subr.mxu0 0.0
        %3503 = vmatpush1.msra.mxu0 0.0
        %3504 = vmatprep.subr.mxu0 0.0
        %3505 = vmatpush1.msra.mxu0 0.0
        %3506 = vmatprep.subr.mxu0 0.0
        %3507 = vmatpush1.msra.mxu0 0.0
        %3508 = vmatprep.subr.mxu0 0.0
        %3509 = vmatpush1.msra.mxu0 0.0
        %3510 = vmatprep.subr.mxu0 0.0
        %3511 = vmatpush1.msra.mxu0 0.0
        %3512 = vmatprep.subr.mxu0 0.0
        %3513 = vmatpush1.msra.mxu0 0.0
        %3514 = vmatprep.mubr.f32.mxu0 0.0
        %3515 = vmatmul.mubr.f32.gmra.mrb[0].mxu0 %v3445
        %v3516 = vpop.f32.mrb[0].mxu0
        %v3517 = vadd.f32 0.0, %v3516
        %v3518 = vpop.f32.mrb[0].mxu0
        %3519 = vmatprep.mubr.f32.mxu0 0.0
        %3520 = vmatmul.mubr.f32.gmra.mrb[0].mxu0 %v3448
        %v3521 = vpop.f32.mrb[0].mxu0
        %v3522 = vadd.f32 0.0, %v3521
        %v3523 = vpop.f32.mrb[0].mxu0
        %3524 = vdwg.mxu0
        %v3525 = vadd.f32 %v3410, %v3517
        %v3526 = vadd.f32 %v3411, %v3522
        %v3527 = vmul.f32 %v3525, 0.5
        %v3528 = vmul.f32 %v3526, 0.5
        %s3529 = scalar_lea.vmem %s134, 48 [#allocation2]
        %3530 = vst.msk [vmem:[%s3529] sm:$0xff] %vm191, %v3527
        %3531 = vst.msk [vmem:[%s3529 + $0x8] sm:$0xff] %vm191, %v3528
        %v3532 = vld [vmem:[%s3409] sm:$0xff]
        %v3533 = vld [vmem:[%s3409 + $0x8] sm:$0xff]
        %3536 = vrot.lane.b32.xlu0 %v3532, 112
        %v3537 = vpop.permute.xlu0 %3536
        %3538 = vrot.lane.b32.xlu0 %v3533, 112
        %v3539 = vpop.permute.xlu0 %3538
        %3542 = vxpose.xlu0.b32.start [1/16] %v3537, 128
        %3543 = vxpose.xlu0.b32.cont [2/16] %v3539, 128
        %3544 = vxpose.xlu0.b32.cont [3/16] 0.0, 128
        %3545 = vxpose.xlu0.b32.cont [4/16] 0.0, 128
        %3546 = vxpose.xlu0.b32.cont [5/16] 0.0, 128
        %3547 = vxpose.xlu0.b32.cont [6/16] 0.0, 128
        %3548 = vxpose.xlu0.b32.cont [7/16] 0.0, 128
        %3549 = vxpose.xlu0.b32.cont [8/16] 0.0, 128
        %3550 = vxpose.xlu0.b32.cont [9/16] 0.0, 128
        %3551 = vxpose.xlu0.b32.cont [10/16] 0.0, 128
        %3552 = vxpose.xlu0.b32.cont [11/16] 0.0, 128
        %3553 = vxpose.xlu0.b32.cont [12/16] 0.0, 128
        %3554 = vxpose.xlu0.b32.cont [13/16] 0.0, 128
        %3555 = vxpose.xlu0.b32.cont [14/16] 0.0, 128
        %3556 = vxpose.xlu0.b32.cont [15/16] 0.0, 128
        %3557 = vxpose.xlu0.b32.end [16/16] 0.0, 128
        %v3558 = vpop.trf.xlu0
        %v3559 = vpop.trf.xlu0
        %v3560 = vpop.trf.xlu0
        %v3561 = vpop.trf.xlu0
        %v3562 = vpop.trf.xlu0
        %v3563 = vpop.trf.xlu0
        %v3564 = vpop.trf.xlu0
        %v3565 = vpop.trf.xlu0
        %v3566 = vpop.trf.xlu0
        %v3567 = vpop.trf.xlu0
        %v3568 = vpop.trf.xlu0
        %v3569 = vpop.trf.xlu0
        %v3570 = vpop.trf.xlu0
        %v3571 = vpop.trf.xlu0
        %v3572 = vpop.trf.xlu0
        %v3573 = vpop.trf.xlu0
        %v3575 = vsel %vm191, %v3558, 0
        %v3578 = vsel %vm191, %v3559, 0
        %3580 = vmatprep.subr.mxu0 0.0
        %3581 = vmatpush1.msra.mxu0 %v155
        %3582 = vmatprep.subr.mxu0 0.0
        %3583 = vmatpush1.msra.mxu0 %v156
        %3584 = vmatprep.subr.mxu0 0.0
        %3585 = vmatpush1.msra.mxu0 0.0
        %3586 = vmatprep.subr.mxu0 0.0
        %3587 = vmatpush1.msra.mxu0 0.0
        %3588 = vmatprep.subr.mxu0 0.0
        %3589 = vmatpush1.msra.mxu0 0.0
        %3590 = vmatprep.subr.mxu0 0.0
        %3591 = vmatpush1.msra.mxu0 0.0
        %3592 = vmatprep.subr.mxu0 0.0
        %3593 = vmatpush1.msra.mxu0 0.0
        %3594 = vmatprep.subr.mxu0 0.0
        %3595 = vmatpush1.msra.mxu0 0.0
        %3596 = vmatprep.subr.mxu0 0.0
        %3597 = vmatpush1.msra.mxu0 0.0
        %3598 = vmatprep.subr.mxu0 0.0
        %3599 = vmatpush1.msra.mxu0 0.0
        %3600 = vmatprep.subr.mxu0 0.0
        %3601 = vmatpush1.msra.mxu0 0.0
        %3602 = vmatprep.subr.mxu0 0.0
        %3603 = vmatpush1.msra.mxu0 0.0
        %3604 = vmatprep.subr.mxu0 0.0
        %3605 = vmatpush1.msra.mxu0 0.0
        %3606 = vmatprep.subr.mxu0 0.0
        %3607 = vmatpush1.msra.mxu0 0.0
        %3608 = vmatprep.subr.mxu0 0.0
        %3609 = vmatpush1.msra.mxu0 0.0
        %3610 = vmatprep.subr.mxu0 0.0
        %3611 = vmatpush1.msra.mxu0 0.0
        %3612 = vmatprep.subr.mxu0 0.0
        %3613 = vmatpush1.msra.mxu0 0.0
        %3614 = vmatprep.subr.mxu0 0.0
        %3615 = vmatpush1.msra.mxu0 0.0
        %3616 = vmatprep.subr.mxu0 0.0
        %3617 = vmatpush1.msra.mxu0 0.0
        %3618 = vmatprep.subr.mxu0 0.0
        %3619 = vmatpush1.msra.mxu0 0.0
        %3620 = vmatprep.subr.mxu0 0.0
        %3621 = vmatpush1.msra.mxu0 0.0
        %3622 = vmatprep.subr.mxu0 0.0
        %3623 = vmatpush1.msra.mxu0 0.0
        %3624 = vmatprep.subr.mxu0 0.0
        %3625 = vmatpush1.msra.mxu0 0.0
        %3626 = vmatprep.subr.mxu0 0.0
        %3627 = vmatpush1.msra.mxu0 0.0
        %3628 = vmatprep.subr.mxu0 0.0
        %3629 = vmatpush1.msra.mxu0 0.0
        %3630 = vmatprep.subr.mxu0 0.0
        %3631 = vmatpush1.msra.mxu0 0.0
        %3632 = vmatprep.subr.mxu0 0.0
        %3633 = vmatpush1.msra.mxu0 0.0
        %3634 = vmatprep.subr.mxu0 0.0
        %3635 = vmatpush1.msra.mxu0 0.0
        %3636 = vmatprep.subr.mxu0 0.0
        %3637 = vmatpush1.msra.mxu0 0.0
        %3638 = vmatprep.subr.mxu0 0.0
        %3639 = vmatpush1.msra.mxu0 0.0
        %3640 = vmatprep.subr.mxu0 0.0
        %3641 = vmatpush1.msra.mxu0 0.0
        %3642 = vmatprep.subr.mxu0 0.0
        %3643 = vmatpush1.msra.mxu0 0.0
        %3644 = vmatprep.mubr.f32.mxu0 0.0
        %3645 = vmatmul.mubr.f32.gmra.mrb[0].mxu0 %v3575
        %v3646 = vpop.f32.mrb[0].mxu0
        %v3647 = vadd.f32 0.0, %v3646
        %v3648 = vpop.f32.mrb[0].mxu0
        %3649 = vmatprep.mubr.f32.mxu0 0.0
        %3650 = vmatmul.mubr.f32.gmra.mrb[0].mxu0 %v3578
        %v3651 = vpop.f32.mrb[0].mxu0
        %v3652 = vadd.f32 0.0, %v3651
        %v3653 = vpop.f32.mrb[0].mxu0
        %3654 = vdwg.mxu0
        %3657 = vrot.lane.b32.xlu0 %v3647, 16
        %v3658 = vpop.permute.xlu0 %3657
        %3659 = vrot.lane.b32.xlu0 %v3652, 16
        %v3660 = vpop.permute.xlu0 %3659
        %v3663 = vadd.f32 %v3532, %v3658
        %v3664 = vadd.f32 %v3533, %v3660
        %v3665 = vmul.f32 %v3663, 0.5
        %v3666 = vmul.f32 %v3664, 0.5
        %3667 = vst.msk [vmem:[%s3529] sm:$0xff] %vm414, %v3665
        %3668 = vst.msk [vmem:[%s3529 + $0x8] sm:$0xff] %vm414, %v3666
        %v3669 = vld [vmem:[%s3409] sm:$0xff]
        %v3670 = vld [vmem:[%s3409 + $0x8] sm:$0xff]
        %3673 = vrot.lane.b32.xlu0 %v3669, 96
        %v3674 = vpop.permute.xlu0 %3673
        %3675 = vrot.lane.b32.xlu0 %v3670, 96
        %v3676 = vpop.permute.xlu0 %3675
        %3679 = vxpose.xlu0.b32.start [1/16] %v3674, 128
        %3680 = vxpose.xlu0.b32.cont [2/16] %v3676, 128
        %3681 = vxpose.xlu0.b32.cont [3/16] 0.0, 128
        %3682 = vxpose.xlu0.b32.cont [4/16] 0.0, 128
        %3683 = vxpose.xlu0.b32.cont [5/16] 0.0, 128
        %3684 = vxpose.xlu0.b32.cont [6/16] 0.0, 128
        %3685 = vxpose.xlu0.b32.cont [7/16] 0.0, 128
        %3686 = vxpose.xlu0.b32.cont [8/16] 0.0, 128
        %3687 = vxpose.xlu0.b32.cont [9/16] 0.0, 128
        %3688 = vxpose.xlu0.b32.cont [10/16] 0.0, 128
        %3689 = vxpose.xlu0.b32.cont [11/16] 0.0, 128
        %3690 = vxpose.xlu0.b32.cont [12/16] 0.0, 128
        %3691 = vxpose.xlu0.b32.cont [13/16] 0.0, 128
        %3692 = vxpose.xlu0.b32.cont [14/16] 0.0, 128
        %3693 = vxpose.xlu0.b32.cont [15/16] 0.0, 128
        %3694 = vxpose.xlu0.b32.end [16/16] 0.0, 128
        %v3695 = vpop.trf.xlu0
        %v3696 = vpop.trf.xlu0
        %v3697 = vpop.trf.xlu0
        %v3698 = vpop.trf.xlu0
        %v3699 = vpop.trf.xlu0
        %v3700 = vpop.trf.xlu0
        %v3701 = vpop.trf.xlu0
        %v3702 = vpop.trf.xlu0
        %v3703 = vpop.trf.xlu0
        %v3704 = vpop.trf.xlu0
        %v3705 = vpop.trf.xlu0
        %v3706 = vpop.trf.xlu0
        %v3707 = vpop.trf.xlu0
        %v3708 = vpop.trf.xlu0
        %v3709 = vpop.trf.xlu0
        %v3710 = vpop.trf.xlu0
        %v3712 = vsel %vm191, %v3695, 0
        %v3715 = vsel %vm191, %v3696, 0
        %3717 = vmatprep.subr.mxu0 0.0
        %3718 = vmatpush1.msra.mxu0 %v155
        %3719 = vmatprep.subr.mxu0 0.0
        %3720 = vmatpush1.msra.mxu0 %v156
        %3721 = vmatprep.subr.mxu0 0.0
        %3722 = vmatpush1.msra.mxu0 0.0
        %3723 = vmatprep.subr.mxu0 0.0
        %3724 = vmatpush1.msra.mxu0 0.0
        %3725 = vmatprep.subr.mxu0 0.0
        %3726 = vmatpush1.msra.mxu0 0.0
        %3727 = vmatprep.subr.mxu0 0.0
        %3728 = vmatpush1.msra.mxu0 0.0
        %3729 = vmatprep.subr.mxu0 0.0
        %3730 = vmatpush1.msra.mxu0 0.0
        %3731 = vmatprep.subr.mxu0 0.0
        %3732 = vmatpush1.msra.mxu0 0.0
        %3733 = vmatprep.subr.mxu0 0.0
        %3734 = vmatpush1.msra.mxu0 0.0
        %3735 = vmatprep.subr.mxu0 0.0
        %3736 = vmatpush1.msra.mxu0 0.0
        %3737 = vmatprep.subr.mxu0 0.0
        %3738 = vmatpush1.msra.mxu0 0.0
        %3739 = vmatprep.subr.mxu0 0.0
        %3740 = vmatpush1.msra.mxu0 0.0
        %3741 = vmatprep.subr.mxu0 0.0
        %3742 = vmatpush1.msra.mxu0 0.0
        %3743 = vmatprep.subr.mxu0 0.0
        %3744 = vmatpush1.msra.mxu0 0.0
        %3745 = vmatprep.subr.mxu0 0.0
        %3746 = vmatpush1.msra.mxu0 0.0
        %3747 = vmatprep.subr.mxu0 0.0
        %3748 = vmatpush1.msra.mxu0 0.0
        %3749 = vmatprep.subr.mxu0 0.0
        %3750 = vmatpush1.msra.mxu0 0.0
        %3751 = vmatprep.subr.mxu0 0.0
        %3752 = vmatpush1.msra.mxu0 0.0
        %3753 = vmatprep.subr.mxu0 0.0
        %3754 = vmatpush1.msra.mxu0 0.0
        %3755 = vmatprep.subr.mxu0 0.0
        %3756 = vmatpush1.msra.mxu0 0.0
        %3757 = vmatprep.subr.mxu0 0.0
        %3758 = vmatpush1.msra.mxu0 0.0
        %3759 = vmatprep.subr.mxu0 0.0
        %3760 = vmatpush1.msra.mxu0 0.0
        %3761 = vmatprep.subr.mxu0 0.0
        %3762 = vmatpush1.msra.mxu0 0.0
        %3763 = vmatprep.subr.mxu0 0.0
        %3764 = vmatpush1.msra.mxu0 0.0
        %3765 = vmatprep.subr.mxu0 0.0
        %3766 = vmatpush1.msra.mxu0 0.0
        %3767 = vmatprep.subr.mxu0 0.0
        %3768 = vmatpush1.msra.mxu0 0.0
        %3769 = vmatprep.subr.mxu0 0.0
        %3770 = vmatpush1.msra.mxu0 0.0
        %3771 = vmatprep.subr.mxu0 0.0
        %3772 = vmatpush1.msra.mxu0 0.0
        %3773 = vmatprep.subr.mxu0 0.0
        %3774 = vmatpush1.msra.mxu0 0.0
        %3775 = vmatprep.subr.mxu0 0.0
        %3776 = vmatpush1.msra.mxu0 0.0
        %3777 = vmatprep.subr.mxu0 0.0
        %3778 = vmatpush1.msra.mxu0 0.0
        %3779 = vmatprep.subr.mxu0 0.0
        %3780 = vmatpush1.msra.mxu0 0.0
        %3781 = vmatprep.mubr.f32.mxu0 0.0
        %3782 = vmatmul.mubr.f32.gmra.mrb[0].mxu0 %v3712
        %v3783 = vpop.f32.mrb[0].mxu0
        %v3784 = vadd.f32 0.0, %v3783
        %v3785 = vpop.f32.mrb[0].mxu0
        %3786 = vmatprep.mubr.f32.mxu0 0.0
        %3787 = vmatmul.mubr.f32.gmra.mrb[0].mxu0 %v3715
        %v3788 = vpop.f32.mrb[0].mxu0
        %v3789 = vadd.f32 0.0, %v3788
        %v3790 = vpop.f32.mrb[0].mxu0
        %3791 = vdwg.mxu0
        %3794 = vrot.lane.b32.xlu0 %v3784, 32
        %v3795 = vpop.permute.xlu0 %3794
        %3796 = vrot.lane.b32.xlu0 %v3789, 32
        %v3797 = vpop.permute.xlu0 %3796
        %v3800 = vadd.f32 %v3669, %v3795
        %v3801 = vadd.f32 %v3670, %v3797
        %v3802 = vmul.f32 %v3800, 0.5
        %v3803 = vmul.f32 %v3801, 0.5
        %3804 = vst.msk [vmem:[%s3529] sm:$0xff] %vm552, %v3802
        %3805 = vst.msk [vmem:[%s3529 + $0x8] sm:$0xff] %vm552, %v3803
        %v3806 = vld [vmem:[%s3409] sm:$0xff]
        %v3807 = vld [vmem:[%s3409 + $0x8] sm:$0xff]
        %3810 = vrot.lane.b32.xlu0 %v3806, 80
        %v3811 = vpop.permute.xlu0 %3810
        %3812 = vrot.lane.b32.xlu0 %v3807, 80
        %v3813 = vpop.permute.xlu0 %3812
        %3816 = vxpose.xlu0.b32.start [1/16] %v3811, 128
        %3817 = vxpose.xlu0.b32.cont [2/16] %v3813, 128
        %3818 = vxpose.xlu0.b32.cont [3/16] 0.0, 128
        %3819 = vxpose.xlu0.b32.cont [4/16] 0.0, 128
        %3820 = vxpose.xlu0.b32.cont [5/16] 0.0, 128
        %3821 = vxpose.xlu0.b32.cont [6/16] 0.0, 128
        %3822 = vxpose.xlu0.b32.cont [7/16] 0.0, 128
        %3823 = vxpose.xlu0.b32.cont [8/16] 0.0, 128
        %3824 = vxpose.xlu0.b32.cont [9/16] 0.0, 128
        %3825 = vxpose.xlu0.b32.cont [10/16] 0.0, 128
        %3826 = vxpose.xlu0.b32.cont [11/16] 0.0, 128
        %3827 = vxpose.xlu0.b32.cont [12/16] 0.0, 128
        %3828 = vxpose.xlu0.b32.cont [13/16] 0.0, 128
        %3829 = vxpose.xlu0.b32.cont [14/16] 0.0, 128
        %3830 = vxpose.xlu0.b32.cont [15/16] 0.0, 128
        %3831 = vxpose.xlu0.b32.end [16/16] 0.0, 128
        %v3832 = vpop.trf.xlu0
        %v3833 = vpop.trf.xlu0
        %v3834 = vpop.trf.xlu0
        %v3835 = vpop.trf.xlu0
        %v3836 = vpop.trf.xlu0
        %v3837 = vpop.trf.xlu0
        %v3838 = vpop.trf.xlu0
        %v3839 = vpop.trf.xlu0
        %v3840 = vpop.trf.xlu0
        %v3841 = vpop.trf.xlu0
        %v3842 = vpop.trf.xlu0
        %v3843 = vpop.trf.xlu0
        %v3844 = vpop.trf.xlu0
        %v3845 = vpop.trf.xlu0
        %v3846 = vpop.trf.xlu0
        %v3847 = vpop.trf.xlu0
        %v3849 = vsel %vm191, %v3832, 0
        %v3852 = vsel %vm191, %v3833, 0
        %3854 = vmatprep.subr.mxu0 0.0
        %3855 = vmatpush1.msra.mxu0 %v155
        %3856 = vmatprep.subr.mxu0 0.0
        %3857 = vmatpush1.msra.mxu0 %v156
        %3858 = vmatprep.subr.mxu0 0.0
        %3859 = vmatpush1.msra.mxu0 0.0
        %3860 = vmatprep.subr.mxu0 0.0
        %3861 = vmatpush1.msra.mxu0 0.0
        %3862 = vmatprep.subr.mxu0 0.0
        %3863 = vmatpush1.msra.mxu0 0.0
        %3864 = vmatprep.subr.mxu0 0.0
        %3865 = vmatpush1.msra.mxu0 0.0
        %3866 = vmatprep.subr.mxu0 0.0
        %3867 = vmatpush1.msra.mxu0 0.0
        %3868 = vmatprep.subr.mxu0 0.0
        %3869 = vmatpush1.msra.mxu0 0.0
        %3870 = vmatprep.subr.mxu0 0.0
        %3871 = vmatpush1.msra.mxu0 0.0
        %3872 = vmatprep.subr.mxu0 0.0
        %3873 = vmatpush1.msra.mxu0 0.0
        %3874 = vmatprep.subr.mxu0 0.0
        %3875 = vmatpush1.msra.mxu0 0.0
        %3876 = vmatprep.subr.mxu0 0.0
        %3877 = vmatpush1.msra.mxu0 0.0
        %3878 = vmatprep.subr.mxu0 0.0
        %3879 = vmatpush1.msra.mxu0 0.0
        %3880 = vmatprep.subr.mxu0 0.0
        %3881 = vmatpush1.msra.mxu0 0.0
        %3882 = vmatprep.subr.mxu0 0.0
        %3883 = vmatpush1.msra.mxu0 0.0
        %3884 = vmatprep.subr.mxu0 0.0
        %3885 = vmatpush1.msra.mxu0 0.0
        %3886 = vmatprep.subr.mxu0 0.0
        %3887 = vmatpush1.msra.mxu0 0.0
        %3888 = vmatprep.subr.mxu0 0.0
        %3889 = vmatpush1.msra.mxu0 0.0
        %3890 = vmatprep.subr.mxu0 0.0
        %3891 = vmatpush1.msra.mxu0 0.0
        %3892 = vmatprep.subr.mxu0 0.0
        %3893 = vmatpush1.msra.mxu0 0.0
        %3894 = vmatprep.subr.mxu0 0.0
        %3895 = vmatpush1.msra.mxu0 0.0
        %3896 = vmatprep.subr.mxu0 0.0
        %3897 = vmatpush1.msra.mxu0 0.0
        %3898 = vmatprep.subr.mxu0 0.0
        %3899 = vmatpush1.msra.mxu0 0.0
        %3900 = vmatprep.subr.mxu0 0.0
        %3901 = vmatpush1.msra.mxu0 0.0
        %3902 = vmatprep.subr.mxu0 0.0
        %3903 = vmatpush1.msra.mxu0 0.0
        %3904 = vmatprep.subr.mxu0 0.0
        %3905 = vmatpush1.msra.mxu0 0.0
        %3906 = vmatprep.subr.mxu0 0.0
        %3907 = vmatpush1.msra.mxu0 0.0
        %3908 = vmatprep.subr.mxu0 0.0
        %3909 = vmatpush1.msra.mxu0 0.0
        %3910 = vmatprep.subr.mxu0 0.0
        %3911 = vmatpush1.msra.mxu0 0.0
        %3912 = vmatprep.subr.mxu0 0.0
        %3913 = vmatpush1.msra.mxu0 0.0
        %3914 = vmatprep.subr.mxu0 0.0
        %3915 = vmatpush1.msra.mxu0 0.0
        %3916 = vmatprep.subr.mxu0 0.0
        %3917 = vmatpush1.msra.mxu0 0.0
        %3918 = vmatprep.mubr.f32.mxu0 0.0
        %3919 = vmatmul.mubr.f32.gmra.mrb[0].mxu0 %v3849
        %v3920 = vpop.f32.mrb[0].mxu0
        %v3921 = vadd.f32 0.0, %v3920
        %v3922 = vpop.f32.mrb[0].mxu0
        %3923 = vmatprep.mubr.f32.mxu0 0.0
        %3924 = vmatmul.mubr.f32.gmra.mrb[0].mxu0 %v3852
        %v3925 = vpop.f32.mrb[0].mxu0
        %v3926 = vadd.f32 0.0, %v3925
        %v3927 = vpop.f32.mrb[0].mxu0
        %3928 = vdwg.mxu0
        %3931 = vrot.lane.b32.xlu0 %v3921, 48
        %v3932 = vpop.permute.xlu0 %3931
        %3933 = vrot.lane.b32.xlu0 %v3926, 48
        %v3934 = vpop.permute.xlu0 %3933
        %v3937 = vadd.f32 %v3806, %v3932
        %v3938 = vadd.f32 %v3807, %v3934
        %v3939 = vmul.f32 %v3937, 0.5
        %v3940 = vmul.f32 %v3938, 0.5
        %3941 = vst.msk [vmem:[%s3529] sm:$0xff] %vm690, %v3939
        %3942 = vst.msk [vmem:[%s3529 + $0x8] sm:$0xff] %vm690, %v3940
        %v3943 = vld [vmem:[%s3409] sm:$0xff]
        %v3944 = vld [vmem:[%s3409 + $0x8] sm:$0xff]
        %3947 = vrot.lane.b32.xlu0 %v3943, 64
        %v3948 = vpop.permute.xlu0 %3947
        %3949 = vrot.lane.b32.xlu0 %v3944, 64
        %v3950 = vpop.permute.xlu0 %3949
        %3953 = vxpose.xlu0.b32.start [1/16] %v3948, 128
        %3954 = vxpose.xlu0.b32.cont [2/16] %v3950, 128
        %3955 = vxpose.xlu0.b32.cont [3/16] 0.0, 128
        %3956 = vxpose.xlu0.b32.cont [4/16] 0.0, 128
        %3957 = vxpose.xlu0.b32.cont [5/16] 0.0, 128
        %3958 = vxpose.xlu0.b32.cont [6/16] 0.0, 128
        %3959 = vxpose.xlu0.b32.cont [7/16] 0.0, 128
        %3960 = vxpose.xlu0.b32.cont [8/16] 0.0, 128
        %3961 = vxpose.xlu0.b32.cont [9/16] 0.0, 128
        %3962 = vxpose.xlu0.b32.cont [10/16] 0.0, 128
        %3963 = vxpose.xlu0.b32.cont [11/16] 0.0, 128
        %3964 = vxpose.xlu0.b32.cont [12/16] 0.0, 128
        %3965 = vxpose.xlu0.b32.cont [13/16] 0.0, 128
        %3966 = vxpose.xlu0.b32.cont [14/16] 0.0, 128
        %3967 = vxpose.xlu0.b32.cont [15/16] 0.0, 128
        %3968 = vxpose.xlu0.b32.end [16/16] 0.0, 128
        %v3969 = vpop.trf.xlu0
        %v3970 = vpop.trf.xlu0
        %v3971 = vpop.trf.xlu0
        %v3972 = vpop.trf.xlu0
        %v3973 = vpop.trf.xlu0
        %v3974 = vpop.trf.xlu0
        %v3975 = vpop.trf.xlu0
        %v3976 = vpop.trf.xlu0
        %v3977 = vpop.trf.xlu0
        %v3978 = vpop.trf.xlu0
        %v3979 = vpop.trf.xlu0
        %v3980 = vpop.trf.xlu0
        %v3981 = vpop.trf.xlu0
        %v3982 = vpop.trf.xlu0
        %v3983 = vpop.trf.xlu0
        %v3984 = vpop.trf.xlu0
        %v3986 = vsel %vm191, %v3969, 0
        %v3989 = vsel %vm191, %v3970, 0
        %3991 = vmatprep.subr.mxu0 0.0
        %3992 = vmatpush1.msra.mxu0 %v155
        %3993 = vmatprep.subr.mxu0 0.0
        %3994 = vmatpush1.msra.mxu0 %v156
        %3995 = vmatprep.subr.mxu0 0.0
        %3996 = vmatpush1.msra.mxu0 0.0
        %3997 = vmatprep.subr.mxu0 0.0
        %3998 = vmatpush1.msra.mxu0 0.0
        %3999 = vmatprep.subr.mxu0 0.0
        %4000 = vmatpush1.msra.mxu0 0.0
        %4001 = vmatprep.subr.mxu0 0.0
        %4002 = vmatpush1.msra.mxu0 0.0
        %4003 = vmatprep.subr.mxu0 0.0
        %4004 = vmatpush1.msra.mxu0 0.0
        %4005 = vmatprep.subr.mxu0 0.0
        %4006 = vmatpush1.msra.mxu0 0.0
        %4007 = vmatprep.subr.mxu0 0.0
        %4008 = vmatpush1.msra.mxu0 0.0
        %4009 = vmatprep.subr.mxu0 0.0
        %4010 = vmatpush1.msra.mxu0 0.0
        %4011 = vmatprep.subr.mxu0 0.0
        %4012 = vmatpush1.msra.mxu0 0.0
        %4013 = vmatprep.subr.mxu0 0.0
        %4014 = vmatpush1.msra.mxu0 0.0
        %4015 = vmatprep.subr.mxu0 0.0
        %4016 = vmatpush1.msra.mxu0 0.0
        %4017 = vmatprep.subr.mxu0 0.0
        %4018 = vmatpush1.msra.mxu0 0.0
        %4019 = vmatprep.subr.mxu0 0.0
        %4020 = vmatpush1.msra.mxu0 0.0
        %4021 = vmatprep.subr.mxu0 0.0
        %4022 = vmatpush1.msra.mxu0 0.0
        %4023 = vmatprep.subr.mxu0 0.0
        %4024 = vmatpush1.msra.mxu0 0.0
        %4025 = vmatprep.subr.mxu0 0.0
        %4026 = vmatpush1.msra.mxu0 0.0
        %4027 = vmatprep.subr.mxu0 0.0
        %4028 = vmatpush1.msra.mxu0 0.0
        %4029 = vmatprep.subr.mxu0 0.0
        %4030 = vmatpush1.msra.mxu0 0.0
        %4031 = vmatprep.subr.mxu0 0.0
        %4032 = vmatpush1.msra.mxu0 0.0
        %4033 = vmatprep.subr.mxu0 0.0
        %4034 = vmatpush1.msra.mxu0 0.0
        %4035 = vmatprep.subr.mxu0 0.0
        %4036 = vmatpush1.msra.mxu0 0.0
        %4037 = vmatprep.subr.mxu0 0.0
        %4038 = vmatpush1.msra.mxu0 0.0
        %4039 = vmatprep.subr.mxu0 0.0
        %4040 = vmatpush1.msra.mxu0 0.0
        %4041 = vmatprep.subr.mxu0 0.0
        %4042 = vmatpush1.msra.mxu0 0.0
        %4043 = vmatprep.subr.mxu0 0.0
        %4044 = vmatpush1.msra.mxu0 0.0
        %4045 = vmatprep.subr.mxu0 0.0
        %4046 = vmatpush1.msra.mxu0 0.0
        %4047 = vmatprep.subr.mxu0 0.0
        %4048 = vmatpush1.msra.mxu0 0.0
        %4049 = vmatprep.subr.mxu0 0.0
        %4050 = vmatpush1.msra.mxu0 0.0
        %4051 = vmatprep.subr.mxu0 0.0
        %4052 = vmatpush1.msra.mxu0 0.0
        %4053 = vmatprep.subr.mxu0 0.0
        %4054 = vmatpush1.msra.mxu0 0.0
        %4055 = vmatprep.mubr.f32.mxu0 0.0
        %4056 = vmatmul.mubr.f32.gmra.mrb[0].mxu0 %v3986
        %v4057 = vpop.f32.mrb[0].mxu0
        %v4058 = vadd.f32 0.0, %v4057
        %v4059 = vpop.f32.mrb[0].mxu0
        %4060 = vmatprep.mubr.f32.mxu0 0.0
        %4061 = vmatmul.mubr.f32.gmra.mrb[0].mxu0 %v3989
        %v4062 = vpop.f32.mrb[0].mxu0
        %v4063 = vadd.f32 0.0, %v4062
        %v4064 = vpop.f32.mrb[0].mxu0
        %4065 = vdwg.mxu0
        %4068 = vrot.lane.b32.xlu0 %v4058, 64
        %v4069 = vpop.permute.xlu0 %4068
        %4070 = vrot.lane.b32.xlu0 %v4063, 64
        %v4071 = vpop.permute.xlu0 %4070
        %v4074 = vadd.f32 %v3943, %v4069
        %v4075 = vadd.f32 %v3944, %v4071
        %v4076 = vmul.f32 %v4074, 0.5
        %v4077 = vmul.f32 %v4075, 0.5
        %4078 = vst.msk [vmem:[%s3529] sm:$0xff] %vm828, %v4076
        %4079 = vst.msk [vmem:[%s3529 + $0x8] sm:$0xff] %vm828, %v4077
        %v4080 = vld [vmem:[%s3409] sm:$0xff]
        %v4081 = vld [vmem:[%s3409 + $0x8] sm:$0xff]
        %4084 = vrot.lane.b32.xlu0 %v4080, 48
        %v4085 = vpop.permute.xlu0 %4084
        %4086 = vrot.lane.b32.xlu0 %v4081, 48
        %v4087 = vpop.permute.xlu0 %4086
        %4090 = vxpose.xlu0.b32.start [1/16] %v4085, 128
        %4091 = vxpose.xlu0.b32.cont [2/16] %v4087, 128
        %4092 = vxpose.xlu0.b32.cont [3/16] 0.0, 128
        %4093 = vxpose.xlu0.b32.cont [4/16] 0.0, 128
        %4094 = vxpose.xlu0.b32.cont [5/16] 0.0, 128
        %4095 = vxpose.xlu0.b32.cont [6/16] 0.0, 128
        %4096 = vxpose.xlu0.b32.cont [7/16] 0.0, 128
        %4097 = vxpose.xlu0.b32.cont [8/16] 0.0, 128
        %4098 = vxpose.xlu0.b32.cont [9/16] 0.0, 128
        %4099 = vxpose.xlu0.b32.cont [10/16] 0.0, 128
        %4100 = vxpose.xlu0.b32.cont [11/16] 0.0, 128
        %4101 = vxpose.xlu0.b32.cont [12/16] 0.0, 128
        %4102 = vxpose.xlu0.b32.cont [13/16] 0.0, 128
        %4103 = vxpose.xlu0.b32.cont [14/16] 0.0, 128
        %4104 = vxpose.xlu0.b32.cont [15/16] 0.0, 128
        %4105 = vxpose.xlu0.b32.end [16/16] 0.0, 128
        %v4106 = vpop.trf.xlu0
        %v4107 = vpop.trf.xlu0
        %v4108 = vpop.trf.xlu0
        %v4109 = vpop.trf.xlu0
        %v4110 = vpop.trf.xlu0
        %v4111 = vpop.trf.xlu0
        %v4112 = vpop.trf.xlu0
        %v4113 = vpop.trf.xlu0
        %v4114 = vpop.trf.xlu0
        %v4115 = vpop.trf.xlu0
        %v4116 = vpop.trf.xlu0
        %v4117 = vpop.trf.xlu0
        %v4118 = vpop.trf.xlu0
        %v4119 = vpop.trf.xlu0
        %v4120 = vpop.trf.xlu0
        %v4121 = vpop.trf.xlu0
        %v4123 = vsel %vm191, %v4106, 0
        %v4126 = vsel %vm191, %v4107, 0
        %4128 = vmatprep.subr.mxu0 0.0
        %4129 = vmatpush1.msra.mxu0 %v155
        %4130 = vmatprep.subr.mxu0 0.0
        %4131 = vmatpush1.msra.mxu0 %v156
        %4132 = vmatprep.subr.mxu0 0.0
        %4133 = vmatpush1.msra.mxu0 0.0
        %4134 = vmatprep.subr.mxu0 0.0
        %4135 = vmatpush1.msra.mxu0 0.0
        %4136 = vmatprep.subr.mxu0 0.0
        %4137 = vmatpush1.msra.mxu0 0.0
        %4138 = vmatprep.subr.mxu0 0.0
        %4139 = vmatpush1.msra.mxu0 0.0
        %4140 = vmatprep.subr.mxu0 0.0
        %4141 = vmatpush1.msra.mxu0 0.0
        %4142 = vmatprep.subr.mxu0 0.0
        %4143 = vmatpush1.msra.mxu0 0.0
        %4144 = vmatprep.subr.mxu0 0.0
        %4145 = vmatpush1.msra.mxu0 0.0
        %4146 = vmatprep.subr.mxu0 0.0
        %4147 = vmatpush1.msra.mxu0 0.0
        %4148 = vmatprep.subr.mxu0 0.0
        %4149 = vmatpush1.msra.mxu0 0.0
        %4150 = vmatprep.subr.mxu0 0.0
        %4151 = vmatpush1.msra.mxu0 0.0
        %4152 = vmatprep.subr.mxu0 0.0
        %4153 = vmatpush1.msra.mxu0 0.0
        %4154 = vmatprep.subr.mxu0 0.0
        %4155 = vmatpush1.msra.mxu0 0.0
        %4156 = vmatprep.subr.mxu0 0.0
        %4157 = vmatpush1.msra.mxu0 0.0
        %4158 = vmatprep.subr.mxu0 0.0
        %4159 = vmatpush1.msra.mxu0 0.0
        %4160 = vmatprep.subr.mxu0 0.0
        %4161 = vmatpush1.msra.mxu0 0.0
        %4162 = vmatprep.subr.mxu0 0.0
        %4163 = vmatpush1.msra.mxu0 0.0
        %4164 = vmatprep.subr.mxu0 0.0
        %4165 = vmatpush1.msra.mxu0 0.0
        %4166 = vmatprep.subr.mxu0 0.0
        %4167 = vmatpush1.msra.mxu0 0.0
        %4168 = vmatprep.subr.mxu0 0.0
        %4169 = vmatpush1.msra.mxu0 0.0
        %4170 = vmatprep.subr.mxu0 0.0
        %4171 = vmatpush1.msra.mxu0 0.0
        %4172 = vmatprep.subr.mxu0 0.0
        %4173 = vmatpush1.msra.mxu0 0.0
        %4174 = vmatprep.subr.mxu0 0.0
        %4175 = vmatpush1.msra.mxu0 0.0
        %4176 = vmatprep.subr.mxu0 0.0
        %4177 = vmatpush1.msra.mxu0 0.0
        %4178 = vmatprep.subr.mxu0 0.0
        %4179 = vmatpush1.msra.mxu0 0.0
        %4180 = vmatprep.subr.mxu0 0.0
        %4181 = vmatpush1.msra.mxu0 0.0
        %4182 = vmatprep.subr.mxu0 0.0
        %4183 = vmatpush1.msra.mxu0 0.0
        %4184 = vmatprep.subr.mxu0 0.0
        %4185 = vmatpush1.msra.mxu0 0.0
        %4186 = vmatprep.subr.mxu0 0.0
        %4187 = vmatpush1.msra.mxu0 0.0
        %4188 = vmatprep.subr.mxu0 0.0
        %4189 = vmatpush1.msra.mxu0 0.0
        %4190 = vmatprep.subr.mxu0 0.0
        %4191 = vmatpush1.msra.mxu0 0.0
        %4192 = vmatprep.mubr.f32.mxu0 0.0
        %4193 = vmatmul.mubr.f32.gmra.mrb[0].mxu0 %v4123
        %v4194 = vpop.f32.mrb[0].mxu0
        %v4195 = vadd.f32 0.0, %v4194
        %v4196 = vpop.f32.mrb[0].mxu0
        %4197 = vmatprep.mubr.f32.mxu0 0.0
        %4198 = vmatmul.mubr.f32.gmra.mrb[0].mxu0 %v4126
        %v4199 = vpop.f32.mrb[0].mxu0
        %v4200 = vadd.f32 0.0, %v4199
        %v4201 = vpop.f32.mrb[0].mxu0
        %4202 = vdwg.mxu0
        %4205 = vrot.lane.b32.xlu0 %v4195, 80
        %v4206 = vpop.permute.xlu0 %4205
        %4207 = vrot.lane.b32.xlu0 %v4200, 80
        %v4208 = vpop.permute.xlu0 %4207
        %v4211 = vadd.f32 %v4080, %v4206
        %v4212 = vadd.f32 %v4081, %v4208
        %v4213 = vmul.f32 %v4211, 0.5
        %v4214 = vmul.f32 %v4212, 0.5
        %4215 = vst.msk [vmem:[%s3529] sm:$0xff] %vm966, %v4213
        %4216 = vst.msk [vmem:[%s3529 + $0x8] sm:$0xff] %vm966, %v4214
        %v4217 = vld [vmem:[%s3409] sm:$0xff]
        %v4218 = vld [vmem:[%s3409 + $0x8] sm:$0xff]
        %4221 = vrot.lane.b32.xlu0 %v4217, 32
        %v4222 = vpop.permute.xlu0 %4221
        %4223 = vrot.lane.b32.xlu0 %v4218, 32
        %v4224 = vpop.permute.xlu0 %4223
        %4227 = vxpose.xlu0.b32.start [1/16] %v4222, 128
        %4228 = vxpose.xlu0.b32.cont [2/16] %v4224, 128
        %4229 = vxpose.xlu0.b32.cont [3/16] 0.0, 128
        %4230 = vxpose.xlu0.b32.cont [4/16] 0.0, 128
        %4231 = vxpose.xlu0.b32.cont [5/16] 0.0, 128
        %4232 = vxpose.xlu0.b32.cont [6/16] 0.0, 128
        %4233 = vxpose.xlu0.b32.cont [7/16] 0.0, 128
        %4234 = vxpose.xlu0.b32.cont [8/16] 0.0, 128
        %4235 = vxpose.xlu0.b32.cont [9/16] 0.0, 128
        %4236 = vxpose.xlu0.b32.cont [10/16] 0.0, 128
        %4237 = vxpose.xlu0.b32.cont [11/16] 0.0, 128
        %4238 = vxpose.xlu0.b32.cont [12/16] 0.0, 128
        %4239 = vxpose.xlu0.b32.cont [13/16] 0.0, 128
        %4240 = vxpose.xlu0.b32.cont [14/16] 0.0, 128
        %4241 = vxpose.xlu0.b32.cont [15/16] 0.0, 128
        %4242 = vxpose.xlu0.b32.end [16/16] 0.0, 128
        %v4243 = vpop.trf.xlu0
        %v4244 = vpop.trf.xlu0
        %v4245 = vpop.trf.xlu0
        %v4246 = vpop.trf.xlu0
        %v4247 = vpop.trf.xlu0
        %v4248 = vpop.trf.xlu0
        %v4249 = vpop.trf.xlu0
        %v4250 = vpop.trf.xlu0
        %v4251 = vpop.trf.xlu0
        %v4252 = vpop.trf.xlu0
        %v4253 = vpop.trf.xlu0
        %v4254 = vpop.trf.xlu0
        %v4255 = vpop.trf.xlu0
        %v4256 = vpop.trf.xlu0
        %v4257 = vpop.trf.xlu0
        %v4258 = vpop.trf.xlu0
        %v4260 = vsel %vm191, %v4243, 0
        %v4263 = vsel %vm191, %v4244, 0
        %4265 = vmatprep.subr.mxu0 0.0
        %4266 = vmatpush1.msra.mxu0 %v155
        %4267 = vmatprep.subr.mxu0 0.0
        %4268 = vmatpush1.msra.mxu0 %v156
        %4269 = vmatprep.subr.mxu0 0.0
        %4270 = vmatpush1.msra.mxu0 0.0
        %4271 = vmatprep.subr.mxu0 0.0
        %4272 = vmatpush1.msra.mxu0 0.0
        %4273 = vmatprep.subr.mxu0 0.0
        %4274 = vmatpush1.msra.mxu0 0.0
        %4275 = vmatprep.subr.mxu0 0.0
        %4276 = vmatpush1.msra.mxu0 0.0
        %4277 = vmatprep.subr.mxu0 0.0
        %4278 = vmatpush1.msra.mxu0 0.0
        %4279 = vmatprep.subr.mxu0 0.0
        %4280 = vmatpush1.msra.mxu0 0.0
        %4281 = vmatprep.subr.mxu0 0.0
        %4282 = vmatpush1.msra.mxu0 0.0
        %4283 = vmatprep.subr.mxu0 0.0
        %4284 = vmatpush1.msra.mxu0 0.0
        %4285 = vmatprep.subr.mxu0 0.0
        %4286 = vmatpush1.msra.mxu0 0.0
        %4287 = vmatprep.subr.mxu0 0.0
        %4288 = vmatpush1.msra.mxu0 0.0
        %4289 = vmatprep.subr.mxu0 0.0
        %4290 = vmatpush1.msra.mxu0 0.0
        %4291 = vmatprep.subr.mxu0 0.0
        %4292 = vmatpush1.msra.mxu0 0.0
        %4293 = vmatprep.subr.mxu0 0.0
        %4294 = vmatpush1.msra.mxu0 0.0
        %4295 = vmatprep.subr.mxu0 0.0
        %4296 = vmatpush1.msra.mxu0 0.0
        %4297 = vmatprep.subr.mxu0 0.0
        %4298 = vmatpush1.msra.mxu0 0.0
        %4299 = vmatprep.subr.mxu0 0.0
        %4300 = vmatpush1.msra.mxu0 0.0
        %4301 = vmatprep.subr.mxu0 0.0
        %4302 = vmatpush1.msra.mxu0 0.0
        %4303 = vmatprep.subr.mxu0 0.0
        %4304 = vmatpush1.msra.mxu0 0.0
        %4305 = vmatprep.subr.mxu0 0.0
        %4306 = vmatpush1.msra.mxu0 0.0
        %4307 = vmatprep.subr.mxu0 0.0
        %4308 = vmatpush1.msra.mxu0 0.0
        %4309 = vmatprep.subr.mxu0 0.0
        %4310 = vmatpush1.msra.mxu0 0.0
        %4311 = vmatprep.subr.mxu0 0.0
        %4312 = vmatpush1.msra.mxu0 0.0
        %4313 = vmatprep.subr.mxu0 0.0
        %4314 = vmatpush1.msra.mxu0 0.0
        %4315 = vmatprep.subr.mxu0 0.0
        %4316 = vmatpush1.msra.mxu0 0.0
        %4317 = vmatprep.subr.mxu0 0.0
        %4318 = vmatpush1.msra.mxu0 0.0
        %4319 = vmatprep.subr.mxu0 0.0
        %4320 = vmatpush1.msra.mxu0 0.0
        %4321 = vmatprep.subr.mxu0 0.0
        %4322 = vmatpush1.msra.mxu0 0.0
        %4323 = vmatprep.subr.mxu0 0.0
        %4324 = vmatpush1.msra.mxu0 0.0
        %4325 = vmatprep.subr.mxu0 0.0
        %4326 = vmatpush1.msra.mxu0 0.0
        %4327 = vmatprep.subr.mxu0 0.0
        %4328 = vmatpush1.msra.mxu0 0.0
        %4329 = vmatprep.mubr.f32.mxu0 0.0
        %4330 = vmatmul.mubr.f32.gmra.mrb[0].mxu0 %v4260
        %v4331 = vpop.f32.mrb[0].mxu0
        %v4332 = vadd.f32 0.0, %v4331
        %v4333 = vpop.f32.mrb[0].mxu0
        %4334 = vmatprep.mubr.f32.mxu0 0.0
        %4335 = vmatmul.mubr.f32.gmra.mrb[0].mxu0 %v4263
        %v4336 = vpop.f32.mrb[0].mxu0
        %v4337 = vadd.f32 0.0, %v4336
        %v4338 = vpop.f32.mrb[0].mxu0
        %4339 = vdwg.mxu0
        %4342 = vrot.lane.b32.xlu0 %v4332, 96
        %v4343 = vpop.permute.xlu0 %4342
        %4344 = vrot.lane.b32.xlu0 %v4337, 96
        %v4345 = vpop.permute.xlu0 %4344
        %v4348 = vadd.f32 %v4217, %v4343
        %v4349 = vadd.f32 %v4218, %v4345
        %v4350 = vmul.f32 %v4348, 0.5
        %v4351 = vmul.f32 %v4349, 0.5
        %4352 = vst.msk [vmem:[%s3529] sm:$0xff] %vm1104, %v4350
        %4353 = vst.msk [vmem:[%s3529 + $0x8] sm:$0xff] %vm1104, %v4351
        %v4354 = vld [vmem:[%s3409] sm:$0xff]
        %v4355 = vld [vmem:[%s3409 + $0x8] sm:$0xff]
        %4358 = vrot.lane.b32.xlu0 %v4354, 16
        %v4359 = vpop.permute.xlu0 %4358
        %4360 = vrot.lane.b32.xlu0 %v4355, 16
        %v4361 = vpop.permute.xlu0 %4360
        %4364 = vxpose.xlu0.b32.start [1/16] %v4359, 128
        %4365 = vxpose.xlu0.b32.cont [2/16] %v4361, 128
        %4366 = vxpose.xlu0.b32.cont [3/16] 0.0, 128
        %4367 = vxpose.xlu0.b32.cont [4/16] 0.0, 128
        %4368 = vxpose.xlu0.b32.cont [5/16] 0.0, 128
        %4369 = vxpose.xlu0.b32.cont [6/16] 0.0, 128
        %4370 = vxpose.xlu0.b32.cont [7/16] 0.0, 128
        %4371 = vxpose.xlu0.b32.cont [8/16] 0.0, 128
        %4372 = vxpose.xlu0.b32.cont [9/16] 0.0, 128
        %4373 = vxpose.xlu0.b32.cont [10/16] 0.0, 128
        %4374 = vxpose.xlu0.b32.cont [11/16] 0.0, 128
        %4375 = vxpose.xlu0.b32.cont [12/16] 0.0, 128
        %4376 = vxpose.xlu0.b32.cont [13/16] 0.0, 128
        %4377 = vxpose.xlu0.b32.cont [14/16] 0.0, 128
        %4378 = vxpose.xlu0.b32.cont [15/16] 0.0, 128
        %4379 = vxpose.xlu0.b32.end [16/16] 0.0, 128
        %v4380 = vpop.trf.xlu0
        %v4381 = vpop.trf.xlu0
        %v4382 = vpop.trf.xlu0
        %v4383 = vpop.trf.xlu0
        %v4384 = vpop.trf.xlu0
        %v4385 = vpop.trf.xlu0
        %v4386 = vpop.trf.xlu0
        %v4387 = vpop.trf.xlu0
        %v4388 = vpop.trf.xlu0
        %v4389 = vpop.trf.xlu0
        %v4390 = vpop.trf.xlu0
        %v4391 = vpop.trf.xlu0
        %v4392 = vpop.trf.xlu0
        %v4393 = vpop.trf.xlu0
        %v4394 = vpop.trf.xlu0
        %v4395 = vpop.trf.xlu0
        %v4397 = vsel %vm191, %v4380, 0
        %v4400 = vsel %vm191, %v4381, 0
        %4402 = vmatprep.subr.mxu0 0.0
        %4403 = vmatpush1.msra.mxu0 %v155
        %4404 = vmatprep.subr.mxu0 0.0
        %4405 = vmatpush1.msra.mxu0 %v156
        %4406 = vmatprep.subr.mxu0 0.0
        %4407 = vmatpush1.msra.mxu0 0.0
        %4408 = vmatprep.subr.mxu0 0.0
        %4409 = vmatpush1.msra.mxu0 0.0
        %4410 = vmatprep.subr.mxu0 0.0
        %4411 = vmatpush1.msra.mxu0 0.0
        %4412 = vmatprep.subr.mxu0 0.0
        %4413 = vmatpush1.msra.mxu0 0.0
        %4414 = vmatprep.subr.mxu0 0.0
        %4415 = vmatpush1.msra.mxu0 0.0
        %4416 = vmatprep.subr.mxu0 0.0
        %4417 = vmatpush1.msra.mxu0 0.0
        %4418 = vmatprep.subr.mxu0 0.0
        %4419 = vmatpush1.msra.mxu0 0.0
        %4420 = vmatprep.subr.mxu0 0.0
        %4421 = vmatpush1.msra.mxu0 0.0
        %4422 = vmatprep.subr.mxu0 0.0
        %4423 = vmatpush1.msra.mxu0 0.0
        %4424 = vmatprep.subr.mxu0 0.0
        %4425 = vmatpush1.msra.mxu0 0.0
        %4426 = vmatprep.subr.mxu0 0.0
        %4427 = vmatpush1.msra.mxu0 0.0
        %4428 = vmatprep.subr.mxu0 0.0
        %4429 = vmatpush1.msra.mxu0 0.0
        %4430 = vmatprep.subr.mxu0 0.0
        %4431 = vmatpush1.msra.mxu0 0.0
        %4432 = vmatprep.subr.mxu0 0.0
        %4433 = vmatpush1.msra.mxu0 0.0
        %4434 = vmatprep.subr.mxu0 0.0
        %4435 = vmatpush1.msra.mxu0 0.0
        %4436 = vmatprep.subr.mxu0 0.0
        %4437 = vmatpush1.msra.mxu0 0.0
        %4438 = vmatprep.subr.mxu0 0.0
        %4439 = vmatpush1.msra.mxu0 0.0
        %4440 = vmatprep.subr.mxu0 0.0
        %4441 = vmatpush1.msra.mxu0 0.0
        %4442 = vmatprep.subr.mxu0 0.0
        %4443 = vmatpush1.msra.mxu0 0.0
        %4444 = vmatprep.subr.mxu0 0.0
        %4445 = vmatpush1.msra.mxu0 0.0
        %4446 = vmatprep.subr.mxu0 0.0
        %4447 = vmatpush1.msra.mxu0 0.0
        %4448 = vmatprep.subr.mxu0 0.0
        %4449 = vmatpush1.msra.mxu0 0.0
        %4450 = vmatprep.subr.mxu0 0.0
        %4451 = vmatpush1.msra.mxu0 0.0
        %4452 = vmatprep.subr.mxu0 0.0
        %4453 = vmatpush1.msra.mxu0 0.0
        %4454 = vmatprep.subr.mxu0 0.0
        %4455 = vmatpush1.msra.mxu0 0.0
        %4456 = vmatprep.subr.mxu0 0.0
        %4457 = vmatpush1.msra.mxu0 0.0
        %4458 = vmatprep.subr.mxu0 0.0
        %4459 = vmatpush1.msra.mxu0 0.0
        %4460 = vmatprep.subr.mxu0 0.0
        %4461 = vmatpush1.msra.mxu0 0.0
        %4462 = vmatprep.subr.mxu0 0.0
        %4463 = vmatpush1.msra.mxu0 0.0
        %4464 = vmatprep.subr.mxu0 0.0
        %4465 = vmatpush1.msra.mxu0 0.0
        %4466 = vmatprep.mubr.f32.mxu0 0.0
        %4467 = vmatmul.mubr.f32.gmra.mrb[0].mxu0 %v4397
        %v4468 = vpop.f32.mrb[0].mxu0
        %v4469 = vadd.f32 0.0, %v4468
        %v4470 = vpop.f32.mrb[0].mxu0
        %4471 = vmatprep.mubr.f32.mxu0 0.0
        %4472 = vmatmul.mubr.f32.gmra.mrb[0].mxu0 %v4400
        %v4473 = vpop.f32.mrb[0].mxu0
        %v4474 = vadd.f32 0.0, %v4473
        %v4475 = vpop.f32.mrb[0].mxu0
        %4476 = vdwg.mxu0
        %4479 = vrot.lane.b32.xlu0 %v4469, 112
        %v4480 = vpop.permute.xlu0 %4479
        %4481 = vrot.lane.b32.xlu0 %v4474, 112
        %v4482 = vpop.permute.xlu0 %4481
        %v4485 = vadd.f32 %v4354, %v4480
        %v4486 = vadd.f32 %v4355, %v4482
        %v4487 = vmul.f32 %v4485, 0.5
        %v4488 = vmul.f32 %v4486, 0.5
        %4489 = vst.msk [vmem:[%s3529] sm:$0xff] %vm1242, %v4487
        %4490 = vst.msk [vmem:[%s3529 + $0x8] sm:$0xff] %vm1242, %v4488
        %s4491 = sand.u32 %s65, 1
        %s4492 = scalar_lea.sflag [#allocation3], %s4491
        %s4493 = sand.u32 %s65, 1
        %s4494 = smul.addr %s4493, 64
        %s4495 = scalar_lea.vmem [#allocation2], %s4494
        // Predicated region
        $region25: #{a_call__.3} parent=23 // pred_check
          %p4496 = pneg %p75
        $region26: #{a_call__.3} parent=23 // pred_check_branch
          %4498 = sbr.rel (%p4496) target = $region28
        $region27: #{a_call__.3} parent=23 // pred_region
          %s4499 = smul.u32 4, %s19
          %s4501 = ssub.s32 1024, 1024
          %4502 = vsyncadd %s4492, %s4501
          %s4503 = smul.addr %s4499, 2
          %s4504 = sadd.s32 %s20, %s4503
          %s4505 = smul.addr %s4504, 128
          %s4506 = scalar_lea.hbm %s1, %s4505
          %s4507 = sshll.u32 %s4495, 4
          %s4508 = int_to_ptr.vmem [resolvable:$true] %s4507
          %4513 = dma.vmem_to_hbm [thread:$0]  %s4508, 1024, %s4506, %s4492, 128, 128, 8
        $region28: #{a_call__.3} parent=23 // pred_fallthru
          _
      $region24: #{a_call__.3} parent=5 // pred_fallthru
        _
      %p4514 = scmp.le.s32.totalorder 2, %s10
      // Predicated region
      $region29: #{a_call__.3} parent=5 // pred_check
        %p4515 = pneg %p4514
      $region30: #{a_call__.3} parent=5 // pred_check_branch
        %4517 = sbr.rel (%p4515) target = $region32
      $region31: #{a_call__.3} parent=5 // pred_region
        %s4518 = ssub.s32 %s10, 2
        // Predicated region
        $region33: #{a_call__.3} parent=31 // pred_check
          %p4519 = pneg %p81
        $region34: #{a_call__.3} parent=31 // pred_check_branch
          %4521 = sbr.rel (%p4519) target = $region36
        $region35: #{a_call__.3} parent=31 // pred_region
          %s4522 = sand.u32 %s66, 1
          %s4523 = scalar_lea.sflag [#allocation3], %s4522
          %s4524 = sand.u32 %s66, 1
          %s4525 = smul.addr %s4524, 64
          %s4526 = scalar_lea.vmem [#allocation2], %s4525
          %4527 = dma.done %s4523, 1024
        $region36: #{a_call__.3} parent=31 // pred_fallthru
          _
      $region32: #{a_call__.3} parent=5 // pred_fallthru
        _
    $region6: #{a_call__.3} parent=1 // loop_footer
      %s14 = sadd.s32 1, %s10
    $region7: #{a_call__.3} parent=1 // loop_footer_branch
      %9 = sbr.rel target = $region3
    $region8: #{a_call__.3} parent=1 // loop_exit
      _
    %4528 = vsyncpa [#allocation3], 1
    %s4529 = scalar_lea.sflag [#allocation3], 1
    %4530 = vsyncpa %s4529, 1

</llo_original>
